<compile_context>
chip_gen: v6e
topology: v6e:2x2x1
jax: 0.10.0
libtpu: 0.0.40
codegen_flags: <defaults>
</compile_context>

<pallas_src>
import jax
import jax.numpy as jnp
import numpy as np
from jax.experimental import pallas as pl
from jax.experimental.pallas import tpu as pltpu


def _round_up(x, m):
    return (x + m - 1) // m * m


def resdown_kernel(x_ref, w_ref, b_ref, o_ref):
    # x_ref: (Cin, TH*K, TW*K)   native NCHW tile (TH output rows, TW output cols)
    # w_ref: (K*K, 2*Cp, Cin)    stacked per-(kh,kw) weights [residual ; 1x1/S^2]
    # b_ref: (2*Cp, 1)           stacked bias (f32)
    # o_ref: (Cout, TH, TW)      NCHW output tile
    cin, thh, tww = x_ref.shape
    cout, th_n, tw = o_ref.shape
    k = thh // th_n                      # == stride == kernel_size
    cp2 = w_ref.shape[1]
    cp = cp2 // 2
    xdt = x_ref.dtype

    # Width space-to-depth as an exact 0/1 selection matmul (built once per step):
    # qsel[b][l, wo] = 1  iff  l == wo*k + b.   Keeps everything as safe 2-D dots.
    l_ix = jax.lax.broadcasted_iota(jnp.int32, (tww, tw), 0)
    w_ix = jax.lax.broadcasted_iota(jnp.int32, (tww, tw), 1)
    qsel = [(l_ix == w_ix * k + b).astype(xdt) for b in range(k)]

    bias = b_ref[...]                    # (2*Cp, 1) f32

    # TODO(synk): for very tall row tiles this static unroll should become a
    # lax.fori_loop with a dynamic sublane slice; TH is capped small here.
    for th in range(th_n):
        acc = jnp.zeros((cp2, tw), jnp.float32)
        for a in range(k):               # kh offset: static row index into the tile
            row = x_ref[:, th * k + a, :]                       # (Cin, TW*K)
            for b in range(k):           # kw offset: exact gather via selection matmul
                sel = jnp.dot(row, qsel[b], preferred_element_type=xdt)   # (Cin, TW)
                acc = acc + jnp.dot(w_ref[a * k + b], sel,
                                    preferred_element_type=jnp.float32)   # (2Cp, TW)
        acc = acc + bias
        res = jnp.maximum(acc[:cp], 0.0)                        # BlockCNA inner ReLU
        out = jnp.maximum(res + acc[cp:], 0.0)                  # outer ReLU
        o_ref[:, th, :] = out[:cout].astype(o_ref.dtype)


def resdown_forward(x, w_res, b_res, w_1x1, b_1x1, kernel_size, stride,
                    *, compute_dtype=None):
    """x: (N, Cin, H, W) NCHW.  Returns (N, Cout, H//stride, W//stride) NCHW."""
    N, Cin, H, W = x.shape
    Cout = w_res.shape[0]
    K, S = kernel_size, stride

    # TODO(synk): general K != S (overlapping windows) would need an in-kernel
    # gather path; the module's canonical downsample config is K == S.
    assert K == S, "fused fast path requires kernel_size == stride (no padding)"
    assert H % S == 0 and W % S == 0, "spatial dims must be divisible by stride"
    Ho, Wo = H // S, W // S
    Cp = max(8, _round_up(Cout, 8))      # sublane-aligned epilogue split

    out_dtype = x.dtype
    x_dtype = compute_dtype if compute_dtype is not None else x.dtype
    xk = x.astype(x_dtype)               # no-op for f32; in a real pipeline the
                                         # bf16 cast would be fused upstream.

    # --- stacked weights: w_ab[o, c] = W_res[o, c, a, b] (rows [0:Cout]) and
    #     W_1x1[o, c] / S^2 (rows [Cp:Cp+Cout]) -- avgpool folded into the 1x1.
    wr = jnp.transpose(w_res, (2, 3, 0, 1)).reshape(K * K, Cout, Cin)
    w1 = w_1x1[:, :, 0, 0] / float(S * S)
    top = jnp.pad(wr, ((0, 0), (0, Cp - Cout), (0, 0)))
    bot = jnp.pad(jnp.broadcast_to(w1[None], (K * K, Cout, Cin)),
                  ((0, 0), (0, Cp - Cout), (0, 0)))
    wab = jnp.concatenate([top, bot], axis=1).astype(x_dtype)    # (K*K, 2*Cp, Cin)
    bias = (jnp.zeros((2 * Cp,), jnp.float32)
            .at[:Cout].set(b_res.astype(jnp.float32))
            .at[Cp:Cp + Cout].set(b_1x1.astype(jnp.float32))
            .reshape(2 * Cp, 1))

    itemsize = jnp.dtype(x_dtype).itemsize
    out_itemsize = jnp.dtype(out_dtype).itemsize

    # --- tile sizes (output rows TH, output cols TW). Blocks keep (H, W) as the
    # trailing dims of the *native* NCHW array, so last-two-dims constraints are
    # met with TH*K a multiple of 8 (or full) and TW*K full / multiple of 128.
    TW = Wo if Wo <= 512 else 512
    if Ho < 8:
        TH = Ho
    elif Ho >= 16 and Cin * 16 * K * TW * K * itemsize <= (4 << 20):
        TH = 16
    else:
        TH = 8
    THh, TWW = TH * K, TW * K

    # --- VMEM accounting (includes f32 accumulator, selection matrices and the
    # default 2x buffering of the resident weights) + explicit limit.
    in_block_bytes = Cin * THh * TWW * itemsize
    out_block_bytes = Cout * TH * TW * out_itemsize
    w_bytes = wab.size * itemsize + bias.size * 4
    temp_bytes = (2 * Cp * TW * 4) + K * TWW * TW * itemsize + (Cin + 2 * Cp) * TW * 4
    est_vmem = 2 * (in_block_bytes + out_block_bytes + w_bytes) + temp_bytes
    vmem_limit = int(min(max(4 * est_vmem, 32 << 20), 48 << 20))  # safe on v5e/v6e/v7x

    grid = (N, pl.cdiv(Ho, TH), pl.cdiv(Wo, TW))    # >= 2 steps -> both v7x cores fed
    per_step_flops = TH * K * K * (2 * Cin * TWW * TW + 2 * (2 * Cp) * Cin * TW)
    steps = int(np.prod(grid))

    out = pl.pallas_call(
        resdown_kernel,
        out_shape=jax.ShapeDtypeStruct((N, Cout, Ho, Wo), out_dtype),
        grid_spec=pltpu.PrefetchScalarGridSpec(
            num_scalar_prefetch=0,
            grid=grid,
            in_specs=[
                # streamed NCHW activation tile (no host relayout, no host pad)
                pl.BlockSpec((None, Cin, THh, TWW), lambda n, i, j: (n, 0, i, j)),
                # resident stacked weights / bias (constant index_map)
                pl.BlockSpec((K * K, 2 * Cp, Cin), lambda n, i, j: (0, 0, 0)),
                pl.BlockSpec((2 * Cp, 1), lambda n, i, j: (0, 0)),
            ],
            out_specs=pl.BlockSpec((None, Cout, TH, TW), lambda n, i, j: (n, 0, i, j)),
        ),
        compiler_params=pltpu.CompilerParams(
            dimension_semantics=("parallel", "parallel", "parallel"),
            vmem_limit_bytes=vmem_limit,
        ),
        cost_estimate=pl.CostEstimate(
            flops=steps * per_step_flops,
            transcendentals=0,
            bytes_accessed=(xk.size * itemsize
                            + N * Cout * Ho * Wo * out_itemsize
                            + wab.size * itemsize + bias.size * 4),
        ),
    )(xk, wab, bias)
    return out                                        # already NCHW -- no post-pass


def resdown_reference(x, w_res, b_res, w_1x1, b_1x1, stride):
    """Plain-JAX reference mirroring the PyTorch ResDown forward exactly."""
    dn = ('NCHW', 'OIHW', 'NCHW')
    res = jax.lax.conv_general_dilated(
        x, w_res, (stride, stride), 'VALID', dimension_numbers=dn)
    res = jnp.maximum(res + b_res[None, :, None, None], 0.0)    # BlockCNA ReLU
    skip = jax.lax.conv_general_dilated(
        x, w_1x1, (1, 1), 'VALID', dimension_numbers=dn)
    skip = skip + b_1x1[None, :, None, None]
    N, C, H, W = skip.shape
    skip = skip.reshape(N, C, H // stride, stride, W // stride, stride)
    skip = skip.mean(axis=(3, 5))
    return jnp.maximum(res + skip, 0.0)


if __name__ == "__main__":
    N, Cin, Cout, H, W = 2, 4, 8, 16, 16
    kernel_size, stride = 2, 2

    key = jax.random.PRNGKey(0)
    k_x, k_wr, k_br, k_w1, k_b1 = jax.random.split(key, 5)
    x = jax.random.normal(k_x, (N, Cin, H, W), dtype=jnp.float32)
    w_res = 0.1 * jax.random.normal(
        k_wr, (Cout, Cin, kernel_size, kernel_size), dtype=jnp.float32)
    b_res = 0.1 * jax.random.normal(k_br, (Cout,), dtype=jnp.float32)
    w_1x1 = 0.1 * jax.random.normal(k_w1, (Cout, Cin, 1, 1), dtype=jnp.float32)
    b_1x1 = 0.1 * jax.random.normal(k_b1, (Cout,), dtype=jnp.float32)

    ref = jax.block_until_ready(
        resdown_reference(x, w_res, b_res, w_1x1, b_1x1, stride))

    # f32 path: exact-ish match against the PyTorch-style reference.
    out = resdown_forward(x, w_res, b_res, w_1x1, b_1x1, kernel_size, stride)
    out = jax.block_until_ready(out)
    assert out.shape == (N, Cout, H // stride, W // stride), out.shape
    np.testing.assert_allclose(np.asarray(out), np.asarray(ref),
                               rtol=1e-5, atol=1e-5)

    # bf16 path (default recommendation for v5e/v6e/v7x): halves the dominant
    # HBM stream; accumulation stays f32, so only input/weight rounding remains.
    out_bf16 = resdown_forward(x, w_res, b_res, w_1x1, b_1x1, kernel_size,
                               stride, compute_dtype=jnp.bfloat16)
    out_bf16 = jax.block_until_ready(out_bf16)
    np.testing.assert_allclose(np.asarray(out_bf16), np.asarray(ref),
                               rtol=1e-1, atol=1e-1)

    print("KERNEL_OK")
</pallas_src>

<mosaic_0001>
module attributes {stable_mosaic.version = 11 : i64} {
  func.func @resdown_kernel(%arg0: i32, %arg1: i32, %arg2: i32, %arg3: memref<1x4x16x16xf32, #tpu.memory_space<vmem>>, %arg4: memref<4x16x4xf32, #tpu.memory_space<vmem>>, %arg5: memref<16x1xf32, #tpu.memory_space<vmem>>, %arg6: memref<1x8x8x8xf32, #tpu.memory_space<vmem>>) attributes {dimension_semantics = [#tpu.dimension_semantics<parallel>, #tpu.dimension_semantics<parallel>, #tpu.dimension_semantics<parallel>], iteration_bounds = array<i64: 2, 1, 1>, scalar_prefetch = 0 : i64, scratch_operands = 0 : i64, tpu.core_type = #tpu.core_type<tc>, window_params = [{transform_indices = @transform_0, window_bounds = array<i64: 1, 4, 16, 16>}, {pipeline_mode = #tpu.pipeline_mode<synchronous>, transform_indices = @transform_1, window_bounds = array<i64: 4, 16, 4>}, {pipeline_mode = #tpu.pipeline_mode<synchronous>, transform_indices = @transform_2, window_bounds = array<i64: 16, 1>}, {transform_indices = @transform_3, window_bounds = array<i64: 1, 8, 8, 8>}]} {
    %0 = tpu.iota {dimensions = array<i32: 0>} : vector<16x8xi32>
    %1 = tpu.iota {dimensions = array<i32: 1>} : vector<16x8xi32>
    %c2_i32 = arith.constant 2 : i32
    %2 = vector.broadcast %c2_i32 : i32 to vector<16x8xi32>
    %3 = arith.muli %1, %2 : vector<16x8xi32>
    %c0_i32 = arith.constant 0 : i32
    %4 = vector.broadcast %c0_i32 : i32 to vector<16x8xi32>
    %5 = arith.addi %3, %4 : vector<16x8xi32>
    %6 = arith.cmpi eq, %0, %5 : vector<16x8xi32>
    %7 = arith.extui %6 : vector<16x8xi1> to vector<16x8xi32>
    %8 = arith.sitofp %7 : vector<16x8xi32> to vector<16x8xf32>
    %c2_i32_0 = arith.constant 2 : i32
    %9 = vector.broadcast %c2_i32_0 : i32 to vector<16x8xi32>
    %10 = arith.muli %1, %9 : vector<16x8xi32>
    %c1_i32 = arith.constant 1 : i32
    %11 = vector.broadcast %c1_i32 : i32 to vector<16x8xi32>
    %12 = arith.addi %10, %11 : vector<16x8xi32>
    %13 = arith.cmpi eq, %0, %12 : vector<16x8xi32>
    %14 = arith.extui %13 : vector<16x8xi1> to vector<16x8xi32>
    %15 = arith.sitofp %14 : vector<16x8xi32> to vector<16x8xf32>
    %c0 = arith.constant 0 : index
    %c0_1 = arith.constant 0 : index
    %16 = vector.load %arg5[%c0, %c0_1] : memref<16x1xf32, #tpu.memory_space<vmem>>, vector<16x1xf32>
    %cst = arith.constant 0.000000e+00 : f32
    %17 = vector.broadcast %cst : f32 to vector<16x8xf32>
    %c0_2 = arith.constant 0 : index
    %c0_3 = arith.constant 0 : index
    %c0_4 = arith.constant 0 : index
    %c0_5 = arith.constant 0 : index
    %18 = vector.load %arg3[%c0_2, %c0_3, %c0_4, %c0_5] : memref<1x4x16x16xf32, #tpu.memory_space<vmem>>, vector<1x4x1x16xf32>
    %19 = vector.shape_cast %18 : vector<1x4x1x16xf32> to vector<4x16xf32>
    %cst_6 = arith.constant dense<0.000000e+00> : vector<4x8xf32>
    %20 = tpu.matmul %19, %8, %cst_6 {dimension_numbers = #tpu.dot_dimension_numbers<[1], [0], [0], [1], [0, 0, 1, 1], [], []>} : vector<4x16xf32>, vector<16x8xf32>, vector<4x8xf32> -> vector<4x8xf32>
    %c0_7 = arith.constant 0 : index
    %c0_8 = arith.constant 0 : index
    %c0_9 = arith.constant 0 : index
    %21 = vector.load %arg4[%c0_7, %c0_8, %c0_9] : memref<4x16x4xf32, #tpu.memory_space<vmem>>, vector<1x16x4xf32>
    %22 = vector.shape_cast %21 : vector<1x16x4xf32> to vector<16x4xf32>
    %cst_10 = arith.constant dense<0.000000e+00> : vector<16x8xf32>
    %23 = tpu.matmul %22, %20, %cst_10 {dimension_numbers = #tpu.dot_dimension_numbers<[1], [0], [0], [1], [0, 0, 1, 1], [], []>} : vector<16x4xf32>, vector<4x8xf32>, vector<16x8xf32> -> vector<16x8xf32>
    %24 = arith.addf %17, %23 : vector<16x8xf32>
    %cst_11 = arith.constant dense<0.000000e+00> : vector<4x8xf32>
    %25 = tpu.matmul %19, %15, %cst_11 {dimension_numbers = #tpu.dot_dimension_numbers<[1], [0], [0], [1], [0, 0, 1, 1], [], []>} : vector<4x16xf32>, vector<16x8xf32>, vector<4x8xf32> -> vector<4x8xf32>
    %c1 = arith.constant 1 : index
    %c0_12 = arith.constant 0 : index
    %c0_13 = arith.constant 0 : index
    %26 = vector.load %arg4[%c1, %c0_12, %c0_13] : memref<4x16x4xf32, #tpu.memory_space<vmem>>, vector<1x16x4xf32>
    %27 = vector.shape_cast %26 : vector<1x16x4xf32> to vector<16x4xf32>
    %cst_14 = arith.constant dense<0.000000e+00> : vector<16x8xf32>
    %28 = tpu.matmul %27, %25, %cst_14 {dimension_numbers = #tpu.dot_dimension_numbers<[1], [0], [0], [1], [0, 0, 1, 1], [], []>} : vector<16x4xf32>, vector<4x8xf32>, vector<16x8xf32> -> vector<16x8xf32>
    %29 = arith.addf %24, %28 : vector<16x8xf32>
    %c0_15 = arith.constant 0 : index
    %c0_16 = arith.constant 0 : index
    %c1_17 = arith.constant 1 : index
    %c0_18 = arith.constant 0 : index
    %30 = vector.load %arg3[%c0_15, %c0_16, %c1_17, %c0_18] : memref<1x4x16x16xf32, #tpu.memory_space<vmem>>, vector<1x4x1x16xf32>
    %31 = vector.shape_cast %30 : vector<1x4x1x16xf32> to vector<4x16xf32>
    %cst_19 = arith.constant dense<0.000000e+00> : vector<4x8xf32>
    %32 = tpu.matmul %31, %8, %cst_19 {dimension_numbers = #tpu.dot_dimension_numbers<[1], [0], [0], [1], [0, 0, 1, 1], [], []>} : vector<4x16xf32>, vector<16x8xf32>, vector<4x8xf32> -> vector<4x8xf32>
    %c2 = arith.constant 2 : index
    %c0_20 = arith.constant 0 : index
    %c0_21 = arith.constant 0 : index
    %33 = vector.load %arg4[%c2, %c0_20, %c0_21] : memref<4x16x4xf32, #tpu.memory_space<vmem>>, vector<1x16x4xf32>
    %34 = vector.shape_cast %33 : vector<1x16x4xf32> to vector<16x4xf32>
    %cst_22 = arith.constant dense<0.000000e+00> : vector<16x8xf32>
    %35 = tpu.matmul %34, %32, %cst_22 {dimension_numbers = #tpu.dot_dimension_numbers<[1], [0], [0], [1], [0, 0, 1, 1], [], []>} : vector<16x4xf32>, vector<4x8xf32>, vector<16x8xf32> -> vector<16x8xf32>
    %36 = arith.addf %29, %35 : vector<16x8xf32>
    %cst_23 = arith.constant dense<0.000000e+00> : vector<4x8xf32>
    %37 = tpu.matmul %31, %15, %cst_23 {dimension_numbers = #tpu.dot_dimension_numbers<[1], [0], [0], [1], [0, 0, 1, 1], [], []>} : vector<4x16xf32>, vector<16x8xf32>, vector<4x8xf32> -> vector<4x8xf32>
    %c3 = arith.constant 3 : index
    %c0_24 = arith.constant 0 : index
    %c0_25 = arith.constant 0 : index
    %38 = vector.load %arg4[%c3, %c0_24, %c0_25] : memref<4x16x4xf32, #tpu.memory_space<vmem>>, vector<1x16x4xf32>
    %39 = vector.shape_cast %38 : vector<1x16x4xf32> to vector<16x4xf32>
    %cst_26 = arith.constant dense<0.000000e+00> : vector<16x8xf32>
    %40 = tpu.matmul %39, %37, %cst_26 {dimension_numbers = #tpu.dot_dimension_numbers<[1], [0], [0], [1], [0, 0, 1, 1], [], []>} : vector<16x4xf32>, vector<4x8xf32>, vector<16x8xf32> -> vector<16x8xf32>
    %41 = arith.addf %36, %40 : vector<16x8xf32>
    %42 = vector.broadcast %16 : vector<16x1xf32> to vector<16x8xf32>
    %43 = arith.addf %41, %42 : vector<16x8xf32>
    %44 = vector.extract_strided_slice %43 {offsets = [0, 0], sizes = [8, 8], strides = [1, 1]} : vector<16x8xf32> to vector<8x8xf32>
    %cst_27 = arith.constant 0.000000e+00 : f32
    %45 = vector.broadcast %cst_27 : f32 to vector<8x8xf32>
    %46 = arith.maximumf %44, %45 : vector<8x8xf32>
    %47 = vector.extract_strided_slice %43 {offsets = [8, 0], sizes = [8, 8], strides = [1, 1]} : vector<16x8xf32> to vector<8x8xf32>
    %48 = arith.addf %46, %47 : vector<8x8xf32>
    %cst_28 = arith.constant 0.000000e+00 : f32
    %49 = vector.broadcast %cst_28 : f32 to vector<8x8xf32>
    %50 = arith.maximumf %48, %49 : vector<8x8xf32>
    %c0_29 = arith.constant 0 : index
    %c0_30 = arith.constant 0 : index
    %c0_31 = arith.constant 0 : index
    %c0_32 = arith.constant 0 : index
    %51 = vector.load %arg6[%c0_29, %c0_30, %c0_31, %c0_32] : memref<1x8x8x8xf32, #tpu.memory_space<vmem>>, vector<1x8x1x8xf32>
    %52 = vector.shape_cast %51 : vector<1x8x1x8xf32> to vector<8x8xf32>
    %53 = vector.shape_cast %50 : vector<8x8xf32> to vector<1x8x1x8xf32>
    tpu.vector_store %arg6[%c0_29, %c0_30, %c0_31, %c0_32], %53 {strides = array<i32>} : memref<1x8x8x8xf32, #tpu.memory_space<vmem>>, vector<1x8x1x8xf32>,
    %cst_33 = arith.constant 0.000000e+00 : f32
    %54 = vector.broadcast %cst_33 : f32 to vector<16x8xf32>
    %c0_34 = arith.constant 0 : index
    %c0_35 = arith.constant 0 : index
    %c2_36 = arith.constant 2 : index
    %c0_37 = arith.constant 0 : index
    %55 = vector.load %arg3[%c0_34, %c0_35, %c2_36, %c0_37] : memref<1x4x16x16xf32, #tpu.memory_space<vmem>>, vector<1x4x1x16xf32>
    %56 = vector.shape_cast %55 : vector<1x4x1x16xf32> to vector<4x16xf32>
    %cst_38 = arith.constant dense<0.000000e+00> : vector<4x8xf32>
    %57 = tpu.matmul %56, %8, %cst_38 {dimension_numbers = #tpu.dot_dimension_numbers<[1], [0], [0], [1], [0, 0, 1, 1], [], []>} : vector<4x16xf32>, vector<16x8xf32>, vector<4x8xf32> -> vector<4x8xf32>
    %c0_39 = arith.constant 0 : index
    %c0_40 = arith.constant 0 : index
    %c0_41 = arith.constant 0 : index
    %58 = vector.load %arg4[%c0_39, %c0_40, %c0_41] : memref<4x16x4xf32, #tpu.memory_space<vmem>>, vector<1x16x4xf32>
    %59 = vector.shape_cast %58 : vector<1x16x4xf32> to vector<16x4xf32>
    %cst_42 = arith.constant dense<0.000000e+00> : vector<16x8xf32>
    %60 = tpu.matmul %59, %57, %cst_42 {dimension_numbers = #tpu.dot_dimension_numbers<[1], [0], [0], [1], [0, 0, 1, 1], [], []>} : vector<16x4xf32>, vector<4x8xf32>, vector<16x8xf32> -> vector<16x8xf32>
    %61 = arith.addf %54, %60 : vector<16x8xf32>
    %cst_43 = arith.constant dense<0.000000e+00> : vector<4x8xf32>
    %62 = tpu.matmul %56, %15, %cst_43 {dimension_numbers = #tpu.dot_dimension_numbers<[1], [0], [0], [1], [0, 0, 1, 1], [], []>} : vector<4x16xf32>, vector<16x8xf32>, vector<4x8xf32> -> vector<4x8xf32>
    %c1_44 = arith.constant 1 : index
    %c0_45 = arith.constant 0 : index
    %c0_46 = arith.constant 0 : index
    %63 = vector.load %arg4[%c1_44, %c0_45, %c0_46] : memref<4x16x4xf32, #tpu.memory_space<vmem>>, vector<1x16x4xf32>
    %64 = vector.shape_cast %63 : vector<1x16x4xf32> to vector<16x4xf32>
    %cst_47 = arith.constant dense<0.000000e+00> : vector<16x8xf32>
    %65 = tpu.matmul %64, %62, %cst_47 {dimension_numbers = #tpu.dot_dimension_numbers<[1], [0], [0], [1], [0, 0, 1, 1], [], []>} : vector<16x4xf32>, vector<4x8xf32>, vector<16x8xf32> -> vector<16x8xf32>
    %66 = arith.addf %61, %65 : vector<16x8xf32>
    %c0_48 = arith.constant 0 : index
    %c0_49 = arith.constant 0 : index
    %c3_50 = arith.constant 3 : index
    %c0_51 = arith.constant 0 : index
    %67 = vector.load %arg3[%c0_48, %c0_49, %c3_50, %c0_51] : memref<1x4x16x16xf32, #tpu.memory_space<vmem>>, vector<1x4x1x16xf32>
    %68 = vector.shape_cast %67 : vector<1x4x1x16xf32> to vector<4x16xf32>
    %cst_52 = arith.constant dense<0.000000e+00> : vector<4x8xf32>
    %69 = tpu.matmul %68, %8, %cst_52 {dimension_numbers = #tpu.dot_dimension_numbers<[1], [0], [0], [1], [0, 0, 1, 1], [], []>} : vector<4x16xf32>, vector<16x8xf32>, vector<4x8xf32> -> vector<4x8xf32>
    %c2_53 = arith.constant 2 : index
    %c0_54 = arith.constant 0 : index
    %c0_55 = arith.constant 0 : index
    %70 = vector.load %arg4[%c2_53, %c0_54, %c0_55] : memref<4x16x4xf32, #tpu.memory_space<vmem>>, vector<1x16x4xf32>
    %71 = vector.shape_cast %70 : vector<1x16x4xf32> to vector<16x4xf32>
    %cst_56 = arith.constant dense<0.000000e+00> : vector<16x8xf32>
    %72 = tpu.matmul %71, %69, %cst_56 {dimension_numbers = #tpu.dot_dimension_numbers<[1], [0], [0], [1], [0, 0, 1, 1], [], []>} : vector<16x4xf32>, vector<4x8xf32>, vector<16x8xf32> -> vector<16x8xf32>
    %73 = arith.addf %66, %72 : vector<16x8xf32>
    %cst_57 = arith.constant dense<0.000000e+00> : vector<4x8xf32>
    %74 = tpu.matmul %68, %15, %cst_57 {dimension_numbers = #tpu.dot_dimension_numbers<[1], [0], [0], [1], [0, 0, 1, 1], [], []>} : vector<4x16xf32>, vector<16x8xf32>, vector<4x8xf32> -> vector<4x8xf32>
    %c3_58 = arith.constant 3 : index
    %c0_59 = arith.constant 0 : index
    %c0_60 = arith.constant 0 : index
    %75 = vector.load %arg4[%c3_58, %c0_59, %c0_60] : memref<4x16x4xf32, #tpu.memory_space<vmem>>, vector<1x16x4xf32>
    %76 = vector.shape_cast %75 : vector<1x16x4xf32> to vector<16x4xf32>
    %cst_61 = arith.constant dense<0.000000e+00> : vector<16x8xf32>
    %77 = tpu.matmul %76, %74, %cst_61 {dimension_numbers = #tpu.dot_dimension_numbers<[1], [0], [0], [1], [0, 0, 1, 1], [], []>} : vector<16x4xf32>, vector<4x8xf32>, vector<16x8xf32> -> vector<16x8xf32>
    %78 = arith.addf %73, %77 : vector<16x8xf32>
    %79 = vector.broadcast %16 : vector<16x1xf32> to vector<16x8xf32>
    %80 = arith.addf %78, %79 : vector<16x8xf32>
    %81 = vector.extract_strided_slice %80 {offsets = [0, 0], sizes = [8, 8], strides = [1, 1]} : vector<16x8xf32> to vector<8x8xf32>
    %cst_62 = arith.constant 0.000000e+00 : f32
    %82 = vector.broadcast %cst_62 : f32 to vector<8x8xf32>
    %83 = arith.maximumf %81, %82 : vector<8x8xf32>
    %84 = vector.extract_strided_slice %80 {offsets = [8, 0], sizes = [8, 8], strides = [1, 1]} : vector<16x8xf32> to vector<8x8xf32>
    %85 = arith.addf %83, %84 : vector<8x8xf32>
    %cst_63 = arith.constant 0.000000e+00 : f32
    %86 = vector.broadcast %cst_63 : f32 to vector<8x8xf32>
    %87 = arith.maximumf %85, %86 : vector<8x8xf32>
    %c0_64 = arith.constant 0 : index
    %c0_65 = arith.constant 0 : index
    %c1_66 = arith.constant 1 : index
    %c0_67 = arith.constant 0 : index
    %88 = vector.load %arg6[%c0_64, %c0_65, %c1_66, %c0_67] : memref<1x8x8x8xf32, #tpu.memory_space<vmem>>, vector<1x8x1x8xf32>
    %89 = vector.shape_cast %88 : vector<1x8x1x8xf32> to vector<8x8xf32>
    %90 = vector.shape_cast %87 : vector<8x8xf32> to vector<1x8x1x8xf32>
    tpu.vector_store %arg6[%c0_64, %c0_65, %c1_66, %c0_67], %90 {strides = array<i32>} : memref<1x8x8x8xf32, #tpu.memory_space<vmem>>, vector<1x8x1x8xf32>,
    %cst_68 = arith.constant 0.000000e+00 : f32
    %91 = vector.broadcast %cst_68 : f32 to vector<16x8xf32>
    %c0_69 = arith.constant 0 : index
    %c0_70 = arith.constant 0 : index
    %c4 = arith.constant 4 : index
    %c0_71 = arith.constant 0 : index
    %92 = vector.load %arg3[%c0_69, %c0_70, %c4, %c0_71] : memref<1x4x16x16xf32, #tpu.memory_space<vmem>>, vector<1x4x1x16xf32>
    %93 = vector.shape_cast %92 : vector<1x4x1x16xf32> to vector<4x16xf32>
    %cst_72 = arith.constant dense<0.000000e+00> : vector<4x8xf32>
    %94 = tpu.matmul %93, %8, %cst_72 {dimension_numbers = #tpu.dot_dimension_numbers<[1], [0], [0], [1], [0, 0, 1, 1], [], []>} : vector<4x16xf32>, vector<16x8xf32>, vector<4x8xf32> -> vector<4x8xf32>
    %c0_73 = arith.constant 0 : index
    %c0_74 = arith.constant 0 : index
    %c0_75 = arith.constant 0 : index
    %95 = vector.load %arg4[%c0_73, %c0_74, %c0_75] : memref<4x16x4xf32, #tpu.memory_space<vmem>>, vector<1x16x4xf32>
    %96 = vector.shape_cast %95 : vector<1x16x4xf32> to vector<16x4xf32>
    %cst_76 = arith.constant dense<0.000000e+00> : vector<16x8xf32>
    %97 = tpu.matmul %96, %94, %cst_76 {dimension_numbers = #tpu.dot_dimension_numbers<[1], [0], [0], [1], [0, 0, 1, 1], [], []>} : vector<16x4xf32>, vector<4x8xf32>, vector<16x8xf32> -> vector<16x8xf32>
    %98 = arith.addf %91, %97 : vector<16x8xf32>
    %cst_77 = arith.constant dense<0.000000e+00> : vector<4x8xf32>
    %99 = tpu.matmul %93, %15, %cst_77 {dimension_numbers = #tpu.dot_dimension_numbers<[1], [0], [0], [1], [0, 0, 1, 1], [], []>} : vector<4x16xf32>, vector<16x8xf32>, vector<4x8xf32> -> vector<4x8xf32>
    %c1_78 = arith.constant 1 : index
    %c0_79 = arith.constant 0 : index
    %c0_80 = arith.constant 0 : index
    %100 = vector.load %arg4[%c1_78, %c0_79, %c0_80] : memref<4x16x4xf32, #tpu.memory_space<vmem>>, vector<1x16x4xf32>
    %101 = vector.shape_cast %100 : vector<1x16x4xf32> to vector<16x4xf32>
    %cst_81 = arith.constant dense<0.000000e+00> : vector<16x8xf32>
    %102 = tpu.matmul %101, %99, %cst_81 {dimension_numbers = #tpu.dot_dimension_numbers<[1], [0], [0], [1], [0, 0, 1, 1], [], []>} : vector<16x4xf32>, vector<4x8xf32>, vector<16x8xf32> -> vector<16x8xf32>
    %103 = arith.addf %98, %102 : vector<16x8xf32>
    %c0_82 = arith.constant 0 : index
    %c0_83 = arith.constant 0 : index
    %c5 = arith.constant 5 : index
    %c0_84 = arith.constant 0 : index
    %104 = vector.load %arg3[%c0_82, %c0_83, %c5, %c0_84] : memref<1x4x16x16xf32, #tpu.memory_space<vmem>>, vector<1x4x1x16xf32>
    %105 = vector.shape_cast %104 : vector<1x4x1x16xf32> to vector<4x16xf32>
    %cst_85 = arith.constant dense<0.000000e+00> : vector<4x8xf32>
    %106 = tpu.matmul %105, %8, %cst_85 {dimension_numbers = #tpu.dot_dimension_numbers<[1], [0], [0], [1], [0, 0, 1, 1], [], []>} : vector<4x16xf32>, vector<16x8xf32>, vector<4x8xf32> -> vector<4x8xf32>
    %c2_86 = arith.constant 2 : index
    %c0_87 = arith.constant 0 : index
    %c0_88 = arith.constant 0 : index
    %107 = vector.load %arg4[%c2_86, %c0_87, %c0_88] : memref<4x16x4xf32, #tpu.memory_space<vmem>>, vector<1x16x4xf32>
    %108 = vector.shape_cast %107 : vector<1x16x4xf32> to vector<16x4xf32>
    %cst_89 = arith.constant dense<0.000000e+00> : vector<16x8xf32>
    %109 = tpu.matmul %108, %106, %cst_89 {dimension_numbers = #tpu.dot_dimension_numbers<[1], [0], [0], [1], [0, 0, 1, 1], [], []>} : vector<16x4xf32>, vector<4x8xf32>, vector<16x8xf32> -> vector<16x8xf32>
    %110 = arith.addf %103, %109 : vector<16x8xf32>
    %cst_90 = arith.constant dense<0.000000e+00> : vector<4x8xf32>
    %111 = tpu.matmul %105, %15, %cst_90 {dimension_numbers = #tpu.dot_dimension_numbers<[1], [0], [0], [1], [0, 0, 1, 1], [], []>} : vector<4x16xf32>, vector<16x8xf32>, vector<4x8xf32> -> vector<4x8xf32>
    %c3_91 = arith.constant 3 : index
    %c0_92 = arith.constant 0 : index
    %c0_93 = arith.constant 0 : index
    %112 = vector.load %arg4[%c3_91, %c0_92, %c0_93] : memref<4x16x4xf32, #tpu.memory_space<vmem>>, vector<1x16x4xf32>
    %113 = vector.shape_cast %112 : vector<1x16x4xf32> to vector<16x4xf32>
    %cst_94 = arith.constant dense<0.000000e+00> : vector<16x8xf32>
    %114 = tpu.matmul %113, %111, %cst_94 {dimension_numbers = #tpu.dot_dimension_numbers<[1], [0], [0], [1], [0, 0, 1, 1], [], []>} : vector<16x4xf32>, vector<4x8xf32>, vector<16x8xf32> -> vector<16x8xf32>
    %115 = arith.addf %110, %114 : vector<16x8xf32>
    %116 = vector.broadcast %16 : vector<16x1xf32> to vector<16x8xf32>
    %117 = arith.addf %115, %116 : vector<16x8xf32>
    %118 = vector.extract_strided_slice %117 {offsets = [0, 0], sizes = [8, 8], strides = [1, 1]} : vector<16x8xf32> to vector<8x8xf32>
    %cst_95 = arith.constant 0.000000e+00 : f32
    %119 = vector.broadcast %cst_95 : f32 to vector<8x8xf32>
    %120 = arith.maximumf %118, %119 : vector<8x8xf32>
    %121 = vector.extract_strided_slice %117 {offsets = [8, 0], sizes = [8, 8], strides = [1, 1]} : vector<16x8xf32> to vector<8x8xf32>
    %122 = arith.addf %120, %121 : vector<8x8xf32>
    %cst_96 = arith.constant 0.000000e+00 : f32
    %123 = vector.broadcast %cst_96 : f32 to vector<8x8xf32>
    %124 = arith.maximumf %122, %123 : vector<8x8xf32>
    %c0_97 = arith.constant 0 : index
    %c0_98 = arith.constant 0 : index
    %c2_99 = arith.constant 2 : index
    %c0_100 = arith.constant 0 : index
    %125 = vector.load %arg6[%c0_97, %c0_98, %c2_99, %c0_100] : memref<1x8x8x8xf32, #tpu.memory_space<vmem>>, vector<1x8x1x8xf32>
    %126 = vector.shape_cast %125 : vector<1x8x1x8xf32> to vector<8x8xf32>
    %127 = vector.shape_cast %124 : vector<8x8xf32> to vector<1x8x1x8xf32>
    tpu.vector_store %arg6[%c0_97, %c0_98, %c2_99, %c0_100], %127 {strides = array<i32>} : memref<1x8x8x8xf32, #tpu.memory_space<vmem>>, vector<1x8x1x8xf32>,
    %cst_101 = arith.constant 0.000000e+00 : f32
    %128 = vector.broadcast %cst_101 : f32 to vector<16x8xf32>
    %c0_102 = arith.constant 0 : index
    %c0_103 = arith.constant 0 : index
    %c6 = arith.constant 6 : index
    %c0_104 = arith.constant 0 : index
    %129 = vector.load %arg3[%c0_102, %c0_103, %c6, %c0_104] : memref<1x4x16x16xf32, #tpu.memory_space<vmem>>, vector<1x4x1x16xf32>
    %130 = vector.shape_cast %129 : vector<1x4x1x16xf32> to vector<4x16xf32>
    %cst_105 = arith.constant dense<0.000000e+00> : vector<4x8xf32>
    %131 = tpu.matmul %130, %8, %cst_105 {dimension_numbers = #tpu.dot_dimension_numbers<[1], [0], [0], [1], [0, 0, 1, 1], [], []>} : vector<4x16xf32>, vector<16x8xf32>, vector<4x8xf32> -> vector<4x8xf32>
    %c0_106 = arith.constant 0 : index
    %c0_107 = arith.constant 0 : index
    %c0_108 = arith.constant 0 : index
    %132 = vector.load %arg4[%c0_106, %c0_107, %c0_108] : memref<4x16x4xf32, #tpu.memory_space<vmem>>, vector<1x16x4xf32>
    %133 = vector.shape_cast %132 : vector<1x16x4xf32> to vector<16x4xf32>
    %cst_109 = arith.constant dense<0.000000e+00> : vector<16x8xf32>
    %134 = tpu.matmul %133, %131, %cst_109 {dimension_numbers = #tpu.dot_dimension_numbers<[1], [0], [0], [1], [0, 0, 1, 1], [], []>} : vector<16x4xf32>, vector<4x8xf32>, vector<16x8xf32> -> vector<16x8xf32>
    %135 = arith.addf %128, %134 : vector<16x8xf32>
    %cst_110 = arith.constant dense<0.000000e+00> : vector<4x8xf32>
    %136 = tpu.matmul %130, %15, %cst_110 {dimension_numbers = #tpu.dot_dimension_numbers<[1], [0], [0], [1], [0, 0, 1, 1], [], []>} : vector<4x16xf32>, vector<16x8xf32>, vector<4x8xf32> -> vector<4x8xf32>
    %c1_111 = arith.constant 1 : index
    %c0_112 = arith.constant 0 : index
    %c0_113 = arith.constant 0 : index
    %137 = vector.load %arg4[%c1_111, %c0_112, %c0_113] : memref<4x16x4xf32, #tpu.memory_space<vmem>>, vector<1x16x4xf32>
    %138 = vector.shape_cast %137 : vector<1x16x4xf32> to vector<16x4xf32>
    %cst_114 = arith.constant dense<0.000000e+00> : vector<16x8xf32>
    %139 = tpu.matmul %138, %136, %cst_114 {dimension_numbers = #tpu.dot_dimension_numbers<[1], [0], [0], [1], [0, 0, 1, 1], [], []>} : vector<16x4xf32>, vector<4x8xf32>, vector<16x8xf32> -> vector<16x8xf32>
    %140 = arith.addf %135, %139 : vector<16x8xf32>
    %c0_115 = arith.constant 0 : index
    %c0_116 = arith.constant 0 : index
    %c7 = arith.constant 7 : index
    %c0_117 = arith.constant 0 : index
    %141 = vector.load %arg3[%c0_115, %c0_116, %c7, %c0_117] : memref<1x4x16x16xf32, #tpu.memory_space<vmem>>, vector<1x4x1x16xf32>
    %142 = vector.shape_cast %141 : vector<1x4x1x16xf32> to vector<4x16xf32>
    %cst_118 = arith.constant dense<0.000000e+00> : vector<4x8xf32>
    %143 = tpu.matmul %142, %8, %cst_118 {dimension_numbers = #tpu.dot_dimension_numbers<[1], [0], [0], [1], [0, 0, 1, 1], [], []>} : vector<4x16xf32>, vector<16x8xf32>, vector<4x8xf32> -> vector<4x8xf32>
    %c2_119 = arith.constant 2 : index
    %c0_120 = arith.constant 0 : index
    %c0_121 = arith.constant 0 : index
    %144 = vector.load %arg4[%c2_119, %c0_120, %c0_121] : memref<4x16x4xf32, #tpu.memory_space<vmem>>, vector<1x16x4xf32>
    %145 = vector.shape_cast %144 : vector<1x16x4xf32> to vector<16x4xf32>
    %cst_122 = arith.constant dense<0.000000e+00> : vector<16x8xf32>
    %146 = tpu.matmul %145, %143, %cst_122 {dimension_numbers = #tpu.dot_dimension_numbers<[1], [0], [0], [1], [0, 0, 1, 1], [], []>} : vector<16x4xf32>, vector<4x8xf32>, vector<16x8xf32> -> vector<16x8xf32>
    %147 = arith.addf %140, %146 : vector<16x8xf32>
    %cst_123 = arith.constant dense<0.000000e+00> : vector<4x8xf32>
    %148 = tpu.matmul %142, %15, %cst_123 {dimension_numbers = #tpu.dot_dimension_numbers<[1], [0], [0], [1], [0, 0, 1, 1], [], []>} : vector<4x16xf32>, vector<16x8xf32>, vector<4x8xf32> -> vector<4x8xf32>
    %c3_124 = arith.constant 3 : index
    %c0_125 = arith.constant 0 : index
    %c0_126 = arith.constant 0 : index
    %149 = vector.load %arg4[%c3_124, %c0_125, %c0_126] : memref<4x16x4xf32, #tpu.memory_space<vmem>>, vector<1x16x4xf32>
    %150 = vector.shape_cast %149 : vector<1x16x4xf32> to vector<16x4xf32>
    %cst_127 = arith.constant dense<0.000000e+00> : vector<16x8xf32>
    %151 = tpu.matmul %150, %148, %cst_127 {dimension_numbers = #tpu.dot_dimension_numbers<[1], [0], [0], [1], [0, 0, 1, 1], [], []>} : vector<16x4xf32>, vector<4x8xf32>, vector<16x8xf32> -> vector<16x8xf32>
    %152 = arith.addf %147, %151 : vector<16x8xf32>
    %153 = vector.broadcast %16 : vector<16x1xf32> to vector<16x8xf32>
    %154 = arith.addf %152, %153 : vector<16x8xf32>
    %155 = vector.extract_strided_slice %154 {offsets = [0, 0], sizes = [8, 8], strides = [1, 1]} : vector<16x8xf32> to vector<8x8xf32>
    %cst_128 = arith.constant 0.000000e+00 : f32
    %156 = vector.broadcast %cst_128 : f32 to vector<8x8xf32>
    %157 = arith.maximumf %155, %156 : vector<8x8xf32>
    %158 = vector.extract_strided_slice %154 {offsets = [8, 0], sizes = [8, 8], strides = [1, 1]} : vector<16x8xf32> to vector<8x8xf32>
    %159 = arith.addf %157, %158 : vector<8x8xf32>
    %cst_129 = arith.constant 0.000000e+00 : f32
    %160 = vector.broadcast %cst_129 : f32 to vector<8x8xf32>
    %161 = arith.maximumf %159, %160 : vector<8x8xf32>
    %c0_130 = arith.constant 0 : index
    %c0_131 = arith.constant 0 : index
    %c3_132 = arith.constant 3 : index
    %c0_133 = arith.constant 0 : index
    %162 = vector.load %arg6[%c0_130, %c0_131, %c3_132, %c0_133] : memref<1x8x8x8xf32, #tpu.memory_space<vmem>>, vector<1x8x1x8xf32>
    %163 = vector.shape_cast %162 : vector<1x8x1x8xf32> to vector<8x8xf32>
    %164 = vector.shape_cast %161 : vector<8x8xf32> to vector<1x8x1x8xf32>
    tpu.vector_store %arg6[%c0_130, %c0_131, %c3_132, %c0_133], %164 {strides = array<i32>} : memref<1x8x8x8xf32, #tpu.memory_space<vmem>>, vector<1x8x1x8xf32>,
    %cst_134 = arith.constant 0.000000e+00 : f32
    %165 = vector.broadcast %cst_134 : f32 to vector<16x8xf32>
    %c0_135 = arith.constant 0 : index
    %c0_136 = arith.constant 0 : index
    %c8 = arith.constant 8 : index
    %c0_137 = arith.constant 0 : index
    %166 = vector.load %arg3[%c0_135, %c0_136, %c8, %c0_137] : memref<1x4x16x16xf32, #tpu.memory_space<vmem>>, vector<1x4x1x16xf32>
    %167 = vector.shape_cast %166 : vector<1x4x1x16xf32> to vector<4x16xf32>
    %cst_138 = arith.constant dense<0.000000e+00> : vector<4x8xf32>
    %168 = tpu.matmul %167, %8, %cst_138 {dimension_numbers = #tpu.dot_dimension_numbers<[1], [0], [0], [1], [0, 0, 1, 1], [], []>} : vector<4x16xf32>, vector<16x8xf32>, vector<4x8xf32> -> vector<4x8xf32>
    %c0_139 = arith.constant 0 : index
    %c0_140 = arith.constant 0 : index
    %c0_141 = arith.constant 0 : index
    %169 = vector.load %arg4[%c0_139, %c0_140, %c0_141] : memref<4x16x4xf32, #tpu.memory_space<vmem>>, vector<1x16x4xf32>
    %170 = vector.shape_cast %169 : vector<1x16x4xf32> to vector<16x4xf32>
    %cst_142 = arith.constant dense<0.000000e+00> : vector<16x8xf32>
    %171 = tpu.matmul %170, %168, %cst_142 {dimension_numbers = #tpu.dot_dimension_numbers<[1], [0], [0], [1], [0, 0, 1, 1], [], []>} : vector<16x4xf32>, vector<4x8xf32>, vector<16x8xf32> -> vector<16x8xf32>
    %172 = arith.addf %165, %171 : vector<16x8xf32>
    %cst_143 = arith.constant dense<0.000000e+00> : vector<4x8xf32>
    %173 = tpu.matmul %167, %15, %cst_143 {dimension_numbers = #tpu.dot_dimension_numbers<[1], [0], [0], [1], [0, 0, 1, 1], [], []>} : vector<4x16xf32>, vector<16x8xf32>, vector<4x8xf32> -> vector<4x8xf32>
    %c1_144 = arith.constant 1 : index
    %c0_145 = arith.constant 0 : index
    %c0_146 = arith.constant 0 : index
    %174 = vector.load %arg4[%c1_144, %c0_145, %c0_146] : memref<4x16x4xf32, #tpu.memory_space<vmem>>, vector<1x16x4xf32>
    %175 = vector.shape_cast %174 : vector<1x16x4xf32> to vector<16x4xf32>
    %cst_147 = arith.constant dense<0.000000e+00> : vector<16x8xf32>
    %176 = tpu.matmul %175, %173, %cst_147 {dimension_numbers = #tpu.dot_dimension_numbers<[1], [0], [0], [1], [0, 0, 1, 1], [], []>} : vector<16x4xf32>, vector<4x8xf32>, vector<16x8xf32> -> vector<16x8xf32>
    %177 = arith.addf %172, %176 : vector<16x8xf32>
    %c0_148 = arith.constant 0 : index
    %c0_149 = arith.constant 0 : index
    %c9 = arith.constant 9 : index
    %c0_150 = arith.constant 0 : index
    %178 = vector.load %arg3[%c0_148, %c0_149, %c9, %c0_150] : memref<1x4x16x16xf32, #tpu.memory_space<vmem>>, vector<1x4x1x16xf32>
    %179 = vector.shape_cast %178 : vector<1x4x1x16xf32> to vector<4x16xf32>
    %cst_151 = arith.constant dense<0.000000e+00> : vector<4x8xf32>
    %180 = tpu.matmul %179, %8, %cst_151 {dimension_numbers = #tpu.dot_dimension_numbers<[1], [0], [0], [1], [0, 0, 1, 1], [], []>} : vector<4x16xf32>, vector<16x8xf32>, vector<4x8xf32> -> vector<4x8xf32>
    %c2_152 = arith.constant 2 : index
    %c0_153 = arith.constant 0 : index
    %c0_154 = arith.constant 0 : index
    %181 = vector.load %arg4[%c2_152, %c0_153, %c0_154] : memref<4x16x4xf32, #tpu.memory_space<vmem>>, vector<1x16x4xf32>
    %182 = vector.shape_cast %181 : vector<1x16x4xf32> to vector<16x4xf32>
    %cst_155 = arith.constant dense<0.000000e+00> : vector<16x8xf32>
    %183 = tpu.matmul %182, %180, %cst_155 {dimension_numbers = #tpu.dot_dimension_numbers<[1], [0], [0], [1], [0, 0, 1, 1], [], []>} : vector<16x4xf32>, vector<4x8xf32>, vector<16x8xf32> -> vector<16x8xf32>
    %184 = arith.addf %177, %183 : vector<16x8xf32>
    %cst_156 = arith.constant dense<0.000000e+00> : vector<4x8xf32>
    %185 = tpu.matmul %179, %15, %cst_156 {dimension_numbers = #tpu.dot_dimension_numbers<[1], [0], [0], [1], [0, 0, 1, 1], [], []>} : vector<4x16xf32>, vector<16x8xf32>, vector<4x8xf32> -> vector<4x8xf32>
    %c3_157 = arith.constant 3 : index
    %c0_158 = arith.constant 0 : index
    %c0_159 = arith.constant 0 : index
    %186 = vector.load %arg4[%c3_157, %c0_158, %c0_159] : memref<4x16x4xf32, #tpu.memory_space<vmem>>, vector<1x16x4xf32>
    %187 = vector.shape_cast %186 : vector<1x16x4xf32> to vector<16x4xf32>
    %cst_160 = arith.constant dense<0.000000e+00> : vector<16x8xf32>
    %188 = tpu.matmul %187, %185, %cst_160 {dimension_numbers = #tpu.dot_dimension_numbers<[1], [0], [0], [1], [0, 0, 1, 1], [], []>} : vector<16x4xf32>, vector<4x8xf32>, vector<16x8xf32> -> vector<16x8xf32>
    %189 = arith.addf %184, %188 : vector<16x8xf32>
    %190 = vector.broadcast %16 : vector<16x1xf32> to vector<16x8xf32>
    %191 = arith.addf %189, %190 : vector<16x8xf32>
    %192 = vector.extract_strided_slice %191 {offsets = [0, 0], sizes = [8, 8], strides = [1, 1]} : vector<16x8xf32> to vector<8x8xf32>
    %cst_161 = arith.constant 0.000000e+00 : f32
    %193 = vector.broadcast %cst_161 : f32 to vector<8x8xf32>
    %194 = arith.maximumf %192, %193 : vector<8x8xf32>
    %195 = vector.extract_strided_slice %191 {offsets = [8, 0], sizes = [8, 8], strides = [1, 1]} : vector<16x8xf32> to vector<8x8xf32>
    %196 = arith.addf %194, %195 : vector<8x8xf32>
    %cst_162 = arith.constant 0.000000e+00 : f32
    %197 = vector.broadcast %cst_162 : f32 to vector<8x8xf32>
    %198 = arith.maximumf %196, %197 : vector<8x8xf32>
    %c0_163 = arith.constant 0 : index
    %c0_164 = arith.constant 0 : index
    %c4_165 = arith.constant 4 : index
    %c0_166 = arith.constant 0 : index
    %199 = vector.load %arg6[%c0_163, %c0_164, %c4_165, %c0_166] : memref<1x8x8x8xf32, #tpu.memory_space<vmem>>, vector<1x8x1x8xf32>
    %200 = vector.shape_cast %199 : vector<1x8x1x8xf32> to vector<8x8xf32>
    %201 = vector.shape_cast %198 : vector<8x8xf32> to vector<1x8x1x8xf32>
    tpu.vector_store %arg6[%c0_163, %c0_164, %c4_165, %c0_166], %201 {strides = array<i32>} : memref<1x8x8x8xf32, #tpu.memory_space<vmem>>, vector<1x8x1x8xf32>,
    %cst_167 = arith.constant 0.000000e+00 : f32
    %202 = vector.broadcast %cst_167 : f32 to vector<16x8xf32>
    %c0_168 = arith.constant 0 : index
    %c0_169 = arith.constant 0 : index
    %c10 = arith.constant 10 : index
    %c0_170 = arith.constant 0 : index
    %203 = vector.load %arg3[%c0_168, %c0_169, %c10, %c0_170] : memref<1x4x16x16xf32, #tpu.memory_space<vmem>>, vector<1x4x1x16xf32>
    %204 = vector.shape_cast %203 : vector<1x4x1x16xf32> to vector<4x16xf32>
    %cst_171 = arith.constant dense<0.000000e+00> : vector<4x8xf32>
    %205 = tpu.matmul %204, %8, %cst_171 {dimension_numbers = #tpu.dot_dimension_numbers<[1], [0], [0], [1], [0, 0, 1, 1], [], []>} : vector<4x16xf32>, vector<16x8xf32>, vector<4x8xf32> -> vector<4x8xf32>
    %c0_172 = arith.constant 0 : index
    %c0_173 = arith.constant 0 : index
    %c0_174 = arith.constant 0 : index
    %206 = vector.load %arg4[%c0_172, %c0_173, %c0_174] : memref<4x16x4xf32, #tpu.memory_space<vmem>>, vector<1x16x4xf32>
    %207 = vector.shape_cast %206 : vector<1x16x4xf32> to vector<16x4xf32>
    %cst_175 = arith.constant dense<0.000000e+00> : vector<16x8xf32>
    %208 = tpu.matmul %207, %205, %cst_175 {dimension_numbers = #tpu.dot_dimension_numbers<[1], [0], [0], [1], [0, 0, 1, 1], [], []>} : vector<16x4xf32>, vector<4x8xf32>, vector<16x8xf32> -> vector<16x8xf32>
    %209 = arith.addf %202, %208 : vector<16x8xf32>
    %cst_176 = arith.constant dense<0.000000e+00> : vector<4x8xf32>
    %210 = tpu.matmul %204, %15, %cst_176 {dimension_numbers = #tpu.dot_dimension_numbers<[1], [0], [0], [1], [0, 0, 1, 1], [], []>} : vector<4x16xf32>, vector<16x8xf32>, vector<4x8xf32> -> vector<4x8xf32>
    %c1_177 = arith.constant 1 : index
    %c0_178 = arith.constant 0 : index
    %c0_179 = arith.constant 0 : index
    %211 = vector.load %arg4[%c1_177, %c0_178, %c0_179] : memref<4x16x4xf32, #tpu.memory_space<vmem>>, vector<1x16x4xf32>
    %212 = vector.shape_cast %211 : vector<1x16x4xf32> to vector<16x4xf32>
    %cst_180 = arith.constant dense<0.000000e+00> : vector<16x8xf32>
    %213 = tpu.matmul %212, %210, %cst_180 {dimension_numbers = #tpu.dot_dimension_numbers<[1], [0], [0], [1], [0, 0, 1, 1], [], []>} : vector<16x4xf32>, vector<4x8xf32>, vector<16x8xf32> -> vector<16x8xf32>
    %214 = arith.addf %209, %213 : vector<16x8xf32>
    %c0_181 = arith.constant 0 : index
    %c0_182 = arith.constant 0 : index
    %c11 = arith.constant 11 : index
    %c0_183 = arith.constant 0 : index
    %215 = vector.load %arg3[%c0_181, %c0_182, %c11, %c0_183] : memref<1x4x16x16xf32, #tpu.memory_space<vmem>>, vector<1x4x1x16xf32>
    %216 = vector.shape_cast %215 : vector<1x4x1x16xf32> to vector<4x16xf32>
    %cst_184 = arith.constant dense<0.000000e+00> : vector<4x8xf32>
    %217 = tpu.matmul %216, %8, %cst_184 {dimension_numbers = #tpu.dot_dimension_numbers<[1], [0], [0], [1], [0, 0, 1, 1], [], []>} : vector<4x16xf32>, vector<16x8xf32>, vector<4x8xf32> -> vector<4x8xf32>
    %c2_185 = arith.constant 2 : index
    %c0_186 = arith.constant 0 : index
    %c0_187 = arith.constant 0 : index
    %218 = vector.load %arg4[%c2_185, %c0_186, %c0_187] : memref<4x16x4xf32, #tpu.memory_space<vmem>>, vector<1x16x4xf32>
    %219 = vector.shape_cast %218 : vector<1x16x4xf32> to vector<16x4xf32>
    %cst_188 = arith.constant dense<0.000000e+00> : vector<16x8xf32>
    %220 = tpu.matmul %219, %217, %cst_188 {dimension_numbers = #tpu.dot_dimension_numbers<[1], [0], [0], [1], [0, 0, 1, 1], [], []>} : vector<16x4xf32>, vector<4x8xf32>, vector<16x8xf32> -> vector<16x8xf32>
    %221 = arith.addf %214, %220 : vector<16x8xf32>
    %cst_189 = arith.constant dense<0.000000e+00> : vector<4x8xf32>
    %222 = tpu.matmul %216, %15, %cst_189 {dimension_numbers = #tpu.dot_dimension_numbers<[1], [0], [0], [1], [0, 0, 1, 1], [], []>} : vector<4x16xf32>, vector<16x8xf32>, vector<4x8xf32> -> vector<4x8xf32>
    %c3_190 = arith.constant 3 : index
    %c0_191 = arith.constant 0 : index
    %c0_192 = arith.constant 0 : index
    %223 = vector.load %arg4[%c3_190, %c0_191, %c0_192] : memref<4x16x4xf32, #tpu.memory_space<vmem>>, vector<1x16x4xf32>
    %224 = vector.shape_cast %223 : vector<1x16x4xf32> to vector<16x4xf32>
    %cst_193 = arith.constant dense<0.000000e+00> : vector<16x8xf32>
    %225 = tpu.matmul %224, %222, %cst_193 {dimension_numbers = #tpu.dot_dimension_numbers<[1], [0], [0], [1], [0, 0, 1, 1], [], []>} : vector<16x4xf32>, vector<4x8xf32>, vector<16x8xf32> -> vector<16x8xf32>
    %226 = arith.addf %221, %225 : vector<16x8xf32>
    %227 = vector.broadcast %16 : vector<16x1xf32> to vector<16x8xf32>
    %228 = arith.addf %226, %227 : vector<16x8xf32>
    %229 = vector.extract_strided_slice %228 {offsets = [0, 0], sizes = [8, 8], strides = [1, 1]} : vector<16x8xf32> to vector<8x8xf32>
    %cst_194 = arith.constant 0.000000e+00 : f32
    %230 = vector.broadcast %cst_194 : f32 to vector<8x8xf32>
    %231 = arith.maximumf %229, %230 : vector<8x8xf32>
    %232 = vector.extract_strided_slice %228 {offsets = [8, 0], sizes = [8, 8], strides = [1, 1]} : vector<16x8xf32> to vector<8x8xf32>
    %233 = arith.addf %231, %232 : vector<8x8xf32>
    %cst_195 = arith.constant 0.000000e+00 : f32
    %234 = vector.broadcast %cst_195 : f32 to vector<8x8xf32>
    %235 = arith.maximumf %233, %234 : vector<8x8xf32>
    %c0_196 = arith.constant 0 : index
    %c0_197 = arith.constant 0 : index
    %c5_198 = arith.constant 5 : index
    %c0_199 = arith.constant 0 : index
    %236 = vector.load %arg6[%c0_196, %c0_197, %c5_198, %c0_199] : memref<1x8x8x8xf32, #tpu.memory_space<vmem>>, vector<1x8x1x8xf32>
    %237 = vector.shape_cast %236 : vector<1x8x1x8xf32> to vector<8x8xf32>
    %238 = vector.shape_cast %235 : vector<8x8xf32> to vector<1x8x1x8xf32>
    tpu.vector_store %arg6[%c0_196, %c0_197, %c5_198, %c0_199], %238 {strides = array<i32>} : memref<1x8x8x8xf32, #tpu.memory_space<vmem>>, vector<1x8x1x8xf32>,
    %cst_200 = arith.constant 0.000000e+00 : f32
    %239 = vector.broadcast %cst_200 : f32 to vector<16x8xf32>
    %c0_201 = arith.constant 0 : index
    %c0_202 = arith.constant 0 : index
    %c12 = arith.constant 12 : index
    %c0_203 = arith.constant 0 : index
    %240 = vector.load %arg3[%c0_201, %c0_202, %c12, %c0_203] : memref<1x4x16x16xf32, #tpu.memory_space<vmem>>, vector<1x4x1x16xf32>
    %241 = vector.shape_cast %240 : vector<1x4x1x16xf32> to vector<4x16xf32>
    %cst_204 = arith.constant dense<0.000000e+00> : vector<4x8xf32>
    %242 = tpu.matmul %241, %8, %cst_204 {dimension_numbers = #tpu.dot_dimension_numbers<[1], [0], [0], [1], [0, 0, 1, 1], [], []>} : vector<4x16xf32>, vector<16x8xf32>, vector<4x8xf32> -> vector<4x8xf32>
    %c0_205 = arith.constant 0 : index
    %c0_206 = arith.constant 0 : index
    %c0_207 = arith.constant 0 : index
    %243 = vector.load %arg4[%c0_205, %c0_206, %c0_207] : memref<4x16x4xf32, #tpu.memory_space<vmem>>, vector<1x16x4xf32>
    %244 = vector.shape_cast %243 : vector<1x16x4xf32> to vector<16x4xf32>
    %cst_208 = arith.constant dense<0.000000e+00> : vector<16x8xf32>
    %245 = tpu.matmul %244, %242, %cst_208 {dimension_numbers = #tpu.dot_dimension_numbers<[1], [0], [0], [1], [0, 0, 1, 1], [], []>} : vector<16x4xf32>, vector<4x8xf32>, vector<16x8xf32> -> vector<16x8xf32>
    %246 = arith.addf %239, %245 : vector<16x8xf32>
    %cst_209 = arith.constant dense<0.000000e+00> : vector<4x8xf32>
    %247 = tpu.matmul %241, %15, %cst_209 {dimension_numbers = #tpu.dot_dimension_numbers<[1], [0], [0], [1], [0, 0, 1, 1], [], []>} : vector<4x16xf32>, vector<16x8xf32>, vector<4x8xf32> -> vector<4x8xf32>
    %c1_210 = arith.constant 1 : index
    %c0_211 = arith.constant 0 : index
    %c0_212 = arith.constant 0 : index
    %248 = vector.load %arg4[%c1_210, %c0_211, %c0_212] : memref<4x16x4xf32, #tpu.memory_space<vmem>>, vector<1x16x4xf32>
    %249 = vector.shape_cast %248 : vector<1x16x4xf32> to vector<16x4xf32>
    %cst_213 = arith.constant dense<0.000000e+00> : vector<16x8xf32>
    %250 = tpu.matmul %249, %247, %cst_213 {dimension_numbers = #tpu.dot_dimension_numbers<[1], [0], [0], [1], [0, 0, 1, 1], [], []>} : vector<16x4xf32>, vector<4x8xf32>, vector<16x8xf32> -> vector<16x8xf32>
    %251 = arith.addf %246, %250 : vector<16x8xf32>
    %c0_214 = arith.constant 0 : index
    %c0_215 = arith.constant 0 : index
    %c13 = arith.constant 13 : index
    %c0_216 = arith.constant 0 : index
    %252 = vector.load %arg3[%c0_214, %c0_215, %c13, %c0_216] : memref<1x4x16x16xf32, #tpu.memory_space<vmem>>, vector<1x4x1x16xf32>
    %253 = vector.shape_cast %252 : vector<1x4x1x16xf32> to vector<4x16xf32>
    %cst_217 = arith.constant dense<0.000000e+00> : vector<4x8xf32>
    %254 = tpu.matmul %253, %8, %cst_217 {dimension_numbers = #tpu.dot_dimension_numbers<[1], [0], [0], [1], [0, 0, 1, 1], [], []>} : vector<4x16xf32>, vector<16x8xf32>, vector<4x8xf32> -> vector<4x8xf32>
    %c2_218 = arith.constant 2 : index
    %c0_219 = arith.constant 0 : index
    %c0_220 = arith.constant 0 : index
    %255 = vector.load %arg4[%c2_218, %c0_219, %c0_220] : memref<4x16x4xf32, #tpu.memory_space<vmem>>, vector<1x16x4xf32>
    %256 = vector.shape_cast %255 : vector<1x16x4xf32> to vector<16x4xf32>
    %cst_221 = arith.constant dense<0.000000e+00> : vector<16x8xf32>
    %257 = tpu.matmul %256, %254, %cst_221 {dimension_numbers = #tpu.dot_dimension_numbers<[1], [0], [0], [1], [0, 0, 1, 1], [], []>} : vector<16x4xf32>, vector<4x8xf32>, vector<16x8xf32> -> vector<16x8xf32>
    %258 = arith.addf %251, %257 : vector<16x8xf32>
    %cst_222 = arith.constant dense<0.000000e+00> : vector<4x8xf32>
    %259 = tpu.matmul %253, %15, %cst_222 {dimension_numbers = #tpu.dot_dimension_numbers<[1], [0], [0], [1], [0, 0, 1, 1], [], []>} : vector<4x16xf32>, vector<16x8xf32>, vector<4x8xf32> -> vector<4x8xf32>
    %c3_223 = arith.constant 3 : index
    %c0_224 = arith.constant 0 : index
    %c0_225 = arith.constant 0 : index
    %260 = vector.load %arg4[%c3_223, %c0_224, %c0_225] : memref<4x16x4xf32, #tpu.memory_space<vmem>>, vector<1x16x4xf32>
    %261 = vector.shape_cast %260 : vector<1x16x4xf32> to vector<16x4xf32>
    %cst_226 = arith.constant dense<0.000000e+00> : vector<16x8xf32>
    %262 = tpu.matmul %261, %259, %cst_226 {dimension_numbers = #tpu.dot_dimension_numbers<[1], [0], [0], [1], [0, 0, 1, 1], [], []>} : vector<16x4xf32>, vector<4x8xf32>, vector<16x8xf32> -> vector<16x8xf32>
    %263 = arith.addf %258, %262 : vector<16x8xf32>
    %264 = vector.broadcast %16 : vector<16x1xf32> to vector<16x8xf32>
    %265 = arith.addf %263, %264 : vector<16x8xf32>
    %266 = vector.extract_strided_slice %265 {offsets = [0, 0], sizes = [8, 8], strides = [1, 1]} : vector<16x8xf32> to vector<8x8xf32>
    %cst_227 = arith.constant 0.000000e+00 : f32
    %267 = vector.broadcast %cst_227 : f32 to vector<8x8xf32>
    %268 = arith.maximumf %266, %267 : vector<8x8xf32>
    %269 = vector.extract_strided_slice %265 {offsets = [8, 0], sizes = [8, 8], strides = [1, 1]} : vector<16x8xf32> to vector<8x8xf32>
    %270 = arith.addf %268, %269 : vector<8x8xf32>
    %cst_228 = arith.constant 0.000000e+00 : f32
    %271 = vector.broadcast %cst_228 : f32 to vector<8x8xf32>
    %272 = arith.maximumf %270, %271 : vector<8x8xf32>
    %c0_229 = arith.constant 0 : index
    %c0_230 = arith.constant 0 : index
    %c6_231 = arith.constant 6 : index
    %c0_232 = arith.constant 0 : index
    %273 = vector.load %arg6[%c0_229, %c0_230, %c6_231, %c0_232] : memref<1x8x8x8xf32, #tpu.memory_space<vmem>>, vector<1x8x1x8xf32>
    %274 = vector.shape_cast %273 : vector<1x8x1x8xf32> to vector<8x8xf32>
    %275 = vector.shape_cast %272 : vector<8x8xf32> to vector<1x8x1x8xf32>
    tpu.vector_store %arg6[%c0_229, %c0_230, %c6_231, %c0_232], %275 {strides = array<i32>} : memref<1x8x8x8xf32, #tpu.memory_space<vmem>>, vector<1x8x1x8xf32>,
    %cst_233 = arith.constant 0.000000e+00 : f32
    %276 = vector.broadcast %cst_233 : f32 to vector<16x8xf32>
    %c0_234 = arith.constant 0 : index
    %c0_235 = arith.constant 0 : index
    %c14 = arith.constant 14 : index
    %c0_236 = arith.constant 0 : index
    %277 = vector.load %arg3[%c0_234, %c0_235, %c14, %c0_236] : memref<1x4x16x16xf32, #tpu.memory_space<vmem>>, vector<1x4x1x16xf32>
    %278 = vector.shape_cast %277 : vector<1x4x1x16xf32> to vector<4x16xf32>
    %cst_237 = arith.constant dense<0.000000e+00> : vector<4x8xf32>
    %279 = tpu.matmul %278, %8, %cst_237 {dimension_numbers = #tpu.dot_dimension_numbers<[1], [0], [0], [1], [0, 0, 1, 1], [], []>} : vector<4x16xf32>, vector<16x8xf32>, vector<4x8xf32> -> vector<4x8xf32>
    %c0_238 = arith.constant 0 : index
    %c0_239 = arith.constant 0 : index
    %c0_240 = arith.constant 0 : index
    %280 = vector.load %arg4[%c0_238, %c0_239, %c0_240] : memref<4x16x4xf32, #tpu.memory_space<vmem>>, vector<1x16x4xf32>
    %281 = vector.shape_cast %280 : vector<1x16x4xf32> to vector<16x4xf32>
    %cst_241 = arith.constant dense<0.000000e+00> : vector<16x8xf32>
    %282 = tpu.matmul %281, %279, %cst_241 {dimension_numbers = #tpu.dot_dimension_numbers<[1], [0], [0], [1], [0, 0, 1, 1], [], []>} : vector<16x4xf32>, vector<4x8xf32>, vector<16x8xf32> -> vector<16x8xf32>
    %283 = arith.addf %276, %282 : vector<16x8xf32>
    %cst_242 = arith.constant dense<0.000000e+00> : vector<4x8xf32>
    %284 = tpu.matmul %278, %15, %cst_242 {dimension_numbers = #tpu.dot_dimension_numbers<[1], [0], [0], [1], [0, 0, 1, 1], [], []>} : vector<4x16xf32>, vector<16x8xf32>, vector<4x8xf32> -> vector<4x8xf32>
    %c1_243 = arith.constant 1 : index
    %c0_244 = arith.constant 0 : index
    %c0_245 = arith.constant 0 : index
    %285 = vector.load %arg4[%c1_243, %c0_244, %c0_245] : memref<4x16x4xf32, #tpu.memory_space<vmem>>, vector<1x16x4xf32>
    %286 = vector.shape_cast %285 : vector<1x16x4xf32> to vector<16x4xf32>
    %cst_246 = arith.constant dense<0.000000e+00> : vector<16x8xf32>
    %287 = tpu.matmul %286, %284, %cst_246 {dimension_numbers = #tpu.dot_dimension_numbers<[1], [0], [0], [1], [0, 0, 1, 1], [], []>} : vector<16x4xf32>, vector<4x8xf32>, vector<16x8xf32> -> vector<16x8xf32>
    %288 = arith.addf %283, %287 : vector<16x8xf32>
    %c0_247 = arith.constant 0 : index
    %c0_248 = arith.constant 0 : index
    %c15 = arith.constant 15 : index
    %c0_249 = arith.constant 0 : index
    %289 = vector.load %arg3[%c0_247, %c0_248, %c15, %c0_249] : memref<1x4x16x16xf32, #tpu.memory_space<vmem>>, vector<1x4x1x16xf32>
    %290 = vector.shape_cast %289 : vector<1x4x1x16xf32> to vector<4x16xf32>
    %cst_250 = arith.constant dense<0.000000e+00> : vector<4x8xf32>
    %291 = tpu.matmul %290, %8, %cst_250 {dimension_numbers = #tpu.dot_dimension_numbers<[1], [0], [0], [1], [0, 0, 1, 1], [], []>} : vector<4x16xf32>, vector<16x8xf32>, vector<4x8xf32> -> vector<4x8xf32>
    %c2_251 = arith.constant 2 : index
    %c0_252 = arith.constant 0 : index
    %c0_253 = arith.constant 0 : index
    %292 = vector.load %arg4[%c2_251, %c0_252, %c0_253] : memref<4x16x4xf32, #tpu.memory_space<vmem>>, vector<1x16x4xf32>
    %293 = vector.shape_cast %292 : vector<1x16x4xf32> to vector<16x4xf32>
    %cst_254 = arith.constant dense<0.000000e+00> : vector<16x8xf32>
    %294 = tpu.matmul %293, %291, %cst_254 {dimension_numbers = #tpu.dot_dimension_numbers<[1], [0], [0], [1], [0, 0, 1, 1], [], []>} : vector<16x4xf32>, vector<4x8xf32>, vector<16x8xf32> -> vector<16x8xf32>
    %295 = arith.addf %288, %294 : vector<16x8xf32>
    %cst_255 = arith.constant dense<0.000000e+00> : vector<4x8xf32>
    %296 = tpu.matmul %290, %15, %cst_255 {dimension_numbers = #tpu.dot_dimension_numbers<[1], [0], [0], [1], [0, 0, 1, 1], [], []>} : vector<4x16xf32>, vector<16x8xf32>, vector<4x8xf32> -> vector<4x8xf32>
    %c3_256 = arith.constant 3 : index
    %c0_257 = arith.constant 0 : index
    %c0_258 = arith.constant 0 : index
    %297 = vector.load %arg4[%c3_256, %c0_257, %c0_258] : memref<4x16x4xf32, #tpu.memory_space<vmem>>, vector<1x16x4xf32>
    %298 = vector.shape_cast %297 : vector<1x16x4xf32> to vector<16x4xf32>
    %cst_259 = arith.constant dense<0.000000e+00> : vector<16x8xf32>
    %299 = tpu.matmul %298, %296, %cst_259 {dimension_numbers = #tpu.dot_dimension_numbers<[1], [0], [0], [1], [0, 0, 1, 1], [], []>} : vector<16x4xf32>, vector<4x8xf32>, vector<16x8xf32> -> vector<16x8xf32>
    %300 = arith.addf %295, %299 : vector<16x8xf32>
    %301 = vector.broadcast %16 : vector<16x1xf32> to vector<16x8xf32>
    %302 = arith.addf %300, %301 : vector<16x8xf32>
    %303 = vector.extract_strided_slice %302 {offsets = [0, 0], sizes = [8, 8], strides = [1, 1]} : vector<16x8xf32> to vector<8x8xf32>
    %cst_260 = arith.constant 0.000000e+00 : f32
    %304 = vector.broadcast %cst_260 : f32 to vector<8x8xf32>
    %305 = arith.maximumf %303, %304 : vector<8x8xf32>
    %306 = vector.extract_strided_slice %302 {offsets = [8, 0], sizes = [8, 8], strides = [1, 1]} : vector<16x8xf32> to vector<8x8xf32>
    %307 = arith.addf %305, %306 : vector<8x8xf32>
    %cst_261 = arith.constant 0.000000e+00 : f32
    %308 = vector.broadcast %cst_261 : f32 to vector<8x8xf32>
    %309 = arith.maximumf %307, %308 : vector<8x8xf32>
    %c0_262 = arith.constant 0 : index
    %c0_263 = arith.constant 0 : index
    %c7_264 = arith.constant 7 : index
    %c0_265 = arith.constant 0 : index
    %310 = vector.load %arg6[%c0_262, %c0_263, %c7_264, %c0_265] : memref<1x8x8x8xf32, #tpu.memory_space<vmem>>, vector<1x8x1x8xf32>
    %311 = vector.shape_cast %310 : vector<1x8x1x8xf32> to vector<8x8xf32>
    %312 = vector.shape_cast %309 : vector<8x8xf32> to vector<1x8x1x8xf32>
    tpu.vector_store %arg6[%c0_262, %c0_263, %c7_264, %c0_265], %312 {strides = array<i32>} : memref<1x8x8x8xf32, #tpu.memory_space<vmem>>, vector<1x8x1x8xf32>,
    return
  }
  func.func @transform_0(%arg0: i32, %arg1: i32, %arg2: i32) -> (i32, i32, i32, i32) {
    %c0_i32 = arith.constant 0 : i32
    %c0_i32_0 = arith.constant 0 : i32
    return %arg0, %c0_i32, %arg1, %arg2 : i32, i32, i32, i32
  }
  func.func @transform_1(%arg0: i32, %arg1: i32, %arg2: i32) -> (i32, i32, i32) {
    %c0_i32 = arith.constant 0 : i32
    %c0_i32_0 = arith.constant 0 : i32
    %c0_i32_1 = arith.constant 0 : i32
    %c0_i32_2 = arith.constant 0 : i32
    return %c0_i32, %c0_i32_0, %c0_i32_1 : i32, i32, i32
  }
  func.func @transform_2(%arg0: i32, %arg1: i32, %arg2: i32) -> (i32, i32) {
    %c0_i32 = arith.constant 0 : i32
    %c0_i32_0 = arith.constant 0 : i32
    %c0_i32_1 = arith.constant 0 : i32
    return %c0_i32, %c0_i32_0 : i32, i32
  }
  func.func @transform_3(%arg0: i32, %arg1: i32, %arg2: i32) -> (i32, i32, i32, i32) {
    %c0_i32 = arith.constant 0 : i32
    %c0_i32_0 = arith.constant 0 : i32
    return %arg0, %c0_i32, %arg1, %arg2 : i32, i32, i32, i32
  }
}

</mosaic_0001>

<llo_original>
// kernel: tpu_custom_call.1
$region0: #{tpu_custom_call.1}
  #allocation0 [shape = 'u32[]', space=smem, size = 0x4, offset = 0x4, fixed_abs, tag = 'smem constant byte address 0x4 - core index']
  #allocation1 [shape = 'u32[144,128]{1,0:T(1,128)}', space=vmem, size = 0x12000, scoped, tag = 'internal scratch']
  %s0 = inlined_call_operand.hbm [shape: f32[2,4,16,16], index: 0, kind: input, shape index: {}]
  %s1 = inlined_call_operand.vmem [shape: f32[4,16,4], index: 1, kind: input, shape index: {}]
  %s2 = inlined_call_operand.vmem [shape: f32[16,1], index: 2, kind: input, shape index: {}]
  %s3 = inlined_call_operand.hbm [shape: f32[2,8,8,8], index: 3, kind: output, shape index: {}]
  %s4 = sld [smem:[#allocation0]]
  $region49: #{tpu_custom_call.1} parent=0
    _
  %s6 = ssub.s32 1, %s4
  %s7 = scalar_select 0, %s6, %s4
  $region1: #{tpu_custom_call.1} parent=0
    #allocation2 [shape = 'u8[65536]{0}', space=vmem, size = 0x10000, scoped, tag = 'input window, operand 0']
    #allocation3 [shape = 's32[2]{0}', space=sflag, size = 0x8, scoped, tag = 'scoped memory for tpu_custom_call.1']
    #allocation4 [shape = 's32[2]{0}', space=sflag, size = 0x8, scoped, tag = 'scoped memory for tpu_custom_call.1']
    #allocation5 [shape = 'u8[65536]{0}', space=vmem, size = 0x10000, scoped, tag = 'output window, operand 0']
    %8 = vsyncpa [#allocation3], 0
    %s9 = scalar_lea.sflag [#allocation3], 1
    %10 = vsyncpa %s9, 0
    %11 = vsyncpa [#allocation4], 0
    %s12 = scalar_lea.sflag [#allocation4], 1
    %13 = vsyncpa %s12, 0
    loop: start=0, step=1, limit=4
    $region2: #{tpu_custom_call.1} parent=1 // loop_pre_header
      _
    $region3: #{tpu_custom_call.1} parent=1 // loop_header
      %s15 = sphi 0, %s19
      %p16 = scmp.ge.s32.totalorder %s15, 4
      %s22 = sphi 0, %s41
      %s23 = sphi 0, %s37
      %s24 = sphi 0, %s33
      %s25 = sphi 0, %s22
      %s26 = sphi 0, %s23
      %s27 = sphi 0, %s24
      %s28 = sphi 0, %s25
      %s29 = sphi 0, %s26
      %s30 = sphi 0, %s27
      %s48 = sphi 0, %s50
      %s51 = sphi 0, %s48
      %s52 = sphi 0, %s51
      %s68 = sphi 0, %s52
      %s72 = sphi 0, %s72
      %s74 = sphi 0, %s72
      %s75 = sphi 0, %s74
      %s89 = sphi 0, %s75
      %s93 = sphi 0, %s93
      %s95 = sphi 0, %s93
      %s96 = sphi 0, %s95
      %s110 = sphi 0, %s96
      %s120 = sphi 0, %s122
      %s123 = sphi 0, %s120
      %s124 = sphi 0, %s123
      %s140 = sphi 0, %s124
    $region4: #{tpu_custom_call.1} parent=1 // loop_header_branch
      %18 = sbr.rel (%p16) target = $region8
    $region5: #{tpu_custom_call.1} parent=1 // loop_body
      %s20 = ssub.s32 %s15, 1
      %s21 = ssub.s32 %s15, 2
      %s31 = sadd.s32 1, %s24
      %p32 = scmp.ge.s32.totalorder %s31, 1
      %s33 = scalar_select %p32, 0, %s31
      %s34 = sadd.s32 1, %s23
      %s35 = scalar_select %p32, %s34, %s23
      %p36 = scmp.ge.s32.totalorder %s35, 1
      %s37 = scalar_select %p36, 0, %s35
      %s38 = sadd.s32 1, %s22
      %s39 = scalar_select %p36, %s38, %s22
      %p40 = scmp.ge.s32.totalorder %s39, 2
      %s41 = scalar_select %p40, 0, %s39
      %s42 = ssub.s32 %s22, %s41
      %s43 = ssub.s32 %s23, %s37
      %s44 = sor.u32 %s42, %s43
      %s45 = ssub.s32 %s24, %s33
      %s46 = sor.u32 %s44, %s45
      %p47 = scmp.eq.s32.totalorder %s46, 0
      %s49 = sadd.s32 %s48, 1
      %s50 = scalar_select %p47, %s48, %s49
      %p53 = pneg %p47
      %p54 = scmp.eq.s32.totalorder %s15, 1
      %p55 = por %p53, %p54
      %p56 = scmp.ne.s32.totalorder %s48, %s51
      %p57 = scmp.eq.s32.totalorder %s15, 0
      %p58 = por %p56, %p57
      %p59 = scmp.ne.s32.totalorder %s48, %s51
      %p60 = scmp.eq.s32.totalorder %s20, 1
      %p61 = por %p59, %p60
      %p62 = scmp.ne.s32.totalorder %s51, %s52
      %p63 = scmp.eq.s32.totalorder %s20, 0
      %p64 = por %p62, %p63
      %p65 = scmp.ne.s32.totalorder %s51, %s52
      %p66 = scmp.eq.s32.totalorder %s21, 1
      %p67 = por %p65, %p66
      %p69 = scmp.ne.s32.totalorder %s52, %s68
      %p70 = scmp.eq.s32.totalorder %s21, 0
      %p71 = por %p69, %p70
      %s73 = sadd.s32 %s72, 1
      %p76 = scmp.eq.s32.totalorder %s15, 1
      %p77 = scmp.ne.s32.totalorder %s72, %s74
      %p78 = scmp.eq.s32.totalorder %s15, 0
      %p79 = por %p77, %p78
      %p80 = scmp.ne.s32.totalorder %s72, %s74
      %p81 = scmp.eq.s32.totalorder %s20, 1
      %p82 = por %p80, %p81
      %p83 = scmp.ne.s32.totalorder %s74, %s75
      %p84 = scmp.eq.s32.totalorder %s20, 0
      %p85 = por %p83, %p84
      %p86 = scmp.ne.s32.totalorder %s74, %s75
      %p87 = scmp.eq.s32.totalorder %s21, 1
      %p88 = por %p86, %p87
      %p90 = scmp.ne.s32.totalorder %s75, %s89
      %p91 = scmp.eq.s32.totalorder %s21, 0
      %p92 = por %p90, %p91
      %s94 = sadd.s32 %s93, 1
      %p97 = scmp.eq.s32.totalorder %s15, 1
      %p98 = scmp.ne.s32.totalorder %s93, %s95
      %p99 = scmp.eq.s32.totalorder %s15, 0
      %p100 = por %p98, %p99
      %p101 = scmp.ne.s32.totalorder %s93, %s95
      %p102 = scmp.eq.s32.totalorder %s20, 1
      %p103 = por %p101, %p102
      %p104 = scmp.ne.s32.totalorder %s95, %s96
      %p105 = scmp.eq.s32.totalorder %s20, 0
      %p106 = por %p104, %p105
      %p107 = scmp.ne.s32.totalorder %s95, %s96
      %p108 = scmp.eq.s32.totalorder %s21, 1
      %p109 = por %p107, %p108
      %p111 = scmp.ne.s32.totalorder %s96, %s110
      %p112 = scmp.eq.s32.totalorder %s21, 0
      %p113 = por %p111, %p112
      %s114 = ssub.s32 %s22, %s41
      %s115 = ssub.s32 %s23, %s37
      %s116 = sor.u32 %s114, %s115
      %s117 = ssub.s32 %s24, %s33
      %s118 = sor.u32 %s116, %s117
      %p119 = scmp.eq.s32.totalorder %s118, 0
      %s121 = sadd.s32 %s120, 1
      %s122 = scalar_select %p119, %s120, %s121
      %p125 = pneg %p119
      %p126 = scmp.eq.s32.totalorder %s15, 1
      %p127 = por %p125, %p126
      %p128 = scmp.ne.s32.totalorder %s120, %s123
      %p129 = scmp.eq.s32.totalorder %s15, 0
      %p130 = por %p128, %p129
      %p131 = scmp.ne.s32.totalorder %s120, %s123
      %p132 = scmp.eq.s32.totalorder %s20, 1
      %p133 = por %p131, %p132
      %p134 = scmp.ne.s32.totalorder %s123, %s124
      %p135 = scmp.eq.s32.totalorder %s20, 0
      %p136 = por %p134, %p135
      %p137 = scmp.ne.s32.totalorder %s123, %s124
      %p138 = scmp.eq.s32.totalorder %s21, 1
      %p139 = por %p137, %p138
      %p141 = scmp.ne.s32.totalorder %s124, %s140
      %p142 = scmp.eq.s32.totalorder %s21, 0
      %p143 = por %p141, %p142
      %p144 = scmp.le.s32.totalorder 1, %s15
      %p145 = scmp.lt.s32.totalorder %s15, 3
      %p146 = pnand %p144, %p145
      %p147 = pneg %p146
      // Predicated region
      $region9: #{tpu_custom_call.1} parent=5 // pred_check
        _
      $region10: #{tpu_custom_call.1} parent=5 // pred_check_branch
        %149 = sbr.rel (%p146) target = $region12
      $region11: #{tpu_custom_call.1} parent=5 // pred_region
        %s150 = ssub.s32 %s15, 1
        // Predicated region
        $region13: #{tpu_custom_call.1} parent=11 // pred_check
          %p151 = pneg %p85
        $region14: #{tpu_custom_call.1} parent=11 // pred_check_branch
          %153 = sbr.rel (%p151) target = $region16
        $region15: #{tpu_custom_call.1} parent=11 // pred_region
          _
        $region16: #{tpu_custom_call.1} parent=11 // pred_fallthru
          _
        // Predicated region
        $region17: #{tpu_custom_call.1} parent=11 // pred_check
          %p154 = pneg %p106
        $region18: #{tpu_custom_call.1} parent=11 // pred_check_branch
          %156 = sbr.rel (%p154) target = $region20
        $region19: #{tpu_custom_call.1} parent=11 // pred_region
          _
        $region20: #{tpu_custom_call.1} parent=11 // pred_fallthru
          _
      $region12: #{tpu_custom_call.1} parent=5 // pred_fallthru
        _
      %p157 = scmp.lt.s32.totalorder %s15, 2
      // Predicated region
      $region21: #{tpu_custom_call.1} parent=5 // pred_check
        %p158 = pneg %p157
      $region22: #{tpu_custom_call.1} parent=5 // pred_check_branch
        %160 = sbr.rel (%p158) target = $region24
      $region23: #{tpu_custom_call.1} parent=5 // pred_region
        // Predicated region
        $region25: #{tpu_custom_call.1} parent=23 // pred_check
          %p161 = pneg %p58
        $region26: #{tpu_custom_call.1} parent=23 // pred_check_branch
          %163 = sbr.rel (%p161) target = $region28
        $region27: #{tpu_custom_call.1} parent=23 // pred_region
          %s164 = sand.u32 %s48, 1
          %s165 = scalar_lea.sflag [#allocation3], %s164
          %s166 = sand.u32 %s48, 1
          %s167 = smul.addr %s166, 64
          %s168 = scalar_lea.vmem [#allocation2], %s167
          %s169 = smul.u32 2, %s23
          %s171 = ssub.s32 1024, 1024
          %172 = vsyncadd %s165, %s171
          %s173 = sadd.s32 %s24, %s169
          %s174 = smul.addr %s22, 8
          %s175 = sadd.s32 %s173, %s174
          %s176 = smul.addr %s175, 128
          %s177 = scalar_lea.hbm %s0, %s176
          %s178 = sshll.u32 %s168, 4
          %s179 = int_to_ptr.vmem [resolvable:$true] %s178
          %184 = dma.hbm_to_vmem [thread:$0]  %s177, 1024, %s179, %s165, 128, 128, 8
        $region28: #{tpu_custom_call.1} parent=23 // pred_fallthru
          _
      $region24: #{tpu_custom_call.1} parent=5 // pred_fallthru
        _
      %p185 = scmp.le.s32.totalorder 1, %s15
      %p186 = scmp.lt.s32.totalorder %s15, 3
      %p187 = pnand %p185, %p186
      %p188 = pneg %p187
      // Predicated region
      $region29: #{tpu_custom_call.1} parent=5 // pred_check
        _
      $region30: #{tpu_custom_call.1} parent=5 // pred_check_branch
        %190 = sbr.rel (%p187) target = $region32
      $region31: #{tpu_custom_call.1} parent=5 // pred_region
        %s191 = ssub.s32 %s15, 1
        %s192 = sand.u32 %s51, 1
        %s193 = scalar_lea.sflag [#allocation3], %s192
        %s194 = sand.u32 %s51, 1
        %s195 = smul.addr %s194, 64
        %s196 = scalar_lea.vmem [#allocation2], %s195
        // Predicated region
        $region33: #{tpu_custom_call.1} parent=31 // pred_check
          %p197 = pneg %p64
        $region34: #{tpu_custom_call.1} parent=31 // pred_check_branch
          %199 = sbr.rel (%p197) target = $region36
        $region35: #{tpu_custom_call.1} parent=31 // pred_region
          %200 = dma.done %s193, 1024
        $region36: #{tpu_custom_call.1} parent=31 // pred_fallthru
          _
        %s201 = sand.u32 %s51, 1
        %s202 = scalar_lea.sflag [#allocation3], %s201
        %s203 = sand.u32 %s51, 1
        %s204 = smul.addr %s203, 64
        %s205 = scalar_lea.vmem [#allocation2], %s204
        %p206 = pneg %p64
        %p207 = pneg %p61
        %p208 = pneg %p85
        %p209 = pneg %p82
        %p210 = pneg %p106
        %p211 = pneg %p103
        %p212 = pneg %p136
        %p213 = pneg %p133
        %s214 = sand.u32 %s123, 1
        %s215 = scalar_lea.sflag [#allocation4], %s214
        %s216 = sand.u32 %s123, 1
        %s217 = smul.addr %s216, 64
        %s218 = scalar_lea.vmem [#allocation5], %s217
        %s219 = smul.u32 2, %s26
        %v220 = vlaneseq
        %v221 = vshrl.u32 %v220, 7
        %v222 = vadd.s32 %v221, 8
        %v223 = vlaneseq
        %v224 = vand.u32 %v223, 127
        %v225 = vmul.u32 %v224, 2
        %vm226 = vcmp.eq.s32.totalorder %v221, %v225
        %vm227 = vcmp.eq.s32.totalorder %v222, %v225
        %v228 = vsel %vm226, 1, 0
        %v229 = vsel %vm227, 1, 0
        %v230 = vcvt.s32.f32 %v228
        %v231 = vcvt.s32.f32 %v229
        %v232 = vadd.s32 %v225, 1
        %vm233 = vcmp.eq.s32.totalorder %v221, %v232
        %vm234 = vcmp.eq.s32.totalorder %v222, %v232
        %v235 = vsel %vm233, 1, 0
        %v236 = vsel %vm234, 1, 0
        %v237 = vcvt.s32.f32 %v235
        %v238 = vcvt.s32.f32 %v236
        %v239 = vld [vmem:[%s2] sm:$0xff]
        %v240 = vld [vmem:[%s2 + $0x8] sm:$0xff]
        %v241 = vld [vmem:[%s196] sm:$0x1]
        %v242 = vld [vmem:[%s196 + $0x10] sm:$0x1]
        %v243 = vld [vmem:[%s196 + $0x20] sm:$0x1]
        %v244 = vld [vmem:[%s196 + $0x30] sm:$0x1]
        %v249 = vrot.slane %v242, 7
        %vm250 = vcmask 1041409
        %v251 = vsel %vm250, %v249, %v241
        %v252 = vrot.slane %v243, 6
        %vm253 = vcmask 1042434
        %v254 = vsel %vm253, %v252, %v251
        %v255 = vrot.slane %v244, 5
        %vm256 = vcmask 1043459
        %v257 = vsel %vm256, %v255, %v254
        %vm258 = vcmask 130048
        %v259 = vsel %vm258, %v257, 0
        %261 = vmatprep.subr.mxu0 0.0
        %262 = vmatpush1.msra.mxu0 0.0
        %263 = vmatprep.subr.mxu0 0.0
        %264 = vmatpush1.msra.mxu0 0.0
        %265 = vmatprep.subr.mxu0 0.0
        %266 = vmatpush1.msra.mxu0 0.0
        %267 = vmatprep.subr.mxu0 0.0
        %268 = vmatpush1.msra.mxu0 0.0
        %269 = vmatprep.subr.mxu0 0.0
        %270 = vmatpush1.msra.mxu0 0.0
        %271 = vmatprep.subr.mxu0 0.0
        %272 = vmatpush1.msra.mxu0 0.0
        %273 = vmatprep.subr.mxu0 0.0
        %274 = vmatpush1.msra.mxu0 0.0
        %275 = vmatprep.subr.mxu0 0.0
        %276 = vmatpush1.msra.mxu0 0.0
        %277 = vmatprep.subr.mxu0 0.0
        %278 = vmatpush1.msra.mxu0 0.0
        %279 = vmatprep.subr.mxu0 0.0
        %280 = vmatpush1.msra.mxu0 0.0
        %281 = vmatprep.subr.mxu0 0.0
        %282 = vmatpush1.msra.mxu0 0.0
        %283 = vmatprep.subr.mxu0 0.0
        %284 = vmatpush1.msra.mxu0 0.0
        %285 = vmatprep.subr.mxu0 0.0
        %286 = vmatpush1.msra.mxu0 0.0
        %287 = vmatprep.subr.mxu0 0.0
        %288 = vmatpush1.msra.mxu0 0.0
        %289 = vmatprep.subr.mxu0 0.0
        %290 = vmatpush1.msra.mxu0 %v231
        %291 = vmatprep.subr.mxu0 0.0
        %292 = vmatpush1.msra.mxu0 %v230
        %293 = vmatprep.subr.mxu0 0.0
        %294 = vmatpush2.msra.mxu0 0.0
        %295 = vmatprep.subr.mxu0 0.0
        %296 = vmatpush2.msra.mxu0 0.0
        %297 = vmatprep.subr.mxu0 0.0
        %298 = vmatpush2.msra.mxu0 0.0
        %299 = vmatprep.subr.mxu0 0.0
        %300 = vmatpush2.msra.mxu0 0.0
        %301 = vmatprep.subr.mxu0 0.0
        %302 = vmatpush2.msra.mxu0 0.0
        %303 = vmatprep.subr.mxu0 0.0
        %304 = vmatpush2.msra.mxu0 0.0
        %305 = vmatprep.subr.mxu0 0.0
        %306 = vmatpush2.msra.mxu0 0.0
        %307 = vmatprep.subr.mxu0 0.0
        %308 = vmatpush2.msra.mxu0 0.0
        %309 = vmatprep.subr.mxu0 0.0
        %310 = vmatpush2.msra.mxu0 0.0
        %311 = vmatprep.subr.mxu0 0.0
        %312 = vmatpush2.msra.mxu0 0.0
        %313 = vmatprep.subr.mxu0 0.0
        %314 = vmatpush2.msra.mxu0 0.0
        %315 = vmatprep.subr.mxu0 0.0
        %316 = vmatpush2.msra.mxu0 0.0
        %317 = vmatprep.subr.mxu0 0.0
        %318 = vmatpush2.msra.mxu0 0.0
        %319 = vmatprep.subr.mxu0 0.0
        %320 = vmatpush2.msra.mxu0 0.0
        %321 = vmatprep.subr.mxu0 0.0
        %322 = vmatpush2.msra.mxu0 0.0
        %323 = vmatprep.subr.mxu0 0.0
        %324 = vmatpush2.msra.mxu0 0.0
        %325 = vmatprep.mubr.f32.mxu0 0.0
        %326 = vmatmul.mubr.f32.gmra.mxu0 %v259
        %v327 = vpop.f32.mrf.mxu0
        %v328 = vadd.f32 0.0, %v327
        %v329 = vpop.f32.mrf.mxu0
        %330 = vdwg.mxu0
        %v331 = vld [vmem:[%s1] sm:$0xff]
        %v332 = vld [vmem:[%s1 + $0x8] sm:$0xff]
        %333 = vmatprep.subr.mxu0 0.0
        %334 = vmatpush1.msra.mxu0 0.0
        %335 = vmatprep.subr.mxu0 0.0
        %336 = vmatpush1.msra.mxu0 0.0
        %337 = vmatprep.subr.mxu0 0.0
        %338 = vmatpush1.msra.mxu0 0.0
        %339 = vmatprep.subr.mxu0 0.0
        %340 = vmatpush1.msra.mxu0 0.0
        %341 = vmatprep.subr.mxu0 0.0
        %342 = vmatpush1.msra.mxu0 0.0
        %343 = vmatprep.subr.mxu0 0.0
        %344 = vmatpush1.msra.mxu0 0.0
        %345 = vmatprep.subr.mxu0 0.0
        %346 = vmatpush1.msra.mxu0 0.0
        %347 = vmatprep.subr.mxu0 0.0
        %348 = vmatpush1.msra.mxu0 0.0
        %349 = vmatprep.subr.mxu0 0.0
        %350 = vmatpush1.msra.mxu0 0.0
        %351 = vmatprep.subr.mxu0 0.0
        %352 = vmatpush1.msra.mxu0 0.0
        %353 = vmatprep.subr.mxu0 0.0
        %354 = vmatpush1.msra.mxu0 0.0
        %355 = vmatprep.subr.mxu0 0.0
        %356 = vmatpush1.msra.mxu0 0.0
        %357 = vmatprep.subr.mxu0 0.0
        %358 = vmatpush1.msra.mxu0 0.0
        %359 = vmatprep.subr.mxu0 0.0
        %360 = vmatpush1.msra.mxu0 0.0
        %361 = vmatprep.subr.mxu0 0.0
        %362 = vmatpush1.msra.mxu0 %v238
        %363 = vmatprep.subr.mxu0 0.0
        %364 = vmatpush1.msra.mxu0 %v237
        %365 = vmatprep.subr.mxu0 0.0
        %366 = vmatpush2.msra.mxu0 0.0
        %367 = vmatprep.subr.mxu0 0.0
        %368 = vmatpush2.msra.mxu0 0.0
        %369 = vmatprep.subr.mxu0 0.0
        %370 = vmatpush2.msra.mxu0 0.0
        %371 = vmatprep.subr.mxu0 0.0
        %372 = vmatpush2.msra.mxu0 0.0
        %373 = vmatprep.subr.mxu0 0.0
        %374 = vmatpush2.msra.mxu0 0.0
        %375 = vmatprep.subr.mxu0 0.0
        %376 = vmatpush2.msra.mxu0 0.0
        %377 = vmatprep.subr.mxu0 0.0
        %378 = vmatpush2.msra.mxu0 0.0
        %379 = vmatprep.subr.mxu0 0.0
        %380 = vmatpush2.msra.mxu0 0.0
        %381 = vmatprep.subr.mxu0 0.0
        %382 = vmatpush2.msra.mxu0 0.0
        %383 = vmatprep.subr.mxu0 0.0
        %384 = vmatpush2.msra.mxu0 0.0
        %385 = vmatprep.subr.mxu0 0.0
        %386 = vmatpush2.msra.mxu0 0.0
        %387 = vmatprep.subr.mxu0 0.0
        %388 = vmatpush2.msra.mxu0 0.0
        %389 = vmatprep.subr.mxu0 0.0
        %390 = vmatpush2.msra.mxu0 0.0
        %391 = vmatprep.subr.mxu0 0.0
        %392 = vmatpush2.msra.mxu0 0.0
        %393 = vmatprep.subr.mxu0 0.0
        %394 = vmatpush2.msra.mxu0 0.0
        %395 = vmatprep.subr.mxu0 0.0
        %396 = vmatpush2.msra.mxu0 0.0
        %397 = vmatprep.mubr.f32.mxu0 0.0
        %398 = vmatmul.mubr.f32.gmra.mxu0 %v259
        %v399 = vpop.f32.mrf.mxu0
        %v400 = vadd.f32 0.0, %v399
        %v401 = vpop.f32.mrf.mxu0
        %402 = vdwg.mxu0
        %s403 = scalar_lea.vmem %s1, 16
        %v404 = vld [vmem:[%s403] sm:$0xff]
        %v405 = vld [vmem:[%s403 + $0x8] sm:$0xff]
        %vm406 = vcmask 31744
        %v408 = vsel %vm406, %v404, 0
        %v411 = vsel %vm406, %v405, 0
        %vm413 = vcmask 1043456
        %v415 = vsel %vm413, %v400, 0
        %417 = vmatprep.subr.mxu0 0.0
        %418 = vmatpush1.msra.mxu0 0.0
        %419 = vmatprep.subr.mxu0 0.0
        %420 = vmatpush1.msra.mxu0 0.0
        %421 = vmatprep.subr.mxu0 0.0
        %422 = vmatpush1.msra.mxu0 0.0
        %423 = vmatprep.subr.mxu0 0.0
        %424 = vmatpush1.msra.mxu0 0.0
        %425 = vmatprep.subr.mxu0 0.0
        %426 = vmatpush1.msra.mxu0 0.0
        %427 = vmatprep.subr.mxu0 0.0
        %428 = vmatpush1.msra.mxu0 0.0
        %429 = vmatprep.subr.mxu0 0.0
        %430 = vmatpush1.msra.mxu0 0.0
        %431 = vmatprep.subr.mxu0 0.0
        %432 = vmatpush1.msra.mxu0 0.0
        %433 = vmatprep.subr.mxu0 0.0
        %434 = vmatpush1.msra.mxu0 0.0
        %435 = vmatprep.subr.mxu0 0.0
        %436 = vmatpush1.msra.mxu0 0.0
        %437 = vmatprep.subr.mxu0 0.0
        %438 = vmatpush1.msra.mxu0 0.0
        %439 = vmatprep.subr.mxu0 0.0
        %440 = vmatpush1.msra.mxu0 0.0
        %441 = vmatprep.subr.mxu0 0.0
        %442 = vmatpush1.msra.mxu0 0.0
        %443 = vmatprep.subr.mxu0 0.0
        %444 = vmatpush1.msra.mxu0 0.0
        %445 = vmatprep.subr.mxu0 0.0
        %446 = vmatpush1.msra.mxu0 0.0
        %447 = vmatprep.subr.mxu0 0.0
        %448 = vmatpush1.msra.mxu0 %v415
        %449 = vmatprep.subr.mxu0 0.0
        %450 = vmatpush2.msra.mxu0 0.0
        %451 = vmatprep.subr.mxu0 0.0
        %452 = vmatpush2.msra.mxu0 0.0
        %453 = vmatprep.subr.mxu0 0.0
        %454 = vmatpush2.msra.mxu0 0.0
        %455 = vmatprep.subr.mxu0 0.0
        %456 = vmatpush2.msra.mxu0 0.0
        %457 = vmatprep.subr.mxu0 0.0
        %458 = vmatpush2.msra.mxu0 0.0
        %459 = vmatprep.subr.mxu0 0.0
        %460 = vmatpush2.msra.mxu0 0.0
        %461 = vmatprep.subr.mxu0 0.0
        %462 = vmatpush2.msra.mxu0 0.0
        %463 = vmatprep.subr.mxu0 0.0
        %464 = vmatpush2.msra.mxu0 0.0
        %465 = vmatprep.subr.mxu0 0.0
        %466 = vmatpush2.msra.mxu0 0.0
        %467 = vmatprep.subr.mxu0 0.0
        %468 = vmatpush2.msra.mxu0 0.0
        %469 = vmatprep.subr.mxu0 0.0
        %470 = vmatpush2.msra.mxu0 0.0
        %471 = vmatprep.subr.mxu0 0.0
        %472 = vmatpush2.msra.mxu0 0.0
        %473 = vmatprep.subr.mxu0 0.0
        %474 = vmatpush2.msra.mxu0 0.0
        %475 = vmatprep.subr.mxu0 0.0
        %476 = vmatpush2.msra.mxu0 0.0
        %477 = vmatprep.subr.mxu0 0.0
        %478 = vmatpush2.msra.mxu0 0.0
        %479 = vmatprep.subr.mxu0 0.0
        %480 = vmatpush2.msra.mxu0 0.0
        %481 = vmatprep.mubr.f32.mxu0 0.0
        %482 = vmatmul.mubr.f32.gmra.mxu0 %v408
        %v483 = vpop.f32.mrf.mxu0
        %v484 = vadd.f32 0.0, %v483
        %v485 = vpop.f32.mrf.mxu0
        %486 = vmatprep.mubr.f32.mxu0 0.0
        %487 = vmatmul.mubr.f32.gmra.mxu0 %v411
        %v488 = vpop.f32.mrf.mxu0
        %v489 = vadd.f32 0.0, %v488
        %v490 = vpop.f32.mrf.mxu0
        %491 = vdwg.mxu0
        %v493 = vsel %vm406, %v331, 0
        %v496 = vsel %vm406, %v332, 0
        %v499 = vsel %vm413, %v328, 0
        %501 = vmatprep.subr.mxu0 0.0
        %502 = vmatpush1.msra.mxu0 0.0
        %503 = vmatprep.subr.mxu0 0.0
        %504 = vmatpush1.msra.mxu0 0.0
        %505 = vmatprep.subr.mxu0 0.0
        %506 = vmatpush1.msra.mxu0 0.0
        %507 = vmatprep.subr.mxu0 0.0
        %508 = vmatpush1.msra.mxu0 0.0
        %509 = vmatprep.subr.mxu0 0.0
        %510 = vmatpush1.msra.mxu0 0.0
        %511 = vmatprep.subr.mxu0 0.0
        %512 = vmatpush1.msra.mxu0 0.0
        %513 = vmatprep.subr.mxu0 0.0
        %514 = vmatpush1.msra.mxu0 0.0
        %515 = vmatprep.subr.mxu0 0.0
        %516 = vmatpush1.msra.mxu0 0.0
        %517 = vmatprep.subr.mxu0 0.0
        %518 = vmatpush1.msra.mxu0 0.0
        %519 = vmatprep.subr.mxu0 0.0
        %520 = vmatpush1.msra.mxu0 0.0
        %521 = vmatprep.subr.mxu0 0.0
        %522 = vmatpush1.msra.mxu0 0.0
        %523 = vmatprep.subr.mxu0 0.0
        %524 = vmatpush1.msra.mxu0 0.0
        %525 = vmatprep.subr.mxu0 0.0
        %526 = vmatpush1.msra.mxu0 0.0
        %527 = vmatprep.subr.mxu0 0.0
        %528 = vmatpush1.msra.mxu0 0.0
        %529 = vmatprep.subr.mxu0 0.0
        %530 = vmatpush1.msra.mxu0 0.0
        %531 = vmatprep.subr.mxu0 0.0
        %532 = vmatpush1.msra.mxu0 %v499
        %533 = vmatprep.subr.mxu0 0.0
        %534 = vmatpush2.msra.mxu0 0.0
        %535 = vmatprep.subr.mxu0 0.0
        %536 = vmatpush2.msra.mxu0 0.0
        %537 = vmatprep.subr.mxu0 0.0
        %538 = vmatpush2.msra.mxu0 0.0
        %539 = vmatprep.subr.mxu0 0.0
        %540 = vmatpush2.msra.mxu0 0.0
        %541 = vmatprep.subr.mxu0 0.0
        %542 = vmatpush2.msra.mxu0 0.0
        %543 = vmatprep.subr.mxu0 0.0
        %544 = vmatpush2.msra.mxu0 0.0
        %545 = vmatprep.subr.mxu0 0.0
        %546 = vmatpush2.msra.mxu0 0.0
        %547 = vmatprep.subr.mxu0 0.0
        %548 = vmatpush2.msra.mxu0 0.0
        %549 = vmatprep.subr.mxu0 0.0
        %550 = vmatpush2.msra.mxu0 0.0
        %551 = vmatprep.subr.mxu0 0.0
        %552 = vmatpush2.msra.mxu0 0.0
        %553 = vmatprep.subr.mxu0 0.0
        %554 = vmatpush2.msra.mxu0 0.0
        %555 = vmatprep.subr.mxu0 0.0
        %556 = vmatpush2.msra.mxu0 0.0
        %557 = vmatprep.subr.mxu0 0.0
        %558 = vmatpush2.msra.mxu0 0.0
        %559 = vmatprep.subr.mxu0 0.0
        %560 = vmatpush2.msra.mxu0 0.0
        %561 = vmatprep.subr.mxu0 0.0
        %562 = vmatpush2.msra.mxu0 0.0
        %563 = vmatprep.subr.mxu0 0.0
        %564 = vmatpush2.msra.mxu0 0.0
        %565 = vmatprep.mubr.f32.mxu0 0.0
        %566 = vmatmul.mubr.f32.gmra.mxu0 %v493
        %v567 = vpop.f32.mrf.mxu0
        %v568 = vadd.f32 %v484, %v567
        %v569 = vpop.f32.mrf.mxu0
        %570 = vmatprep.mubr.f32.mxu0 0.0
        %571 = vmatmul.mubr.f32.gmra.mxu0 %v496
        %v572 = vpop.f32.mrf.mxu0
        %v573 = vadd.f32 %v489, %v572
        %v574 = vpop.f32.mrf.mxu0
        %575 = vdwg.mxu0
        %v576 = vld [vmem:[%s196 + $0x1] sm:$0x1]
        %v577 = vld [vmem:[%s196 + $0x11] sm:$0x1]
        %v578 = vld [vmem:[%s196 + $0x21] sm:$0x1]
        %v579 = vld [vmem:[%s196 + $0x31] sm:$0x1]
        %v584 = vrot.slane %v577, 7
        %v585 = vsel %vm250, %v584, %v576
        %v586 = vrot.slane %v578, 6
        %v587 = vsel %vm253, %v586, %v585
        %v588 = vrot.slane %v579, 5
        %v589 = vsel %vm256, %v588, %v587
        %v590 = vsel %vm258, %v589, 0
        %592 = vmatprep.subr.mxu0 0.0
        %593 = vmatpush1.msra.mxu0 0.0
        %594 = vmatprep.subr.mxu0 0.0
        %595 = vmatpush1.msra.mxu0 0.0
        %596 = vmatprep.subr.mxu0 0.0
        %597 = vmatpush1.msra.mxu0 0.0
        %598 = vmatprep.subr.mxu0 0.0
        %599 = vmatpush1.msra.mxu0 0.0
        %600 = vmatprep.subr.mxu0 0.0
        %601 = vmatpush1.msra.mxu0 0.0
        %602 = vmatprep.subr.mxu0 0.0
        %603 = vmatpush1.msra.mxu0 0.0
        %604 = vmatprep.subr.mxu0 0.0
        %605 = vmatpush1.msra.mxu0 0.0
        %606 = vmatprep.subr.mxu0 0.0
        %607 = vmatpush1.msra.mxu0 0.0
        %608 = vmatprep.subr.mxu0 0.0
        %609 = vmatpush1.msra.mxu0 0.0
        %610 = vmatprep.subr.mxu0 0.0
        %611 = vmatpush1.msra.mxu0 0.0
        %612 = vmatprep.subr.mxu0 0.0
        %613 = vmatpush1.msra.mxu0 0.0
        %614 = vmatprep.subr.mxu0 0.0
        %615 = vmatpush1.msra.mxu0 0.0
        %616 = vmatprep.subr.mxu0 0.0
        %617 = vmatpush1.msra.mxu0 0.0
        %618 = vmatprep.subr.mxu0 0.0
        %619 = vmatpush1.msra.mxu0 0.0
        %620 = vmatprep.subr.mxu0 0.0
        %621 = vmatpush1.msra.mxu0 %v231
        %622 = vmatprep.subr.mxu0 0.0
        %623 = vmatpush1.msra.mxu0 %v230
        %624 = vmatprep.subr.mxu0 0.0
        %625 = vmatpush2.msra.mxu0 0.0
        %626 = vmatprep.subr.mxu0 0.0
        %627 = vmatpush2.msra.mxu0 0.0
        %628 = vmatprep.subr.mxu0 0.0
        %629 = vmatpush2.msra.mxu0 0.0
        %630 = vmatprep.subr.mxu0 0.0
        %631 = vmatpush2.msra.mxu0 0.0
        %632 = vmatprep.subr.mxu0 0.0
        %633 = vmatpush2.msra.mxu0 0.0
        %634 = vmatprep.subr.mxu0 0.0
        %635 = vmatpush2.msra.mxu0 0.0
        %636 = vmatprep.subr.mxu0 0.0
        %637 = vmatpush2.msra.mxu0 0.0
        %638 = vmatprep.subr.mxu0 0.0
        %639 = vmatpush2.msra.mxu0 0.0
        %640 = vmatprep.subr.mxu0 0.0
        %641 = vmatpush2.msra.mxu0 0.0
        %642 = vmatprep.subr.mxu0 0.0
        %643 = vmatpush2.msra.mxu0 0.0
        %644 = vmatprep.subr.mxu0 0.0
        %645 = vmatpush2.msra.mxu0 0.0
        %646 = vmatprep.subr.mxu0 0.0
        %647 = vmatpush2.msra.mxu0 0.0
        %648 = vmatprep.subr.mxu0 0.0
        %649 = vmatpush2.msra.mxu0 0.0
        %650 = vmatprep.subr.mxu0 0.0
        %651 = vmatpush2.msra.mxu0 0.0
        %652 = vmatprep.subr.mxu0 0.0
        %653 = vmatpush2.msra.mxu0 0.0
        %654 = vmatprep.subr.mxu0 0.0
        %655 = vmatpush2.msra.mxu0 0.0
        %656 = vmatprep.mubr.f32.mxu0 0.0
        %657 = vmatmul.mubr.f32.gmra.mxu0 %v590
        %v658 = vpop.f32.mrf.mxu0
        %v659 = vadd.f32 0.0, %v658
        %v660 = vpop.f32.mrf.mxu0
        %661 = vdwg.mxu0
        %s662 = scalar_lea.vmem %s1, 32
        %v663 = vld [vmem:[%s662] sm:$0xff]
        %v664 = vld [vmem:[%s662 + $0x8] sm:$0xff]
        %v666 = vsel %vm406, %v663, 0
        %v669 = vsel %vm406, %v664, 0
        %v672 = vsel %vm413, %v659, 0
        %674 = vmatprep.subr.mxu0 0.0
        %675 = vmatpush1.msra.mxu0 0.0
        %676 = vmatprep.subr.mxu0 0.0
        %677 = vmatpush1.msra.mxu0 0.0
        %678 = vmatprep.subr.mxu0 0.0
        %679 = vmatpush1.msra.mxu0 0.0
        %680 = vmatprep.subr.mxu0 0.0
        %681 = vmatpush1.msra.mxu0 0.0
        %682 = vmatprep.subr.mxu0 0.0
        %683 = vmatpush1.msra.mxu0 0.0
        %684 = vmatprep.subr.mxu0 0.0
        %685 = vmatpush1.msra.mxu0 0.0
        %686 = vmatprep.subr.mxu0 0.0
        %687 = vmatpush1.msra.mxu0 0.0
        %688 = vmatprep.subr.mxu0 0.0
        %689 = vmatpush1.msra.mxu0 0.0
        %690 = vmatprep.subr.mxu0 0.0
        %691 = vmatpush1.msra.mxu0 0.0
        %692 = vmatprep.subr.mxu0 0.0
        %693 = vmatpush1.msra.mxu0 0.0
        %694 = vmatprep.subr.mxu0 0.0
        %695 = vmatpush1.msra.mxu0 0.0
        %696 = vmatprep.subr.mxu0 0.0
        %697 = vmatpush1.msra.mxu0 0.0
        %698 = vmatprep.subr.mxu0 0.0
        %699 = vmatpush1.msra.mxu0 0.0
        %700 = vmatprep.subr.mxu0 0.0
        %701 = vmatpush1.msra.mxu0 0.0
        %702 = vmatprep.subr.mxu0 0.0
        %703 = vmatpush1.msra.mxu0 0.0
        %704 = vmatprep.subr.mxu0 0.0
        %705 = vmatpush1.msra.mxu0 %v672
        %706 = vmatprep.subr.mxu0 0.0
        %707 = vmatpush2.msra.mxu0 0.0
        %708 = vmatprep.subr.mxu0 0.0
        %709 = vmatpush2.msra.mxu0 0.0
        %710 = vmatprep.subr.mxu0 0.0
        %711 = vmatpush2.msra.mxu0 0.0
        %712 = vmatprep.subr.mxu0 0.0
        %713 = vmatpush2.msra.mxu0 0.0
        %714 = vmatprep.subr.mxu0 0.0
        %715 = vmatpush2.msra.mxu0 0.0
        %716 = vmatprep.subr.mxu0 0.0
        %717 = vmatpush2.msra.mxu0 0.0
        %718 = vmatprep.subr.mxu0 0.0
        %719 = vmatpush2.msra.mxu0 0.0
        %720 = vmatprep.subr.mxu0 0.0
        %721 = vmatpush2.msra.mxu0 0.0
        %722 = vmatprep.subr.mxu0 0.0
        %723 = vmatpush2.msra.mxu0 0.0
        %724 = vmatprep.subr.mxu0 0.0
        %725 = vmatpush2.msra.mxu0 0.0
        %726 = vmatprep.subr.mxu0 0.0
        %727 = vmatpush2.msra.mxu0 0.0
        %728 = vmatprep.subr.mxu0 0.0
        %729 = vmatpush2.msra.mxu0 0.0
        %730 = vmatprep.subr.mxu0 0.0
        %731 = vmatpush2.msra.mxu0 0.0
        %732 = vmatprep.subr.mxu0 0.0
        %733 = vmatpush2.msra.mxu0 0.0
        %734 = vmatprep.subr.mxu0 0.0
        %735 = vmatpush2.msra.mxu0 0.0
        %736 = vmatprep.subr.mxu0 0.0
        %737 = vmatpush2.msra.mxu0 0.0
        %738 = vmatprep.mubr.f32.mxu0 0.0
        %739 = vmatmul.mubr.f32.gmra.mxu0 %v666
        %v740 = vpop.f32.mrf.mxu0
        %v741 = vadd.f32 0.0, %v740
        %v742 = vpop.f32.mrf.mxu0
        %743 = vmatprep.mubr.f32.mxu0 0.0
        %744 = vmatmul.mubr.f32.gmra.mxu0 %v669
        %v745 = vpop.f32.mrf.mxu0
        %v746 = vadd.f32 0.0, %v745
        %v747 = vpop.f32.mrf.mxu0
        %748 = vdwg.mxu0
        %v749 = vadd.f32 %v568, %v741
        %v750 = vadd.f32 %v573, %v746
        %751 = vmatprep.subr.mxu0 0.0
        %752 = vmatpush1.msra.mxu0 0.0
        %753 = vmatprep.subr.mxu0 0.0
        %754 = vmatpush1.msra.mxu0 0.0
        %755 = vmatprep.subr.mxu0 0.0
        %756 = vmatpush1.msra.mxu0 0.0
        %757 = vmatprep.subr.mxu0 0.0
        %758 = vmatpush1.msra.mxu0 0.0
        %759 = vmatprep.subr.mxu0 0.0
        %760 = vmatpush1.msra.mxu0 0.0
        %761 = vmatprep.subr.mxu0 0.0
        %762 = vmatpush1.msra.mxu0 0.0
        %763 = vmatprep.subr.mxu0 0.0
        %764 = vmatpush1.msra.mxu0 0.0
        %765 = vmatprep.subr.mxu0 0.0
        %766 = vmatpush1.msra.mxu0 0.0
        %767 = vmatprep.subr.mxu0 0.0
        %768 = vmatpush1.msra.mxu0 0.0
        %769 = vmatprep.subr.mxu0 0.0
        %770 = vmatpush1.msra.mxu0 0.0
        %771 = vmatprep.subr.mxu0 0.0
        %772 = vmatpush1.msra.mxu0 0.0
        %773 = vmatprep.subr.mxu0 0.0
        %774 = vmatpush1.msra.mxu0 0.0
        %775 = vmatprep.subr.mxu0 0.0
        %776 = vmatpush1.msra.mxu0 0.0
        %777 = vmatprep.subr.mxu0 0.0
        %778 = vmatpush1.msra.mxu0 0.0
        %779 = vmatprep.subr.mxu0 0.0
        %780 = vmatpush1.msra.mxu0 %v238
        %781 = vmatprep.subr.mxu0 0.0
        %782 = vmatpush1.msra.mxu0 %v237
        %783 = vmatprep.subr.mxu0 0.0
        %784 = vmatpush2.msra.mxu0 0.0
        %785 = vmatprep.subr.mxu0 0.0
        %786 = vmatpush2.msra.mxu0 0.0
        %787 = vmatprep.subr.mxu0 0.0
        %788 = vmatpush2.msra.mxu0 0.0
        %789 = vmatprep.subr.mxu0 0.0
        %790 = vmatpush2.msra.mxu0 0.0
        %791 = vmatprep.subr.mxu0 0.0
        %792 = vmatpush2.msra.mxu0 0.0
        %793 = vmatprep.subr.mxu0 0.0
        %794 = vmatpush2.msra.mxu0 0.0
        %795 = vmatprep.subr.mxu0 0.0
        %796 = vmatpush2.msra.mxu0 0.0
        %797 = vmatprep.subr.mxu0 0.0
        %798 = vmatpush2.msra.mxu0 0.0
        %799 = vmatprep.subr.mxu0 0.0
        %800 = vmatpush2.msra.mxu0 0.0
        %801 = vmatprep.subr.mxu0 0.0
        %802 = vmatpush2.msra.mxu0 0.0
        %803 = vmatprep.subr.mxu0 0.0
        %804 = vmatpush2.msra.mxu0 0.0
        %805 = vmatprep.subr.mxu0 0.0
        %806 = vmatpush2.msra.mxu0 0.0
        %807 = vmatprep.subr.mxu0 0.0
        %808 = vmatpush2.msra.mxu0 0.0
        %809 = vmatprep.subr.mxu0 0.0
        %810 = vmatpush2.msra.mxu0 0.0
        %811 = vmatprep.subr.mxu0 0.0
        %812 = vmatpush2.msra.mxu0 0.0
        %813 = vmatprep.subr.mxu0 0.0
        %814 = vmatpush2.msra.mxu0 0.0
        %815 = vmatprep.mubr.f32.mxu0 0.0
        %816 = vmatmul.mubr.f32.gmra.mxu0 %v590
        %v817 = vpop.f32.mrf.mxu0
        %v818 = vadd.f32 0.0, %v817
        %v819 = vpop.f32.mrf.mxu0
        %820 = vdwg.mxu0
        %s821 = scalar_lea.vmem %s1, 48
        %v822 = vld [vmem:[%s821] sm:$0xff]
        %v823 = vld [vmem:[%s821 + $0x8] sm:$0xff]
        %v825 = vsel %vm406, %v822, 0
        %v828 = vsel %vm406, %v823, 0
        %v831 = vsel %vm413, %v818, 0
        %833 = vmatprep.subr.mxu0 0.0
        %834 = vmatpush1.msra.mxu0 0.0
        %835 = vmatprep.subr.mxu0 0.0
        %836 = vmatpush1.msra.mxu0 0.0
        %837 = vmatprep.subr.mxu0 0.0
        %838 = vmatpush1.msra.mxu0 0.0
        %839 = vmatprep.subr.mxu0 0.0
        %840 = vmatpush1.msra.mxu0 0.0
        %841 = vmatprep.subr.mxu0 0.0
        %842 = vmatpush1.msra.mxu0 0.0
        %843 = vmatprep.subr.mxu0 0.0
        %844 = vmatpush1.msra.mxu0 0.0
        %845 = vmatprep.subr.mxu0 0.0
        %846 = vmatpush1.msra.mxu0 0.0
        %847 = vmatprep.subr.mxu0 0.0
        %848 = vmatpush1.msra.mxu0 0.0
        %849 = vmatprep.subr.mxu0 0.0
        %850 = vmatpush1.msra.mxu0 0.0
        %851 = vmatprep.subr.mxu0 0.0
        %852 = vmatpush1.msra.mxu0 0.0
        %853 = vmatprep.subr.mxu0 0.0
        %854 = vmatpush1.msra.mxu0 0.0
        %855 = vmatprep.subr.mxu0 0.0
        %856 = vmatpush1.msra.mxu0 0.0
        %857 = vmatprep.subr.mxu0 0.0
        %858 = vmatpush1.msra.mxu0 0.0
        %859 = vmatprep.subr.mxu0 0.0
        %860 = vmatpush1.msra.mxu0 0.0
        %861 = vmatprep.subr.mxu0 0.0
        %862 = vmatpush1.msra.mxu0 0.0
        %863 = vmatprep.subr.mxu0 0.0
        %864 = vmatpush1.msra.mxu0 %v831
        %865 = vmatprep.subr.mxu0 0.0
        %866 = vmatpush2.msra.mxu0 0.0
        %867 = vmatprep.subr.mxu0 0.0
        %868 = vmatpush2.msra.mxu0 0.0
        %869 = vmatprep.subr.mxu0 0.0
        %870 = vmatpush2.msra.mxu0 0.0
        %871 = vmatprep.subr.mxu0 0.0
        %872 = vmatpush2.msra.mxu0 0.0
        %873 = vmatprep.subr.mxu0 0.0
        %874 = vmatpush2.msra.mxu0 0.0
        %875 = vmatprep.subr.mxu0 0.0
        %876 = vmatpush2.msra.mxu0 0.0
        %877 = vmatprep.subr.mxu0 0.0
        %878 = vmatpush2.msra.mxu0 0.0
        %879 = vmatprep.subr.mxu0 0.0
        %880 = vmatpush2.msra.mxu0 0.0
        %881 = vmatprep.subr.mxu0 0.0
        %882 = vmatpush2.msra.mxu0 0.0
        %883 = vmatprep.subr.mxu0 0.0
        %884 = vmatpush2.msra.mxu0 0.0
        %885 = vmatprep.subr.mxu0 0.0
        %886 = vmatpush2.msra.mxu0 0.0
        %887 = vmatprep.subr.mxu0 0.0
        %888 = vmatpush2.msra.mxu0 0.0
        %889 = vmatprep.subr.mxu0 0.0
        %890 = vmatpush2.msra.mxu0 0.0
        %891 = vmatprep.subr.mxu0 0.0
        %892 = vmatpush2.msra.mxu0 0.0
        %893 = vmatprep.subr.mxu0 0.0
        %894 = vmatpush2.msra.mxu0 0.0
        %895 = vmatprep.subr.mxu0 0.0
        %896 = vmatpush2.msra.mxu0 0.0
        %897 = vmatprep.mubr.f32.mxu0 0.0
        %898 = vmatmul.mubr.f32.gmra.mxu0 %v825
        %v899 = vpop.f32.mrf.mxu0
        %v900 = vadd.f32 0.0, %v899
        %v901 = vpop.f32.mrf.mxu0
        %902 = vmatprep.mubr.f32.mxu0 0.0
        %903 = vmatmul.mubr.f32.gmra.mxu0 %v828
        %v904 = vpop.f32.mrf.mxu0
        %v905 = vadd.f32 0.0, %v904
        %v906 = vpop.f32.mrf.mxu0
        %907 = vdwg.mxu0
        %v908 = vadd.f32 %v749, %v900
        %v909 = vadd.f32 %v750, %v905
        %911 = vset.pattern.permute.xlu0 0
        %912 = vperm.xlu0 %911, %v239
        %v913 = vpop.permute.xlu0 %912
        %916 = vset.pattern.permute.xlu0 0
        %917 = vperm.xlu0 %916, %v240
        %v918 = vpop.permute.xlu0 %917
        %v920 = vadd.f32 %v908, %v913
        %v921 = vadd.f32 %v909, %v918
        %v922 = vmax.f32 %v920, 0.0
        %v923 = vadd.f32 %v922, %v921
        %v924 = vmax.f32 %v923, 0.0
        %v926 = vcombine.high %v924, %v924
        %v928 = vunpack.c.l.s4 1966171168
        %v929 = vunpack.c.0.s8 %v928
        %v930 = vlaneseq
        %v931 = vshrl.u32 %v930, 7
        %v932 = vsub.s32 %v929, %v931
        %v933 = vrot.slane %v924, %v932
        %v935 = vunpack.c.l.s4 1966171168
        %v936 = vunpack.c.0.s8 %v935
        %v937 = vlaneseq
        %v938 = vshrl.u32 %v937, 7
        %v939 = vsub.s32 %v936, %v938
        %v940 = vrot.slane %v926, %v939
        %v941 = vcombine.high %v933, %v933
        %v942 = vcombine.high %v940, %v940
        %v944 = vunpack.c.l.s4 1966171168
        %v945 = vunpack.c.0.s8 %v944
        %v946 = vlaneseq
        %v947 = vshrl.u32 %v946, 7
        %v948 = vsub.s32 %v945, %v947
        %v949 = vrot.slane %v933, %v948
        %v951 = vunpack.c.l.s4 1966171168
        %v952 = vunpack.c.0.s8 %v951
        %v953 = vlaneseq
        %v954 = vshrl.u32 %v953, 7
        %v955 = vsub.s32 %v952, %v954
        %v956 = vrot.slane %v940, %v955
        %v958 = vunpack.c.l.s4 1966171168
        %v959 = vunpack.c.0.s8 %v958
        %v960 = vlaneseq
        %v961 = vshrl.u32 %v960, 7
        %v962 = vsub.s32 %v959, %v961
        %v963 = vrot.slane %v941, %v962
        %v965 = vunpack.c.l.s4 1966171168
        %v966 = vunpack.c.0.s8 %v965
        %v967 = vlaneseq
        %v968 = vshrl.u32 %v967, 7
        %v969 = vsub.s32 %v966, %v968
        %v970 = vrot.slane %v942, %v969
        %v971 = vcombine.high %v949, %v949
        %v972 = vcombine.high %v956, %v956
        %v973 = vcombine.high %v963, %v963
        %v974 = vcombine.high %v970, %v970
        %vm983 = vcmask 57344
        %984 = vst.msk [vmem:[%s218] sm:$0x1] %vm983, %v949
        %985 = vst.msk [vmem:[%s218 + $0x8] sm:$0x1] %vm983, %v963
        %986 = vst.msk [vmem:[%s218 + $0x10] sm:$0x1] %vm983, %v971
        %987 = vst.msk [vmem:[%s218 + $0x18] sm:$0x1] %vm983, %v973
        %988 = vst.msk [vmem:[%s218 + $0x20] sm:$0x1] %vm983, %v956
        %989 = vst.msk [vmem:[%s218 + $0x28] sm:$0x1] %vm983, %v970
        %990 = vst.msk [vmem:[%s218 + $0x30] sm:$0x1] %vm983, %v972
        %991 = vst.msk [vmem:[%s218 + $0x38] sm:$0x1] %vm983, %v974
        %v992 = vld [vmem:[%s196 + $0x2] sm:$0x1]
        %v993 = vld [vmem:[%s196 + $0x12] sm:$0x1]
        %v994 = vld [vmem:[%s196 + $0x22] sm:$0x1]
        %v995 = vld [vmem:[%s196 + $0x32] sm:$0x1]
        %v1000 = vrot.slane %v993, 7
        %v1001 = vsel %vm250, %v1000, %v992
        %v1002 = vrot.slane %v994, 6
        %v1003 = vsel %vm253, %v1002, %v1001
        %v1004 = vrot.slane %v995, 5
        %v1005 = vsel %vm256, %v1004, %v1003
        %v1006 = vsel %vm258, %v1005, 0
        %1008 = vmatprep.subr.mxu0 0.0
        %1009 = vmatpush1.msra.mxu0 0.0
        %1010 = vmatprep.subr.mxu0 0.0
        %1011 = vmatpush1.msra.mxu0 0.0
        %1012 = vmatprep.subr.mxu0 0.0
        %1013 = vmatpush1.msra.mxu0 0.0
        %1014 = vmatprep.subr.mxu0 0.0
        %1015 = vmatpush1.msra.mxu0 0.0
        %1016 = vmatprep.subr.mxu0 0.0
        %1017 = vmatpush1.msra.mxu0 0.0
        %1018 = vmatprep.subr.mxu0 0.0
        %1019 = vmatpush1.msra.mxu0 0.0
        %1020 = vmatprep.subr.mxu0 0.0
        %1021 = vmatpush1.msra.mxu0 0.0
        %1022 = vmatprep.subr.mxu0 0.0
        %1023 = vmatpush1.msra.mxu0 0.0
        %1024 = vmatprep.subr.mxu0 0.0
        %1025 = vmatpush1.msra.mxu0 0.0
        %1026 = vmatprep.subr.mxu0 0.0
        %1027 = vmatpush1.msra.mxu0 0.0
        %1028 = vmatprep.subr.mxu0 0.0
        %1029 = vmatpush1.msra.mxu0 0.0
        %1030 = vmatprep.subr.mxu0 0.0
        %1031 = vmatpush1.msra.mxu0 0.0
        %1032 = vmatprep.subr.mxu0 0.0
        %1033 = vmatpush1.msra.mxu0 0.0
        %1034 = vmatprep.subr.mxu0 0.0
        %1035 = vmatpush1.msra.mxu0 0.0
        %1036 = vmatprep.subr.mxu0 0.0
        %1037 = vmatpush1.msra.mxu0 %v231
        %1038 = vmatprep.subr.mxu0 0.0
        %1039 = vmatpush1.msra.mxu0 %v230
        %1040 = vmatprep.subr.mxu0 0.0
        %1041 = vmatpush2.msra.mxu0 0.0
        %1042 = vmatprep.subr.mxu0 0.0
        %1043 = vmatpush2.msra.mxu0 0.0
        %1044 = vmatprep.subr.mxu0 0.0
        %1045 = vmatpush2.msra.mxu0 0.0
        %1046 = vmatprep.subr.mxu0 0.0
        %1047 = vmatpush2.msra.mxu0 0.0
        %1048 = vmatprep.subr.mxu0 0.0
        %1049 = vmatpush2.msra.mxu0 0.0
        %1050 = vmatprep.subr.mxu0 0.0
        %1051 = vmatpush2.msra.mxu0 0.0
        %1052 = vmatprep.subr.mxu0 0.0
        %1053 = vmatpush2.msra.mxu0 0.0
        %1054 = vmatprep.subr.mxu0 0.0
        %1055 = vmatpush2.msra.mxu0 0.0
        %1056 = vmatprep.subr.mxu0 0.0
        %1057 = vmatpush2.msra.mxu0 0.0
        %1058 = vmatprep.subr.mxu0 0.0
        %1059 = vmatpush2.msra.mxu0 0.0
        %1060 = vmatprep.subr.mxu0 0.0
        %1061 = vmatpush2.msra.mxu0 0.0
        %1062 = vmatprep.subr.mxu0 0.0
        %1063 = vmatpush2.msra.mxu0 0.0
        %1064 = vmatprep.subr.mxu0 0.0
        %1065 = vmatpush2.msra.mxu0 0.0
        %1066 = vmatprep.subr.mxu0 0.0
        %1067 = vmatpush2.msra.mxu0 0.0
        %1068 = vmatprep.subr.mxu0 0.0
        %1069 = vmatpush2.msra.mxu0 0.0
        %1070 = vmatprep.subr.mxu0 0.0
        %1071 = vmatpush2.msra.mxu0 0.0
        %1072 = vmatprep.mubr.f32.mxu0 0.0
        %1073 = vmatmul.mubr.f32.gmra.mxu0 %v1006
        %v1074 = vpop.f32.mrf.mxu0
        %v1075 = vadd.f32 0.0, %v1074
        %v1076 = vpop.f32.mrf.mxu0
        %1077 = vdwg.mxu0
        %v1078 = vld [vmem:[%s1] sm:$0xff]
        %v1079 = vld [vmem:[%s1 + $0x8] sm:$0xff]
        %1080 = vmatprep.subr.mxu0 0.0
        %1081 = vmatpush1.msra.mxu0 0.0
        %1082 = vmatprep.subr.mxu0 0.0
        %1083 = vmatpush1.msra.mxu0 0.0
        %1084 = vmatprep.subr.mxu0 0.0
        %1085 = vmatpush1.msra.mxu0 0.0
        %1086 = vmatprep.subr.mxu0 0.0
        %1087 = vmatpush1.msra.mxu0 0.0
        %1088 = vmatprep.subr.mxu0 0.0
        %1089 = vmatpush1.msra.mxu0 0.0
        %1090 = vmatprep.subr.mxu0 0.0
        %1091 = vmatpush1.msra.mxu0 0.0
        %1092 = vmatprep.subr.mxu0 0.0
        %1093 = vmatpush1.msra.mxu0 0.0
        %1094 = vmatprep.subr.mxu0 0.0
        %1095 = vmatpush1.msra.mxu0 0.0
        %1096 = vmatprep.subr.mxu0 0.0
        %1097 = vmatpush1.msra.mxu0 0.0
        %1098 = vmatprep.subr.mxu0 0.0
        %1099 = vmatpush1.msra.mxu0 0.0
        %1100 = vmatprep.subr.mxu0 0.0
        %1101 = vmatpush1.msra.mxu0 0.0
        %1102 = vmatprep.subr.mxu0 0.0
        %1103 = vmatpush1.msra.mxu0 0.0
        %1104 = vmatprep.subr.mxu0 0.0
        %1105 = vmatpush1.msra.mxu0 0.0
        %1106 = vmatprep.subr.mxu0 0.0
        %1107 = vmatpush1.msra.mxu0 0.0
        %1108 = vmatprep.subr.mxu0 0.0
        %1109 = vmatpush1.msra.mxu0 %v238
        %1110 = vmatprep.subr.mxu0 0.0
        %1111 = vmatpush1.msra.mxu0 %v237
        %1112 = vmatprep.subr.mxu0 0.0
        %1113 = vmatpush2.msra.mxu0 0.0
        %1114 = vmatprep.subr.mxu0 0.0
        %1115 = vmatpush2.msra.mxu0 0.0
        %1116 = vmatprep.subr.mxu0 0.0
        %1117 = vmatpush2.msra.mxu0 0.0
        %1118 = vmatprep.subr.mxu0 0.0
        %1119 = vmatpush2.msra.mxu0 0.0
        %1120 = vmatprep.subr.mxu0 0.0
        %1121 = vmatpush2.msra.mxu0 0.0
        %1122 = vmatprep.subr.mxu0 0.0
        %1123 = vmatpush2.msra.mxu0 0.0
        %1124 = vmatprep.subr.mxu0 0.0
        %1125 = vmatpush2.msra.mxu0 0.0
        %1126 = vmatprep.subr.mxu0 0.0
        %1127 = vmatpush2.msra.mxu0 0.0
        %1128 = vmatprep.subr.mxu0 0.0
        %1129 = vmatpush2.msra.mxu0 0.0
        %1130 = vmatprep.subr.mxu0 0.0
        %1131 = vmatpush2.msra.mxu0 0.0
        %1132 = vmatprep.subr.mxu0 0.0
        %1133 = vmatpush2.msra.mxu0 0.0
        %1134 = vmatprep.subr.mxu0 0.0
        %1135 = vmatpush2.msra.mxu0 0.0
        %1136 = vmatprep.subr.mxu0 0.0
        %1137 = vmatpush2.msra.mxu0 0.0
        %1138 = vmatprep.subr.mxu0 0.0
        %1139 = vmatpush2.msra.mxu0 0.0
        %1140 = vmatprep.subr.mxu0 0.0
        %1141 = vmatpush2.msra.mxu0 0.0
        %1142 = vmatprep.subr.mxu0 0.0
        %1143 = vmatpush2.msra.mxu0 0.0
        %1144 = vmatprep.mubr.f32.mxu0 0.0
        %1145 = vmatmul.mubr.f32.gmra.mxu0 %v1006
        %v1146 = vpop.f32.mrf.mxu0
        %v1147 = vadd.f32 0.0, %v1146
        %v1148 = vpop.f32.mrf.mxu0
        %1149 = vdwg.mxu0
        %v1150 = vld [vmem:[%s403] sm:$0xff]
        %v1151 = vld [vmem:[%s403 + $0x8] sm:$0xff]
        %v1153 = vsel %vm406, %v1150, 0
        %v1156 = vsel %vm406, %v1151, 0
        %v1159 = vsel %vm413, %v1147, 0
        %1161 = vmatprep.subr.mxu0 0.0
        %1162 = vmatpush1.msra.mxu0 0.0
        %1163 = vmatprep.subr.mxu0 0.0
        %1164 = vmatpush1.msra.mxu0 0.0
        %1165 = vmatprep.subr.mxu0 0.0
        %1166 = vmatpush1.msra.mxu0 0.0
        %1167 = vmatprep.subr.mxu0 0.0
        %1168 = vmatpush1.msra.mxu0 0.0
        %1169 = vmatprep.subr.mxu0 0.0
        %1170 = vmatpush1.msra.mxu0 0.0
        %1171 = vmatprep.subr.mxu0 0.0
        %1172 = vmatpush1.msra.mxu0 0.0
        %1173 = vmatprep.subr.mxu0 0.0
        %1174 = vmatpush1.msra.mxu0 0.0
        %1175 = vmatprep.subr.mxu0 0.0
        %1176 = vmatpush1.msra.mxu0 0.0
        %1177 = vmatprep.subr.mxu0 0.0
        %1178 = vmatpush1.msra.mxu0 0.0
        %1179 = vmatprep.subr.mxu0 0.0
        %1180 = vmatpush1.msra.mxu0 0.0
        %1181 = vmatprep.subr.mxu0 0.0
        %1182 = vmatpush1.msra.mxu0 0.0
        %1183 = vmatprep.subr.mxu0 0.0
        %1184 = vmatpush1.msra.mxu0 0.0
        %1185 = vmatprep.subr.mxu0 0.0
        %1186 = vmatpush1.msra.mxu0 0.0
        %1187 = vmatprep.subr.mxu0 0.0
        %1188 = vmatpush1.msra.mxu0 0.0
        %1189 = vmatprep.subr.mxu0 0.0
        %1190 = vmatpush1.msra.mxu0 0.0
        %1191 = vmatprep.subr.mxu0 0.0
        %1192 = vmatpush1.msra.mxu0 %v1159
        %1193 = vmatprep.subr.mxu0 0.0
        %1194 = vmatpush2.msra.mxu0 0.0
        %1195 = vmatprep.subr.mxu0 0.0
        %1196 = vmatpush2.msra.mxu0 0.0
        %1197 = vmatprep.subr.mxu0 0.0
        %1198 = vmatpush2.msra.mxu0 0.0
        %1199 = vmatprep.subr.mxu0 0.0
        %1200 = vmatpush2.msra.mxu0 0.0
        %1201 = vmatprep.subr.mxu0 0.0
        %1202 = vmatpush2.msra.mxu0 0.0
        %1203 = vmatprep.subr.mxu0 0.0
        %1204 = vmatpush2.msra.mxu0 0.0
        %1205 = vmatprep.subr.mxu0 0.0
        %1206 = vmatpush2.msra.mxu0 0.0
        %1207 = vmatprep.subr.mxu0 0.0
        %1208 = vmatpush2.msra.mxu0 0.0
        %1209 = vmatprep.subr.mxu0 0.0
        %1210 = vmatpush2.msra.mxu0 0.0
        %1211 = vmatprep.subr.mxu0 0.0
        %1212 = vmatpush2.msra.mxu0 0.0
        %1213 = vmatprep.subr.mxu0 0.0
        %1214 = vmatpush2.msra.mxu0 0.0
        %1215 = vmatprep.subr.mxu0 0.0
        %1216 = vmatpush2.msra.mxu0 0.0
        %1217 = vmatprep.subr.mxu0 0.0
        %1218 = vmatpush2.msra.mxu0 0.0
        %1219 = vmatprep.subr.mxu0 0.0
        %1220 = vmatpush2.msra.mxu0 0.0
        %1221 = vmatprep.subr.mxu0 0.0
        %1222 = vmatpush2.msra.mxu0 0.0
        %1223 = vmatprep.subr.mxu0 0.0
        %1224 = vmatpush2.msra.mxu0 0.0
        %1225 = vmatprep.mubr.f32.mxu0 0.0
        %1226 = vmatmul.mubr.f32.gmra.mxu0 %v1153
        %v1227 = vpop.f32.mrf.mxu0
        %v1228 = vadd.f32 0.0, %v1227
        %v1229 = vpop.f32.mrf.mxu0
        %1230 = vmatprep.mubr.f32.mxu0 0.0
        %1231 = vmatmul.mubr.f32.gmra.mxu0 %v1156
        %v1232 = vpop.f32.mrf.mxu0
        %v1233 = vadd.f32 0.0, %v1232
        %v1234 = vpop.f32.mrf.mxu0
        %1235 = vdwg.mxu0
        %v1237 = vsel %vm406, %v1078, 0
        %v1240 = vsel %vm406, %v1079, 0
        %v1243 = vsel %vm413, %v1075, 0
        %1245 = vmatprep.subr.mxu0 0.0
        %1246 = vmatpush1.msra.mxu0 0.0
        %1247 = vmatprep.subr.mxu0 0.0
        %1248 = vmatpush1.msra.mxu0 0.0
        %1249 = vmatprep.subr.mxu0 0.0
        %1250 = vmatpush1.msra.mxu0 0.0
        %1251 = vmatprep.subr.mxu0 0.0
        %1252 = vmatpush1.msra.mxu0 0.0
        %1253 = vmatprep.subr.mxu0 0.0
        %1254 = vmatpush1.msra.mxu0 0.0
        %1255 = vmatprep.subr.mxu0 0.0
        %1256 = vmatpush1.msra.mxu0 0.0
        %1257 = vmatprep.subr.mxu0 0.0
        %1258 = vmatpush1.msra.mxu0 0.0
        %1259 = vmatprep.subr.mxu0 0.0
        %1260 = vmatpush1.msra.mxu0 0.0
        %1261 = vmatprep.subr.mxu0 0.0
        %1262 = vmatpush1.msra.mxu0 0.0
        %1263 = vmatprep.subr.mxu0 0.0
        %1264 = vmatpush1.msra.mxu0 0.0
        %1265 = vmatprep.subr.mxu0 0.0
        %1266 = vmatpush1.msra.mxu0 0.0
        %1267 = vmatprep.subr.mxu0 0.0
        %1268 = vmatpush1.msra.mxu0 0.0
        %1269 = vmatprep.subr.mxu0 0.0
        %1270 = vmatpush1.msra.mxu0 0.0
        %1271 = vmatprep.subr.mxu0 0.0
        %1272 = vmatpush1.msra.mxu0 0.0
        %1273 = vmatprep.subr.mxu0 0.0
        %1274 = vmatpush1.msra.mxu0 0.0
        %1275 = vmatprep.subr.mxu0 0.0
        %1276 = vmatpush1.msra.mxu0 %v1243
        %1277 = vmatprep.subr.mxu0 0.0
        %1278 = vmatpush2.msra.mxu0 0.0
        %1279 = vmatprep.subr.mxu0 0.0
        %1280 = vmatpush2.msra.mxu0 0.0
        %1281 = vmatprep.subr.mxu0 0.0
        %1282 = vmatpush2.msra.mxu0 0.0
        %1283 = vmatprep.subr.mxu0 0.0
        %1284 = vmatpush2.msra.mxu0 0.0
        %1285 = vmatprep.subr.mxu0 0.0
        %1286 = vmatpush2.msra.mxu0 0.0
        %1287 = vmatprep.subr.mxu0 0.0
        %1288 = vmatpush2.msra.mxu0 0.0
        %1289 = vmatprep.subr.mxu0 0.0
        %1290 = vmatpush2.msra.mxu0 0.0
        %1291 = vmatprep.subr.mxu0 0.0
        %1292 = vmatpush2.msra.mxu0 0.0
        %1293 = vmatprep.subr.mxu0 0.0
        %1294 = vmatpush2.msra.mxu0 0.0
        %1295 = vmatprep.subr.mxu0 0.0
        %1296 = vmatpush2.msra.mxu0 0.0
        %1297 = vmatprep.subr.mxu0 0.0
        %1298 = vmatpush2.msra.mxu0 0.0
        %1299 = vmatprep.subr.mxu0 0.0
        %1300 = vmatpush2.msra.mxu0 0.0
        %1301 = vmatprep.subr.mxu0 0.0
        %1302 = vmatpush2.msra.mxu0 0.0
        %1303 = vmatprep.subr.mxu0 0.0
        %1304 = vmatpush2.msra.mxu0 0.0
        %1305 = vmatprep.subr.mxu0 0.0
        %1306 = vmatpush2.msra.mxu0 0.0
        %1307 = vmatprep.subr.mxu0 0.0
        %1308 = vmatpush2.msra.mxu0 0.0
        %1309 = vmatprep.mubr.f32.mxu0 0.0
        %1310 = vmatmul.mubr.f32.gmra.mxu0 %v1237
        %v1311 = vpop.f32.mrf.mxu0
        %v1312 = vadd.f32 %v1228, %v1311
        %v1313 = vpop.f32.mrf.mxu0
        %1314 = vmatprep.mubr.f32.mxu0 0.0
        %1315 = vmatmul.mubr.f32.gmra.mxu0 %v1240
        %v1316 = vpop.f32.mrf.mxu0
        %v1317 = vadd.f32 %v1233, %v1316
        %v1318 = vpop.f32.mrf.mxu0
        %1319 = vdwg.mxu0
        %v1320 = vld [vmem:[%s196 + $0x3] sm:$0x1]
        %v1321 = vld [vmem:[%s196 + $0x13] sm:$0x1]
        %v1322 = vld [vmem:[%s196 + $0x23] sm:$0x1]
        %v1323 = vld [vmem:[%s196 + $0x33] sm:$0x1]
        %v1328 = vrot.slane %v1321, 7
        %v1329 = vsel %vm250, %v1328, %v1320
        %v1330 = vrot.slane %v1322, 6
        %v1331 = vsel %vm253, %v1330, %v1329
        %v1332 = vrot.slane %v1323, 5
        %v1333 = vsel %vm256, %v1332, %v1331
        %v1334 = vsel %vm258, %v1333, 0
        %1336 = vmatprep.subr.mxu0 0.0
        %1337 = vmatpush1.msra.mxu0 0.0
        %1338 = vmatprep.subr.mxu0 0.0
        %1339 = vmatpush1.msra.mxu0 0.0
        %1340 = vmatprep.subr.mxu0 0.0
        %1341 = vmatpush1.msra.mxu0 0.0
        %1342 = vmatprep.subr.mxu0 0.0
        %1343 = vmatpush1.msra.mxu0 0.0
        %1344 = vmatprep.subr.mxu0 0.0
        %1345 = vmatpush1.msra.mxu0 0.0
        %1346 = vmatprep.subr.mxu0 0.0
        %1347 = vmatpush1.msra.mxu0 0.0
        %1348 = vmatprep.subr.mxu0 0.0
        %1349 = vmatpush1.msra.mxu0 0.0
        %1350 = vmatprep.subr.mxu0 0.0
        %1351 = vmatpush1.msra.mxu0 0.0
        %1352 = vmatprep.subr.mxu0 0.0
        %1353 = vmatpush1.msra.mxu0 0.0
        %1354 = vmatprep.subr.mxu0 0.0
        %1355 = vmatpush1.msra.mxu0 0.0
        %1356 = vmatprep.subr.mxu0 0.0
        %1357 = vmatpush1.msra.mxu0 0.0
        %1358 = vmatprep.subr.mxu0 0.0
        %1359 = vmatpush1.msra.mxu0 0.0
        %1360 = vmatprep.subr.mxu0 0.0
        %1361 = vmatpush1.msra.mxu0 0.0
        %1362 = vmatprep.subr.mxu0 0.0
        %1363 = vmatpush1.msra.mxu0 0.0
        %1364 = vmatprep.subr.mxu0 0.0
        %1365 = vmatpush1.msra.mxu0 %v231
        %1366 = vmatprep.subr.mxu0 0.0
        %1367 = vmatpush1.msra.mxu0 %v230
        %1368 = vmatprep.subr.mxu0 0.0
        %1369 = vmatpush2.msra.mxu0 0.0
        %1370 = vmatprep.subr.mxu0 0.0
        %1371 = vmatpush2.msra.mxu0 0.0
        %1372 = vmatprep.subr.mxu0 0.0
        %1373 = vmatpush2.msra.mxu0 0.0
        %1374 = vmatprep.subr.mxu0 0.0
        %1375 = vmatpush2.msra.mxu0 0.0
        %1376 = vmatprep.subr.mxu0 0.0
        %1377 = vmatpush2.msra.mxu0 0.0
        %1378 = vmatprep.subr.mxu0 0.0
        %1379 = vmatpush2.msra.mxu0 0.0
        %1380 = vmatprep.subr.mxu0 0.0
        %1381 = vmatpush2.msra.mxu0 0.0
        %1382 = vmatprep.subr.mxu0 0.0
        %1383 = vmatpush2.msra.mxu0 0.0
        %1384 = vmatprep.subr.mxu0 0.0
        %1385 = vmatpush2.msra.mxu0 0.0
        %1386 = vmatprep.subr.mxu0 0.0
        %1387 = vmatpush2.msra.mxu0 0.0
        %1388 = vmatprep.subr.mxu0 0.0
        %1389 = vmatpush2.msra.mxu0 0.0
        %1390 = vmatprep.subr.mxu0 0.0
        %1391 = vmatpush2.msra.mxu0 0.0
        %1392 = vmatprep.subr.mxu0 0.0
        %1393 = vmatpush2.msra.mxu0 0.0
        %1394 = vmatprep.subr.mxu0 0.0
        %1395 = vmatpush2.msra.mxu0 0.0
        %1396 = vmatprep.subr.mxu0 0.0
        %1397 = vmatpush2.msra.mxu0 0.0
        %1398 = vmatprep.subr.mxu0 0.0
        %1399 = vmatpush2.msra.mxu0 0.0
        %1400 = vmatprep.mubr.f32.mxu0 0.0
        %1401 = vmatmul.mubr.f32.gmra.mxu0 %v1334
        %v1402 = vpop.f32.mrf.mxu0
        %v1403 = vadd.f32 0.0, %v1402
        %v1404 = vpop.f32.mrf.mxu0
        %1405 = vdwg.mxu0
        %v1406 = vld [vmem:[%s662] sm:$0xff]
        %v1407 = vld [vmem:[%s662 + $0x8] sm:$0xff]
        %v1409 = vsel %vm406, %v1406, 0
        %v1412 = vsel %vm406, %v1407, 0
        %v1415 = vsel %vm413, %v1403, 0
        %1417 = vmatprep.subr.mxu0 0.0
        %1418 = vmatpush1.msra.mxu0 0.0
        %1419 = vmatprep.subr.mxu0 0.0
        %1420 = vmatpush1.msra.mxu0 0.0
        %1421 = vmatprep.subr.mxu0 0.0
        %1422 = vmatpush1.msra.mxu0 0.0
        %1423 = vmatprep.subr.mxu0 0.0
        %1424 = vmatpush1.msra.mxu0 0.0
        %1425 = vmatprep.subr.mxu0 0.0
        %1426 = vmatpush1.msra.mxu0 0.0
        %1427 = vmatprep.subr.mxu0 0.0
        %1428 = vmatpush1.msra.mxu0 0.0
        %1429 = vmatprep.subr.mxu0 0.0
        %1430 = vmatpush1.msra.mxu0 0.0
        %1431 = vmatprep.subr.mxu0 0.0
        %1432 = vmatpush1.msra.mxu0 0.0
        %1433 = vmatprep.subr.mxu0 0.0
        %1434 = vmatpush1.msra.mxu0 0.0
        %1435 = vmatprep.subr.mxu0 0.0
        %1436 = vmatpush1.msra.mxu0 0.0
        %1437 = vmatprep.subr.mxu0 0.0
        %1438 = vmatpush1.msra.mxu0 0.0
        %1439 = vmatprep.subr.mxu0 0.0
        %1440 = vmatpush1.msra.mxu0 0.0
        %1441 = vmatprep.subr.mxu0 0.0
        %1442 = vmatpush1.msra.mxu0 0.0
        %1443 = vmatprep.subr.mxu0 0.0
        %1444 = vmatpush1.msra.mxu0 0.0
        %1445 = vmatprep.subr.mxu0 0.0
        %1446 = vmatpush1.msra.mxu0 0.0
        %1447 = vmatprep.subr.mxu0 0.0
        %1448 = vmatpush1.msra.mxu0 %v1415
        %1449 = vmatprep.subr.mxu0 0.0
        %1450 = vmatpush2.msra.mxu0 0.0
        %1451 = vmatprep.subr.mxu0 0.0
        %1452 = vmatpush2.msra.mxu0 0.0
        %1453 = vmatprep.subr.mxu0 0.0
        %1454 = vmatpush2.msra.mxu0 0.0
        %1455 = vmatprep.subr.mxu0 0.0
        %1456 = vmatpush2.msra.mxu0 0.0
        %1457 = vmatprep.subr.mxu0 0.0
        %1458 = vmatpush2.msra.mxu0 0.0
        %1459 = vmatprep.subr.mxu0 0.0
        %1460 = vmatpush2.msra.mxu0 0.0
        %1461 = vmatprep.subr.mxu0 0.0
        %1462 = vmatpush2.msra.mxu0 0.0
        %1463 = vmatprep.subr.mxu0 0.0
        %1464 = vmatpush2.msra.mxu0 0.0
        %1465 = vmatprep.subr.mxu0 0.0
        %1466 = vmatpush2.msra.mxu0 0.0
        %1467 = vmatprep.subr.mxu0 0.0
        %1468 = vmatpush2.msra.mxu0 0.0
        %1469 = vmatprep.subr.mxu0 0.0
        %1470 = vmatpush2.msra.mxu0 0.0
        %1471 = vmatprep.subr.mxu0 0.0
        %1472 = vmatpush2.msra.mxu0 0.0
        %1473 = vmatprep.subr.mxu0 0.0
        %1474 = vmatpush2.msra.mxu0 0.0
        %1475 = vmatprep.subr.mxu0 0.0
        %1476 = vmatpush2.msra.mxu0 0.0
        %1477 = vmatprep.subr.mxu0 0.0
        %1478 = vmatpush2.msra.mxu0 0.0
        %1479 = vmatprep.subr.mxu0 0.0
        %1480 = vmatpush2.msra.mxu0 0.0
        %1481 = vmatprep.mubr.f32.mxu0 0.0
        %1482 = vmatmul.mubr.f32.gmra.mxu0 %v1409
        %v1483 = vpop.f32.mrf.mxu0
        %v1484 = vadd.f32 0.0, %v1483
        %v1485 = vpop.f32.mrf.mxu0
        %1486 = vmatprep.mubr.f32.mxu0 0.0
        %1487 = vmatmul.mubr.f32.gmra.mxu0 %v1412
        %v1488 = vpop.f32.mrf.mxu0
        %v1489 = vadd.f32 0.0, %v1488
        %v1490 = vpop.f32.mrf.mxu0
        %1491 = vdwg.mxu0
        %v1492 = vadd.f32 %v1312, %v1484
        %v1493 = vadd.f32 %v1317, %v1489
        %1494 = vmatprep.subr.mxu0 0.0
        %1495 = vmatpush1.msra.mxu0 0.0
        %1496 = vmatprep.subr.mxu0 0.0
        %1497 = vmatpush1.msra.mxu0 0.0
        %1498 = vmatprep.subr.mxu0 0.0
        %1499 = vmatpush1.msra.mxu0 0.0
        %1500 = vmatprep.subr.mxu0 0.0
        %1501 = vmatpush1.msra.mxu0 0.0
        %1502 = vmatprep.subr.mxu0 0.0
        %1503 = vmatpush1.msra.mxu0 0.0
        %1504 = vmatprep.subr.mxu0 0.0
        %1505 = vmatpush1.msra.mxu0 0.0
        %1506 = vmatprep.subr.mxu0 0.0
        %1507 = vmatpush1.msra.mxu0 0.0
        %1508 = vmatprep.subr.mxu0 0.0
        %1509 = vmatpush1.msra.mxu0 0.0
        %1510 = vmatprep.subr.mxu0 0.0
        %1511 = vmatpush1.msra.mxu0 0.0
        %1512 = vmatprep.subr.mxu0 0.0
        %1513 = vmatpush1.msra.mxu0 0.0
        %1514 = vmatprep.subr.mxu0 0.0
        %1515 = vmatpush1.msra.mxu0 0.0
        %1516 = vmatprep.subr.mxu0 0.0
        %1517 = vmatpush1.msra.mxu0 0.0
        %1518 = vmatprep.subr.mxu0 0.0
        %1519 = vmatpush1.msra.mxu0 0.0
        %1520 = vmatprep.subr.mxu0 0.0
        %1521 = vmatpush1.msra.mxu0 0.0
        %1522 = vmatprep.subr.mxu0 0.0
        %1523 = vmatpush1.msra.mxu0 %v238
        %1524 = vmatprep.subr.mxu0 0.0
        %1525 = vmatpush1.msra.mxu0 %v237
        %1526 = vmatprep.subr.mxu0 0.0
        %1527 = vmatpush2.msra.mxu0 0.0
        %1528 = vmatprep.subr.mxu0 0.0
        %1529 = vmatpush2.msra.mxu0 0.0
        %1530 = vmatprep.subr.mxu0 0.0
        %1531 = vmatpush2.msra.mxu0 0.0
        %1532 = vmatprep.subr.mxu0 0.0
        %1533 = vmatpush2.msra.mxu0 0.0
        %1534 = vmatprep.subr.mxu0 0.0
        %1535 = vmatpush2.msra.mxu0 0.0
        %1536 = vmatprep.subr.mxu0 0.0
        %1537 = vmatpush2.msra.mxu0 0.0
        %1538 = vmatprep.subr.mxu0 0.0
        %1539 = vmatpush2.msra.mxu0 0.0
        %1540 = vmatprep.subr.mxu0 0.0
        %1541 = vmatpush2.msra.mxu0 0.0
        %1542 = vmatprep.subr.mxu0 0.0
        %1543 = vmatpush2.msra.mxu0 0.0
        %1544 = vmatprep.subr.mxu0 0.0
        %1545 = vmatpush2.msra.mxu0 0.0
        %1546 = vmatprep.subr.mxu0 0.0
        %1547 = vmatpush2.msra.mxu0 0.0
        %1548 = vmatprep.subr.mxu0 0.0
        %1549 = vmatpush2.msra.mxu0 0.0
        %1550 = vmatprep.subr.mxu0 0.0
        %1551 = vmatpush2.msra.mxu0 0.0
        %1552 = vmatprep.subr.mxu0 0.0
        %1553 = vmatpush2.msra.mxu0 0.0
        %1554 = vmatprep.subr.mxu0 0.0
        %1555 = vmatpush2.msra.mxu0 0.0
        %1556 = vmatprep.subr.mxu0 0.0
        %1557 = vmatpush2.msra.mxu0 0.0
        %1558 = vmatprep.mubr.f32.mxu0 0.0
        %1559 = vmatmul.mubr.f32.gmra.mxu0 %v1334
        %v1560 = vpop.f32.mrf.mxu0
        %v1561 = vadd.f32 0.0, %v1560
        %v1562 = vpop.f32.mrf.mxu0
        %1563 = vdwg.mxu0
        %v1564 = vld [vmem:[%s821] sm:$0xff]
        %v1565 = vld [vmem:[%s821 + $0x8] sm:$0xff]
        %v1567 = vsel %vm406, %v1564, 0
        %v1570 = vsel %vm406, %v1565, 0
        %v1573 = vsel %vm413, %v1561, 0
        %1575 = vmatprep.subr.mxu0 0.0
        %1576 = vmatpush1.msra.mxu0 0.0
        %1577 = vmatprep.subr.mxu0 0.0
        %1578 = vmatpush1.msra.mxu0 0.0
        %1579 = vmatprep.subr.mxu0 0.0
        %1580 = vmatpush1.msra.mxu0 0.0
        %1581 = vmatprep.subr.mxu0 0.0
        %1582 = vmatpush1.msra.mxu0 0.0
        %1583 = vmatprep.subr.mxu0 0.0
        %1584 = vmatpush1.msra.mxu0 0.0
        %1585 = vmatprep.subr.mxu0 0.0
        %1586 = vmatpush1.msra.mxu0 0.0
        %1587 = vmatprep.subr.mxu0 0.0
        %1588 = vmatpush1.msra.mxu0 0.0
        %1589 = vmatprep.subr.mxu0 0.0
        %1590 = vmatpush1.msra.mxu0 0.0
        %1591 = vmatprep.subr.mxu0 0.0
        %1592 = vmatpush1.msra.mxu0 0.0
        %1593 = vmatprep.subr.mxu0 0.0
        %1594 = vmatpush1.msra.mxu0 0.0
        %1595 = vmatprep.subr.mxu0 0.0
        %1596 = vmatpush1.msra.mxu0 0.0
        %1597 = vmatprep.subr.mxu0 0.0
        %1598 = vmatpush1.msra.mxu0 0.0
        %1599 = vmatprep.subr.mxu0 0.0
        %1600 = vmatpush1.msra.mxu0 0.0
        %1601 = vmatprep.subr.mxu0 0.0
        %1602 = vmatpush1.msra.mxu0 0.0
        %1603 = vmatprep.subr.mxu0 0.0
        %1604 = vmatpush1.msra.mxu0 0.0
        %1605 = vmatprep.subr.mxu0 0.0
        %1606 = vmatpush1.msra.mxu0 %v1573
        %1607 = vmatprep.subr.mxu0 0.0
        %1608 = vmatpush2.msra.mxu0 0.0
        %1609 = vmatprep.subr.mxu0 0.0
        %1610 = vmatpush2.msra.mxu0 0.0
        %1611 = vmatprep.subr.mxu0 0.0
        %1612 = vmatpush2.msra.mxu0 0.0
        %1613 = vmatprep.subr.mxu0 0.0
        %1614 = vmatpush2.msra.mxu0 0.0
        %1615 = vmatprep.subr.mxu0 0.0
        %1616 = vmatpush2.msra.mxu0 0.0
        %1617 = vmatprep.subr.mxu0 0.0
        %1618 = vmatpush2.msra.mxu0 0.0
        %1619 = vmatprep.subr.mxu0 0.0
        %1620 = vmatpush2.msra.mxu0 0.0
        %1621 = vmatprep.subr.mxu0 0.0
        %1622 = vmatpush2.msra.mxu0 0.0
        %1623 = vmatprep.subr.mxu0 0.0
        %1624 = vmatpush2.msra.mxu0 0.0
        %1625 = vmatprep.subr.mxu0 0.0
        %1626 = vmatpush2.msra.mxu0 0.0
        %1627 = vmatprep.subr.mxu0 0.0
        %1628 = vmatpush2.msra.mxu0 0.0
        %1629 = vmatprep.subr.mxu0 0.0
        %1630 = vmatpush2.msra.mxu0 0.0
        %1631 = vmatprep.subr.mxu0 0.0
        %1632 = vmatpush2.msra.mxu0 0.0
        %1633 = vmatprep.subr.mxu0 0.0
        %1634 = vmatpush2.msra.mxu0 0.0
        %1635 = vmatprep.subr.mxu0 0.0
        %1636 = vmatpush2.msra.mxu0 0.0
        %1637 = vmatprep.subr.mxu0 0.0
        %1638 = vmatpush2.msra.mxu0 0.0
        %1639 = vmatprep.mubr.f32.mxu0 0.0
        %1640 = vmatmul.mubr.f32.gmra.mxu0 %v1567
        %v1641 = vpop.f32.mrf.mxu0
        %v1642 = vadd.f32 0.0, %v1641
        %v1643 = vpop.f32.mrf.mxu0
        %1644 = vmatprep.mubr.f32.mxu0 0.0
        %1645 = vmatmul.mubr.f32.gmra.mxu0 %v1570
        %v1646 = vpop.f32.mrf.mxu0
        %v1647 = vadd.f32 0.0, %v1646
        %v1648 = vpop.f32.mrf.mxu0
        %1649 = vdwg.mxu0
        %v1650 = vadd.f32 %v1492, %v1642
        %v1651 = vadd.f32 %v1493, %v1647
        %v1652 = vadd.f32 %v1650, %v913
        %v1653 = vadd.f32 %v1651, %v918
        %v1654 = vmax.f32 %v1652, 0.0
        %v1655 = vadd.f32 %v1654, %v1653
        %v1656 = vmax.f32 %v1655, 0.0
        %v1658 = vcombine.high %v1656, %v1656
        %v1660 = vunpack.c.l.s4 1966171168
        %v1661 = vunpack.c.0.s8 %v1660
        %v1662 = vlaneseq
        %v1663 = vshrl.u32 %v1662, 7
        %v1664 = vsub.s32 %v1661, %v1663
        %v1665 = vrot.slane %v1656, %v1664
        %v1667 = vunpack.c.l.s4 1966171168
        %v1668 = vunpack.c.0.s8 %v1667
        %v1669 = vlaneseq
        %v1670 = vshrl.u32 %v1669, 7
        %v1671 = vsub.s32 %v1668, %v1670
        %v1672 = vrot.slane %v1658, %v1671
        %v1673 = vcombine.high %v1665, %v1665
        %v1674 = vcombine.high %v1672, %v1672
        %v1676 = vunpack.c.l.s4 1966171168
        %v1677 = vunpack.c.0.s8 %v1676
        %v1678 = vlaneseq
        %v1679 = vshrl.u32 %v1678, 7
        %v1680 = vsub.s32 %v1677, %v1679
        %v1681 = vrot.slane %v1665, %v1680
        %v1683 = vunpack.c.l.s4 1966171168
        %v1684 = vunpack.c.0.s8 %v1683
        %v1685 = vlaneseq
        %v1686 = vshrl.u32 %v1685, 7
        %v1687 = vsub.s32 %v1684, %v1686
        %v1688 = vrot.slane %v1672, %v1687
        %v1690 = vunpack.c.l.s4 1966171168
        %v1691 = vunpack.c.0.s8 %v1690
        %v1692 = vlaneseq
        %v1693 = vshrl.u32 %v1692, 7
        %v1694 = vsub.s32 %v1691, %v1693
        %v1695 = vrot.slane %v1673, %v1694
        %v1697 = vunpack.c.l.s4 1966171168
        %v1698 = vunpack.c.0.s8 %v1697
        %v1699 = vlaneseq
        %v1700 = vshrl.u32 %v1699, 7
        %v1701 = vsub.s32 %v1698, %v1700
        %v1702 = vrot.slane %v1674, %v1701
        %v1703 = vcombine.high %v1681, %v1681
        %v1704 = vcombine.high %v1688, %v1688
        %v1705 = vcombine.high %v1695, %v1695
        %v1706 = vcombine.high %v1702, %v1702
        %1715 = vst.msk [vmem:[%s218 + $0x1] sm:$0x1] %vm983, %v1681
        %1716 = vst.msk [vmem:[%s218 + $0x9] sm:$0x1] %vm983, %v1695
        %1717 = vst.msk [vmem:[%s218 + $0x11] sm:$0x1] %vm983, %v1703
        %1718 = vst.msk [vmem:[%s218 + $0x19] sm:$0x1] %vm983, %v1705
        %1719 = vst.msk [vmem:[%s218 + $0x21] sm:$0x1] %vm983, %v1688
        %1720 = vst.msk [vmem:[%s218 + $0x29] sm:$0x1] %vm983, %v1702
        %1721 = vst.msk [vmem:[%s218 + $0x31] sm:$0x1] %vm983, %v1704
        %1722 = vst.msk [vmem:[%s218 + $0x39] sm:$0x1] %vm983, %v1706
        %v1723 = vld [vmem:[%s196 + $0x4] sm:$0x1]
        %v1724 = vld [vmem:[%s196 + $0x14] sm:$0x1]
        %v1725 = vld [vmem:[%s196 + $0x24] sm:$0x1]
        %v1726 = vld [vmem:[%s196 + $0x34] sm:$0x1]
        %v1731 = vrot.slane %v1724, 7
        %v1732 = vsel %vm250, %v1731, %v1723
        %v1733 = vrot.slane %v1725, 6
        %v1734 = vsel %vm253, %v1733, %v1732
        %v1735 = vrot.slane %v1726, 5
        %v1736 = vsel %vm256, %v1735, %v1734
        %v1737 = vsel %vm258, %v1736, 0
        %1739 = vmatprep.subr.mxu0 0.0
        %1740 = vmatpush1.msra.mxu0 0.0
        %1741 = vmatprep.subr.mxu0 0.0
        %1742 = vmatpush1.msra.mxu0 0.0
        %1743 = vmatprep.subr.mxu0 0.0
        %1744 = vmatpush1.msra.mxu0 0.0
        %1745 = vmatprep.subr.mxu0 0.0
        %1746 = vmatpush1.msra.mxu0 0.0
        %1747 = vmatprep.subr.mxu0 0.0
        %1748 = vmatpush1.msra.mxu0 0.0
        %1749 = vmatprep.subr.mxu0 0.0
        %1750 = vmatpush1.msra.mxu0 0.0
        %1751 = vmatprep.subr.mxu0 0.0
        %1752 = vmatpush1.msra.mxu0 0.0
        %1753 = vmatprep.subr.mxu0 0.0
        %1754 = vmatpush1.msra.mxu0 0.0
        %1755 = vmatprep.subr.mxu0 0.0
        %1756 = vmatpush1.msra.mxu0 0.0
        %1757 = vmatprep.subr.mxu0 0.0
        %1758 = vmatpush1.msra.mxu0 0.0
        %1759 = vmatprep.subr.mxu0 0.0
        %1760 = vmatpush1.msra.mxu0 0.0
        %1761 = vmatprep.subr.mxu0 0.0
        %1762 = vmatpush1.msra.mxu0 0.0
        %1763 = vmatprep.subr.mxu0 0.0
        %1764 = vmatpush1.msra.mxu0 0.0
        %1765 = vmatprep.subr.mxu0 0.0
        %1766 = vmatpush1.msra.mxu0 0.0
        %1767 = vmatprep.subr.mxu0 0.0
        %1768 = vmatpush1.msra.mxu0 %v231
        %1769 = vmatprep.subr.mxu0 0.0
        %1770 = vmatpush1.msra.mxu0 %v230
        %1771 = vmatprep.subr.mxu0 0.0
        %1772 = vmatpush2.msra.mxu0 0.0
        %1773 = vmatprep.subr.mxu0 0.0
        %1774 = vmatpush2.msra.mxu0 0.0
        %1775 = vmatprep.subr.mxu0 0.0
        %1776 = vmatpush2.msra.mxu0 0.0
        %1777 = vmatprep.subr.mxu0 0.0
        %1778 = vmatpush2.msra.mxu0 0.0
        %1779 = vmatprep.subr.mxu0 0.0
        %1780 = vmatpush2.msra.mxu0 0.0
        %1781 = vmatprep.subr.mxu0 0.0
        %1782 = vmatpush2.msra.mxu0 0.0
        %1783 = vmatprep.subr.mxu0 0.0
        %1784 = vmatpush2.msra.mxu0 0.0
        %1785 = vmatprep.subr.mxu0 0.0
        %1786 = vmatpush2.msra.mxu0 0.0
        %1787 = vmatprep.subr.mxu0 0.0
        %1788 = vmatpush2.msra.mxu0 0.0
        %1789 = vmatprep.subr.mxu0 0.0
        %1790 = vmatpush2.msra.mxu0 0.0
        %1791 = vmatprep.subr.mxu0 0.0
        %1792 = vmatpush2.msra.mxu0 0.0
        %1793 = vmatprep.subr.mxu0 0.0
        %1794 = vmatpush2.msra.mxu0 0.0
        %1795 = vmatprep.subr.mxu0 0.0
        %1796 = vmatpush2.msra.mxu0 0.0
        %1797 = vmatprep.subr.mxu0 0.0
        %1798 = vmatpush2.msra.mxu0 0.0
        %1799 = vmatprep.subr.mxu0 0.0
        %1800 = vmatpush2.msra.mxu0 0.0
        %1801 = vmatprep.subr.mxu0 0.0
        %1802 = vmatpush2.msra.mxu0 0.0
        %1803 = vmatprep.mubr.f32.mxu0 0.0
        %1804 = vmatmul.mubr.f32.gmra.mxu0 %v1737
        %v1805 = vpop.f32.mrf.mxu0
        %v1806 = vadd.f32 0.0, %v1805
        %v1807 = vpop.f32.mrf.mxu0
        %1808 = vdwg.mxu0
        %v1809 = vld [vmem:[%s1] sm:$0xff]
        %v1810 = vld [vmem:[%s1 + $0x8] sm:$0xff]
        %1811 = vmatprep.subr.mxu0 0.0
        %1812 = vmatpush1.msra.mxu0 0.0
        %1813 = vmatprep.subr.mxu0 0.0
        %1814 = vmatpush1.msra.mxu0 0.0
        %1815 = vmatprep.subr.mxu0 0.0
        %1816 = vmatpush1.msra.mxu0 0.0
        %1817 = vmatprep.subr.mxu0 0.0
        %1818 = vmatpush1.msra.mxu0 0.0
        %1819 = vmatprep.subr.mxu0 0.0
        %1820 = vmatpush1.msra.mxu0 0.0
        %1821 = vmatprep.subr.mxu0 0.0
        %1822 = vmatpush1.msra.mxu0 0.0
        %1823 = vmatprep.subr.mxu0 0.0
        %1824 = vmatpush1.msra.mxu0 0.0
        %1825 = vmatprep.subr.mxu0 0.0
        %1826 = vmatpush1.msra.mxu0 0.0
        %1827 = vmatprep.subr.mxu0 0.0
        %1828 = vmatpush1.msra.mxu0 0.0
        %1829 = vmatprep.subr.mxu0 0.0
        %1830 = vmatpush1.msra.mxu0 0.0
        %1831 = vmatprep.subr.mxu0 0.0
        %1832 = vmatpush1.msra.mxu0 0.0
        %1833 = vmatprep.subr.mxu0 0.0
        %1834 = vmatpush1.msra.mxu0 0.0
        %1835 = vmatprep.subr.mxu0 0.0
        %1836 = vmatpush1.msra.mxu0 0.0
        %1837 = vmatprep.subr.mxu0 0.0
        %1838 = vmatpush1.msra.mxu0 0.0
        %1839 = vmatprep.subr.mxu0 0.0
        %1840 = vmatpush1.msra.mxu0 %v238
        %1841 = vmatprep.subr.mxu0 0.0
        %1842 = vmatpush1.msra.mxu0 %v237
        %1843 = vmatprep.subr.mxu0 0.0
        %1844 = vmatpush2.msra.mxu0 0.0
        %1845 = vmatprep.subr.mxu0 0.0
        %1846 = vmatpush2.msra.mxu0 0.0
        %1847 = vmatprep.subr.mxu0 0.0
        %1848 = vmatpush2.msra.mxu0 0.0
        %1849 = vmatprep.subr.mxu0 0.0
        %1850 = vmatpush2.msra.mxu0 0.0
        %1851 = vmatprep.subr.mxu0 0.0
        %1852 = vmatpush2.msra.mxu0 0.0
        %1853 = vmatprep.subr.mxu0 0.0
        %1854 = vmatpush2.msra.mxu0 0.0
        %1855 = vmatprep.subr.mxu0 0.0
        %1856 = vmatpush2.msra.mxu0 0.0
        %1857 = vmatprep.subr.mxu0 0.0
        %1858 = vmatpush2.msra.mxu0 0.0
        %1859 = vmatprep.subr.mxu0 0.0
        %1860 = vmatpush2.msra.mxu0 0.0
        %1861 = vmatprep.subr.mxu0 0.0
        %1862 = vmatpush2.msra.mxu0 0.0
        %1863 = vmatprep.subr.mxu0 0.0
        %1864 = vmatpush2.msra.mxu0 0.0
        %1865 = vmatprep.subr.mxu0 0.0
        %1866 = vmatpush2.msra.mxu0 0.0
        %1867 = vmatprep.subr.mxu0 0.0
        %1868 = vmatpush2.msra.mxu0 0.0
        %1869 = vmatprep.subr.mxu0 0.0
        %1870 = vmatpush2.msra.mxu0 0.0
        %1871 = vmatprep.subr.mxu0 0.0
        %1872 = vmatpush2.msra.mxu0 0.0
        %1873 = vmatprep.subr.mxu0 0.0
        %1874 = vmatpush2.msra.mxu0 0.0
        %1875 = vmatprep.mubr.f32.mxu0 0.0
        %1876 = vmatmul.mubr.f32.gmra.mxu0 %v1737
        %v1877 = vpop.f32.mrf.mxu0
        %v1878 = vadd.f32 0.0, %v1877
        %v1879 = vpop.f32.mrf.mxu0
        %1880 = vdwg.mxu0
        %v1881 = vld [vmem:[%s403] sm:$0xff]
        %v1882 = vld [vmem:[%s403 + $0x8] sm:$0xff]
        %v1884 = vsel %vm406, %v1881, 0
        %v1887 = vsel %vm406, %v1882, 0
        %v1890 = vsel %vm413, %v1878, 0
        %1892 = vmatprep.subr.mxu0 0.0
        %1893 = vmatpush1.msra.mxu0 0.0
        %1894 = vmatprep.subr.mxu0 0.0
        %1895 = vmatpush1.msra.mxu0 0.0
        %1896 = vmatprep.subr.mxu0 0.0
        %1897 = vmatpush1.msra.mxu0 0.0
        %1898 = vmatprep.subr.mxu0 0.0
        %1899 = vmatpush1.msra.mxu0 0.0
        %1900 = vmatprep.subr.mxu0 0.0
        %1901 = vmatpush1.msra.mxu0 0.0
        %1902 = vmatprep.subr.mxu0 0.0
        %1903 = vmatpush1.msra.mxu0 0.0
        %1904 = vmatprep.subr.mxu0 0.0
        %1905 = vmatpush1.msra.mxu0 0.0
        %1906 = vmatprep.subr.mxu0 0.0
        %1907 = vmatpush1.msra.mxu0 0.0
        %1908 = vmatprep.subr.mxu0 0.0
        %1909 = vmatpush1.msra.mxu0 0.0
        %1910 = vmatprep.subr.mxu0 0.0
        %1911 = vmatpush1.msra.mxu0 0.0
        %1912 = vmatprep.subr.mxu0 0.0
        %1913 = vmatpush1.msra.mxu0 0.0
        %1914 = vmatprep.subr.mxu0 0.0
        %1915 = vmatpush1.msra.mxu0 0.0
        %1916 = vmatprep.subr.mxu0 0.0
        %1917 = vmatpush1.msra.mxu0 0.0
        %1918 = vmatprep.subr.mxu0 0.0
        %1919 = vmatpush1.msra.mxu0 0.0
        %1920 = vmatprep.subr.mxu0 0.0
        %1921 = vmatpush1.msra.mxu0 0.0
        %1922 = vmatprep.subr.mxu0 0.0
        %1923 = vmatpush1.msra.mxu0 %v1890
        %1924 = vmatprep.subr.mxu0 0.0
        %1925 = vmatpush2.msra.mxu0 0.0
        %1926 = vmatprep.subr.mxu0 0.0
        %1927 = vmatpush2.msra.mxu0 0.0
        %1928 = vmatprep.subr.mxu0 0.0
        %1929 = vmatpush2.msra.mxu0 0.0
        %1930 = vmatprep.subr.mxu0 0.0
        %1931 = vmatpush2.msra.mxu0 0.0
        %1932 = vmatprep.subr.mxu0 0.0
        %1933 = vmatpush2.msra.mxu0 0.0
        %1934 = vmatprep.subr.mxu0 0.0
        %1935 = vmatpush2.msra.mxu0 0.0
        %1936 = vmatprep.subr.mxu0 0.0
        %1937 = vmatpush2.msra.mxu0 0.0
        %1938 = vmatprep.subr.mxu0 0.0
        %1939 = vmatpush2.msra.mxu0 0.0
        %1940 = vmatprep.subr.mxu0 0.0
        %1941 = vmatpush2.msra.mxu0 0.0
        %1942 = vmatprep.subr.mxu0 0.0
        %1943 = vmatpush2.msra.mxu0 0.0
        %1944 = vmatprep.subr.mxu0 0.0
        %1945 = vmatpush2.msra.mxu0 0.0
        %1946 = vmatprep.subr.mxu0 0.0
        %1947 = vmatpush2.msra.mxu0 0.0
        %1948 = vmatprep.subr.mxu0 0.0
        %1949 = vmatpush2.msra.mxu0 0.0
        %1950 = vmatprep.subr.mxu0 0.0
        %1951 = vmatpush2.msra.mxu0 0.0
        %1952 = vmatprep.subr.mxu0 0.0
        %1953 = vmatpush2.msra.mxu0 0.0
        %1954 = vmatprep.subr.mxu0 0.0
        %1955 = vmatpush2.msra.mxu0 0.0
        %1956 = vmatprep.mubr.f32.mxu0 0.0
        %1957 = vmatmul.mubr.f32.gmra.mxu0 %v1884
        %v1958 = vpop.f32.mrf.mxu0
        %v1959 = vadd.f32 0.0, %v1958
        %v1960 = vpop.f32.mrf.mxu0
        %1961 = vmatprep.mubr.f32.mxu0 0.0
        %1962 = vmatmul.mubr.f32.gmra.mxu0 %v1887
        %v1963 = vpop.f32.mrf.mxu0
        %v1964 = vadd.f32 0.0, %v1963
        %v1965 = vpop.f32.mrf.mxu0
        %1966 = vdwg.mxu0
        %v1968 = vsel %vm406, %v1809, 0
        %v1971 = vsel %vm406, %v1810, 0
        %v1974 = vsel %vm413, %v1806, 0
        %1976 = vmatprep.subr.mxu0 0.0
        %1977 = vmatpush1.msra.mxu0 0.0
        %1978 = vmatprep.subr.mxu0 0.0
        %1979 = vmatpush1.msra.mxu0 0.0
        %1980 = vmatprep.subr.mxu0 0.0
        %1981 = vmatpush1.msra.mxu0 0.0
        %1982 = vmatprep.subr.mxu0 0.0
        %1983 = vmatpush1.msra.mxu0 0.0
        %1984 = vmatprep.subr.mxu0 0.0
        %1985 = vmatpush1.msra.mxu0 0.0
        %1986 = vmatprep.subr.mxu0 0.0
        %1987 = vmatpush1.msra.mxu0 0.0
        %1988 = vmatprep.subr.mxu0 0.0
        %1989 = vmatpush1.msra.mxu0 0.0
        %1990 = vmatprep.subr.mxu0 0.0
        %1991 = vmatpush1.msra.mxu0 0.0
        %1992 = vmatprep.subr.mxu0 0.0
        %1993 = vmatpush1.msra.mxu0 0.0
        %1994 = vmatprep.subr.mxu0 0.0
        %1995 = vmatpush1.msra.mxu0 0.0
        %1996 = vmatprep.subr.mxu0 0.0
        %1997 = vmatpush1.msra.mxu0 0.0
        %1998 = vmatprep.subr.mxu0 0.0
        %1999 = vmatpush1.msra.mxu0 0.0
        %2000 = vmatprep.subr.mxu0 0.0
        %2001 = vmatpush1.msra.mxu0 0.0
        %2002 = vmatprep.subr.mxu0 0.0
        %2003 = vmatpush1.msra.mxu0 0.0
        %2004 = vmatprep.subr.mxu0 0.0
        %2005 = vmatpush1.msra.mxu0 0.0
        %2006 = vmatprep.subr.mxu0 0.0
        %2007 = vmatpush1.msra.mxu0 %v1974
        %2008 = vmatprep.subr.mxu0 0.0
        %2009 = vmatpush2.msra.mxu0 0.0
        %2010 = vmatprep.subr.mxu0 0.0
        %2011 = vmatpush2.msra.mxu0 0.0
        %2012 = vmatprep.subr.mxu0 0.0
        %2013 = vmatpush2.msra.mxu0 0.0
        %2014 = vmatprep.subr.mxu0 0.0
        %2015 = vmatpush2.msra.mxu0 0.0
        %2016 = vmatprep.subr.mxu0 0.0
        %2017 = vmatpush2.msra.mxu0 0.0
        %2018 = vmatprep.subr.mxu0 0.0
        %2019 = vmatpush2.msra.mxu0 0.0
        %2020 = vmatprep.subr.mxu0 0.0
        %2021 = vmatpush2.msra.mxu0 0.0
        %2022 = vmatprep.subr.mxu0 0.0
        %2023 = vmatpush2.msra.mxu0 0.0
        %2024 = vmatprep.subr.mxu0 0.0
        %2025 = vmatpush2.msra.mxu0 0.0
        %2026 = vmatprep.subr.mxu0 0.0
        %2027 = vmatpush2.msra.mxu0 0.0
        %2028 = vmatprep.subr.mxu0 0.0
        %2029 = vmatpush2.msra.mxu0 0.0
        %2030 = vmatprep.subr.mxu0 0.0
        %2031 = vmatpush2.msra.mxu0 0.0
        %2032 = vmatprep.subr.mxu0 0.0
        %2033 = vmatpush2.msra.mxu0 0.0
        %2034 = vmatprep.subr.mxu0 0.0
        %2035 = vmatpush2.msra.mxu0 0.0
        %2036 = vmatprep.subr.mxu0 0.0
        %2037 = vmatpush2.msra.mxu0 0.0
        %2038 = vmatprep.subr.mxu0 0.0
        %2039 = vmatpush2.msra.mxu0 0.0
        %2040 = vmatprep.mubr.f32.mxu0 0.0
        %2041 = vmatmul.mubr.f32.gmra.mxu0 %v1968
        %v2042 = vpop.f32.mrf.mxu0
        %v2043 = vadd.f32 %v1959, %v2042
        %v2044 = vpop.f32.mrf.mxu0
        %2045 = vmatprep.mubr.f32.mxu0 0.0
        %2046 = vmatmul.mubr.f32.gmra.mxu0 %v1971
        %v2047 = vpop.f32.mrf.mxu0
        %v2048 = vadd.f32 %v1964, %v2047
        %v2049 = vpop.f32.mrf.mxu0
        %2050 = vdwg.mxu0
        %v2051 = vld [vmem:[%s196 + $0x5] sm:$0x1]
        %v2052 = vld [vmem:[%s196 + $0x15] sm:$0x1]
        %v2053 = vld [vmem:[%s196 + $0x25] sm:$0x1]
        %v2054 = vld [vmem:[%s196 + $0x35] sm:$0x1]
        %v2059 = vrot.slane %v2052, 7
        %v2060 = vsel %vm250, %v2059, %v2051
        %v2061 = vrot.slane %v2053, 6
        %v2062 = vsel %vm253, %v2061, %v2060
        %v2063 = vrot.slane %v2054, 5
        %v2064 = vsel %vm256, %v2063, %v2062
        %v2065 = vsel %vm258, %v2064, 0
        %2067 = vmatprep.subr.mxu0 0.0
        %2068 = vmatpush1.msra.mxu0 0.0
        %2069 = vmatprep.subr.mxu0 0.0
        %2070 = vmatpush1.msra.mxu0 0.0
        %2071 = vmatprep.subr.mxu0 0.0
        %2072 = vmatpush1.msra.mxu0 0.0
        %2073 = vmatprep.subr.mxu0 0.0
        %2074 = vmatpush1.msra.mxu0 0.0
        %2075 = vmatprep.subr.mxu0 0.0
        %2076 = vmatpush1.msra.mxu0 0.0
        %2077 = vmatprep.subr.mxu0 0.0
        %2078 = vmatpush1.msra.mxu0 0.0
        %2079 = vmatprep.subr.mxu0 0.0
        %2080 = vmatpush1.msra.mxu0 0.0
        %2081 = vmatprep.subr.mxu0 0.0
        %2082 = vmatpush1.msra.mxu0 0.0
        %2083 = vmatprep.subr.mxu0 0.0
        %2084 = vmatpush1.msra.mxu0 0.0
        %2085 = vmatprep.subr.mxu0 0.0
        %2086 = vmatpush1.msra.mxu0 0.0
        %2087 = vmatprep.subr.mxu0 0.0
        %2088 = vmatpush1.msra.mxu0 0.0
        %2089 = vmatprep.subr.mxu0 0.0
        %2090 = vmatpush1.msra.mxu0 0.0
        %2091 = vmatprep.subr.mxu0 0.0
        %2092 = vmatpush1.msra.mxu0 0.0
        %2093 = vmatprep.subr.mxu0 0.0
        %2094 = vmatpush1.msra.mxu0 0.0
        %2095 = vmatprep.subr.mxu0 0.0
        %2096 = vmatpush1.msra.mxu0 %v231
        %2097 = vmatprep.subr.mxu0 0.0
        %2098 = vmatpush1.msra.mxu0 %v230
        %2099 = vmatprep.subr.mxu0 0.0
        %2100 = vmatpush2.msra.mxu0 0.0
        %2101 = vmatprep.subr.mxu0 0.0
        %2102 = vmatpush2.msra.mxu0 0.0
        %2103 = vmatprep.subr.mxu0 0.0
        %2104 = vmatpush2.msra.mxu0 0.0
        %2105 = vmatprep.subr.mxu0 0.0
        %2106 = vmatpush2.msra.mxu0 0.0
        %2107 = vmatprep.subr.mxu0 0.0
        %2108 = vmatpush2.msra.mxu0 0.0
        %2109 = vmatprep.subr.mxu0 0.0
        %2110 = vmatpush2.msra.mxu0 0.0
        %2111 = vmatprep.subr.mxu0 0.0
        %2112 = vmatpush2.msra.mxu0 0.0
        %2113 = vmatprep.subr.mxu0 0.0
        %2114 = vmatpush2.msra.mxu0 0.0
        %2115 = vmatprep.subr.mxu0 0.0
        %2116 = vmatpush2.msra.mxu0 0.0
        %2117 = vmatprep.subr.mxu0 0.0
        %2118 = vmatpush2.msra.mxu0 0.0
        %2119 = vmatprep.subr.mxu0 0.0
        %2120 = vmatpush2.msra.mxu0 0.0
        %2121 = vmatprep.subr.mxu0 0.0
        %2122 = vmatpush2.msra.mxu0 0.0
        %2123 = vmatprep.subr.mxu0 0.0
        %2124 = vmatpush2.msra.mxu0 0.0
        %2125 = vmatprep.subr.mxu0 0.0
        %2126 = vmatpush2.msra.mxu0 0.0
        %2127 = vmatprep.subr.mxu0 0.0
        %2128 = vmatpush2.msra.mxu0 0.0
        %2129 = vmatprep.subr.mxu0 0.0
        %2130 = vmatpush2.msra.mxu0 0.0
        %2131 = vmatprep.mubr.f32.mxu0 0.0
        %2132 = vmatmul.mubr.f32.gmra.mxu0 %v2065
        %v2133 = vpop.f32.mrf.mxu0
        %v2134 = vadd.f32 0.0, %v2133
        %v2135 = vpop.f32.mrf.mxu0
        %2136 = vdwg.mxu0
        %v2137 = vld [vmem:[%s662] sm:$0xff]
        %v2138 = vld [vmem:[%s662 + $0x8] sm:$0xff]
        %v2140 = vsel %vm406, %v2137, 0
        %v2143 = vsel %vm406, %v2138, 0
        %v2146 = vsel %vm413, %v2134, 0
        %2148 = vmatprep.subr.mxu0 0.0
        %2149 = vmatpush1.msra.mxu0 0.0
        %2150 = vmatprep.subr.mxu0 0.0
        %2151 = vmatpush1.msra.mxu0 0.0
        %2152 = vmatprep.subr.mxu0 0.0
        %2153 = vmatpush1.msra.mxu0 0.0
        %2154 = vmatprep.subr.mxu0 0.0
        %2155 = vmatpush1.msra.mxu0 0.0
        %2156 = vmatprep.subr.mxu0 0.0
        %2157 = vmatpush1.msra.mxu0 0.0
        %2158 = vmatprep.subr.mxu0 0.0
        %2159 = vmatpush1.msra.mxu0 0.0
        %2160 = vmatprep.subr.mxu0 0.0
        %2161 = vmatpush1.msra.mxu0 0.0
        %2162 = vmatprep.subr.mxu0 0.0
        %2163 = vmatpush1.msra.mxu0 0.0
        %2164 = vmatprep.subr.mxu0 0.0
        %2165 = vmatpush1.msra.mxu0 0.0
        %2166 = vmatprep.subr.mxu0 0.0
        %2167 = vmatpush1.msra.mxu0 0.0
        %2168 = vmatprep.subr.mxu0 0.0
        %2169 = vmatpush1.msra.mxu0 0.0
        %2170 = vmatprep.subr.mxu0 0.0
        %2171 = vmatpush1.msra.mxu0 0.0
        %2172 = vmatprep.subr.mxu0 0.0
        %2173 = vmatpush1.msra.mxu0 0.0
        %2174 = vmatprep.subr.mxu0 0.0
        %2175 = vmatpush1.msra.mxu0 0.0
        %2176 = vmatprep.subr.mxu0 0.0
        %2177 = vmatpush1.msra.mxu0 0.0
        %2178 = vmatprep.subr.mxu0 0.0
        %2179 = vmatpush1.msra.mxu0 %v2146
        %2180 = vmatprep.subr.mxu0 0.0
        %2181 = vmatpush2.msra.mxu0 0.0
        %2182 = vmatprep.subr.mxu0 0.0
        %2183 = vmatpush2.msra.mxu0 0.0
        %2184 = vmatprep.subr.mxu0 0.0
        %2185 = vmatpush2.msra.mxu0 0.0
        %2186 = vmatprep.subr.mxu0 0.0
        %2187 = vmatpush2.msra.mxu0 0.0
        %2188 = vmatprep.subr.mxu0 0.0
        %2189 = vmatpush2.msra.mxu0 0.0
        %2190 = vmatprep.subr.mxu0 0.0
        %2191 = vmatpush2.msra.mxu0 0.0
        %2192 = vmatprep.subr.mxu0 0.0
        %2193 = vmatpush2.msra.mxu0 0.0
        %2194 = vmatprep.subr.mxu0 0.0
        %2195 = vmatpush2.msra.mxu0 0.0
        %2196 = vmatprep.subr.mxu0 0.0
        %2197 = vmatpush2.msra.mxu0 0.0
        %2198 = vmatprep.subr.mxu0 0.0
        %2199 = vmatpush2.msra.mxu0 0.0
        %2200 = vmatprep.subr.mxu0 0.0
        %2201 = vmatpush2.msra.mxu0 0.0
        %2202 = vmatprep.subr.mxu0 0.0
        %2203 = vmatpush2.msra.mxu0 0.0
        %2204 = vmatprep.subr.mxu0 0.0
        %2205 = vmatpush2.msra.mxu0 0.0
        %2206 = vmatprep.subr.mxu0 0.0
        %2207 = vmatpush2.msra.mxu0 0.0
        %2208 = vmatprep.subr.mxu0 0.0
        %2209 = vmatpush2.msra.mxu0 0.0
        %2210 = vmatprep.subr.mxu0 0.0
        %2211 = vmatpush2.msra.mxu0 0.0
        %2212 = vmatprep.mubr.f32.mxu0 0.0
        %2213 = vmatmul.mubr.f32.gmra.mxu0 %v2140
        %v2214 = vpop.f32.mrf.mxu0
        %v2215 = vadd.f32 0.0, %v2214
        %v2216 = vpop.f32.mrf.mxu0
        %2217 = vmatprep.mubr.f32.mxu0 0.0
        %2218 = vmatmul.mubr.f32.gmra.mxu0 %v2143
        %v2219 = vpop.f32.mrf.mxu0
        %v2220 = vadd.f32 0.0, %v2219
        %v2221 = vpop.f32.mrf.mxu0
        %2222 = vdwg.mxu0
        %v2223 = vadd.f32 %v2043, %v2215
        %v2224 = vadd.f32 %v2048, %v2220
        %2225 = vmatprep.subr.mxu0 0.0
        %2226 = vmatpush1.msra.mxu0 0.0
        %2227 = vmatprep.subr.mxu0 0.0
        %2228 = vmatpush1.msra.mxu0 0.0
        %2229 = vmatprep.subr.mxu0 0.0
        %2230 = vmatpush1.msra.mxu0 0.0
        %2231 = vmatprep.subr.mxu0 0.0
        %2232 = vmatpush1.msra.mxu0 0.0
        %2233 = vmatprep.subr.mxu0 0.0
        %2234 = vmatpush1.msra.mxu0 0.0
        %2235 = vmatprep.subr.mxu0 0.0
        %2236 = vmatpush1.msra.mxu0 0.0
        %2237 = vmatprep.subr.mxu0 0.0
        %2238 = vmatpush1.msra.mxu0 0.0
        %2239 = vmatprep.subr.mxu0 0.0
        %2240 = vmatpush1.msra.mxu0 0.0
        %2241 = vmatprep.subr.mxu0 0.0
        %2242 = vmatpush1.msra.mxu0 0.0
        %2243 = vmatprep.subr.mxu0 0.0
        %2244 = vmatpush1.msra.mxu0 0.0
        %2245 = vmatprep.subr.mxu0 0.0
        %2246 = vmatpush1.msra.mxu0 0.0
        %2247 = vmatprep.subr.mxu0 0.0
        %2248 = vmatpush1.msra.mxu0 0.0
        %2249 = vmatprep.subr.mxu0 0.0
        %2250 = vmatpush1.msra.mxu0 0.0
        %2251 = vmatprep.subr.mxu0 0.0
        %2252 = vmatpush1.msra.mxu0 0.0
        %2253 = vmatprep.subr.mxu0 0.0
        %2254 = vmatpush1.msra.mxu0 %v238
        %2255 = vmatprep.subr.mxu0 0.0
        %2256 = vmatpush1.msra.mxu0 %v237
        %2257 = vmatprep.subr.mxu0 0.0
        %2258 = vmatpush2.msra.mxu0 0.0
        %2259 = vmatprep.subr.mxu0 0.0
        %2260 = vmatpush2.msra.mxu0 0.0
        %2261 = vmatprep.subr.mxu0 0.0
        %2262 = vmatpush2.msra.mxu0 0.0
        %2263 = vmatprep.subr.mxu0 0.0
        %2264 = vmatpush2.msra.mxu0 0.0
        %2265 = vmatprep.subr.mxu0 0.0
        %2266 = vmatpush2.msra.mxu0 0.0
        %2267 = vmatprep.subr.mxu0 0.0
        %2268 = vmatpush2.msra.mxu0 0.0
        %2269 = vmatprep.subr.mxu0 0.0
        %2270 = vmatpush2.msra.mxu0 0.0
        %2271 = vmatprep.subr.mxu0 0.0
        %2272 = vmatpush2.msra.mxu0 0.0
        %2273 = vmatprep.subr.mxu0 0.0
        %2274 = vmatpush2.msra.mxu0 0.0
        %2275 = vmatprep.subr.mxu0 0.0
        %2276 = vmatpush2.msra.mxu0 0.0
        %2277 = vmatprep.subr.mxu0 0.0
        %2278 = vmatpush2.msra.mxu0 0.0
        %2279 = vmatprep.subr.mxu0 0.0
        %2280 = vmatpush2.msra.mxu0 0.0
        %2281 = vmatprep.subr.mxu0 0.0
        %2282 = vmatpush2.msra.mxu0 0.0
        %2283 = vmatprep.subr.mxu0 0.0
        %2284 = vmatpush2.msra.mxu0 0.0
        %2285 = vmatprep.subr.mxu0 0.0
        %2286 = vmatpush2.msra.mxu0 0.0
        %2287 = vmatprep.subr.mxu0 0.0
        %2288 = vmatpush2.msra.mxu0 0.0
        %2289 = vmatprep.mubr.f32.mxu0 0.0
        %2290 = vmatmul.mubr.f32.gmra.mxu0 %v2065
        %v2291 = vpop.f32.mrf.mxu0
        %v2292 = vadd.f32 0.0, %v2291
        %v2293 = vpop.f32.mrf.mxu0
        %2294 = vdwg.mxu0
        %v2295 = vld [vmem:[%s821] sm:$0xff]
        %v2296 = vld [vmem:[%s821 + $0x8] sm:$0xff]
        %v2298 = vsel %vm406, %v2295, 0
        %v2301 = vsel %vm406, %v2296, 0
        %v2304 = vsel %vm413, %v2292, 0
        %2306 = vmatprep.subr.mxu0 0.0
        %2307 = vmatpush1.msra.mxu0 0.0
        %2308 = vmatprep.subr.mxu0 0.0
        %2309 = vmatpush1.msra.mxu0 0.0
        %2310 = vmatprep.subr.mxu0 0.0
        %2311 = vmatpush1.msra.mxu0 0.0
        %2312 = vmatprep.subr.mxu0 0.0
        %2313 = vmatpush1.msra.mxu0 0.0
        %2314 = vmatprep.subr.mxu0 0.0
        %2315 = vmatpush1.msra.mxu0 0.0
        %2316 = vmatprep.subr.mxu0 0.0
        %2317 = vmatpush1.msra.mxu0 0.0
        %2318 = vmatprep.subr.mxu0 0.0
        %2319 = vmatpush1.msra.mxu0 0.0
        %2320 = vmatprep.subr.mxu0 0.0
        %2321 = vmatpush1.msra.mxu0 0.0
        %2322 = vmatprep.subr.mxu0 0.0
        %2323 = vmatpush1.msra.mxu0 0.0
        %2324 = vmatprep.subr.mxu0 0.0
        %2325 = vmatpush1.msra.mxu0 0.0
        %2326 = vmatprep.subr.mxu0 0.0
        %2327 = vmatpush1.msra.mxu0 0.0
        %2328 = vmatprep.subr.mxu0 0.0
        %2329 = vmatpush1.msra.mxu0 0.0
        %2330 = vmatprep.subr.mxu0 0.0
        %2331 = vmatpush1.msra.mxu0 0.0
        %2332 = vmatprep.subr.mxu0 0.0
        %2333 = vmatpush1.msra.mxu0 0.0
        %2334 = vmatprep.subr.mxu0 0.0
        %2335 = vmatpush1.msra.mxu0 0.0
        %2336 = vmatprep.subr.mxu0 0.0
        %2337 = vmatpush1.msra.mxu0 %v2304
        %2338 = vmatprep.subr.mxu0 0.0
        %2339 = vmatpush2.msra.mxu0 0.0
        %2340 = vmatprep.subr.mxu0 0.0
        %2341 = vmatpush2.msra.mxu0 0.0
        %2342 = vmatprep.subr.mxu0 0.0
        %2343 = vmatpush2.msra.mxu0 0.0
        %2344 = vmatprep.subr.mxu0 0.0
        %2345 = vmatpush2.msra.mxu0 0.0
        %2346 = vmatprep.subr.mxu0 0.0
        %2347 = vmatpush2.msra.mxu0 0.0
        %2348 = vmatprep.subr.mxu0 0.0
        %2349 = vmatpush2.msra.mxu0 0.0
        %2350 = vmatprep.subr.mxu0 0.0
        %2351 = vmatpush2.msra.mxu0 0.0
        %2352 = vmatprep.subr.mxu0 0.0
        %2353 = vmatpush2.msra.mxu0 0.0
        %2354 = vmatprep.subr.mxu0 0.0
        %2355 = vmatpush2.msra.mxu0 0.0
        %2356 = vmatprep.subr.mxu0 0.0
        %2357 = vmatpush2.msra.mxu0 0.0
        %2358 = vmatprep.subr.mxu0 0.0
        %2359 = vmatpush2.msra.mxu0 0.0
        %2360 = vmatprep.subr.mxu0 0.0
        %2361 = vmatpush2.msra.mxu0 0.0
        %2362 = vmatprep.subr.mxu0 0.0
        %2363 = vmatpush2.msra.mxu0 0.0
        %2364 = vmatprep.subr.mxu0 0.0
        %2365 = vmatpush2.msra.mxu0 0.0
        %2366 = vmatprep.subr.mxu0 0.0
        %2367 = vmatpush2.msra.mxu0 0.0
        %2368 = vmatprep.subr.mxu0 0.0
        %2369 = vmatpush2.msra.mxu0 0.0
        %2370 = vmatprep.mubr.f32.mxu0 0.0
        %2371 = vmatmul.mubr.f32.gmra.mxu0 %v2298
        %v2372 = vpop.f32.mrf.mxu0
        %v2373 = vadd.f32 0.0, %v2372
        %v2374 = vpop.f32.mrf.mxu0
        %2375 = vmatprep.mubr.f32.mxu0 0.0
        %2376 = vmatmul.mubr.f32.gmra.mxu0 %v2301
        %v2377 = vpop.f32.mrf.mxu0
        %v2378 = vadd.f32 0.0, %v2377
        %v2379 = vpop.f32.mrf.mxu0
        %2380 = vdwg.mxu0
        %v2381 = vadd.f32 %v2223, %v2373
        %v2382 = vadd.f32 %v2224, %v2378
        %v2383 = vadd.f32 %v2381, %v913
        %v2384 = vadd.f32 %v2382, %v918
        %v2385 = vmax.f32 %v2383, 0.0
        %v2386 = vadd.f32 %v2385, %v2384
        %v2387 = vmax.f32 %v2386, 0.0
        %v2389 = vcombine.high %v2387, %v2387
        %v2391 = vunpack.c.l.s4 1966171168
        %v2392 = vunpack.c.0.s8 %v2391
        %v2393 = vlaneseq
        %v2394 = vshrl.u32 %v2393, 7
        %v2395 = vsub.s32 %v2392, %v2394
        %v2396 = vrot.slane %v2387, %v2395
        %v2398 = vunpack.c.l.s4 1966171168
        %v2399 = vunpack.c.0.s8 %v2398
        %v2400 = vlaneseq
        %v2401 = vshrl.u32 %v2400, 7
        %v2402 = vsub.s32 %v2399, %v2401
        %v2403 = vrot.slane %v2389, %v2402
        %v2404 = vcombine.high %v2396, %v2396
        %v2405 = vcombine.high %v2403, %v2403
        %v2407 = vunpack.c.l.s4 1966171168
        %v2408 = vunpack.c.0.s8 %v2407
        %v2409 = vlaneseq
        %v2410 = vshrl.u32 %v2409, 7
        %v2411 = vsub.s32 %v2408, %v2410
        %v2412 = vrot.slane %v2396, %v2411
        %v2414 = vunpack.c.l.s4 1966171168
        %v2415 = vunpack.c.0.s8 %v2414
        %v2416 = vlaneseq
        %v2417 = vshrl.u32 %v2416, 7
        %v2418 = vsub.s32 %v2415, %v2417
        %v2419 = vrot.slane %v2403, %v2418
        %v2421 = vunpack.c.l.s4 1966171168
        %v2422 = vunpack.c.0.s8 %v2421
        %v2423 = vlaneseq
        %v2424 = vshrl.u32 %v2423, 7
        %v2425 = vsub.s32 %v2422, %v2424
        %v2426 = vrot.slane %v2404, %v2425
        %v2428 = vunpack.c.l.s4 1966171168
        %v2429 = vunpack.c.0.s8 %v2428
        %v2430 = vlaneseq
        %v2431 = vshrl.u32 %v2430, 7
        %v2432 = vsub.s32 %v2429, %v2431
        %v2433 = vrot.slane %v2405, %v2432
        %v2434 = vcombine.high %v2412, %v2412
        %v2435 = vcombine.high %v2419, %v2419
        %v2436 = vcombine.high %v2426, %v2426
        %v2437 = vcombine.high %v2433, %v2433
        %2446 = vst.msk [vmem:[%s218 + $0x2] sm:$0x1] %vm983, %v2412
        %2447 = vst.msk [vmem:[%s218 + $0xa] sm:$0x1] %vm983, %v2426
        %2448 = vst.msk [vmem:[%s218 + $0x12] sm:$0x1] %vm983, %v2434
        %2449 = vst.msk [vmem:[%s218 + $0x1a] sm:$0x1] %vm983, %v2436
        %2450 = vst.msk [vmem:[%s218 + $0x22] sm:$0x1] %vm983, %v2419
        %2451 = vst.msk [vmem:[%s218 + $0x2a] sm:$0x1] %vm983, %v2433
        %2452 = vst.msk [vmem:[%s218 + $0x32] sm:$0x1] %vm983, %v2435
        %2453 = vst.msk [vmem:[%s218 + $0x3a] sm:$0x1] %vm983, %v2437
        %v2454 = vld [vmem:[%s196 + $0x6] sm:$0x1]
        %v2455 = vld [vmem:[%s196 + $0x16] sm:$0x1]
        %v2456 = vld [vmem:[%s196 + $0x26] sm:$0x1]
        %v2457 = vld [vmem:[%s196 + $0x36] sm:$0x1]
        %v2462 = vrot.slane %v2455, 7
        %v2463 = vsel %vm250, %v2462, %v2454
        %v2464 = vrot.slane %v2456, 6
        %v2465 = vsel %vm253, %v2464, %v2463
        %v2466 = vrot.slane %v2457, 5
        %v2467 = vsel %vm256, %v2466, %v2465
        %v2468 = vsel %vm258, %v2467, 0
        %2470 = vmatprep.subr.mxu0 0.0
        %2471 = vmatpush1.msra.mxu0 0.0
        %2472 = vmatprep.subr.mxu0 0.0
        %2473 = vmatpush1.msra.mxu0 0.0
        %2474 = vmatprep.subr.mxu0 0.0
        %2475 = vmatpush1.msra.mxu0 0.0
        %2476 = vmatprep.subr.mxu0 0.0
        %2477 = vmatpush1.msra.mxu0 0.0
        %2478 = vmatprep.subr.mxu0 0.0
        %2479 = vmatpush1.msra.mxu0 0.0
        %2480 = vmatprep.subr.mxu0 0.0
        %2481 = vmatpush1.msra.mxu0 0.0
        %2482 = vmatprep.subr.mxu0 0.0
        %2483 = vmatpush1.msra.mxu0 0.0
        %2484 = vmatprep.subr.mxu0 0.0
        %2485 = vmatpush1.msra.mxu0 0.0
        %2486 = vmatprep.subr.mxu0 0.0
        %2487 = vmatpush1.msra.mxu0 0.0
        %2488 = vmatprep.subr.mxu0 0.0
        %2489 = vmatpush1.msra.mxu0 0.0
        %2490 = vmatprep.subr.mxu0 0.0
        %2491 = vmatpush1.msra.mxu0 0.0
        %2492 = vmatprep.subr.mxu0 0.0
        %2493 = vmatpush1.msra.mxu0 0.0
        %2494 = vmatprep.subr.mxu0 0.0
        %2495 = vmatpush1.msra.mxu0 0.0
        %2496 = vmatprep.subr.mxu0 0.0
        %2497 = vmatpush1.msra.mxu0 0.0
        %2498 = vmatprep.subr.mxu0 0.0
        %2499 = vmatpush1.msra.mxu0 %v231
        %2500 = vmatprep.subr.mxu0 0.0
        %2501 = vmatpush1.msra.mxu0 %v230
        %2502 = vmatprep.subr.mxu0 0.0
        %2503 = vmatpush2.msra.mxu0 0.0
        %2504 = vmatprep.subr.mxu0 0.0
        %2505 = vmatpush2.msra.mxu0 0.0
        %2506 = vmatprep.subr.mxu0 0.0
        %2507 = vmatpush2.msra.mxu0 0.0
        %2508 = vmatprep.subr.mxu0 0.0
        %2509 = vmatpush2.msra.mxu0 0.0
        %2510 = vmatprep.subr.mxu0 0.0
        %2511 = vmatpush2.msra.mxu0 0.0
        %2512 = vmatprep.subr.mxu0 0.0
        %2513 = vmatpush2.msra.mxu0 0.0
        %2514 = vmatprep.subr.mxu0 0.0
        %2515 = vmatpush2.msra.mxu0 0.0
        %2516 = vmatprep.subr.mxu0 0.0
        %2517 = vmatpush2.msra.mxu0 0.0
        %2518 = vmatprep.subr.mxu0 0.0
        %2519 = vmatpush2.msra.mxu0 0.0
        %2520 = vmatprep.subr.mxu0 0.0
        %2521 = vmatpush2.msra.mxu0 0.0
        %2522 = vmatprep.subr.mxu0 0.0
        %2523 = vmatpush2.msra.mxu0 0.0
        %2524 = vmatprep.subr.mxu0 0.0
        %2525 = vmatpush2.msra.mxu0 0.0
        %2526 = vmatprep.subr.mxu0 0.0
        %2527 = vmatpush2.msra.mxu0 0.0
        %2528 = vmatprep.subr.mxu0 0.0
        %2529 = vmatpush2.msra.mxu0 0.0
        %2530 = vmatprep.subr.mxu0 0.0
        %2531 = vmatpush2.msra.mxu0 0.0
        %2532 = vmatprep.subr.mxu0 0.0
        %2533 = vmatpush2.msra.mxu0 0.0
        %2534 = vmatprep.mubr.f32.mxu0 0.0
        %2535 = vmatmul.mubr.f32.gmra.mxu0 %v2468
        %v2536 = vpop.f32.mrf.mxu0
        %v2537 = vadd.f32 0.0, %v2536
        %v2538 = vpop.f32.mrf.mxu0
        %2539 = vdwg.mxu0
        %v2540 = vld [vmem:[%s1] sm:$0xff]
        %v2541 = vld [vmem:[%s1 + $0x8] sm:$0xff]
        %2542 = vmatprep.subr.mxu0 0.0
        %2543 = vmatpush1.msra.mxu0 0.0
        %2544 = vmatprep.subr.mxu0 0.0
        %2545 = vmatpush1.msra.mxu0 0.0
        %2546 = vmatprep.subr.mxu0 0.0
        %2547 = vmatpush1.msra.mxu0 0.0
        %2548 = vmatprep.subr.mxu0 0.0
        %2549 = vmatpush1.msra.mxu0 0.0
        %2550 = vmatprep.subr.mxu0 0.0
        %2551 = vmatpush1.msra.mxu0 0.0
        %2552 = vmatprep.subr.mxu0 0.0
        %2553 = vmatpush1.msra.mxu0 0.0
        %2554 = vmatprep.subr.mxu0 0.0
        %2555 = vmatpush1.msra.mxu0 0.0
        %2556 = vmatprep.subr.mxu0 0.0
        %2557 = vmatpush1.msra.mxu0 0.0
        %2558 = vmatprep.subr.mxu0 0.0
        %2559 = vmatpush1.msra.mxu0 0.0
        %2560 = vmatprep.subr.mxu0 0.0
        %2561 = vmatpush1.msra.mxu0 0.0
        %2562 = vmatprep.subr.mxu0 0.0
        %2563 = vmatpush1.msra.mxu0 0.0
        %2564 = vmatprep.subr.mxu0 0.0
        %2565 = vmatpush1.msra.mxu0 0.0
        %2566 = vmatprep.subr.mxu0 0.0
        %2567 = vmatpush1.msra.mxu0 0.0
        %2568 = vmatprep.subr.mxu0 0.0
        %2569 = vmatpush1.msra.mxu0 0.0
        %2570 = vmatprep.subr.mxu0 0.0
        %2571 = vmatpush1.msra.mxu0 %v238
        %2572 = vmatprep.subr.mxu0 0.0
        %2573 = vmatpush1.msra.mxu0 %v237
        %2574 = vmatprep.subr.mxu0 0.0
        %2575 = vmatpush2.msra.mxu0 0.0
        %2576 = vmatprep.subr.mxu0 0.0
        %2577 = vmatpush2.msra.mxu0 0.0
        %2578 = vmatprep.subr.mxu0 0.0
        %2579 = vmatpush2.msra.mxu0 0.0
        %2580 = vmatprep.subr.mxu0 0.0
        %2581 = vmatpush2.msra.mxu0 0.0
        %2582 = vmatprep.subr.mxu0 0.0
        %2583 = vmatpush2.msra.mxu0 0.0
        %2584 = vmatprep.subr.mxu0 0.0
        %2585 = vmatpush2.msra.mxu0 0.0
        %2586 = vmatprep.subr.mxu0 0.0
        %2587 = vmatpush2.msra.mxu0 0.0
        %2588 = vmatprep.subr.mxu0 0.0
        %2589 = vmatpush2.msra.mxu0 0.0
        %2590 = vmatprep.subr.mxu0 0.0
        %2591 = vmatpush2.msra.mxu0 0.0
        %2592 = vmatprep.subr.mxu0 0.0
        %2593 = vmatpush2.msra.mxu0 0.0
        %2594 = vmatprep.subr.mxu0 0.0
        %2595 = vmatpush2.msra.mxu0 0.0
        %2596 = vmatprep.subr.mxu0 0.0
        %2597 = vmatpush2.msra.mxu0 0.0
        %2598 = vmatprep.subr.mxu0 0.0
        %2599 = vmatpush2.msra.mxu0 0.0
        %2600 = vmatprep.subr.mxu0 0.0
        %2601 = vmatpush2.msra.mxu0 0.0
        %2602 = vmatprep.subr.mxu0 0.0
        %2603 = vmatpush2.msra.mxu0 0.0
        %2604 = vmatprep.subr.mxu0 0.0
        %2605 = vmatpush2.msra.mxu0 0.0
        %2606 = vmatprep.mubr.f32.mxu0 0.0
        %2607 = vmatmul.mubr.f32.gmra.mxu0 %v2468
        %v2608 = vpop.f32.mrf.mxu0
        %v2609 = vadd.f32 0.0, %v2608
        %v2610 = vpop.f32.mrf.mxu0
        %2611 = vdwg.mxu0
        %v2612 = vld [vmem:[%s403] sm:$0xff]
        %v2613 = vld [vmem:[%s403 + $0x8] sm:$0xff]
        %v2615 = vsel %vm406, %v2612, 0
        %v2618 = vsel %vm406, %v2613, 0
        %v2621 = vsel %vm413, %v2609, 0
        %2623 = vmatprep.subr.mxu0 0.0
        %2624 = vmatpush1.msra.mxu0 0.0
        %2625 = vmatprep.subr.mxu0 0.0
        %2626 = vmatpush1.msra.mxu0 0.0
        %2627 = vmatprep.subr.mxu0 0.0
        %2628 = vmatpush1.msra.mxu0 0.0
        %2629 = vmatprep.subr.mxu0 0.0
        %2630 = vmatpush1.msra.mxu0 0.0
        %2631 = vmatprep.subr.mxu0 0.0
        %2632 = vmatpush1.msra.mxu0 0.0
        %2633 = vmatprep.subr.mxu0 0.0
        %2634 = vmatpush1.msra.mxu0 0.0
        %2635 = vmatprep.subr.mxu0 0.0
        %2636 = vmatpush1.msra.mxu0 0.0
        %2637 = vmatprep.subr.mxu0 0.0
        %2638 = vmatpush1.msra.mxu0 0.0
        %2639 = vmatprep.subr.mxu0 0.0
        %2640 = vmatpush1.msra.mxu0 0.0
        %2641 = vmatprep.subr.mxu0 0.0
        %2642 = vmatpush1.msra.mxu0 0.0
        %2643 = vmatprep.subr.mxu0 0.0
        %2644 = vmatpush1.msra.mxu0 0.0
        %2645 = vmatprep.subr.mxu0 0.0
        %2646 = vmatpush1.msra.mxu0 0.0
        %2647 = vmatprep.subr.mxu0 0.0
        %2648 = vmatpush1.msra.mxu0 0.0
        %2649 = vmatprep.subr.mxu0 0.0
        %2650 = vmatpush1.msra.mxu0 0.0
        %2651 = vmatprep.subr.mxu0 0.0
        %2652 = vmatpush1.msra.mxu0 0.0
        %2653 = vmatprep.subr.mxu0 0.0
        %2654 = vmatpush1.msra.mxu0 %v2621
        %2655 = vmatprep.subr.mxu0 0.0
        %2656 = vmatpush2.msra.mxu0 0.0
        %2657 = vmatprep.subr.mxu0 0.0
        %2658 = vmatpush2.msra.mxu0 0.0
        %2659 = vmatprep.subr.mxu0 0.0
        %2660 = vmatpush2.msra.mxu0 0.0
        %2661 = vmatprep.subr.mxu0 0.0
        %2662 = vmatpush2.msra.mxu0 0.0
        %2663 = vmatprep.subr.mxu0 0.0
        %2664 = vmatpush2.msra.mxu0 0.0
        %2665 = vmatprep.subr.mxu0 0.0
        %2666 = vmatpush2.msra.mxu0 0.0
        %2667 = vmatprep.subr.mxu0 0.0
        %2668 = vmatpush2.msra.mxu0 0.0
        %2669 = vmatprep.subr.mxu0 0.0
        %2670 = vmatpush2.msra.mxu0 0.0
        %2671 = vmatprep.subr.mxu0 0.0
        %2672 = vmatpush2.msra.mxu0 0.0
        %2673 = vmatprep.subr.mxu0 0.0
        %2674 = vmatpush2.msra.mxu0 0.0
        %2675 = vmatprep.subr.mxu0 0.0
        %2676 = vmatpush2.msra.mxu0 0.0
        %2677 = vmatprep.subr.mxu0 0.0
        %2678 = vmatpush2.msra.mxu0 0.0
        %2679 = vmatprep.subr.mxu0 0.0
        %2680 = vmatpush2.msra.mxu0 0.0
        %2681 = vmatprep.subr.mxu0 0.0
        %2682 = vmatpush2.msra.mxu0 0.0
        %2683 = vmatprep.subr.mxu0 0.0
        %2684 = vmatpush2.msra.mxu0 0.0
        %2685 = vmatprep.subr.mxu0 0.0
        %2686 = vmatpush2.msra.mxu0 0.0
        %2687 = vmatprep.mubr.f32.mxu0 0.0
        %2688 = vmatmul.mubr.f32.gmra.mxu0 %v2615
        %v2689 = vpop.f32.mrf.mxu0
        %v2690 = vadd.f32 0.0, %v2689
        %v2691 = vpop.f32.mrf.mxu0
        %2692 = vmatprep.mubr.f32.mxu0 0.0
        %2693 = vmatmul.mubr.f32.gmra.mxu0 %v2618
        %v2694 = vpop.f32.mrf.mxu0
        %v2695 = vadd.f32 0.0, %v2694
        %v2696 = vpop.f32.mrf.mxu0
        %2697 = vdwg.mxu0
        %v2699 = vsel %vm406, %v2540, 0
        %v2702 = vsel %vm406, %v2541, 0
        %v2705 = vsel %vm413, %v2537, 0
        %2707 = vmatprep.subr.mxu0 0.0
        %2708 = vmatpush1.msra.mxu0 0.0
        %2709 = vmatprep.subr.mxu0 0.0
        %2710 = vmatpush1.msra.mxu0 0.0
        %2711 = vmatprep.subr.mxu0 0.0
        %2712 = vmatpush1.msra.mxu0 0.0
        %2713 = vmatprep.subr.mxu0 0.0
        %2714 = vmatpush1.msra.mxu0 0.0
        %2715 = vmatprep.subr.mxu0 0.0
        %2716 = vmatpush1.msra.mxu0 0.0
        %2717 = vmatprep.subr.mxu0 0.0
        %2718 = vmatpush1.msra.mxu0 0.0
        %2719 = vmatprep.subr.mxu0 0.0
        %2720 = vmatpush1.msra.mxu0 0.0
        %2721 = vmatprep.subr.mxu0 0.0
        %2722 = vmatpush1.msra.mxu0 0.0
        %2723 = vmatprep.subr.mxu0 0.0
        %2724 = vmatpush1.msra.mxu0 0.0
        %2725 = vmatprep.subr.mxu0 0.0
        %2726 = vmatpush1.msra.mxu0 0.0
        %2727 = vmatprep.subr.mxu0 0.0
        %2728 = vmatpush1.msra.mxu0 0.0
        %2729 = vmatprep.subr.mxu0 0.0
        %2730 = vmatpush1.msra.mxu0 0.0
        %2731 = vmatprep.subr.mxu0 0.0
        %2732 = vmatpush1.msra.mxu0 0.0
        %2733 = vmatprep.subr.mxu0 0.0
        %2734 = vmatpush1.msra.mxu0 0.0
        %2735 = vmatprep.subr.mxu0 0.0
        %2736 = vmatpush1.msra.mxu0 0.0
        %2737 = vmatprep.subr.mxu0 0.0
        %2738 = vmatpush1.msra.mxu0 %v2705
        %2739 = vmatprep.subr.mxu0 0.0
        %2740 = vmatpush2.msra.mxu0 0.0
        %2741 = vmatprep.subr.mxu0 0.0
        %2742 = vmatpush2.msra.mxu0 0.0
        %2743 = vmatprep.subr.mxu0 0.0
        %2744 = vmatpush2.msra.mxu0 0.0
        %2745 = vmatprep.subr.mxu0 0.0
        %2746 = vmatpush2.msra.mxu0 0.0
        %2747 = vmatprep.subr.mxu0 0.0
        %2748 = vmatpush2.msra.mxu0 0.0
        %2749 = vmatprep.subr.mxu0 0.0
        %2750 = vmatpush2.msra.mxu0 0.0
        %2751 = vmatprep.subr.mxu0 0.0
        %2752 = vmatpush2.msra.mxu0 0.0
        %2753 = vmatprep.subr.mxu0 0.0
        %2754 = vmatpush2.msra.mxu0 0.0
        %2755 = vmatprep.subr.mxu0 0.0
        %2756 = vmatpush2.msra.mxu0 0.0
        %2757 = vmatprep.subr.mxu0 0.0
        %2758 = vmatpush2.msra.mxu0 0.0
        %2759 = vmatprep.subr.mxu0 0.0
        %2760 = vmatpush2.msra.mxu0 0.0
        %2761 = vmatprep.subr.mxu0 0.0
        %2762 = vmatpush2.msra.mxu0 0.0
        %2763 = vmatprep.subr.mxu0 0.0
        %2764 = vmatpush2.msra.mxu0 0.0
        %2765 = vmatprep.subr.mxu0 0.0
        %2766 = vmatpush2.msra.mxu0 0.0
        %2767 = vmatprep.subr.mxu0 0.0
        %2768 = vmatpush2.msra.mxu0 0.0
        %2769 = vmatprep.subr.mxu0 0.0
        %2770 = vmatpush2.msra.mxu0 0.0
        %2771 = vmatprep.mubr.f32.mxu0 0.0
        %2772 = vmatmul.mubr.f32.gmra.mxu0 %v2699
        %v2773 = vpop.f32.mrf.mxu0
        %v2774 = vadd.f32 %v2690, %v2773
        %v2775 = vpop.f32.mrf.mxu0
        %2776 = vmatprep.mubr.f32.mxu0 0.0
        %2777 = vmatmul.mubr.f32.gmra.mxu0 %v2702
        %v2778 = vpop.f32.mrf.mxu0
        %v2779 = vadd.f32 %v2695, %v2778
        %v2780 = vpop.f32.mrf.mxu0
        %2781 = vdwg.mxu0
        %v2782 = vld [vmem:[%s196 + $0x7] sm:$0x1]
        %v2783 = vld [vmem:[%s196 + $0x17] sm:$0x1]
        %v2784 = vld [vmem:[%s196 + $0x27] sm:$0x1]
        %v2785 = vld [vmem:[%s196 + $0x37] sm:$0x1]
        %v2790 = vrot.slane %v2783, 7
        %v2791 = vsel %vm250, %v2790, %v2782
        %v2792 = vrot.slane %v2784, 6
        %v2793 = vsel %vm253, %v2792, %v2791
        %v2794 = vrot.slane %v2785, 5
        %v2795 = vsel %vm256, %v2794, %v2793
        %v2796 = vsel %vm258, %v2795, 0
        %2798 = vmatprep.subr.mxu0 0.0
        %2799 = vmatpush1.msra.mxu0 0.0
        %2800 = vmatprep.subr.mxu0 0.0
        %2801 = vmatpush1.msra.mxu0 0.0
        %2802 = vmatprep.subr.mxu0 0.0
        %2803 = vmatpush1.msra.mxu0 0.0
        %2804 = vmatprep.subr.mxu0 0.0
        %2805 = vmatpush1.msra.mxu0 0.0
        %2806 = vmatprep.subr.mxu0 0.0
        %2807 = vmatpush1.msra.mxu0 0.0
        %2808 = vmatprep.subr.mxu0 0.0
        %2809 = vmatpush1.msra.mxu0 0.0
        %2810 = vmatprep.subr.mxu0 0.0
        %2811 = vmatpush1.msra.mxu0 0.0
        %2812 = vmatprep.subr.mxu0 0.0
        %2813 = vmatpush1.msra.mxu0 0.0
        %2814 = vmatprep.subr.mxu0 0.0
        %2815 = vmatpush1.msra.mxu0 0.0
        %2816 = vmatprep.subr.mxu0 0.0
        %2817 = vmatpush1.msra.mxu0 0.0
        %2818 = vmatprep.subr.mxu0 0.0
        %2819 = vmatpush1.msra.mxu0 0.0
        %2820 = vmatprep.subr.mxu0 0.0
        %2821 = vmatpush1.msra.mxu0 0.0
        %2822 = vmatprep.subr.mxu0 0.0
        %2823 = vmatpush1.msra.mxu0 0.0
        %2824 = vmatprep.subr.mxu0 0.0
        %2825 = vmatpush1.msra.mxu0 0.0
        %2826 = vmatprep.subr.mxu0 0.0
        %2827 = vmatpush1.msra.mxu0 %v231
        %2828 = vmatprep.subr.mxu0 0.0
        %2829 = vmatpush1.msra.mxu0 %v230
        %2830 = vmatprep.subr.mxu0 0.0
        %2831 = vmatpush2.msra.mxu0 0.0
        %2832 = vmatprep.subr.mxu0 0.0
        %2833 = vmatpush2.msra.mxu0 0.0
        %2834 = vmatprep.subr.mxu0 0.0
        %2835 = vmatpush2.msra.mxu0 0.0
        %2836 = vmatprep.subr.mxu0 0.0
        %2837 = vmatpush2.msra.mxu0 0.0
        %2838 = vmatprep.subr.mxu0 0.0
        %2839 = vmatpush2.msra.mxu0 0.0
        %2840 = vmatprep.subr.mxu0 0.0
        %2841 = vmatpush2.msra.mxu0 0.0
        %2842 = vmatprep.subr.mxu0 0.0
        %2843 = vmatpush2.msra.mxu0 0.0
        %2844 = vmatprep.subr.mxu0 0.0
        %2845 = vmatpush2.msra.mxu0 0.0
        %2846 = vmatprep.subr.mxu0 0.0
        %2847 = vmatpush2.msra.mxu0 0.0
        %2848 = vmatprep.subr.mxu0 0.0
        %2849 = vmatpush2.msra.mxu0 0.0
        %2850 = vmatprep.subr.mxu0 0.0
        %2851 = vmatpush2.msra.mxu0 0.0
        %2852 = vmatprep.subr.mxu0 0.0
        %2853 = vmatpush2.msra.mxu0 0.0
        %2854 = vmatprep.subr.mxu0 0.0
        %2855 = vmatpush2.msra.mxu0 0.0
        %2856 = vmatprep.subr.mxu0 0.0
        %2857 = vmatpush2.msra.mxu0 0.0
        %2858 = vmatprep.subr.mxu0 0.0
        %2859 = vmatpush2.msra.mxu0 0.0
        %2860 = vmatprep.subr.mxu0 0.0
        %2861 = vmatpush2.msra.mxu0 0.0
        %2862 = vmatprep.mubr.f32.mxu0 0.0
        %2863 = vmatmul.mubr.f32.gmra.mxu0 %v2796
        %v2864 = vpop.f32.mrf.mxu0
        %v2865 = vadd.f32 0.0, %v2864
        %v2866 = vpop.f32.mrf.mxu0
        %2867 = vdwg.mxu0
        %v2868 = vld [vmem:[%s662] sm:$0xff]
        %v2869 = vld [vmem:[%s662 + $0x8] sm:$0xff]
        %v2871 = vsel %vm406, %v2868, 0
        %v2874 = vsel %vm406, %v2869, 0
        %v2877 = vsel %vm413, %v2865, 0
        %2879 = vmatprep.subr.mxu0 0.0
        %2880 = vmatpush1.msra.mxu0 0.0
        %2881 = vmatprep.subr.mxu0 0.0
        %2882 = vmatpush1.msra.mxu0 0.0
        %2883 = vmatprep.subr.mxu0 0.0
        %2884 = vmatpush1.msra.mxu0 0.0
        %2885 = vmatprep.subr.mxu0 0.0
        %2886 = vmatpush1.msra.mxu0 0.0
        %2887 = vmatprep.subr.mxu0 0.0
        %2888 = vmatpush1.msra.mxu0 0.0
        %2889 = vmatprep.subr.mxu0 0.0
        %2890 = vmatpush1.msra.mxu0 0.0
        %2891 = vmatprep.subr.mxu0 0.0
        %2892 = vmatpush1.msra.mxu0 0.0
        %2893 = vmatprep.subr.mxu0 0.0
        %2894 = vmatpush1.msra.mxu0 0.0
        %2895 = vmatprep.subr.mxu0 0.0
        %2896 = vmatpush1.msra.mxu0 0.0
        %2897 = vmatprep.subr.mxu0 0.0
        %2898 = vmatpush1.msra.mxu0 0.0
        %2899 = vmatprep.subr.mxu0 0.0
        %2900 = vmatpush1.msra.mxu0 0.0
        %2901 = vmatprep.subr.mxu0 0.0
        %2902 = vmatpush1.msra.mxu0 0.0
        %2903 = vmatprep.subr.mxu0 0.0
        %2904 = vmatpush1.msra.mxu0 0.0
        %2905 = vmatprep.subr.mxu0 0.0
        %2906 = vmatpush1.msra.mxu0 0.0
        %2907 = vmatprep.subr.mxu0 0.0
        %2908 = vmatpush1.msra.mxu0 0.0
        %2909 = vmatprep.subr.mxu0 0.0
        %2910 = vmatpush1.msra.mxu0 %v2877
        %2911 = vmatprep.subr.mxu0 0.0
        %2912 = vmatpush2.msra.mxu0 0.0
        %2913 = vmatprep.subr.mxu0 0.0
        %2914 = vmatpush2.msra.mxu0 0.0
        %2915 = vmatprep.subr.mxu0 0.0
        %2916 = vmatpush2.msra.mxu0 0.0
        %2917 = vmatprep.subr.mxu0 0.0
        %2918 = vmatpush2.msra.mxu0 0.0
        %2919 = vmatprep.subr.mxu0 0.0
        %2920 = vmatpush2.msra.mxu0 0.0
        %2921 = vmatprep.subr.mxu0 0.0
        %2922 = vmatpush2.msra.mxu0 0.0
        %2923 = vmatprep.subr.mxu0 0.0
        %2924 = vmatpush2.msra.mxu0 0.0
        %2925 = vmatprep.subr.mxu0 0.0
        %2926 = vmatpush2.msra.mxu0 0.0
        %2927 = vmatprep.subr.mxu0 0.0
        %2928 = vmatpush2.msra.mxu0 0.0
        %2929 = vmatprep.subr.mxu0 0.0
        %2930 = vmatpush2.msra.mxu0 0.0
        %2931 = vmatprep.subr.mxu0 0.0
        %2932 = vmatpush2.msra.mxu0 0.0
        %2933 = vmatprep.subr.mxu0 0.0
        %2934 = vmatpush2.msra.mxu0 0.0
        %2935 = vmatprep.subr.mxu0 0.0
        %2936 = vmatpush2.msra.mxu0 0.0
        %2937 = vmatprep.subr.mxu0 0.0
        %2938 = vmatpush2.msra.mxu0 0.0
        %2939 = vmatprep.subr.mxu0 0.0
        %2940 = vmatpush2.msra.mxu0 0.0
        %2941 = vmatprep.subr.mxu0 0.0
        %2942 = vmatpush2.msra.mxu0 0.0
        %2943 = vmatprep.mubr.f32.mxu0 0.0
        %2944 = vmatmul.mubr.f32.gmra.mxu0 %v2871
        %v2945 = vpop.f32.mrf.mxu0
        %v2946 = vadd.f32 0.0, %v2945
        %v2947 = vpop.f32.mrf.mxu0
        %2948 = vmatprep.mubr.f32.mxu0 0.0
        %2949 = vmatmul.mubr.f32.gmra.mxu0 %v2874
        %v2950 = vpop.f32.mrf.mxu0
        %v2951 = vadd.f32 0.0, %v2950
        %v2952 = vpop.f32.mrf.mxu0
        %2953 = vdwg.mxu0
        %v2954 = vadd.f32 %v2774, %v2946
        %v2955 = vadd.f32 %v2779, %v2951
        %2956 = vmatprep.subr.mxu0 0.0
        %2957 = vmatpush1.msra.mxu0 0.0
        %2958 = vmatprep.subr.mxu0 0.0
        %2959 = vmatpush1.msra.mxu0 0.0
        %2960 = vmatprep.subr.mxu0 0.0
        %2961 = vmatpush1.msra.mxu0 0.0
        %2962 = vmatprep.subr.mxu0 0.0
        %2963 = vmatpush1.msra.mxu0 0.0
        %2964 = vmatprep.subr.mxu0 0.0
        %2965 = vmatpush1.msra.mxu0 0.0
        %2966 = vmatprep.subr.mxu0 0.0
        %2967 = vmatpush1.msra.mxu0 0.0
        %2968 = vmatprep.subr.mxu0 0.0
        %2969 = vmatpush1.msra.mxu0 0.0
        %2970 = vmatprep.subr.mxu0 0.0
        %2971 = vmatpush1.msra.mxu0 0.0
        %2972 = vmatprep.subr.mxu0 0.0
        %2973 = vmatpush1.msra.mxu0 0.0
        %2974 = vmatprep.subr.mxu0 0.0
        %2975 = vmatpush1.msra.mxu0 0.0
        %2976 = vmatprep.subr.mxu0 0.0
        %2977 = vmatpush1.msra.mxu0 0.0
        %2978 = vmatprep.subr.mxu0 0.0
        %2979 = vmatpush1.msra.mxu0 0.0
        %2980 = vmatprep.subr.mxu0 0.0
        %2981 = vmatpush1.msra.mxu0 0.0
        %2982 = vmatprep.subr.mxu0 0.0
        %2983 = vmatpush1.msra.mxu0 0.0
        %2984 = vmatprep.subr.mxu0 0.0
        %2985 = vmatpush1.msra.mxu0 %v238
        %2986 = vmatprep.subr.mxu0 0.0
        %2987 = vmatpush1.msra.mxu0 %v237
        %2988 = vmatprep.subr.mxu0 0.0
        %2989 = vmatpush2.msra.mxu0 0.0
        %2990 = vmatprep.subr.mxu0 0.0
        %2991 = vmatpush2.msra.mxu0 0.0
        %2992 = vmatprep.subr.mxu0 0.0
        %2993 = vmatpush2.msra.mxu0 0.0
        %2994 = vmatprep.subr.mxu0 0.0
        %2995 = vmatpush2.msra.mxu0 0.0
        %2996 = vmatprep.subr.mxu0 0.0
        %2997 = vmatpush2.msra.mxu0 0.0
        %2998 = vmatprep.subr.mxu0 0.0
        %2999 = vmatpush2.msra.mxu0 0.0
        %3000 = vmatprep.subr.mxu0 0.0
        %3001 = vmatpush2.msra.mxu0 0.0
        %3002 = vmatprep.subr.mxu0 0.0
        %3003 = vmatpush2.msra.mxu0 0.0
        %3004 = vmatprep.subr.mxu0 0.0
        %3005 = vmatpush2.msra.mxu0 0.0
        %3006 = vmatprep.subr.mxu0 0.0
        %3007 = vmatpush2.msra.mxu0 0.0
        %3008 = vmatprep.subr.mxu0 0.0
        %3009 = vmatpush2.msra.mxu0 0.0
        %3010 = vmatprep.subr.mxu0 0.0
        %3011 = vmatpush2.msra.mxu0 0.0
        %3012 = vmatprep.subr.mxu0 0.0
        %3013 = vmatpush2.msra.mxu0 0.0
        %3014 = vmatprep.subr.mxu0 0.0
        %3015 = vmatpush2.msra.mxu0 0.0
        %3016 = vmatprep.subr.mxu0 0.0
        %3017 = vmatpush2.msra.mxu0 0.0
        %3018 = vmatprep.subr.mxu0 0.0
        %3019 = vmatpush2.msra.mxu0 0.0
        %3020 = vmatprep.mubr.f32.mxu0 0.0
        %3021 = vmatmul.mubr.f32.gmra.mxu0 %v2796
        %v3022 = vpop.f32.mrf.mxu0
        %v3023 = vadd.f32 0.0, %v3022
        %v3024 = vpop.f32.mrf.mxu0
        %3025 = vdwg.mxu0
        %v3026 = vld [vmem:[%s821] sm:$0xff]
        %v3027 = vld [vmem:[%s821 + $0x8] sm:$0xff]
        %v3029 = vsel %vm406, %v3026, 0
        %v3032 = vsel %vm406, %v3027, 0
        %v3035 = vsel %vm413, %v3023, 0
        %3037 = vmatprep.subr.mxu0 0.0
        %3038 = vmatpush1.msra.mxu0 0.0
        %3039 = vmatprep.subr.mxu0 0.0
        %3040 = vmatpush1.msra.mxu0 0.0
        %3041 = vmatprep.subr.mxu0 0.0
        %3042 = vmatpush1.msra.mxu0 0.0
        %3043 = vmatprep.subr.mxu0 0.0
        %3044 = vmatpush1.msra.mxu0 0.0
        %3045 = vmatprep.subr.mxu0 0.0
        %3046 = vmatpush1.msra.mxu0 0.0
        %3047 = vmatprep.subr.mxu0 0.0
        %3048 = vmatpush1.msra.mxu0 0.0
        %3049 = vmatprep.subr.mxu0 0.0
        %3050 = vmatpush1.msra.mxu0 0.0
        %3051 = vmatprep.subr.mxu0 0.0
        %3052 = vmatpush1.msra.mxu0 0.0
        %3053 = vmatprep.subr.mxu0 0.0
        %3054 = vmatpush1.msra.mxu0 0.0
        %3055 = vmatprep.subr.mxu0 0.0
        %3056 = vmatpush1.msra.mxu0 0.0
        %3057 = vmatprep.subr.mxu0 0.0
        %3058 = vmatpush1.msra.mxu0 0.0
        %3059 = vmatprep.subr.mxu0 0.0
        %3060 = vmatpush1.msra.mxu0 0.0
        %3061 = vmatprep.subr.mxu0 0.0
        %3062 = vmatpush1.msra.mxu0 0.0
        %3063 = vmatprep.subr.mxu0 0.0
        %3064 = vmatpush1.msra.mxu0 0.0
        %3065 = vmatprep.subr.mxu0 0.0
        %3066 = vmatpush1.msra.mxu0 0.0
        %3067 = vmatprep.subr.mxu0 0.0
        %3068 = vmatpush1.msra.mxu0 %v3035
        %3069 = vmatprep.subr.mxu0 0.0
        %3070 = vmatpush2.msra.mxu0 0.0
        %3071 = vmatprep.subr.mxu0 0.0
        %3072 = vmatpush2.msra.mxu0 0.0
        %3073 = vmatprep.subr.mxu0 0.0
        %3074 = vmatpush2.msra.mxu0 0.0
        %3075 = vmatprep.subr.mxu0 0.0
        %3076 = vmatpush2.msra.mxu0 0.0
        %3077 = vmatprep.subr.mxu0 0.0
        %3078 = vmatpush2.msra.mxu0 0.0
        %3079 = vmatprep.subr.mxu0 0.0
        %3080 = vmatpush2.msra.mxu0 0.0
        %3081 = vmatprep.subr.mxu0 0.0
        %3082 = vmatpush2.msra.mxu0 0.0
        %3083 = vmatprep.subr.mxu0 0.0
        %3084 = vmatpush2.msra.mxu0 0.0
        %3085 = vmatprep.subr.mxu0 0.0
        %3086 = vmatpush2.msra.mxu0 0.0
        %3087 = vmatprep.subr.mxu0 0.0
        %3088 = vmatpush2.msra.mxu0 0.0
        %3089 = vmatprep.subr.mxu0 0.0
        %3090 = vmatpush2.msra.mxu0 0.0
        %3091 = vmatprep.subr.mxu0 0.0
        %3092 = vmatpush2.msra.mxu0 0.0
        %3093 = vmatprep.subr.mxu0 0.0
        %3094 = vmatpush2.msra.mxu0 0.0
        %3095 = vmatprep.subr.mxu0 0.0
        %3096 = vmatpush2.msra.mxu0 0.0
        %3097 = vmatprep.subr.mxu0 0.0
        %3098 = vmatpush2.msra.mxu0 0.0
        %3099 = vmatprep.subr.mxu0 0.0
        %3100 = vmatpush2.msra.mxu0 0.0
        %3101 = vmatprep.mubr.f32.mxu0 0.0
        %3102 = vmatmul.mubr.f32.gmra.mxu0 %v3029
        %v3103 = vpop.f32.mrf.mxu0
        %v3104 = vadd.f32 0.0, %v3103
        %v3105 = vpop.f32.mrf.mxu0
        %3106 = vmatprep.mubr.f32.mxu0 0.0
        %3107 = vmatmul.mubr.f32.gmra.mxu0 %v3032
        %v3108 = vpop.f32.mrf.mxu0
        %v3109 = vadd.f32 0.0, %v3108
        %v3110 = vpop.f32.mrf.mxu0
        %3111 = vdwg.mxu0
        %v3112 = vadd.f32 %v2954, %v3104
        %v3113 = vadd.f32 %v2955, %v3109
        %v3114 = vadd.f32 %v3112, %v913
        %v3115 = vadd.f32 %v3113, %v918
        %v3116 = vmax.f32 %v3114, 0.0
        %v3117 = vadd.f32 %v3116, %v3115
        %v3118 = vmax.f32 %v3117, 0.0
        %v3120 = vcombine.high %v3118, %v3118
        %v3122 = vunpack.c.l.s4 1966171168
        %v3123 = vunpack.c.0.s8 %v3122
        %v3124 = vlaneseq
        %v3125 = vshrl.u32 %v3124, 7
        %v3126 = vsub.s32 %v3123, %v3125
        %v3127 = vrot.slane %v3118, %v3126
        %v3129 = vunpack.c.l.s4 1966171168
        %v3130 = vunpack.c.0.s8 %v3129
        %v3131 = vlaneseq
        %v3132 = vshrl.u32 %v3131, 7
        %v3133 = vsub.s32 %v3130, %v3132
        %v3134 = vrot.slane %v3120, %v3133
        %v3135 = vcombine.high %v3127, %v3127
        %v3136 = vcombine.high %v3134, %v3134
        %v3138 = vunpack.c.l.s4 1966171168
        %v3139 = vunpack.c.0.s8 %v3138
        %v3140 = vlaneseq
        %v3141 = vshrl.u32 %v3140, 7
        %v3142 = vsub.s32 %v3139, %v3141
        %v3143 = vrot.slane %v3127, %v3142
        %v3145 = vunpack.c.l.s4 1966171168
        %v3146 = vunpack.c.0.s8 %v3145
        %v3147 = vlaneseq
        %v3148 = vshrl.u32 %v3147, 7
        %v3149 = vsub.s32 %v3146, %v3148
        %v3150 = vrot.slane %v3134, %v3149
        %v3152 = vunpack.c.l.s4 1966171168
        %v3153 = vunpack.c.0.s8 %v3152
        %v3154 = vlaneseq
        %v3155 = vshrl.u32 %v3154, 7
        %v3156 = vsub.s32 %v3153, %v3155
        %v3157 = vrot.slane %v3135, %v3156
        %v3159 = vunpack.c.l.s4 1966171168
        %v3160 = vunpack.c.0.s8 %v3159
        %v3161 = vlaneseq
        %v3162 = vshrl.u32 %v3161, 7
        %v3163 = vsub.s32 %v3160, %v3162
        %v3164 = vrot.slane %v3136, %v3163
        %v3165 = vcombine.high %v3143, %v3143
        %v3166 = vcombine.high %v3150, %v3150
        %v3167 = vcombine.high %v3157, %v3157
        %v3168 = vcombine.high %v3164, %v3164
        %3177 = vst.msk [vmem:[%s218 + $0x3] sm:$0x1] %vm983, %v3143
        %3178 = vst.msk [vmem:[%s218 + $0xb] sm:$0x1] %vm983, %v3157
        %3179 = vst.msk [vmem:[%s218 + $0x13] sm:$0x1] %vm983, %v3165
        %3180 = vst.msk [vmem:[%s218 + $0x1b] sm:$0x1] %vm983, %v3167
        %3181 = vst.msk [vmem:[%s218 + $0x23] sm:$0x1] %vm983, %v3150
        %3182 = vst.msk [vmem:[%s218 + $0x2b] sm:$0x1] %vm983, %v3164
        %3183 = vst.msk [vmem:[%s218 + $0x33] sm:$0x1] %vm983, %v3166
        %3184 = vst.msk [vmem:[%s218 + $0x3b] sm:$0x1] %vm983, %v3168
        %v3185 = vld [vmem:[%s196 + $0x8] sm:$0x1]
        %v3186 = vld [vmem:[%s196 + $0x18] sm:$0x1]
        %v3187 = vld [vmem:[%s196 + $0x28] sm:$0x1]
        %v3188 = vld [vmem:[%s196 + $0x38] sm:$0x1]
        %v3193 = vrot.slane %v3186, 7
        %v3194 = vsel %vm250, %v3193, %v3185
        %v3195 = vrot.slane %v3187, 6
        %v3196 = vsel %vm253, %v3195, %v3194
        %v3197 = vrot.slane %v3188, 5
        %v3198 = vsel %vm256, %v3197, %v3196
        %v3199 = vsel %vm258, %v3198, 0
        %3201 = vmatprep.subr.mxu0 0.0
        %3202 = vmatpush1.msra.mxu0 0.0
        %3203 = vmatprep.subr.mxu0 0.0
        %3204 = vmatpush1.msra.mxu0 0.0
        %3205 = vmatprep.subr.mxu0 0.0
        %3206 = vmatpush1.msra.mxu0 0.0
        %3207 = vmatprep.subr.mxu0 0.0
        %3208 = vmatpush1.msra.mxu0 0.0
        %3209 = vmatprep.subr.mxu0 0.0
        %3210 = vmatpush1.msra.mxu0 0.0
        %3211 = vmatprep.subr.mxu0 0.0
        %3212 = vmatpush1.msra.mxu0 0.0
        %3213 = vmatprep.subr.mxu0 0.0
        %3214 = vmatpush1.msra.mxu0 0.0
        %3215 = vmatprep.subr.mxu0 0.0
        %3216 = vmatpush1.msra.mxu0 0.0
        %3217 = vmatprep.subr.mxu0 0.0
        %3218 = vmatpush1.msra.mxu0 0.0
        %3219 = vmatprep.subr.mxu0 0.0
        %3220 = vmatpush1.msra.mxu0 0.0
        %3221 = vmatprep.subr.mxu0 0.0
        %3222 = vmatpush1.msra.mxu0 0.0
        %3223 = vmatprep.subr.mxu0 0.0
        %3224 = vmatpush1.msra.mxu0 0.0
        %3225 = vmatprep.subr.mxu0 0.0
        %3226 = vmatpush1.msra.mxu0 0.0
        %3227 = vmatprep.subr.mxu0 0.0
        %3228 = vmatpush1.msra.mxu0 0.0
        %3229 = vmatprep.subr.mxu0 0.0
        %3230 = vmatpush1.msra.mxu0 %v231
        %3231 = vmatprep.subr.mxu0 0.0
        %3232 = vmatpush1.msra.mxu0 %v230
        %3233 = vmatprep.subr.mxu0 0.0
        %3234 = vmatpush2.msra.mxu0 0.0
        %3235 = vmatprep.subr.mxu0 0.0
        %3236 = vmatpush2.msra.mxu0 0.0
        %3237 = vmatprep.subr.mxu0 0.0
        %3238 = vmatpush2.msra.mxu0 0.0
        %3239 = vmatprep.subr.mxu0 0.0
        %3240 = vmatpush2.msra.mxu0 0.0
        %3241 = vmatprep.subr.mxu0 0.0
        %3242 = vmatpush2.msra.mxu0 0.0
        %3243 = vmatprep.subr.mxu0 0.0
        %3244 = vmatpush2.msra.mxu0 0.0
        %3245 = vmatprep.subr.mxu0 0.0
        %3246 = vmatpush2.msra.mxu0 0.0
        %3247 = vmatprep.subr.mxu0 0.0
        %3248 = vmatpush2.msra.mxu0 0.0
        %3249 = vmatprep.subr.mxu0 0.0
        %3250 = vmatpush2.msra.mxu0 0.0
        %3251 = vmatprep.subr.mxu0 0.0
        %3252 = vmatpush2.msra.mxu0 0.0
        %3253 = vmatprep.subr.mxu0 0.0
        %3254 = vmatpush2.msra.mxu0 0.0
        %3255 = vmatprep.subr.mxu0 0.0
        %3256 = vmatpush2.msra.mxu0 0.0
        %3257 = vmatprep.subr.mxu0 0.0
        %3258 = vmatpush2.msra.mxu0 0.0
        %3259 = vmatprep.subr.mxu0 0.0
        %3260 = vmatpush2.msra.mxu0 0.0
        %3261 = vmatprep.subr.mxu0 0.0
        %3262 = vmatpush2.msra.mxu0 0.0
        %3263 = vmatprep.subr.mxu0 0.0
        %3264 = vmatpush2.msra.mxu0 0.0
        %3265 = vmatprep.mubr.f32.mxu0 0.0
        %3266 = vmatmul.mubr.f32.gmra.mxu0 %v3199
        %v3267 = vpop.f32.mrf.mxu0
        %v3268 = vadd.f32 0.0, %v3267
        %v3269 = vpop.f32.mrf.mxu0
        %3270 = vdwg.mxu0
        %v3271 = vld [vmem:[%s1] sm:$0xff]
        %v3272 = vld [vmem:[%s1 + $0x8] sm:$0xff]
        %3273 = vmatprep.subr.mxu0 0.0
        %3274 = vmatpush1.msra.mxu0 0.0
        %3275 = vmatprep.subr.mxu0 0.0
        %3276 = vmatpush1.msra.mxu0 0.0
        %3277 = vmatprep.subr.mxu0 0.0
        %3278 = vmatpush1.msra.mxu0 0.0
        %3279 = vmatprep.subr.mxu0 0.0
        %3280 = vmatpush1.msra.mxu0 0.0
        %3281 = vmatprep.subr.mxu0 0.0
        %3282 = vmatpush1.msra.mxu0 0.0
        %3283 = vmatprep.subr.mxu0 0.0
        %3284 = vmatpush1.msra.mxu0 0.0
        %3285 = vmatprep.subr.mxu0 0.0
        %3286 = vmatpush1.msra.mxu0 0.0
        %3287 = vmatprep.subr.mxu0 0.0
        %3288 = vmatpush1.msra.mxu0 0.0
        %3289 = vmatprep.subr.mxu0 0.0
        %3290 = vmatpush1.msra.mxu0 0.0
        %3291 = vmatprep.subr.mxu0 0.0
        %3292 = vmatpush1.msra.mxu0 0.0
        %3293 = vmatprep.subr.mxu0 0.0
        %3294 = vmatpush1.msra.mxu0 0.0
        %3295 = vmatprep.subr.mxu0 0.0
        %3296 = vmatpush1.msra.mxu0 0.0
        %3297 = vmatprep.subr.mxu0 0.0
        %3298 = vmatpush1.msra.mxu0 0.0
        %3299 = vmatprep.subr.mxu0 0.0
        %3300 = vmatpush1.msra.mxu0 0.0
        %3301 = vmatprep.subr.mxu0 0.0
        %3302 = vmatpush1.msra.mxu0 %v238
        %3303 = vmatprep.subr.mxu0 0.0
        %3304 = vmatpush1.msra.mxu0 %v237
        %3305 = vmatprep.subr.mxu0 0.0
        %3306 = vmatpush2.msra.mxu0 0.0
        %3307 = vmatprep.subr.mxu0 0.0
        %3308 = vmatpush2.msra.mxu0 0.0
        %3309 = vmatprep.subr.mxu0 0.0
        %3310 = vmatpush2.msra.mxu0 0.0
        %3311 = vmatprep.subr.mxu0 0.0
        %3312 = vmatpush2.msra.mxu0 0.0
        %3313 = vmatprep.subr.mxu0 0.0
        %3314 = vmatpush2.msra.mxu0 0.0
        %3315 = vmatprep.subr.mxu0 0.0
        %3316 = vmatpush2.msra.mxu0 0.0
        %3317 = vmatprep.subr.mxu0 0.0
        %3318 = vmatpush2.msra.mxu0 0.0
        %3319 = vmatprep.subr.mxu0 0.0
        %3320 = vmatpush2.msra.mxu0 0.0
        %3321 = vmatprep.subr.mxu0 0.0
        %3322 = vmatpush2.msra.mxu0 0.0
        %3323 = vmatprep.subr.mxu0 0.0
        %3324 = vmatpush2.msra.mxu0 0.0
        %3325 = vmatprep.subr.mxu0 0.0
        %3326 = vmatpush2.msra.mxu0 0.0
        %3327 = vmatprep.subr.mxu0 0.0
        %3328 = vmatpush2.msra.mxu0 0.0
        %3329 = vmatprep.subr.mxu0 0.0
        %3330 = vmatpush2.msra.mxu0 0.0
        %3331 = vmatprep.subr.mxu0 0.0
        %3332 = vmatpush2.msra.mxu0 0.0
        %3333 = vmatprep.subr.mxu0 0.0
        %3334 = vmatpush2.msra.mxu0 0.0
        %3335 = vmatprep.subr.mxu0 0.0
        %3336 = vmatpush2.msra.mxu0 0.0
        %3337 = vmatprep.mubr.f32.mxu0 0.0
        %3338 = vmatmul.mubr.f32.gmra.mxu0 %v3199
        %v3339 = vpop.f32.mrf.mxu0
        %v3340 = vadd.f32 0.0, %v3339
        %v3341 = vpop.f32.mrf.mxu0
        %3342 = vdwg.mxu0
        %v3343 = vld [vmem:[%s403] sm:$0xff]
        %v3344 = vld [vmem:[%s403 + $0x8] sm:$0xff]
        %v3346 = vsel %vm406, %v3343, 0
        %v3349 = vsel %vm406, %v3344, 0
        %v3352 = vsel %vm413, %v3340, 0
        %3354 = vmatprep.subr.mxu0 0.0
        %3355 = vmatpush1.msra.mxu0 0.0
        %3356 = vmatprep.subr.mxu0 0.0
        %3357 = vmatpush1.msra.mxu0 0.0
        %3358 = vmatprep.subr.mxu0 0.0
        %3359 = vmatpush1.msra.mxu0 0.0
        %3360 = vmatprep.subr.mxu0 0.0
        %3361 = vmatpush1.msra.mxu0 0.0
        %3362 = vmatprep.subr.mxu0 0.0
        %3363 = vmatpush1.msra.mxu0 0.0
        %3364 = vmatprep.subr.mxu0 0.0
        %3365 = vmatpush1.msra.mxu0 0.0
        %3366 = vmatprep.subr.mxu0 0.0
        %3367 = vmatpush1.msra.mxu0 0.0
        %3368 = vmatprep.subr.mxu0 0.0
        %3369 = vmatpush1.msra.mxu0 0.0
        %3370 = vmatprep.subr.mxu0 0.0
        %3371 = vmatpush1.msra.mxu0 0.0
        %3372 = vmatprep.subr.mxu0 0.0
        %3373 = vmatpush1.msra.mxu0 0.0
        %3374 = vmatprep.subr.mxu0 0.0
        %3375 = vmatpush1.msra.mxu0 0.0
        %3376 = vmatprep.subr.mxu0 0.0
        %3377 = vmatpush1.msra.mxu0 0.0
        %3378 = vmatprep.subr.mxu0 0.0
        %3379 = vmatpush1.msra.mxu0 0.0
        %3380 = vmatprep.subr.mxu0 0.0
        %3381 = vmatpush1.msra.mxu0 0.0
        %3382 = vmatprep.subr.mxu0 0.0
        %3383 = vmatpush1.msra.mxu0 0.0
        %3384 = vmatprep.subr.mxu0 0.0
        %3385 = vmatpush1.msra.mxu0 %v3352
        %3386 = vmatprep.subr.mxu0 0.0
        %3387 = vmatpush2.msra.mxu0 0.0
        %3388 = vmatprep.subr.mxu0 0.0
        %3389 = vmatpush2.msra.mxu0 0.0
        %3390 = vmatprep.subr.mxu0 0.0
        %3391 = vmatpush2.msra.mxu0 0.0
        %3392 = vmatprep.subr.mxu0 0.0
        %3393 = vmatpush2.msra.mxu0 0.0
        %3394 = vmatprep.subr.mxu0 0.0
        %3395 = vmatpush2.msra.mxu0 0.0
        %3396 = vmatprep.subr.mxu0 0.0
        %3397 = vmatpush2.msra.mxu0 0.0
        %3398 = vmatprep.subr.mxu0 0.0
        %3399 = vmatpush2.msra.mxu0 0.0
        %3400 = vmatprep.subr.mxu0 0.0
        %3401 = vmatpush2.msra.mxu0 0.0
        %3402 = vmatprep.subr.mxu0 0.0
        %3403 = vmatpush2.msra.mxu0 0.0
        %3404 = vmatprep.subr.mxu0 0.0
        %3405 = vmatpush2.msra.mxu0 0.0
        %3406 = vmatprep.subr.mxu0 0.0
        %3407 = vmatpush2.msra.mxu0 0.0
        %3408 = vmatprep.subr.mxu0 0.0
        %3409 = vmatpush2.msra.mxu0 0.0
        %3410 = vmatprep.subr.mxu0 0.0
        %3411 = vmatpush2.msra.mxu0 0.0
        %3412 = vmatprep.subr.mxu0 0.0
        %3413 = vmatpush2.msra.mxu0 0.0
        %3414 = vmatprep.subr.mxu0 0.0
        %3415 = vmatpush2.msra.mxu0 0.0
        %3416 = vmatprep.subr.mxu0 0.0
        %3417 = vmatpush2.msra.mxu0 0.0
        %3418 = vmatprep.mubr.f32.mxu0 0.0
        %3419 = vmatmul.mubr.f32.gmra.mxu0 %v3346
        %v3420 = vpop.f32.mrf.mxu0
        %v3421 = vadd.f32 0.0, %v3420
        %v3422 = vpop.f32.mrf.mxu0
        %3423 = vmatprep.mubr.f32.mxu0 0.0
        %3424 = vmatmul.mubr.f32.gmra.mxu0 %v3349
        %v3425 = vpop.f32.mrf.mxu0
        %v3426 = vadd.f32 0.0, %v3425
        %v3427 = vpop.f32.mrf.mxu0
        %3428 = vdwg.mxu0
        %v3430 = vsel %vm406, %v3271, 0
        %v3433 = vsel %vm406, %v3272, 0
        %v3436 = vsel %vm413, %v3268, 0
        %3438 = vmatprep.subr.mxu0 0.0
        %3439 = vmatpush1.msra.mxu0 0.0
        %3440 = vmatprep.subr.mxu0 0.0
        %3441 = vmatpush1.msra.mxu0 0.0
        %3442 = vmatprep.subr.mxu0 0.0
        %3443 = vmatpush1.msra.mxu0 0.0
        %3444 = vmatprep.subr.mxu0 0.0
        %3445 = vmatpush1.msra.mxu0 0.0
        %3446 = vmatprep.subr.mxu0 0.0
        %3447 = vmatpush1.msra.mxu0 0.0
        %3448 = vmatprep.subr.mxu0 0.0
        %3449 = vmatpush1.msra.mxu0 0.0
        %3450 = vmatprep.subr.mxu0 0.0
        %3451 = vmatpush1.msra.mxu0 0.0
        %3452 = vmatprep.subr.mxu0 0.0
        %3453 = vmatpush1.msra.mxu0 0.0
        %3454 = vmatprep.subr.mxu0 0.0
        %3455 = vmatpush1.msra.mxu0 0.0
        %3456 = vmatprep.subr.mxu0 0.0
        %3457 = vmatpush1.msra.mxu0 0.0
        %3458 = vmatprep.subr.mxu0 0.0
        %3459 = vmatpush1.msra.mxu0 0.0
        %3460 = vmatprep.subr.mxu0 0.0
        %3461 = vmatpush1.msra.mxu0 0.0
        %3462 = vmatprep.subr.mxu0 0.0
        %3463 = vmatpush1.msra.mxu0 0.0
        %3464 = vmatprep.subr.mxu0 0.0
        %3465 = vmatpush1.msra.mxu0 0.0
        %3466 = vmatprep.subr.mxu0 0.0
        %3467 = vmatpush1.msra.mxu0 0.0
        %3468 = vmatprep.subr.mxu0 0.0
        %3469 = vmatpush1.msra.mxu0 %v3436
        %3470 = vmatprep.subr.mxu0 0.0
        %3471 = vmatpush2.msra.mxu0 0.0
        %3472 = vmatprep.subr.mxu0 0.0
        %3473 = vmatpush2.msra.mxu0 0.0
        %3474 = vmatprep.subr.mxu0 0.0
        %3475 = vmatpush2.msra.mxu0 0.0
        %3476 = vmatprep.subr.mxu0 0.0
        %3477 = vmatpush2.msra.mxu0 0.0
        %3478 = vmatprep.subr.mxu0 0.0
        %3479 = vmatpush2.msra.mxu0 0.0
        %3480 = vmatprep.subr.mxu0 0.0
        %3481 = vmatpush2.msra.mxu0 0.0
        %3482 = vmatprep.subr.mxu0 0.0
        %3483 = vmatpush2.msra.mxu0 0.0
        %3484 = vmatprep.subr.mxu0 0.0
        %3485 = vmatpush2.msra.mxu0 0.0
        %3486 = vmatprep.subr.mxu0 0.0
        %3487 = vmatpush2.msra.mxu0 0.0
        %3488 = vmatprep.subr.mxu0 0.0
        %3489 = vmatpush2.msra.mxu0 0.0
        %3490 = vmatprep.subr.mxu0 0.0
        %3491 = vmatpush2.msra.mxu0 0.0
        %3492 = vmatprep.subr.mxu0 0.0
        %3493 = vmatpush2.msra.mxu0 0.0
        %3494 = vmatprep.subr.mxu0 0.0
        %3495 = vmatpush2.msra.mxu0 0.0
        %3496 = vmatprep.subr.mxu0 0.0
        %3497 = vmatpush2.msra.mxu0 0.0
        %3498 = vmatprep.subr.mxu0 0.0
        %3499 = vmatpush2.msra.mxu0 0.0
        %3500 = vmatprep.subr.mxu0 0.0
        %3501 = vmatpush2.msra.mxu0 0.0
        %3502 = vmatprep.mubr.f32.mxu0 0.0
        %3503 = vmatmul.mubr.f32.gmra.mxu0 %v3430
        %v3504 = vpop.f32.mrf.mxu0
        %v3505 = vadd.f32 %v3421, %v3504
        %v3506 = vpop.f32.mrf.mxu0
        %3507 = vmatprep.mubr.f32.mxu0 0.0
        %3508 = vmatmul.mubr.f32.gmra.mxu0 %v3433
        %v3509 = vpop.f32.mrf.mxu0
        %v3510 = vadd.f32 %v3426, %v3509
        %v3511 = vpop.f32.mrf.mxu0
        %3512 = vdwg.mxu0
        %v3513 = vld [vmem:[%s196 + $0x9] sm:$0x1]
        %v3514 = vld [vmem:[%s196 + $0x19] sm:$0x1]
        %v3515 = vld [vmem:[%s196 + $0x29] sm:$0x1]
        %v3516 = vld [vmem:[%s196 + $0x39] sm:$0x1]
        %v3521 = vrot.slane %v3514, 7
        %v3522 = vsel %vm250, %v3521, %v3513
        %v3523 = vrot.slane %v3515, 6
        %v3524 = vsel %vm253, %v3523, %v3522
        %v3525 = vrot.slane %v3516, 5
        %v3526 = vsel %vm256, %v3525, %v3524
        %v3527 = vsel %vm258, %v3526, 0
        %3529 = vmatprep.subr.mxu0 0.0
        %3530 = vmatpush1.msra.mxu0 0.0
        %3531 = vmatprep.subr.mxu0 0.0
        %3532 = vmatpush1.msra.mxu0 0.0
        %3533 = vmatprep.subr.mxu0 0.0
        %3534 = vmatpush1.msra.mxu0 0.0
        %3535 = vmatprep.subr.mxu0 0.0
        %3536 = vmatpush1.msra.mxu0 0.0
        %3537 = vmatprep.subr.mxu0 0.0
        %3538 = vmatpush1.msra.mxu0 0.0
        %3539 = vmatprep.subr.mxu0 0.0
        %3540 = vmatpush1.msra.mxu0 0.0
        %3541 = vmatprep.subr.mxu0 0.0
        %3542 = vmatpush1.msra.mxu0 0.0
        %3543 = vmatprep.subr.mxu0 0.0
        %3544 = vmatpush1.msra.mxu0 0.0
        %3545 = vmatprep.subr.mxu0 0.0
        %3546 = vmatpush1.msra.mxu0 0.0
        %3547 = vmatprep.subr.mxu0 0.0
        %3548 = vmatpush1.msra.mxu0 0.0
        %3549 = vmatprep.subr.mxu0 0.0
        %3550 = vmatpush1.msra.mxu0 0.0
        %3551 = vmatprep.subr.mxu0 0.0
        %3552 = vmatpush1.msra.mxu0 0.0
        %3553 = vmatprep.subr.mxu0 0.0
        %3554 = vmatpush1.msra.mxu0 0.0
        %3555 = vmatprep.subr.mxu0 0.0
        %3556 = vmatpush1.msra.mxu0 0.0
        %3557 = vmatprep.subr.mxu0 0.0
        %3558 = vmatpush1.msra.mxu0 %v231
        %3559 = vmatprep.subr.mxu0 0.0
        %3560 = vmatpush1.msra.mxu0 %v230
        %3561 = vmatprep.subr.mxu0 0.0
        %3562 = vmatpush2.msra.mxu0 0.0
        %3563 = vmatprep.subr.mxu0 0.0
        %3564 = vmatpush2.msra.mxu0 0.0
        %3565 = vmatprep.subr.mxu0 0.0
        %3566 = vmatpush2.msra.mxu0 0.0
        %3567 = vmatprep.subr.mxu0 0.0
        %3568 = vmatpush2.msra.mxu0 0.0
        %3569 = vmatprep.subr.mxu0 0.0
        %3570 = vmatpush2.msra.mxu0 0.0
        %3571 = vmatprep.subr.mxu0 0.0
        %3572 = vmatpush2.msra.mxu0 0.0
        %3573 = vmatprep.subr.mxu0 0.0
        %3574 = vmatpush2.msra.mxu0 0.0
        %3575 = vmatprep.subr.mxu0 0.0
        %3576 = vmatpush2.msra.mxu0 0.0
        %3577 = vmatprep.subr.mxu0 0.0
        %3578 = vmatpush2.msra.mxu0 0.0
        %3579 = vmatprep.subr.mxu0 0.0
        %3580 = vmatpush2.msra.mxu0 0.0
        %3581 = vmatprep.subr.mxu0 0.0
        %3582 = vmatpush2.msra.mxu0 0.0
        %3583 = vmatprep.subr.mxu0 0.0
        %3584 = vmatpush2.msra.mxu0 0.0
        %3585 = vmatprep.subr.mxu0 0.0
        %3586 = vmatpush2.msra.mxu0 0.0
        %3587 = vmatprep.subr.mxu0 0.0
        %3588 = vmatpush2.msra.mxu0 0.0
        %3589 = vmatprep.subr.mxu0 0.0
        %3590 = vmatpush2.msra.mxu0 0.0
        %3591 = vmatprep.subr.mxu0 0.0
        %3592 = vmatpush2.msra.mxu0 0.0
        %3593 = vmatprep.mubr.f32.mxu0 0.0
        %3594 = vmatmul.mubr.f32.gmra.mxu0 %v3527
        %v3595 = vpop.f32.mrf.mxu0
        %v3596 = vadd.f32 0.0, %v3595
        %v3597 = vpop.f32.mrf.mxu0
        %3598 = vdwg.mxu0
        %v3599 = vld [vmem:[%s662] sm:$0xff]
        %v3600 = vld [vmem:[%s662 + $0x8] sm:$0xff]
        %v3602 = vsel %vm406, %v3599, 0
        %v3605 = vsel %vm406, %v3600, 0
        %v3608 = vsel %vm413, %v3596, 0
        %3610 = vmatprep.subr.mxu0 0.0
        %3611 = vmatpush1.msra.mxu0 0.0
        %3612 = vmatprep.subr.mxu0 0.0
        %3613 = vmatpush1.msra.mxu0 0.0
        %3614 = vmatprep.subr.mxu0 0.0
        %3615 = vmatpush1.msra.mxu0 0.0
        %3616 = vmatprep.subr.mxu0 0.0
        %3617 = vmatpush1.msra.mxu0 0.0
        %3618 = vmatprep.subr.mxu0 0.0
        %3619 = vmatpush1.msra.mxu0 0.0
        %3620 = vmatprep.subr.mxu0 0.0
        %3621 = vmatpush1.msra.mxu0 0.0
        %3622 = vmatprep.subr.mxu0 0.0
        %3623 = vmatpush1.msra.mxu0 0.0
        %3624 = vmatprep.subr.mxu0 0.0
        %3625 = vmatpush1.msra.mxu0 0.0
        %3626 = vmatprep.subr.mxu0 0.0
        %3627 = vmatpush1.msra.mxu0 0.0
        %3628 = vmatprep.subr.mxu0 0.0
        %3629 = vmatpush1.msra.mxu0 0.0
        %3630 = vmatprep.subr.mxu0 0.0
        %3631 = vmatpush1.msra.mxu0 0.0
        %3632 = vmatprep.subr.mxu0 0.0
        %3633 = vmatpush1.msra.mxu0 0.0
        %3634 = vmatprep.subr.mxu0 0.0
        %3635 = vmatpush1.msra.mxu0 0.0
        %3636 = vmatprep.subr.mxu0 0.0
        %3637 = vmatpush1.msra.mxu0 0.0
        %3638 = vmatprep.subr.mxu0 0.0
        %3639 = vmatpush1.msra.mxu0 0.0
        %3640 = vmatprep.subr.mxu0 0.0
        %3641 = vmatpush1.msra.mxu0 %v3608
        %3642 = vmatprep.subr.mxu0 0.0
        %3643 = vmatpush2.msra.mxu0 0.0
        %3644 = vmatprep.subr.mxu0 0.0
        %3645 = vmatpush2.msra.mxu0 0.0
        %3646 = vmatprep.subr.mxu0 0.0
        %3647 = vmatpush2.msra.mxu0 0.0
        %3648 = vmatprep.subr.mxu0 0.0
        %3649 = vmatpush2.msra.mxu0 0.0
        %3650 = vmatprep.subr.mxu0 0.0
        %3651 = vmatpush2.msra.mxu0 0.0
        %3652 = vmatprep.subr.mxu0 0.0
        %3653 = vmatpush2.msra.mxu0 0.0
        %3654 = vmatprep.subr.mxu0 0.0
        %3655 = vmatpush2.msra.mxu0 0.0
        %3656 = vmatprep.subr.mxu0 0.0
        %3657 = vmatpush2.msra.mxu0 0.0
        %3658 = vmatprep.subr.mxu0 0.0
        %3659 = vmatpush2.msra.mxu0 0.0
        %3660 = vmatprep.subr.mxu0 0.0
        %3661 = vmatpush2.msra.mxu0 0.0
        %3662 = vmatprep.subr.mxu0 0.0
        %3663 = vmatpush2.msra.mxu0 0.0
        %3664 = vmatprep.subr.mxu0 0.0
        %3665 = vmatpush2.msra.mxu0 0.0
        %3666 = vmatprep.subr.mxu0 0.0
        %3667 = vmatpush2.msra.mxu0 0.0
        %3668 = vmatprep.subr.mxu0 0.0
        %3669 = vmatpush2.msra.mxu0 0.0
        %3670 = vmatprep.subr.mxu0 0.0
        %3671 = vmatpush2.msra.mxu0 0.0
        %3672 = vmatprep.subr.mxu0 0.0
        %3673 = vmatpush2.msra.mxu0 0.0
        %3674 = vmatprep.mubr.f32.mxu0 0.0
        %3675 = vmatmul.mubr.f32.gmra.mxu0 %v3602
        %v3676 = vpop.f32.mrf.mxu0
        %v3677 = vadd.f32 0.0, %v3676
        %v3678 = vpop.f32.mrf.mxu0
        %3679 = vmatprep.mubr.f32.mxu0 0.0
        %3680 = vmatmul.mubr.f32.gmra.mxu0 %v3605
        %v3681 = vpop.f32.mrf.mxu0
        %v3682 = vadd.f32 0.0, %v3681
        %v3683 = vpop.f32.mrf.mxu0
        %3684 = vdwg.mxu0
        %v3685 = vadd.f32 %v3505, %v3677
        %v3686 = vadd.f32 %v3510, %v3682
        %3687 = vmatprep.subr.mxu0 0.0
        %3688 = vmatpush1.msra.mxu0 0.0
        %3689 = vmatprep.subr.mxu0 0.0
        %3690 = vmatpush1.msra.mxu0 0.0
        %3691 = vmatprep.subr.mxu0 0.0
        %3692 = vmatpush1.msra.mxu0 0.0
        %3693 = vmatprep.subr.mxu0 0.0
        %3694 = vmatpush1.msra.mxu0 0.0
        %3695 = vmatprep.subr.mxu0 0.0
        %3696 = vmatpush1.msra.mxu0 0.0
        %3697 = vmatprep.subr.mxu0 0.0
        %3698 = vmatpush1.msra.mxu0 0.0
        %3699 = vmatprep.subr.mxu0 0.0
        %3700 = vmatpush1.msra.mxu0 0.0
        %3701 = vmatprep.subr.mxu0 0.0
        %3702 = vmatpush1.msra.mxu0 0.0
        %3703 = vmatprep.subr.mxu0 0.0
        %3704 = vmatpush1.msra.mxu0 0.0
        %3705 = vmatprep.subr.mxu0 0.0
        %3706 = vmatpush1.msra.mxu0 0.0
        %3707 = vmatprep.subr.mxu0 0.0
        %3708 = vmatpush1.msra.mxu0 0.0
        %3709 = vmatprep.subr.mxu0 0.0
        %3710 = vmatpush1.msra.mxu0 0.0
        %3711 = vmatprep.subr.mxu0 0.0
        %3712 = vmatpush1.msra.mxu0 0.0
        %3713 = vmatprep.subr.mxu0 0.0
        %3714 = vmatpush1.msra.mxu0 0.0
        %3715 = vmatprep.subr.mxu0 0.0
        %3716 = vmatpush1.msra.mxu0 %v238
        %3717 = vmatprep.subr.mxu0 0.0
        %3718 = vmatpush1.msra.mxu0 %v237
        %3719 = vmatprep.subr.mxu0 0.0
        %3720 = vmatpush2.msra.mxu0 0.0
        %3721 = vmatprep.subr.mxu0 0.0
        %3722 = vmatpush2.msra.mxu0 0.0
        %3723 = vmatprep.subr.mxu0 0.0
        %3724 = vmatpush2.msra.mxu0 0.0
        %3725 = vmatprep.subr.mxu0 0.0
        %3726 = vmatpush2.msra.mxu0 0.0
        %3727 = vmatprep.subr.mxu0 0.0
        %3728 = vmatpush2.msra.mxu0 0.0
        %3729 = vmatprep.subr.mxu0 0.0
        %3730 = vmatpush2.msra.mxu0 0.0
        %3731 = vmatprep.subr.mxu0 0.0
        %3732 = vmatpush2.msra.mxu0 0.0
        %3733 = vmatprep.subr.mxu0 0.0
        %3734 = vmatpush2.msra.mxu0 0.0
        %3735 = vmatprep.subr.mxu0 0.0
        %3736 = vmatpush2.msra.mxu0 0.0
        %3737 = vmatprep.subr.mxu0 0.0
        %3738 = vmatpush2.msra.mxu0 0.0
        %3739 = vmatprep.subr.mxu0 0.0
        %3740 = vmatpush2.msra.mxu0 0.0
        %3741 = vmatprep.subr.mxu0 0.0
        %3742 = vmatpush2.msra.mxu0 0.0
        %3743 = vmatprep.subr.mxu0 0.0
        %3744 = vmatpush2.msra.mxu0 0.0
        %3745 = vmatprep.subr.mxu0 0.0
        %3746 = vmatpush2.msra.mxu0 0.0
        %3747 = vmatprep.subr.mxu0 0.0
        %3748 = vmatpush2.msra.mxu0 0.0
        %3749 = vmatprep.subr.mxu0 0.0
        %3750 = vmatpush2.msra.mxu0 0.0
        %3751 = vmatprep.mubr.f32.mxu0 0.0
        %3752 = vmatmul.mubr.f32.gmra.mxu0 %v3527
        %v3753 = vpop.f32.mrf.mxu0
        %v3754 = vadd.f32 0.0, %v3753
        %v3755 = vpop.f32.mrf.mxu0
        %3756 = vdwg.mxu0
        %v3757 = vld [vmem:[%s821] sm:$0xff]
        %v3758 = vld [vmem:[%s821 + $0x8] sm:$0xff]
        %v3760 = vsel %vm406, %v3757, 0
        %v3763 = vsel %vm406, %v3758, 0
        %v3766 = vsel %vm413, %v3754, 0
        %3768 = vmatprep.subr.mxu0 0.0
        %3769 = vmatpush1.msra.mxu0 0.0
        %3770 = vmatprep.subr.mxu0 0.0
        %3771 = vmatpush1.msra.mxu0 0.0
        %3772 = vmatprep.subr.mxu0 0.0
        %3773 = vmatpush1.msra.mxu0 0.0
        %3774 = vmatprep.subr.mxu0 0.0
        %3775 = vmatpush1.msra.mxu0 0.0
        %3776 = vmatprep.subr.mxu0 0.0
        %3777 = vmatpush1.msra.mxu0 0.0
        %3778 = vmatprep.subr.mxu0 0.0
        %3779 = vmatpush1.msra.mxu0 0.0
        %3780 = vmatprep.subr.mxu0 0.0
        %3781 = vmatpush1.msra.mxu0 0.0
        %3782 = vmatprep.subr.mxu0 0.0
        %3783 = vmatpush1.msra.mxu0 0.0
        %3784 = vmatprep.subr.mxu0 0.0
        %3785 = vmatpush1.msra.mxu0 0.0
        %3786 = vmatprep.subr.mxu0 0.0
        %3787 = vmatpush1.msra.mxu0 0.0
        %3788 = vmatprep.subr.mxu0 0.0
        %3789 = vmatpush1.msra.mxu0 0.0
        %3790 = vmatprep.subr.mxu0 0.0
        %3791 = vmatpush1.msra.mxu0 0.0
        %3792 = vmatprep.subr.mxu0 0.0
        %3793 = vmatpush1.msra.mxu0 0.0
        %3794 = vmatprep.subr.mxu0 0.0
        %3795 = vmatpush1.msra.mxu0 0.0
        %3796 = vmatprep.subr.mxu0 0.0
        %3797 = vmatpush1.msra.mxu0 0.0
        %3798 = vmatprep.subr.mxu0 0.0
        %3799 = vmatpush1.msra.mxu0 %v3766
        %3800 = vmatprep.subr.mxu0 0.0
        %3801 = vmatpush2.msra.mxu0 0.0
        %3802 = vmatprep.subr.mxu0 0.0
        %3803 = vmatpush2.msra.mxu0 0.0
        %3804 = vmatprep.subr.mxu0 0.0
        %3805 = vmatpush2.msra.mxu0 0.0
        %3806 = vmatprep.subr.mxu0 0.0
        %3807 = vmatpush2.msra.mxu0 0.0
        %3808 = vmatprep.subr.mxu0 0.0
        %3809 = vmatpush2.msra.mxu0 0.0
        %3810 = vmatprep.subr.mxu0 0.0
        %3811 = vmatpush2.msra.mxu0 0.0
        %3812 = vmatprep.subr.mxu0 0.0
        %3813 = vmatpush2.msra.mxu0 0.0
        %3814 = vmatprep.subr.mxu0 0.0
        %3815 = vmatpush2.msra.mxu0 0.0
        %3816 = vmatprep.subr.mxu0 0.0
        %3817 = vmatpush2.msra.mxu0 0.0
        %3818 = vmatprep.subr.mxu0 0.0
        %3819 = vmatpush2.msra.mxu0 0.0
        %3820 = vmatprep.subr.mxu0 0.0
        %3821 = vmatpush2.msra.mxu0 0.0
        %3822 = vmatprep.subr.mxu0 0.0
        %3823 = vmatpush2.msra.mxu0 0.0
        %3824 = vmatprep.subr.mxu0 0.0
        %3825 = vmatpush2.msra.mxu0 0.0
        %3826 = vmatprep.subr.mxu0 0.0
        %3827 = vmatpush2.msra.mxu0 0.0
        %3828 = vmatprep.subr.mxu0 0.0
        %3829 = vmatpush2.msra.mxu0 0.0
        %3830 = vmatprep.subr.mxu0 0.0
        %3831 = vmatpush2.msra.mxu0 0.0
        %3832 = vmatprep.mubr.f32.mxu0 0.0
        %3833 = vmatmul.mubr.f32.gmra.mxu0 %v3760
        %v3834 = vpop.f32.mrf.mxu0
        %v3835 = vadd.f32 0.0, %v3834
        %v3836 = vpop.f32.mrf.mxu0
        %3837 = vmatprep.mubr.f32.mxu0 0.0
        %3838 = vmatmul.mubr.f32.gmra.mxu0 %v3763
        %v3839 = vpop.f32.mrf.mxu0
        %v3840 = vadd.f32 0.0, %v3839
        %v3841 = vpop.f32.mrf.mxu0
        %3842 = vdwg.mxu0
        %v3843 = vadd.f32 %v3685, %v3835
        %v3844 = vadd.f32 %v3686, %v3840
        %v3845 = vadd.f32 %v3843, %v913
        %v3846 = vadd.f32 %v3844, %v918
        %v3847 = vmax.f32 %v3845, 0.0
        %v3848 = vadd.f32 %v3847, %v3846
        %v3849 = vmax.f32 %v3848, 0.0
        %v3851 = vcombine.high %v3849, %v3849
        %v3853 = vunpack.c.l.s4 1966171168
        %v3854 = vunpack.c.0.s8 %v3853
        %v3855 = vlaneseq
        %v3856 = vshrl.u32 %v3855, 7
        %v3857 = vsub.s32 %v3854, %v3856
        %v3858 = vrot.slane %v3849, %v3857
        %v3860 = vunpack.c.l.s4 1966171168
        %v3861 = vunpack.c.0.s8 %v3860
        %v3862 = vlaneseq
        %v3863 = vshrl.u32 %v3862, 7
        %v3864 = vsub.s32 %v3861, %v3863
        %v3865 = vrot.slane %v3851, %v3864
        %v3866 = vcombine.high %v3858, %v3858
        %v3867 = vcombine.high %v3865, %v3865
        %v3869 = vunpack.c.l.s4 1966171168
        %v3870 = vunpack.c.0.s8 %v3869
        %v3871 = vlaneseq
        %v3872 = vshrl.u32 %v3871, 7
        %v3873 = vsub.s32 %v3870, %v3872
        %v3874 = vrot.slane %v3858, %v3873
        %v3876 = vunpack.c.l.s4 1966171168
        %v3877 = vunpack.c.0.s8 %v3876
        %v3878 = vlaneseq
        %v3879 = vshrl.u32 %v3878, 7
        %v3880 = vsub.s32 %v3877, %v3879
        %v3881 = vrot.slane %v3865, %v3880
        %v3883 = vunpack.c.l.s4 1966171168
        %v3884 = vunpack.c.0.s8 %v3883
        %v3885 = vlaneseq
        %v3886 = vshrl.u32 %v3885, 7
        %v3887 = vsub.s32 %v3884, %v3886
        %v3888 = vrot.slane %v3866, %v3887
        %v3890 = vunpack.c.l.s4 1966171168
        %v3891 = vunpack.c.0.s8 %v3890
        %v3892 = vlaneseq
        %v3893 = vshrl.u32 %v3892, 7
        %v3894 = vsub.s32 %v3891, %v3893
        %v3895 = vrot.slane %v3867, %v3894
        %v3896 = vcombine.high %v3874, %v3874
        %v3897 = vcombine.high %v3881, %v3881
        %v3898 = vcombine.high %v3888, %v3888
        %v3899 = vcombine.high %v3895, %v3895
        %3908 = vst.msk [vmem:[%s218 + $0x4] sm:$0x1] %vm983, %v3874
        %3909 = vst.msk [vmem:[%s218 + $0xc] sm:$0x1] %vm983, %v3888
        %3910 = vst.msk [vmem:[%s218 + $0x14] sm:$0x1] %vm983, %v3896
        %3911 = vst.msk [vmem:[%s218 + $0x1c] sm:$0x1] %vm983, %v3898
        %3912 = vst.msk [vmem:[%s218 + $0x24] sm:$0x1] %vm983, %v3881
        %3913 = vst.msk [vmem:[%s218 + $0x2c] sm:$0x1] %vm983, %v3895
        %3914 = vst.msk [vmem:[%s218 + $0x34] sm:$0x1] %vm983, %v3897
        %3915 = vst.msk [vmem:[%s218 + $0x3c] sm:$0x1] %vm983, %v3899
        %v3916 = vld [vmem:[%s196 + $0xa] sm:$0x1]
        %v3917 = vld [vmem:[%s196 + $0x1a] sm:$0x1]
        %v3918 = vld [vmem:[%s196 + $0x2a] sm:$0x1]
        %v3919 = vld [vmem:[%s196 + $0x3a] sm:$0x1]
        %v3924 = vrot.slane %v3917, 7
        %v3925 = vsel %vm250, %v3924, %v3916
        %v3926 = vrot.slane %v3918, 6
        %v3927 = vsel %vm253, %v3926, %v3925
        %v3928 = vrot.slane %v3919, 5
        %v3929 = vsel %vm256, %v3928, %v3927
        %v3930 = vsel %vm258, %v3929, 0
        %3932 = vmatprep.subr.mxu0 0.0
        %3933 = vmatpush1.msra.mxu0 0.0
        %3934 = vmatprep.subr.mxu0 0.0
        %3935 = vmatpush1.msra.mxu0 0.0
        %3936 = vmatprep.subr.mxu0 0.0
        %3937 = vmatpush1.msra.mxu0 0.0
        %3938 = vmatprep.subr.mxu0 0.0
        %3939 = vmatpush1.msra.mxu0 0.0
        %3940 = vmatprep.subr.mxu0 0.0
        %3941 = vmatpush1.msra.mxu0 0.0
        %3942 = vmatprep.subr.mxu0 0.0
        %3943 = vmatpush1.msra.mxu0 0.0
        %3944 = vmatprep.subr.mxu0 0.0
        %3945 = vmatpush1.msra.mxu0 0.0
        %3946 = vmatprep.subr.mxu0 0.0
        %3947 = vmatpush1.msra.mxu0 0.0
        %3948 = vmatprep.subr.mxu0 0.0
        %3949 = vmatpush1.msra.mxu0 0.0
        %3950 = vmatprep.subr.mxu0 0.0
        %3951 = vmatpush1.msra.mxu0 0.0
        %3952 = vmatprep.subr.mxu0 0.0
        %3953 = vmatpush1.msra.mxu0 0.0
        %3954 = vmatprep.subr.mxu0 0.0
        %3955 = vmatpush1.msra.mxu0 0.0
        %3956 = vmatprep.subr.mxu0 0.0
        %3957 = vmatpush1.msra.mxu0 0.0
        %3958 = vmatprep.subr.mxu0 0.0
        %3959 = vmatpush1.msra.mxu0 0.0
        %3960 = vmatprep.subr.mxu0 0.0
        %3961 = vmatpush1.msra.mxu0 %v231
        %3962 = vmatprep.subr.mxu0 0.0
        %3963 = vmatpush1.msra.mxu0 %v230
        %3964 = vmatprep.subr.mxu0 0.0
        %3965 = vmatpush2.msra.mxu0 0.0
        %3966 = vmatprep.subr.mxu0 0.0
        %3967 = vmatpush2.msra.mxu0 0.0
        %3968 = vmatprep.subr.mxu0 0.0
        %3969 = vmatpush2.msra.mxu0 0.0
        %3970 = vmatprep.subr.mxu0 0.0
        %3971 = vmatpush2.msra.mxu0 0.0
        %3972 = vmatprep.subr.mxu0 0.0
        %3973 = vmatpush2.msra.mxu0 0.0
        %3974 = vmatprep.subr.mxu0 0.0
        %3975 = vmatpush2.msra.mxu0 0.0
        %3976 = vmatprep.subr.mxu0 0.0
        %3977 = vmatpush2.msra.mxu0 0.0
        %3978 = vmatprep.subr.mxu0 0.0
        %3979 = vmatpush2.msra.mxu0 0.0
        %3980 = vmatprep.subr.mxu0 0.0
        %3981 = vmatpush2.msra.mxu0 0.0
        %3982 = vmatprep.subr.mxu0 0.0
        %3983 = vmatpush2.msra.mxu0 0.0
        %3984 = vmatprep.subr.mxu0 0.0
        %3985 = vmatpush2.msra.mxu0 0.0
        %3986 = vmatprep.subr.mxu0 0.0
        %3987 = vmatpush2.msra.mxu0 0.0
        %3988 = vmatprep.subr.mxu0 0.0
        %3989 = vmatpush2.msra.mxu0 0.0
        %3990 = vmatprep.subr.mxu0 0.0
        %3991 = vmatpush2.msra.mxu0 0.0
        %3992 = vmatprep.subr.mxu0 0.0
        %3993 = vmatpush2.msra.mxu0 0.0
        %3994 = vmatprep.subr.mxu0 0.0
        %3995 = vmatpush2.msra.mxu0 0.0
        %3996 = vmatprep.mubr.f32.mxu0 0.0
        %3997 = vmatmul.mubr.f32.gmra.mxu0 %v3930
        %v3998 = vpop.f32.mrf.mxu0
        %v3999 = vadd.f32 0.0, %v3998
        %v4000 = vpop.f32.mrf.mxu0
        %4001 = vdwg.mxu0
        %v4002 = vld [vmem:[%s1] sm:$0xff]
        %v4003 = vld [vmem:[%s1 + $0x8] sm:$0xff]
        %4004 = vmatprep.subr.mxu0 0.0
        %4005 = vmatpush1.msra.mxu0 0.0
        %4006 = vmatprep.subr.mxu0 0.0
        %4007 = vmatpush1.msra.mxu0 0.0
        %4008 = vmatprep.subr.mxu0 0.0
        %4009 = vmatpush1.msra.mxu0 0.0
        %4010 = vmatprep.subr.mxu0 0.0
        %4011 = vmatpush1.msra.mxu0 0.0
        %4012 = vmatprep.subr.mxu0 0.0
        %4013 = vmatpush1.msra.mxu0 0.0
        %4014 = vmatprep.subr.mxu0 0.0
        %4015 = vmatpush1.msra.mxu0 0.0
        %4016 = vmatprep.subr.mxu0 0.0
        %4017 = vmatpush1.msra.mxu0 0.0
        %4018 = vmatprep.subr.mxu0 0.0
        %4019 = vmatpush1.msra.mxu0 0.0
        %4020 = vmatprep.subr.mxu0 0.0
        %4021 = vmatpush1.msra.mxu0 0.0
        %4022 = vmatprep.subr.mxu0 0.0
        %4023 = vmatpush1.msra.mxu0 0.0
        %4024 = vmatprep.subr.mxu0 0.0
        %4025 = vmatpush1.msra.mxu0 0.0
        %4026 = vmatprep.subr.mxu0 0.0
        %4027 = vmatpush1.msra.mxu0 0.0
        %4028 = vmatprep.subr.mxu0 0.0
        %4029 = vmatpush1.msra.mxu0 0.0
        %4030 = vmatprep.subr.mxu0 0.0
        %4031 = vmatpush1.msra.mxu0 0.0
        %4032 = vmatprep.subr.mxu0 0.0
        %4033 = vmatpush1.msra.mxu0 %v238
        %4034 = vmatprep.subr.mxu0 0.0
        %4035 = vmatpush1.msra.mxu0 %v237
        %4036 = vmatprep.subr.mxu0 0.0
        %4037 = vmatpush2.msra.mxu0 0.0
        %4038 = vmatprep.subr.mxu0 0.0
        %4039 = vmatpush2.msra.mxu0 0.0
        %4040 = vmatprep.subr.mxu0 0.0
        %4041 = vmatpush2.msra.mxu0 0.0
        %4042 = vmatprep.subr.mxu0 0.0
        %4043 = vmatpush2.msra.mxu0 0.0
        %4044 = vmatprep.subr.mxu0 0.0
        %4045 = vmatpush2.msra.mxu0 0.0
        %4046 = vmatprep.subr.mxu0 0.0
        %4047 = vmatpush2.msra.mxu0 0.0
        %4048 = vmatprep.subr.mxu0 0.0
        %4049 = vmatpush2.msra.mxu0 0.0
        %4050 = vmatprep.subr.mxu0 0.0
        %4051 = vmatpush2.msra.mxu0 0.0
        %4052 = vmatprep.subr.mxu0 0.0
        %4053 = vmatpush2.msra.mxu0 0.0
        %4054 = vmatprep.subr.mxu0 0.0
        %4055 = vmatpush2.msra.mxu0 0.0
        %4056 = vmatprep.subr.mxu0 0.0
        %4057 = vmatpush2.msra.mxu0 0.0
        %4058 = vmatprep.subr.mxu0 0.0
        %4059 = vmatpush2.msra.mxu0 0.0
        %4060 = vmatprep.subr.mxu0 0.0
        %4061 = vmatpush2.msra.mxu0 0.0
        %4062 = vmatprep.subr.mxu0 0.0
        %4063 = vmatpush2.msra.mxu0 0.0
        %4064 = vmatprep.subr.mxu0 0.0
        %4065 = vmatpush2.msra.mxu0 0.0
        %4066 = vmatprep.subr.mxu0 0.0
        %4067 = vmatpush2.msra.mxu0 0.0
        %4068 = vmatprep.mubr.f32.mxu0 0.0
        %4069 = vmatmul.mubr.f32.gmra.mxu0 %v3930
        %v4070 = vpop.f32.mrf.mxu0
        %v4071 = vadd.f32 0.0, %v4070
        %v4072 = vpop.f32.mrf.mxu0
        %4073 = vdwg.mxu0
        %v4074 = vld [vmem:[%s403] sm:$0xff]
        %v4075 = vld [vmem:[%s403 + $0x8] sm:$0xff]
        %v4077 = vsel %vm406, %v4074, 0
        %v4080 = vsel %vm406, %v4075, 0
        %v4083 = vsel %vm413, %v4071, 0
        %4085 = vmatprep.subr.mxu0 0.0
        %4086 = vmatpush1.msra.mxu0 0.0
        %4087 = vmatprep.subr.mxu0 0.0
        %4088 = vmatpush1.msra.mxu0 0.0
        %4089 = vmatprep.subr.mxu0 0.0
        %4090 = vmatpush1.msra.mxu0 0.0
        %4091 = vmatprep.subr.mxu0 0.0
        %4092 = vmatpush1.msra.mxu0 0.0
        %4093 = vmatprep.subr.mxu0 0.0
        %4094 = vmatpush1.msra.mxu0 0.0
        %4095 = vmatprep.subr.mxu0 0.0
        %4096 = vmatpush1.msra.mxu0 0.0
        %4097 = vmatprep.subr.mxu0 0.0
        %4098 = vmatpush1.msra.mxu0 0.0
        %4099 = vmatprep.subr.mxu0 0.0
        %4100 = vmatpush1.msra.mxu0 0.0
        %4101 = vmatprep.subr.mxu0 0.0
        %4102 = vmatpush1.msra.mxu0 0.0
        %4103 = vmatprep.subr.mxu0 0.0
        %4104 = vmatpush1.msra.mxu0 0.0
        %4105 = vmatprep.subr.mxu0 0.0
        %4106 = vmatpush1.msra.mxu0 0.0
        %4107 = vmatprep.subr.mxu0 0.0
        %4108 = vmatpush1.msra.mxu0 0.0
        %4109 = vmatprep.subr.mxu0 0.0
        %4110 = vmatpush1.msra.mxu0 0.0
        %4111 = vmatprep.subr.mxu0 0.0
        %4112 = vmatpush1.msra.mxu0 0.0
        %4113 = vmatprep.subr.mxu0 0.0
        %4114 = vmatpush1.msra.mxu0 0.0
        %4115 = vmatprep.subr.mxu0 0.0
        %4116 = vmatpush1.msra.mxu0 %v4083
        %4117 = vmatprep.subr.mxu0 0.0
        %4118 = vmatpush2.msra.mxu0 0.0
        %4119 = vmatprep.subr.mxu0 0.0
        %4120 = vmatpush2.msra.mxu0 0.0
        %4121 = vmatprep.subr.mxu0 0.0
        %4122 = vmatpush2.msra.mxu0 0.0
        %4123 = vmatprep.subr.mxu0 0.0
        %4124 = vmatpush2.msra.mxu0 0.0
        %4125 = vmatprep.subr.mxu0 0.0
        %4126 = vmatpush2.msra.mxu0 0.0
        %4127 = vmatprep.subr.mxu0 0.0
        %4128 = vmatpush2.msra.mxu0 0.0
        %4129 = vmatprep.subr.mxu0 0.0
        %4130 = vmatpush2.msra.mxu0 0.0
        %4131 = vmatprep.subr.mxu0 0.0
        %4132 = vmatpush2.msra.mxu0 0.0
        %4133 = vmatprep.subr.mxu0 0.0
        %4134 = vmatpush2.msra.mxu0 0.0
        %4135 = vmatprep.subr.mxu0 0.0
        %4136 = vmatpush2.msra.mxu0 0.0
        %4137 = vmatprep.subr.mxu0 0.0
        %4138 = vmatpush2.msra.mxu0 0.0
        %4139 = vmatprep.subr.mxu0 0.0
        %4140 = vmatpush2.msra.mxu0 0.0
        %4141 = vmatprep.subr.mxu0 0.0
        %4142 = vmatpush2.msra.mxu0 0.0
        %4143 = vmatprep.subr.mxu0 0.0
        %4144 = vmatpush2.msra.mxu0 0.0
        %4145 = vmatprep.subr.mxu0 0.0
        %4146 = vmatpush2.msra.mxu0 0.0
        %4147 = vmatprep.subr.mxu0 0.0
        %4148 = vmatpush2.msra.mxu0 0.0
        %4149 = vmatprep.mubr.f32.mxu0 0.0
        %4150 = vmatmul.mubr.f32.gmra.mxu0 %v4077
        %v4151 = vpop.f32.mrf.mxu0
        %v4152 = vadd.f32 0.0, %v4151
        %v4153 = vpop.f32.mrf.mxu0
        %4154 = vmatprep.mubr.f32.mxu0 0.0
        %4155 = vmatmul.mubr.f32.gmra.mxu0 %v4080
        %v4156 = vpop.f32.mrf.mxu0
        %v4157 = vadd.f32 0.0, %v4156
        %v4158 = vpop.f32.mrf.mxu0
        %4159 = vdwg.mxu0
        %v4161 = vsel %vm406, %v4002, 0
        %v4164 = vsel %vm406, %v4003, 0
        %v4167 = vsel %vm413, %v3999, 0
        %4169 = vmatprep.subr.mxu0 0.0
        %4170 = vmatpush1.msra.mxu0 0.0
        %4171 = vmatprep.subr.mxu0 0.0
        %4172 = vmatpush1.msra.mxu0 0.0
        %4173 = vmatprep.subr.mxu0 0.0
        %4174 = vmatpush1.msra.mxu0 0.0
        %4175 = vmatprep.subr.mxu0 0.0
        %4176 = vmatpush1.msra.mxu0 0.0
        %4177 = vmatprep.subr.mxu0 0.0
        %4178 = vmatpush1.msra.mxu0 0.0
        %4179 = vmatprep.subr.mxu0 0.0
        %4180 = vmatpush1.msra.mxu0 0.0
        %4181 = vmatprep.subr.mxu0 0.0
        %4182 = vmatpush1.msra.mxu0 0.0
        %4183 = vmatprep.subr.mxu0 0.0
        %4184 = vmatpush1.msra.mxu0 0.0
        %4185 = vmatprep.subr.mxu0 0.0
        %4186 = vmatpush1.msra.mxu0 0.0
        %4187 = vmatprep.subr.mxu0 0.0
        %4188 = vmatpush1.msra.mxu0 0.0
        %4189 = vmatprep.subr.mxu0 0.0
        %4190 = vmatpush1.msra.mxu0 0.0
        %4191 = vmatprep.subr.mxu0 0.0
        %4192 = vmatpush1.msra.mxu0 0.0
        %4193 = vmatprep.subr.mxu0 0.0
        %4194 = vmatpush1.msra.mxu0 0.0
        %4195 = vmatprep.subr.mxu0 0.0
        %4196 = vmatpush1.msra.mxu0 0.0
        %4197 = vmatprep.subr.mxu0 0.0
        %4198 = vmatpush1.msra.mxu0 0.0
        %4199 = vmatprep.subr.mxu0 0.0
        %4200 = vmatpush1.msra.mxu0 %v4167
        %4201 = vmatprep.subr.mxu0 0.0
        %4202 = vmatpush2.msra.mxu0 0.0
        %4203 = vmatprep.subr.mxu0 0.0
        %4204 = vmatpush2.msra.mxu0 0.0
        %4205 = vmatprep.subr.mxu0 0.0
        %4206 = vmatpush2.msra.mxu0 0.0
        %4207 = vmatprep.subr.mxu0 0.0
        %4208 = vmatpush2.msra.mxu0 0.0
        %4209 = vmatprep.subr.mxu0 0.0
        %4210 = vmatpush2.msra.mxu0 0.0
        %4211 = vmatprep.subr.mxu0 0.0
        %4212 = vmatpush2.msra.mxu0 0.0
        %4213 = vmatprep.subr.mxu0 0.0
        %4214 = vmatpush2.msra.mxu0 0.0
        %4215 = vmatprep.subr.mxu0 0.0
        %4216 = vmatpush2.msra.mxu0 0.0
        %4217 = vmatprep.subr.mxu0 0.0
        %4218 = vmatpush2.msra.mxu0 0.0
        %4219 = vmatprep.subr.mxu0 0.0
        %4220 = vmatpush2.msra.mxu0 0.0
        %4221 = vmatprep.subr.mxu0 0.0
        %4222 = vmatpush2.msra.mxu0 0.0
        %4223 = vmatprep.subr.mxu0 0.0
        %4224 = vmatpush2.msra.mxu0 0.0
        %4225 = vmatprep.subr.mxu0 0.0
        %4226 = vmatpush2.msra.mxu0 0.0
        %4227 = vmatprep.subr.mxu0 0.0
        %4228 = vmatpush2.msra.mxu0 0.0
        %4229 = vmatprep.subr.mxu0 0.0
        %4230 = vmatpush2.msra.mxu0 0.0
        %4231 = vmatprep.subr.mxu0 0.0
        %4232 = vmatpush2.msra.mxu0 0.0
        %4233 = vmatprep.mubr.f32.mxu0 0.0
        %4234 = vmatmul.mubr.f32.gmra.mxu0 %v4161
        %v4235 = vpop.f32.mrf.mxu0
        %v4236 = vadd.f32 %v4152, %v4235
        %v4237 = vpop.f32.mrf.mxu0
        %4238 = vmatprep.mubr.f32.mxu0 0.0
        %4239 = vmatmul.mubr.f32.gmra.mxu0 %v4164
        %v4240 = vpop.f32.mrf.mxu0
        %v4241 = vadd.f32 %v4157, %v4240
        %v4242 = vpop.f32.mrf.mxu0
        %4243 = vdwg.mxu0
        %v4244 = vld [vmem:[%s196 + $0xb] sm:$0x1]
        %v4245 = vld [vmem:[%s196 + $0x1b] sm:$0x1]
        %v4246 = vld [vmem:[%s196 + $0x2b] sm:$0x1]
        %v4247 = vld [vmem:[%s196 + $0x3b] sm:$0x1]
        %v4252 = vrot.slane %v4245, 7
        %v4253 = vsel %vm250, %v4252, %v4244
        %v4254 = vrot.slane %v4246, 6
        %v4255 = vsel %vm253, %v4254, %v4253
        %v4256 = vrot.slane %v4247, 5
        %v4257 = vsel %vm256, %v4256, %v4255
        %v4258 = vsel %vm258, %v4257, 0
        %4260 = vmatprep.subr.mxu0 0.0
        %4261 = vmatpush1.msra.mxu0 0.0
        %4262 = vmatprep.subr.mxu0 0.0
        %4263 = vmatpush1.msra.mxu0 0.0
        %4264 = vmatprep.subr.mxu0 0.0
        %4265 = vmatpush1.msra.mxu0 0.0
        %4266 = vmatprep.subr.mxu0 0.0
        %4267 = vmatpush1.msra.mxu0 0.0
        %4268 = vmatprep.subr.mxu0 0.0
        %4269 = vmatpush1.msra.mxu0 0.0
        %4270 = vmatprep.subr.mxu0 0.0
        %4271 = vmatpush1.msra.mxu0 0.0
        %4272 = vmatprep.subr.mxu0 0.0
        %4273 = vmatpush1.msra.mxu0 0.0
        %4274 = vmatprep.subr.mxu0 0.0
        %4275 = vmatpush1.msra.mxu0 0.0
        %4276 = vmatprep.subr.mxu0 0.0
        %4277 = vmatpush1.msra.mxu0 0.0
        %4278 = vmatprep.subr.mxu0 0.0
        %4279 = vmatpush1.msra.mxu0 0.0
        %4280 = vmatprep.subr.mxu0 0.0
        %4281 = vmatpush1.msra.mxu0 0.0
        %4282 = vmatprep.subr.mxu0 0.0
        %4283 = vmatpush1.msra.mxu0 0.0
        %4284 = vmatprep.subr.mxu0 0.0
        %4285 = vmatpush1.msra.mxu0 0.0
        %4286 = vmatprep.subr.mxu0 0.0
        %4287 = vmatpush1.msra.mxu0 0.0
        %4288 = vmatprep.subr.mxu0 0.0
        %4289 = vmatpush1.msra.mxu0 %v231
        %4290 = vmatprep.subr.mxu0 0.0
        %4291 = vmatpush1.msra.mxu0 %v230
        %4292 = vmatprep.subr.mxu0 0.0
        %4293 = vmatpush2.msra.mxu0 0.0
        %4294 = vmatprep.subr.mxu0 0.0
        %4295 = vmatpush2.msra.mxu0 0.0
        %4296 = vmatprep.subr.mxu0 0.0
        %4297 = vmatpush2.msra.mxu0 0.0
        %4298 = vmatprep.subr.mxu0 0.0
        %4299 = vmatpush2.msra.mxu0 0.0
        %4300 = vmatprep.subr.mxu0 0.0
        %4301 = vmatpush2.msra.mxu0 0.0
        %4302 = vmatprep.subr.mxu0 0.0
        %4303 = vmatpush2.msra.mxu0 0.0
        %4304 = vmatprep.subr.mxu0 0.0
        %4305 = vmatpush2.msra.mxu0 0.0
        %4306 = vmatprep.subr.mxu0 0.0
        %4307 = vmatpush2.msra.mxu0 0.0
        %4308 = vmatprep.subr.mxu0 0.0
        %4309 = vmatpush2.msra.mxu0 0.0
        %4310 = vmatprep.subr.mxu0 0.0
        %4311 = vmatpush2.msra.mxu0 0.0
        %4312 = vmatprep.subr.mxu0 0.0
        %4313 = vmatpush2.msra.mxu0 0.0
        %4314 = vmatprep.subr.mxu0 0.0
        %4315 = vmatpush2.msra.mxu0 0.0
        %4316 = vmatprep.subr.mxu0 0.0
        %4317 = vmatpush2.msra.mxu0 0.0
        %4318 = vmatprep.subr.mxu0 0.0
        %4319 = vmatpush2.msra.mxu0 0.0
        %4320 = vmatprep.subr.mxu0 0.0
        %4321 = vmatpush2.msra.mxu0 0.0
        %4322 = vmatprep.subr.mxu0 0.0
        %4323 = vmatpush2.msra.mxu0 0.0
        %4324 = vmatprep.mubr.f32.mxu0 0.0
        %4325 = vmatmul.mubr.f32.gmra.mxu0 %v4258
        %v4326 = vpop.f32.mrf.mxu0
        %v4327 = vadd.f32 0.0, %v4326
        %v4328 = vpop.f32.mrf.mxu0
        %4329 = vdwg.mxu0
        %v4330 = vld [vmem:[%s662] sm:$0xff]
        %v4331 = vld [vmem:[%s662 + $0x8] sm:$0xff]
        %v4333 = vsel %vm406, %v4330, 0
        %v4336 = vsel %vm406, %v4331, 0
        %v4339 = vsel %vm413, %v4327, 0
        %4341 = vmatprep.subr.mxu0 0.0
        %4342 = vmatpush1.msra.mxu0 0.0
        %4343 = vmatprep.subr.mxu0 0.0
        %4344 = vmatpush1.msra.mxu0 0.0
        %4345 = vmatprep.subr.mxu0 0.0
        %4346 = vmatpush1.msra.mxu0 0.0
        %4347 = vmatprep.subr.mxu0 0.0
        %4348 = vmatpush1.msra.mxu0 0.0
        %4349 = vmatprep.subr.mxu0 0.0
        %4350 = vmatpush1.msra.mxu0 0.0
        %4351 = vmatprep.subr.mxu0 0.0
        %4352 = vmatpush1.msra.mxu0 0.0
        %4353 = vmatprep.subr.mxu0 0.0
        %4354 = vmatpush1.msra.mxu0 0.0
        %4355 = vmatprep.subr.mxu0 0.0
        %4356 = vmatpush1.msra.mxu0 0.0
        %4357 = vmatprep.subr.mxu0 0.0
        %4358 = vmatpush1.msra.mxu0 0.0
        %4359 = vmatprep.subr.mxu0 0.0
        %4360 = vmatpush1.msra.mxu0 0.0
        %4361 = vmatprep.subr.mxu0 0.0
        %4362 = vmatpush1.msra.mxu0 0.0
        %4363 = vmatprep.subr.mxu0 0.0
        %4364 = vmatpush1.msra.mxu0 0.0
        %4365 = vmatprep.subr.mxu0 0.0
        %4366 = vmatpush1.msra.mxu0 0.0
        %4367 = vmatprep.subr.mxu0 0.0
        %4368 = vmatpush1.msra.mxu0 0.0
        %4369 = vmatprep.subr.mxu0 0.0
        %4370 = vmatpush1.msra.mxu0 0.0
        %4371 = vmatprep.subr.mxu0 0.0
        %4372 = vmatpush1.msra.mxu0 %v4339
        %4373 = vmatprep.subr.mxu0 0.0
        %4374 = vmatpush2.msra.mxu0 0.0
        %4375 = vmatprep.subr.mxu0 0.0
        %4376 = vmatpush2.msra.mxu0 0.0
        %4377 = vmatprep.subr.mxu0 0.0
        %4378 = vmatpush2.msra.mxu0 0.0
        %4379 = vmatprep.subr.mxu0 0.0
        %4380 = vmatpush2.msra.mxu0 0.0
        %4381 = vmatprep.subr.mxu0 0.0
        %4382 = vmatpush2.msra.mxu0 0.0
        %4383 = vmatprep.subr.mxu0 0.0
        %4384 = vmatpush2.msra.mxu0 0.0
        %4385 = vmatprep.subr.mxu0 0.0
        %4386 = vmatpush2.msra.mxu0 0.0
        %4387 = vmatprep.subr.mxu0 0.0
        %4388 = vmatpush2.msra.mxu0 0.0
        %4389 = vmatprep.subr.mxu0 0.0
        %4390 = vmatpush2.msra.mxu0 0.0
        %4391 = vmatprep.subr.mxu0 0.0
        %4392 = vmatpush2.msra.mxu0 0.0
        %4393 = vmatprep.subr.mxu0 0.0
        %4394 = vmatpush2.msra.mxu0 0.0
        %4395 = vmatprep.subr.mxu0 0.0
        %4396 = vmatpush2.msra.mxu0 0.0
        %4397 = vmatprep.subr.mxu0 0.0
        %4398 = vmatpush2.msra.mxu0 0.0
        %4399 = vmatprep.subr.mxu0 0.0
        %4400 = vmatpush2.msra.mxu0 0.0
        %4401 = vmatprep.subr.mxu0 0.0
        %4402 = vmatpush2.msra.mxu0 0.0
        %4403 = vmatprep.subr.mxu0 0.0
        %4404 = vmatpush2.msra.mxu0 0.0
        %4405 = vmatprep.mubr.f32.mxu0 0.0
        %4406 = vmatmul.mubr.f32.gmra.mxu0 %v4333
        %v4407 = vpop.f32.mrf.mxu0
        %v4408 = vadd.f32 0.0, %v4407
        %v4409 = vpop.f32.mrf.mxu0
        %4410 = vmatprep.mubr.f32.mxu0 0.0
        %4411 = vmatmul.mubr.f32.gmra.mxu0 %v4336
        %v4412 = vpop.f32.mrf.mxu0
        %v4413 = vadd.f32 0.0, %v4412
        %v4414 = vpop.f32.mrf.mxu0
        %4415 = vdwg.mxu0
        %v4416 = vadd.f32 %v4236, %v4408
        %v4417 = vadd.f32 %v4241, %v4413
        %4418 = vmatprep.subr.mxu0 0.0
        %4419 = vmatpush1.msra.mxu0 0.0
        %4420 = vmatprep.subr.mxu0 0.0
        %4421 = vmatpush1.msra.mxu0 0.0
        %4422 = vmatprep.subr.mxu0 0.0
        %4423 = vmatpush1.msra.mxu0 0.0
        %4424 = vmatprep.subr.mxu0 0.0
        %4425 = vmatpush1.msra.mxu0 0.0
        %4426 = vmatprep.subr.mxu0 0.0
        %4427 = vmatpush1.msra.mxu0 0.0
        %4428 = vmatprep.subr.mxu0 0.0
        %4429 = vmatpush1.msra.mxu0 0.0
        %4430 = vmatprep.subr.mxu0 0.0
        %4431 = vmatpush1.msra.mxu0 0.0
        %4432 = vmatprep.subr.mxu0 0.0
        %4433 = vmatpush1.msra.mxu0 0.0
        %4434 = vmatprep.subr.mxu0 0.0
        %4435 = vmatpush1.msra.mxu0 0.0
        %4436 = vmatprep.subr.mxu0 0.0
        %4437 = vmatpush1.msra.mxu0 0.0
        %4438 = vmatprep.subr.mxu0 0.0
        %4439 = vmatpush1.msra.mxu0 0.0
        %4440 = vmatprep.subr.mxu0 0.0
        %4441 = vmatpush1.msra.mxu0 0.0
        %4442 = vmatprep.subr.mxu0 0.0
        %4443 = vmatpush1.msra.mxu0 0.0
        %4444 = vmatprep.subr.mxu0 0.0
        %4445 = vmatpush1.msra.mxu0 0.0
        %4446 = vmatprep.subr.mxu0 0.0
        %4447 = vmatpush1.msra.mxu0 %v238
        %4448 = vmatprep.subr.mxu0 0.0
        %4449 = vmatpush1.msra.mxu0 %v237
        %4450 = vmatprep.subr.mxu0 0.0
        %4451 = vmatpush2.msra.mxu0 0.0
        %4452 = vmatprep.subr.mxu0 0.0
        %4453 = vmatpush2.msra.mxu0 0.0
        %4454 = vmatprep.subr.mxu0 0.0
        %4455 = vmatpush2.msra.mxu0 0.0
        %4456 = vmatprep.subr.mxu0 0.0
        %4457 = vmatpush2.msra.mxu0 0.0
        %4458 = vmatprep.subr.mxu0 0.0
        %4459 = vmatpush2.msra.mxu0 0.0
        %4460 = vmatprep.subr.mxu0 0.0
        %4461 = vmatpush2.msra.mxu0 0.0
        %4462 = vmatprep.subr.mxu0 0.0
        %4463 = vmatpush2.msra.mxu0 0.0
        %4464 = vmatprep.subr.mxu0 0.0
        %4465 = vmatpush2.msra.mxu0 0.0
        %4466 = vmatprep.subr.mxu0 0.0
        %4467 = vmatpush2.msra.mxu0 0.0
        %4468 = vmatprep.subr.mxu0 0.0
        %4469 = vmatpush2.msra.mxu0 0.0
        %4470 = vmatprep.subr.mxu0 0.0
        %4471 = vmatpush2.msra.mxu0 0.0
        %4472 = vmatprep.subr.mxu0 0.0
        %4473 = vmatpush2.msra.mxu0 0.0
        %4474 = vmatprep.subr.mxu0 0.0
        %4475 = vmatpush2.msra.mxu0 0.0
        %4476 = vmatprep.subr.mxu0 0.0
        %4477 = vmatpush2.msra.mxu0 0.0
        %4478 = vmatprep.subr.mxu0 0.0
        %4479 = vmatpush2.msra.mxu0 0.0
        %4480 = vmatprep.subr.mxu0 0.0
        %4481 = vmatpush2.msra.mxu0 0.0
        %4482 = vmatprep.mubr.f32.mxu0 0.0
        %4483 = vmatmul.mubr.f32.gmra.mxu0 %v4258
        %v4484 = vpop.f32.mrf.mxu0
        %v4485 = vadd.f32 0.0, %v4484
        %v4486 = vpop.f32.mrf.mxu0
        %4487 = vdwg.mxu0
        %v4488 = vld [vmem:[%s821] sm:$0xff]
        %v4489 = vld [vmem:[%s821 + $0x8] sm:$0xff]
        %v4491 = vsel %vm406, %v4488, 0
        %v4494 = vsel %vm406, %v4489, 0
        %v4497 = vsel %vm413, %v4485, 0
        %4499 = vmatprep.subr.mxu0 0.0
        %4500 = vmatpush1.msra.mxu0 0.0
        %4501 = vmatprep.subr.mxu0 0.0
        %4502 = vmatpush1.msra.mxu0 0.0
        %4503 = vmatprep.subr.mxu0 0.0
        %4504 = vmatpush1.msra.mxu0 0.0
        %4505 = vmatprep.subr.mxu0 0.0
        %4506 = vmatpush1.msra.mxu0 0.0
        %4507 = vmatprep.subr.mxu0 0.0
        %4508 = vmatpush1.msra.mxu0 0.0
        %4509 = vmatprep.subr.mxu0 0.0
        %4510 = vmatpush1.msra.mxu0 0.0
        %4511 = vmatprep.subr.mxu0 0.0
        %4512 = vmatpush1.msra.mxu0 0.0
        %4513 = vmatprep.subr.mxu0 0.0
        %4514 = vmatpush1.msra.mxu0 0.0
        %4515 = vmatprep.subr.mxu0 0.0
        %4516 = vmatpush1.msra.mxu0 0.0
        %4517 = vmatprep.subr.mxu0 0.0
        %4518 = vmatpush1.msra.mxu0 0.0
        %4519 = vmatprep.subr.mxu0 0.0
        %4520 = vmatpush1.msra.mxu0 0.0
        %4521 = vmatprep.subr.mxu0 0.0
        %4522 = vmatpush1.msra.mxu0 0.0
        %4523 = vmatprep.subr.mxu0 0.0
        %4524 = vmatpush1.msra.mxu0 0.0
        %4525 = vmatprep.subr.mxu0 0.0
        %4526 = vmatpush1.msra.mxu0 0.0
        %4527 = vmatprep.subr.mxu0 0.0
        %4528 = vmatpush1.msra.mxu0 0.0
        %4529 = vmatprep.subr.mxu0 0.0
        %4530 = vmatpush1.msra.mxu0 %v4497
        %4531 = vmatprep.subr.mxu0 0.0
        %4532 = vmatpush2.msra.mxu0 0.0
        %4533 = vmatprep.subr.mxu0 0.0
        %4534 = vmatpush2.msra.mxu0 0.0
        %4535 = vmatprep.subr.mxu0 0.0
        %4536 = vmatpush2.msra.mxu0 0.0
        %4537 = vmatprep.subr.mxu0 0.0
        %4538 = vmatpush2.msra.mxu0 0.0
        %4539 = vmatprep.subr.mxu0 0.0
        %4540 = vmatpush2.msra.mxu0 0.0
        %4541 = vmatprep.subr.mxu0 0.0
        %4542 = vmatpush2.msra.mxu0 0.0
        %4543 = vmatprep.subr.mxu0 0.0
        %4544 = vmatpush2.msra.mxu0 0.0
        %4545 = vmatprep.subr.mxu0 0.0
        %4546 = vmatpush2.msra.mxu0 0.0
        %4547 = vmatprep.subr.mxu0 0.0
        %4548 = vmatpush2.msra.mxu0 0.0
        %4549 = vmatprep.subr.mxu0 0.0
        %4550 = vmatpush2.msra.mxu0 0.0
        %4551 = vmatprep.subr.mxu0 0.0
        %4552 = vmatpush2.msra.mxu0 0.0
        %4553 = vmatprep.subr.mxu0 0.0
        %4554 = vmatpush2.msra.mxu0 0.0
        %4555 = vmatprep.subr.mxu0 0.0
        %4556 = vmatpush2.msra.mxu0 0.0
        %4557 = vmatprep.subr.mxu0 0.0
        %4558 = vmatpush2.msra.mxu0 0.0
        %4559 = vmatprep.subr.mxu0 0.0
        %4560 = vmatpush2.msra.mxu0 0.0
        %4561 = vmatprep.subr.mxu0 0.0
        %4562 = vmatpush2.msra.mxu0 0.0
        %4563 = vmatprep.mubr.f32.mxu0 0.0
        %4564 = vmatmul.mubr.f32.gmra.mxu0 %v4491
        %v4565 = vpop.f32.mrf.mxu0
        %v4566 = vadd.f32 0.0, %v4565
        %v4567 = vpop.f32.mrf.mxu0
        %4568 = vmatprep.mubr.f32.mxu0 0.0
        %4569 = vmatmul.mubr.f32.gmra.mxu0 %v4494
        %v4570 = vpop.f32.mrf.mxu0
        %v4571 = vadd.f32 0.0, %v4570
        %v4572 = vpop.f32.mrf.mxu0
        %4573 = vdwg.mxu0
        %v4574 = vadd.f32 %v4416, %v4566
        %v4575 = vadd.f32 %v4417, %v4571
        %v4576 = vadd.f32 %v4574, %v913
        %v4577 = vadd.f32 %v4575, %v918
        %v4578 = vmax.f32 %v4576, 0.0
        %v4579 = vadd.f32 %v4578, %v4577
        %v4580 = vmax.f32 %v4579, 0.0
        %v4582 = vcombine.high %v4580, %v4580
        %v4584 = vunpack.c.l.s4 1966171168
        %v4585 = vunpack.c.0.s8 %v4584
        %v4586 = vlaneseq
        %v4587 = vshrl.u32 %v4586, 7
        %v4588 = vsub.s32 %v4585, %v4587
        %v4589 = vrot.slane %v4580, %v4588
        %v4591 = vunpack.c.l.s4 1966171168
        %v4592 = vunpack.c.0.s8 %v4591
        %v4593 = vlaneseq
        %v4594 = vshrl.u32 %v4593, 7
        %v4595 = vsub.s32 %v4592, %v4594
        %v4596 = vrot.slane %v4582, %v4595
        %v4597 = vcombine.high %v4589, %v4589
        %v4598 = vcombine.high %v4596, %v4596
        %v4600 = vunpack.c.l.s4 1966171168
        %v4601 = vunpack.c.0.s8 %v4600
        %v4602 = vlaneseq
        %v4603 = vshrl.u32 %v4602, 7
        %v4604 = vsub.s32 %v4601, %v4603
        %v4605 = vrot.slane %v4589, %v4604
        %v4607 = vunpack.c.l.s4 1966171168
        %v4608 = vunpack.c.0.s8 %v4607
        %v4609 = vlaneseq
        %v4610 = vshrl.u32 %v4609, 7
        %v4611 = vsub.s32 %v4608, %v4610
        %v4612 = vrot.slane %v4596, %v4611
        %v4614 = vunpack.c.l.s4 1966171168
        %v4615 = vunpack.c.0.s8 %v4614
        %v4616 = vlaneseq
        %v4617 = vshrl.u32 %v4616, 7
        %v4618 = vsub.s32 %v4615, %v4617
        %v4619 = vrot.slane %v4597, %v4618
        %v4621 = vunpack.c.l.s4 1966171168
        %v4622 = vunpack.c.0.s8 %v4621
        %v4623 = vlaneseq
        %v4624 = vshrl.u32 %v4623, 7
        %v4625 = vsub.s32 %v4622, %v4624
        %v4626 = vrot.slane %v4598, %v4625
        %v4627 = vcombine.high %v4605, %v4605
        %v4628 = vcombine.high %v4612, %v4612
        %v4629 = vcombine.high %v4619, %v4619
        %v4630 = vcombine.high %v4626, %v4626
        %4639 = vst.msk [vmem:[%s218 + $0x5] sm:$0x1] %vm983, %v4605
        %4640 = vst.msk [vmem:[%s218 + $0xd] sm:$0x1] %vm983, %v4619
        %4641 = vst.msk [vmem:[%s218 + $0x15] sm:$0x1] %vm983, %v4627
        %4642 = vst.msk [vmem:[%s218 + $0x1d] sm:$0x1] %vm983, %v4629
        %4643 = vst.msk [vmem:[%s218 + $0x25] sm:$0x1] %vm983, %v4612
        %4644 = vst.msk [vmem:[%s218 + $0x2d] sm:$0x1] %vm983, %v4626
        %4645 = vst.msk [vmem:[%s218 + $0x35] sm:$0x1] %vm983, %v4628
        %4646 = vst.msk [vmem:[%s218 + $0x3d] sm:$0x1] %vm983, %v4630
        %v4647 = vld [vmem:[%s196 + $0xc] sm:$0x1]
        %v4648 = vld [vmem:[%s196 + $0x1c] sm:$0x1]
        %v4649 = vld [vmem:[%s196 + $0x2c] sm:$0x1]
        %v4650 = vld [vmem:[%s196 + $0x3c] sm:$0x1]
        %v4655 = vrot.slane %v4648, 7
        %v4656 = vsel %vm250, %v4655, %v4647
        %v4657 = vrot.slane %v4649, 6
        %v4658 = vsel %vm253, %v4657, %v4656
        %v4659 = vrot.slane %v4650, 5
        %v4660 = vsel %vm256, %v4659, %v4658
        %v4661 = vsel %vm258, %v4660, 0
        %4663 = vmatprep.subr.mxu0 0.0
        %4664 = vmatpush1.msra.mxu0 0.0
        %4665 = vmatprep.subr.mxu0 0.0
        %4666 = vmatpush1.msra.mxu0 0.0
        %4667 = vmatprep.subr.mxu0 0.0
        %4668 = vmatpush1.msra.mxu0 0.0
        %4669 = vmatprep.subr.mxu0 0.0
        %4670 = vmatpush1.msra.mxu0 0.0
        %4671 = vmatprep.subr.mxu0 0.0
        %4672 = vmatpush1.msra.mxu0 0.0
        %4673 = vmatprep.subr.mxu0 0.0
        %4674 = vmatpush1.msra.mxu0 0.0
        %4675 = vmatprep.subr.mxu0 0.0
        %4676 = vmatpush1.msra.mxu0 0.0
        %4677 = vmatprep.subr.mxu0 0.0
        %4678 = vmatpush1.msra.mxu0 0.0
        %4679 = vmatprep.subr.mxu0 0.0
        %4680 = vmatpush1.msra.mxu0 0.0
        %4681 = vmatprep.subr.mxu0 0.0
        %4682 = vmatpush1.msra.mxu0 0.0
        %4683 = vmatprep.subr.mxu0 0.0
        %4684 = vmatpush1.msra.mxu0 0.0
        %4685 = vmatprep.subr.mxu0 0.0
        %4686 = vmatpush1.msra.mxu0 0.0
        %4687 = vmatprep.subr.mxu0 0.0
        %4688 = vmatpush1.msra.mxu0 0.0
        %4689 = vmatprep.subr.mxu0 0.0
        %4690 = vmatpush1.msra.mxu0 0.0
        %4691 = vmatprep.subr.mxu0 0.0
        %4692 = vmatpush1.msra.mxu0 %v231
        %4693 = vmatprep.subr.mxu0 0.0
        %4694 = vmatpush1.msra.mxu0 %v230
        %4695 = vmatprep.subr.mxu0 0.0
        %4696 = vmatpush2.msra.mxu0 0.0
        %4697 = vmatprep.subr.mxu0 0.0
        %4698 = vmatpush2.msra.mxu0 0.0
        %4699 = vmatprep.subr.mxu0 0.0
        %4700 = vmatpush2.msra.mxu0 0.0
        %4701 = vmatprep.subr.mxu0 0.0
        %4702 = vmatpush2.msra.mxu0 0.0
        %4703 = vmatprep.subr.mxu0 0.0
        %4704 = vmatpush2.msra.mxu0 0.0
        %4705 = vmatprep.subr.mxu0 0.0
        %4706 = vmatpush2.msra.mxu0 0.0
        %4707 = vmatprep.subr.mxu0 0.0
        %4708 = vmatpush2.msra.mxu0 0.0
        %4709 = vmatprep.subr.mxu0 0.0
        %4710 = vmatpush2.msra.mxu0 0.0
        %4711 = vmatprep.subr.mxu0 0.0
        %4712 = vmatpush2.msra.mxu0 0.0
        %4713 = vmatprep.subr.mxu0 0.0
        %4714 = vmatpush2.msra.mxu0 0.0
        %4715 = vmatprep.subr.mxu0 0.0
        %4716 = vmatpush2.msra.mxu0 0.0
        %4717 = vmatprep.subr.mxu0 0.0
        %4718 = vmatpush2.msra.mxu0 0.0
        %4719 = vmatprep.subr.mxu0 0.0
        %4720 = vmatpush2.msra.mxu0 0.0
        %4721 = vmatprep.subr.mxu0 0.0
        %4722 = vmatpush2.msra.mxu0 0.0
        %4723 = vmatprep.subr.mxu0 0.0
        %4724 = vmatpush2.msra.mxu0 0.0
        %4725 = vmatprep.subr.mxu0 0.0
        %4726 = vmatpush2.msra.mxu0 0.0
        %4727 = vmatprep.mubr.f32.mxu0 0.0
        %4728 = vmatmul.mubr.f32.gmra.mxu0 %v4661
        %v4729 = vpop.f32.mrf.mxu0
        %v4730 = vadd.f32 0.0, %v4729
        %v4731 = vpop.f32.mrf.mxu0
        %4732 = vdwg.mxu0
        %v4733 = vld [vmem:[%s1] sm:$0xff]
        %v4734 = vld [vmem:[%s1 + $0x8] sm:$0xff]
        %4735 = vmatprep.subr.mxu0 0.0
        %4736 = vmatpush1.msra.mxu0 0.0
        %4737 = vmatprep.subr.mxu0 0.0
        %4738 = vmatpush1.msra.mxu0 0.0
        %4739 = vmatprep.subr.mxu0 0.0
        %4740 = vmatpush1.msra.mxu0 0.0
        %4741 = vmatprep.subr.mxu0 0.0
        %4742 = vmatpush1.msra.mxu0 0.0
        %4743 = vmatprep.subr.mxu0 0.0
        %4744 = vmatpush1.msra.mxu0 0.0
        %4745 = vmatprep.subr.mxu0 0.0
        %4746 = vmatpush1.msra.mxu0 0.0
        %4747 = vmatprep.subr.mxu0 0.0
        %4748 = vmatpush1.msra.mxu0 0.0
        %4749 = vmatprep.subr.mxu0 0.0
        %4750 = vmatpush1.msra.mxu0 0.0
        %4751 = vmatprep.subr.mxu0 0.0
        %4752 = vmatpush1.msra.mxu0 0.0
        %4753 = vmatprep.subr.mxu0 0.0
        %4754 = vmatpush1.msra.mxu0 0.0
        %4755 = vmatprep.subr.mxu0 0.0
        %4756 = vmatpush1.msra.mxu0 0.0
        %4757 = vmatprep.subr.mxu0 0.0
        %4758 = vmatpush1.msra.mxu0 0.0
        %4759 = vmatprep.subr.mxu0 0.0
        %4760 = vmatpush1.msra.mxu0 0.0
        %4761 = vmatprep.subr.mxu0 0.0
        %4762 = vmatpush1.msra.mxu0 0.0
        %4763 = vmatprep.subr.mxu0 0.0
        %4764 = vmatpush1.msra.mxu0 %v238
        %4765 = vmatprep.subr.mxu0 0.0
        %4766 = vmatpush1.msra.mxu0 %v237
        %4767 = vmatprep.subr.mxu0 0.0
        %4768 = vmatpush2.msra.mxu0 0.0
        %4769 = vmatprep.subr.mxu0 0.0
        %4770 = vmatpush2.msra.mxu0 0.0
        %4771 = vmatprep.subr.mxu0 0.0
        %4772 = vmatpush2.msra.mxu0 0.0
        %4773 = vmatprep.subr.mxu0 0.0
        %4774 = vmatpush2.msra.mxu0 0.0
        %4775 = vmatprep.subr.mxu0 0.0
        %4776 = vmatpush2.msra.mxu0 0.0
        %4777 = vmatprep.subr.mxu0 0.0
        %4778 = vmatpush2.msra.mxu0 0.0
        %4779 = vmatprep.subr.mxu0 0.0
        %4780 = vmatpush2.msra.mxu0 0.0
        %4781 = vmatprep.subr.mxu0 0.0
        %4782 = vmatpush2.msra.mxu0 0.0
        %4783 = vmatprep.subr.mxu0 0.0
        %4784 = vmatpush2.msra.mxu0 0.0
        %4785 = vmatprep.subr.mxu0 0.0
        %4786 = vmatpush2.msra.mxu0 0.0
        %4787 = vmatprep.subr.mxu0 0.0
        %4788 = vmatpush2.msra.mxu0 0.0
        %4789 = vmatprep.subr.mxu0 0.0
        %4790 = vmatpush2.msra.mxu0 0.0
        %4791 = vmatprep.subr.mxu0 0.0
        %4792 = vmatpush2.msra.mxu0 0.0
        %4793 = vmatprep.subr.mxu0 0.0
        %4794 = vmatpush2.msra.mxu0 0.0
        %4795 = vmatprep.subr.mxu0 0.0
        %4796 = vmatpush2.msra.mxu0 0.0
        %4797 = vmatprep.subr.mxu0 0.0
        %4798 = vmatpush2.msra.mxu0 0.0
        %4799 = vmatprep.mubr.f32.mxu0 0.0
        %4800 = vmatmul.mubr.f32.gmra.mxu0 %v4661
        %v4801 = vpop.f32.mrf.mxu0
        %v4802 = vadd.f32 0.0, %v4801
        %v4803 = vpop.f32.mrf.mxu0
        %4804 = vdwg.mxu0
        %v4805 = vld [vmem:[%s403] sm:$0xff]
        %v4806 = vld [vmem:[%s403 + $0x8] sm:$0xff]
        %v4808 = vsel %vm406, %v4805, 0
        %v4811 = vsel %vm406, %v4806, 0
        %v4814 = vsel %vm413, %v4802, 0
        %4816 = vmatprep.subr.mxu0 0.0
        %4817 = vmatpush1.msra.mxu0 0.0
        %4818 = vmatprep.subr.mxu0 0.0
        %4819 = vmatpush1.msra.mxu0 0.0
        %4820 = vmatprep.subr.mxu0 0.0
        %4821 = vmatpush1.msra.mxu0 0.0
        %4822 = vmatprep.subr.mxu0 0.0
        %4823 = vmatpush1.msra.mxu0 0.0
        %4824 = vmatprep.subr.mxu0 0.0
        %4825 = vmatpush1.msra.mxu0 0.0
        %4826 = vmatprep.subr.mxu0 0.0
        %4827 = vmatpush1.msra.mxu0 0.0
        %4828 = vmatprep.subr.mxu0 0.0
        %4829 = vmatpush1.msra.mxu0 0.0
        %4830 = vmatprep.subr.mxu0 0.0
        %4831 = vmatpush1.msra.mxu0 0.0
        %4832 = vmatprep.subr.mxu0 0.0
        %4833 = vmatpush1.msra.mxu0 0.0
        %4834 = vmatprep.subr.mxu0 0.0
        %4835 = vmatpush1.msra.mxu0 0.0
        %4836 = vmatprep.subr.mxu0 0.0
        %4837 = vmatpush1.msra.mxu0 0.0
        %4838 = vmatprep.subr.mxu0 0.0
        %4839 = vmatpush1.msra.mxu0 0.0
        %4840 = vmatprep.subr.mxu0 0.0
        %4841 = vmatpush1.msra.mxu0 0.0
        %4842 = vmatprep.subr.mxu0 0.0
        %4843 = vmatpush1.msra.mxu0 0.0
        %4844 = vmatprep.subr.mxu0 0.0
        %4845 = vmatpush1.msra.mxu0 0.0
        %4846 = vmatprep.subr.mxu0 0.0
        %4847 = vmatpush1.msra.mxu0 %v4814
        %4848 = vmatprep.subr.mxu0 0.0
        %4849 = vmatpush2.msra.mxu0 0.0
        %4850 = vmatprep.subr.mxu0 0.0
        %4851 = vmatpush2.msra.mxu0 0.0
        %4852 = vmatprep.subr.mxu0 0.0
        %4853 = vmatpush2.msra.mxu0 0.0
        %4854 = vmatprep.subr.mxu0 0.0
        %4855 = vmatpush2.msra.mxu0 0.0
        %4856 = vmatprep.subr.mxu0 0.0
        %4857 = vmatpush2.msra.mxu0 0.0
        %4858 = vmatprep.subr.mxu0 0.0
        %4859 = vmatpush2.msra.mxu0 0.0
        %4860 = vmatprep.subr.mxu0 0.0
        %4861 = vmatpush2.msra.mxu0 0.0
        %4862 = vmatprep.subr.mxu0 0.0
        %4863 = vmatpush2.msra.mxu0 0.0
        %4864 = vmatprep.subr.mxu0 0.0
        %4865 = vmatpush2.msra.mxu0 0.0
        %4866 = vmatprep.subr.mxu0 0.0
        %4867 = vmatpush2.msra.mxu0 0.0
        %4868 = vmatprep.subr.mxu0 0.0
        %4869 = vmatpush2.msra.mxu0 0.0
        %4870 = vmatprep.subr.mxu0 0.0
        %4871 = vmatpush2.msra.mxu0 0.0
        %4872 = vmatprep.subr.mxu0 0.0
        %4873 = vmatpush2.msra.mxu0 0.0
        %4874 = vmatprep.subr.mxu0 0.0
        %4875 = vmatpush2.msra.mxu0 0.0
        %4876 = vmatprep.subr.mxu0 0.0
        %4877 = vmatpush2.msra.mxu0 0.0
        %4878 = vmatprep.subr.mxu0 0.0
        %4879 = vmatpush2.msra.mxu0 0.0
        %4880 = vmatprep.mubr.f32.mxu0 0.0
        %4881 = vmatmul.mubr.f32.gmra.mxu0 %v4808
        %v4882 = vpop.f32.mrf.mxu0
        %v4883 = vadd.f32 0.0, %v4882
        %v4884 = vpop.f32.mrf.mxu0
        %4885 = vmatprep.mubr.f32.mxu0 0.0
        %4886 = vmatmul.mubr.f32.gmra.mxu0 %v4811
        %v4887 = vpop.f32.mrf.mxu0
        %v4888 = vadd.f32 0.0, %v4887
        %v4889 = vpop.f32.mrf.mxu0
        %4890 = vdwg.mxu0
        %v4892 = vsel %vm406, %v4733, 0
        %v4895 = vsel %vm406, %v4734, 0
        %v4898 = vsel %vm413, %v4730, 0
        %4900 = vmatprep.subr.mxu0 0.0
        %4901 = vmatpush1.msra.mxu0 0.0
        %4902 = vmatprep.subr.mxu0 0.0
        %4903 = vmatpush1.msra.mxu0 0.0
        %4904 = vmatprep.subr.mxu0 0.0
        %4905 = vmatpush1.msra.mxu0 0.0
        %4906 = vmatprep.subr.mxu0 0.0
        %4907 = vmatpush1.msra.mxu0 0.0
        %4908 = vmatprep.subr.mxu0 0.0
        %4909 = vmatpush1.msra.mxu0 0.0
        %4910 = vmatprep.subr.mxu0 0.0
        %4911 = vmatpush1.msra.mxu0 0.0
        %4912 = vmatprep.subr.mxu0 0.0
        %4913 = vmatpush1.msra.mxu0 0.0
        %4914 = vmatprep.subr.mxu0 0.0
        %4915 = vmatpush1.msra.mxu0 0.0
        %4916 = vmatprep.subr.mxu0 0.0
        %4917 = vmatpush1.msra.mxu0 0.0
        %4918 = vmatprep.subr.mxu0 0.0
        %4919 = vmatpush1.msra.mxu0 0.0
        %4920 = vmatprep.subr.mxu0 0.0
        %4921 = vmatpush1.msra.mxu0 0.0
        %4922 = vmatprep.subr.mxu0 0.0
        %4923 = vmatpush1.msra.mxu0 0.0
        %4924 = vmatprep.subr.mxu0 0.0
        %4925 = vmatpush1.msra.mxu0 0.0
        %4926 = vmatprep.subr.mxu0 0.0
        %4927 = vmatpush1.msra.mxu0 0.0
        %4928 = vmatprep.subr.mxu0 0.0
        %4929 = vmatpush1.msra.mxu0 0.0
        %4930 = vmatprep.subr.mxu0 0.0
        %4931 = vmatpush1.msra.mxu0 %v4898
        %4932 = vmatprep.subr.mxu0 0.0
        %4933 = vmatpush2.msra.mxu0 0.0
        %4934 = vmatprep.subr.mxu0 0.0
        %4935 = vmatpush2.msra.mxu0 0.0
        %4936 = vmatprep.subr.mxu0 0.0
        %4937 = vmatpush2.msra.mxu0 0.0
        %4938 = vmatprep.subr.mxu0 0.0
        %4939 = vmatpush2.msra.mxu0 0.0
        %4940 = vmatprep.subr.mxu0 0.0
        %4941 = vmatpush2.msra.mxu0 0.0
        %4942 = vmatprep.subr.mxu0 0.0
        %4943 = vmatpush2.msra.mxu0 0.0
        %4944 = vmatprep.subr.mxu0 0.0
        %4945 = vmatpush2.msra.mxu0 0.0
        %4946 = vmatprep.subr.mxu0 0.0
        %4947 = vmatpush2.msra.mxu0 0.0
        %4948 = vmatprep.subr.mxu0 0.0
        %4949 = vmatpush2.msra.mxu0 0.0
        %4950 = vmatprep.subr.mxu0 0.0
        %4951 = vmatpush2.msra.mxu0 0.0
        %4952 = vmatprep.subr.mxu0 0.0
        %4953 = vmatpush2.msra.mxu0 0.0
        %4954 = vmatprep.subr.mxu0 0.0
        %4955 = vmatpush2.msra.mxu0 0.0
        %4956 = vmatprep.subr.mxu0 0.0
        %4957 = vmatpush2.msra.mxu0 0.0
        %4958 = vmatprep.subr.mxu0 0.0
        %4959 = vmatpush2.msra.mxu0 0.0
        %4960 = vmatprep.subr.mxu0 0.0
        %4961 = vmatpush2.msra.mxu0 0.0
        %4962 = vmatprep.subr.mxu0 0.0
        %4963 = vmatpush2.msra.mxu0 0.0
        %4964 = vmatprep.mubr.f32.mxu0 0.0
        %4965 = vmatmul.mubr.f32.gmra.mxu0 %v4892
        %v4966 = vpop.f32.mrf.mxu0
        %v4967 = vadd.f32 %v4883, %v4966
        %v4968 = vpop.f32.mrf.mxu0
        %4969 = vmatprep.mubr.f32.mxu0 0.0
        %4970 = vmatmul.mubr.f32.gmra.mxu0 %v4895
        %v4971 = vpop.f32.mrf.mxu0
        %v4972 = vadd.f32 %v4888, %v4971
        %v4973 = vpop.f32.mrf.mxu0
        %4974 = vdwg.mxu0
        %v4975 = vld [vmem:[%s196 + $0xd] sm:$0x1]
        %v4976 = vld [vmem:[%s196 + $0x1d] sm:$0x1]
        %v4977 = vld [vmem:[%s196 + $0x2d] sm:$0x1]
        %v4978 = vld [vmem:[%s196 + $0x3d] sm:$0x1]
        %v4983 = vrot.slane %v4976, 7
        %v4984 = vsel %vm250, %v4983, %v4975
        %v4985 = vrot.slane %v4977, 6
        %v4986 = vsel %vm253, %v4985, %v4984
        %v4987 = vrot.slane %v4978, 5
        %v4988 = vsel %vm256, %v4987, %v4986
        %v4989 = vsel %vm258, %v4988, 0
        %4991 = vmatprep.subr.mxu0 0.0
        %4992 = vmatpush1.msra.mxu0 0.0
        %4993 = vmatprep.subr.mxu0 0.0
        %4994 = vmatpush1.msra.mxu0 0.0
        %4995 = vmatprep.subr.mxu0 0.0
        %4996 = vmatpush1.msra.mxu0 0.0
        %4997 = vmatprep.subr.mxu0 0.0
        %4998 = vmatpush1.msra.mxu0 0.0
        %4999 = vmatprep.subr.mxu0 0.0
        %5000 = vmatpush1.msra.mxu0 0.0
        %5001 = vmatprep.subr.mxu0 0.0
        %5002 = vmatpush1.msra.mxu0 0.0
        %5003 = vmatprep.subr.mxu0 0.0
        %5004 = vmatpush1.msra.mxu0 0.0
        %5005 = vmatprep.subr.mxu0 0.0
        %5006 = vmatpush1.msra.mxu0 0.0
        %5007 = vmatprep.subr.mxu0 0.0
        %5008 = vmatpush1.msra.mxu0 0.0
        %5009 = vmatprep.subr.mxu0 0.0
        %5010 = vmatpush1.msra.mxu0 0.0
        %5011 = vmatprep.subr.mxu0 0.0
        %5012 = vmatpush1.msra.mxu0 0.0
        %5013 = vmatprep.subr.mxu0 0.0
        %5014 = vmatpush1.msra.mxu0 0.0
        %5015 = vmatprep.subr.mxu0 0.0
        %5016 = vmatpush1.msra.mxu0 0.0
        %5017 = vmatprep.subr.mxu0 0.0
        %5018 = vmatpush1.msra.mxu0 0.0
        %5019 = vmatprep.subr.mxu0 0.0
        %5020 = vmatpush1.msra.mxu0 %v231
        %5021 = vmatprep.subr.mxu0 0.0
        %5022 = vmatpush1.msra.mxu0 %v230
        %5023 = vmatprep.subr.mxu0 0.0
        %5024 = vmatpush2.msra.mxu0 0.0
        %5025 = vmatprep.subr.mxu0 0.0
        %5026 = vmatpush2.msra.mxu0 0.0
        %5027 = vmatprep.subr.mxu0 0.0
        %5028 = vmatpush2.msra.mxu0 0.0
        %5029 = vmatprep.subr.mxu0 0.0
        %5030 = vmatpush2.msra.mxu0 0.0
        %5031 = vmatprep.subr.mxu0 0.0
        %5032 = vmatpush2.msra.mxu0 0.0
        %5033 = vmatprep.subr.mxu0 0.0
        %5034 = vmatpush2.msra.mxu0 0.0
        %5035 = vmatprep.subr.mxu0 0.0
        %5036 = vmatpush2.msra.mxu0 0.0
        %5037 = vmatprep.subr.mxu0 0.0
        %5038 = vmatpush2.msra.mxu0 0.0
        %5039 = vmatprep.subr.mxu0 0.0
        %5040 = vmatpush2.msra.mxu0 0.0
        %5041 = vmatprep.subr.mxu0 0.0
        %5042 = vmatpush2.msra.mxu0 0.0
        %5043 = vmatprep.subr.mxu0 0.0
        %5044 = vmatpush2.msra.mxu0 0.0
        %5045 = vmatprep.subr.mxu0 0.0
        %5046 = vmatpush2.msra.mxu0 0.0
        %5047 = vmatprep.subr.mxu0 0.0
        %5048 = vmatpush2.msra.mxu0 0.0
        %5049 = vmatprep.subr.mxu0 0.0
        %5050 = vmatpush2.msra.mxu0 0.0
        %5051 = vmatprep.subr.mxu0 0.0
        %5052 = vmatpush2.msra.mxu0 0.0
        %5053 = vmatprep.subr.mxu0 0.0
        %5054 = vmatpush2.msra.mxu0 0.0
        %5055 = vmatprep.mubr.f32.mxu0 0.0
        %5056 = vmatmul.mubr.f32.gmra.mxu0 %v4989
        %v5057 = vpop.f32.mrf.mxu0
        %v5058 = vadd.f32 0.0, %v5057
        %v5059 = vpop.f32.mrf.mxu0
        %5060 = vdwg.mxu0
        %v5061 = vld [vmem:[%s662] sm:$0xff]
        %v5062 = vld [vmem:[%s662 + $0x8] sm:$0xff]
        %v5064 = vsel %vm406, %v5061, 0
        %v5067 = vsel %vm406, %v5062, 0
        %v5070 = vsel %vm413, %v5058, 0
        %5072 = vmatprep.subr.mxu0 0.0
        %5073 = vmatpush1.msra.mxu0 0.0
        %5074 = vmatprep.subr.mxu0 0.0
        %5075 = vmatpush1.msra.mxu0 0.0
        %5076 = vmatprep.subr.mxu0 0.0
        %5077 = vmatpush1.msra.mxu0 0.0
        %5078 = vmatprep.subr.mxu0 0.0
        %5079 = vmatpush1.msra.mxu0 0.0
        %5080 = vmatprep.subr.mxu0 0.0
        %5081 = vmatpush1.msra.mxu0 0.0
        %5082 = vmatprep.subr.mxu0 0.0
        %5083 = vmatpush1.msra.mxu0 0.0
        %5084 = vmatprep.subr.mxu0 0.0
        %5085 = vmatpush1.msra.mxu0 0.0
        %5086 = vmatprep.subr.mxu0 0.0
        %5087 = vmatpush1.msra.mxu0 0.0
        %5088 = vmatprep.subr.mxu0 0.0
        %5089 = vmatpush1.msra.mxu0 0.0
        %5090 = vmatprep.subr.mxu0 0.0
        %5091 = vmatpush1.msra.mxu0 0.0
        %5092 = vmatprep.subr.mxu0 0.0
        %5093 = vmatpush1.msra.mxu0 0.0
        %5094 = vmatprep.subr.mxu0 0.0
        %5095 = vmatpush1.msra.mxu0 0.0
        %5096 = vmatprep.subr.mxu0 0.0
        %5097 = vmatpush1.msra.mxu0 0.0
        %5098 = vmatprep.subr.mxu0 0.0
        %5099 = vmatpush1.msra.mxu0 0.0
        %5100 = vmatprep.subr.mxu0 0.0
        %5101 = vmatpush1.msra.mxu0 0.0
        %5102 = vmatprep.subr.mxu0 0.0
        %5103 = vmatpush1.msra.mxu0 %v5070
        %5104 = vmatprep.subr.mxu0 0.0
        %5105 = vmatpush2.msra.mxu0 0.0
        %5106 = vmatprep.subr.mxu0 0.0
        %5107 = vmatpush2.msra.mxu0 0.0
        %5108 = vmatprep.subr.mxu0 0.0
        %5109 = vmatpush2.msra.mxu0 0.0
        %5110 = vmatprep.subr.mxu0 0.0
        %5111 = vmatpush2.msra.mxu0 0.0
        %5112 = vmatprep.subr.mxu0 0.0
        %5113 = vmatpush2.msra.mxu0 0.0
        %5114 = vmatprep.subr.mxu0 0.0
        %5115 = vmatpush2.msra.mxu0 0.0
        %5116 = vmatprep.subr.mxu0 0.0
        %5117 = vmatpush2.msra.mxu0 0.0
        %5118 = vmatprep.subr.mxu0 0.0
        %5119 = vmatpush2.msra.mxu0 0.0
        %5120 = vmatprep.subr.mxu0 0.0
        %5121 = vmatpush2.msra.mxu0 0.0
        %5122 = vmatprep.subr.mxu0 0.0
        %5123 = vmatpush2.msra.mxu0 0.0
        %5124 = vmatprep.subr.mxu0 0.0
        %5125 = vmatpush2.msra.mxu0 0.0
        %5126 = vmatprep.subr.mxu0 0.0
        %5127 = vmatpush2.msra.mxu0 0.0
        %5128 = vmatprep.subr.mxu0 0.0
        %5129 = vmatpush2.msra.mxu0 0.0
        %5130 = vmatprep.subr.mxu0 0.0
        %5131 = vmatpush2.msra.mxu0 0.0
        %5132 = vmatprep.subr.mxu0 0.0
        %5133 = vmatpush2.msra.mxu0 0.0
        %5134 = vmatprep.subr.mxu0 0.0
        %5135 = vmatpush2.msra.mxu0 0.0
        %5136 = vmatprep.mubr.f32.mxu0 0.0
        %5137 = vmatmul.mubr.f32.gmra.mxu0 %v5064
        %v5138 = vpop.f32.mrf.mxu0
        %v5139 = vadd.f32 0.0, %v5138
        %v5140 = vpop.f32.mrf.mxu0
        %5141 = vmatprep.mubr.f32.mxu0 0.0
        %5142 = vmatmul.mubr.f32.gmra.mxu0 %v5067
        %v5143 = vpop.f32.mrf.mxu0
        %v5144 = vadd.f32 0.0, %v5143
        %v5145 = vpop.f32.mrf.mxu0
        %5146 = vdwg.mxu0
        %v5147 = vadd.f32 %v4967, %v5139
        %v5148 = vadd.f32 %v4972, %v5144
        %5149 = vmatprep.subr.mxu0 0.0
        %5150 = vmatpush1.msra.mxu0 0.0
        %5151 = vmatprep.subr.mxu0 0.0
        %5152 = vmatpush1.msra.mxu0 0.0
        %5153 = vmatprep.subr.mxu0 0.0
        %5154 = vmatpush1.msra.mxu0 0.0
        %5155 = vmatprep.subr.mxu0 0.0
        %5156 = vmatpush1.msra.mxu0 0.0
        %5157 = vmatprep.subr.mxu0 0.0
        %5158 = vmatpush1.msra.mxu0 0.0
        %5159 = vmatprep.subr.mxu0 0.0
        %5160 = vmatpush1.msra.mxu0 0.0
        %5161 = vmatprep.subr.mxu0 0.0
        %5162 = vmatpush1.msra.mxu0 0.0
        %5163 = vmatprep.subr.mxu0 0.0
        %5164 = vmatpush1.msra.mxu0 0.0
        %5165 = vmatprep.subr.mxu0 0.0
        %5166 = vmatpush1.msra.mxu0 0.0
        %5167 = vmatprep.subr.mxu0 0.0
        %5168 = vmatpush1.msra.mxu0 0.0
        %5169 = vmatprep.subr.mxu0 0.0
        %5170 = vmatpush1.msra.mxu0 0.0
        %5171 = vmatprep.subr.mxu0 0.0
        %5172 = vmatpush1.msra.mxu0 0.0
        %5173 = vmatprep.subr.mxu0 0.0
        %5174 = vmatpush1.msra.mxu0 0.0
        %5175 = vmatprep.subr.mxu0 0.0
        %5176 = vmatpush1.msra.mxu0 0.0
        %5177 = vmatprep.subr.mxu0 0.0
        %5178 = vmatpush1.msra.mxu0 %v238
        %5179 = vmatprep.subr.mxu0 0.0
        %5180 = vmatpush1.msra.mxu0 %v237
        %5181 = vmatprep.subr.mxu0 0.0
        %5182 = vmatpush2.msra.mxu0 0.0
        %5183 = vmatprep.subr.mxu0 0.0
        %5184 = vmatpush2.msra.mxu0 0.0
        %5185 = vmatprep.subr.mxu0 0.0
        %5186 = vmatpush2.msra.mxu0 0.0
        %5187 = vmatprep.subr.mxu0 0.0
        %5188 = vmatpush2.msra.mxu0 0.0
        %5189 = vmatprep.subr.mxu0 0.0
        %5190 = vmatpush2.msra.mxu0 0.0
        %5191 = vmatprep.subr.mxu0 0.0
        %5192 = vmatpush2.msra.mxu0 0.0
        %5193 = vmatprep.subr.mxu0 0.0
        %5194 = vmatpush2.msra.mxu0 0.0
        %5195 = vmatprep.subr.mxu0 0.0
        %5196 = vmatpush2.msra.mxu0 0.0
        %5197 = vmatprep.subr.mxu0 0.0
        %5198 = vmatpush2.msra.mxu0 0.0
        %5199 = vmatprep.subr.mxu0 0.0
        %5200 = vmatpush2.msra.mxu0 0.0
        %5201 = vmatprep.subr.mxu0 0.0
        %5202 = vmatpush2.msra.mxu0 0.0
        %5203 = vmatprep.subr.mxu0 0.0
        %5204 = vmatpush2.msra.mxu0 0.0
        %5205 = vmatprep.subr.mxu0 0.0
        %5206 = vmatpush2.msra.mxu0 0.0
        %5207 = vmatprep.subr.mxu0 0.0
        %5208 = vmatpush2.msra.mxu0 0.0
        %5209 = vmatprep.subr.mxu0 0.0
        %5210 = vmatpush2.msra.mxu0 0.0
        %5211 = vmatprep.subr.mxu0 0.0
        %5212 = vmatpush2.msra.mxu0 0.0
        %5213 = vmatprep.mubr.f32.mxu0 0.0
        %5214 = vmatmul.mubr.f32.gmra.mxu0 %v4989
        %v5215 = vpop.f32.mrf.mxu0
        %v5216 = vadd.f32 0.0, %v5215
        %v5217 = vpop.f32.mrf.mxu0
        %5218 = vdwg.mxu0
        %v5219 = vld [vmem:[%s821] sm:$0xff]
        %v5220 = vld [vmem:[%s821 + $0x8] sm:$0xff]
        %v5222 = vsel %vm406, %v5219, 0
        %v5225 = vsel %vm406, %v5220, 0
        %v5228 = vsel %vm413, %v5216, 0
        %5230 = vmatprep.subr.mxu0 0.0
        %5231 = vmatpush1.msra.mxu0 0.0
        %5232 = vmatprep.subr.mxu0 0.0
        %5233 = vmatpush1.msra.mxu0 0.0
        %5234 = vmatprep.subr.mxu0 0.0
        %5235 = vmatpush1.msra.mxu0 0.0
        %5236 = vmatprep.subr.mxu0 0.0
        %5237 = vmatpush1.msra.mxu0 0.0
        %5238 = vmatprep.subr.mxu0 0.0
        %5239 = vmatpush1.msra.mxu0 0.0
        %5240 = vmatprep.subr.mxu0 0.0
        %5241 = vmatpush1.msra.mxu0 0.0
        %5242 = vmatprep.subr.mxu0 0.0
        %5243 = vmatpush1.msra.mxu0 0.0
        %5244 = vmatprep.subr.mxu0 0.0
        %5245 = vmatpush1.msra.mxu0 0.0
        %5246 = vmatprep.subr.mxu0 0.0
        %5247 = vmatpush1.msra.mxu0 0.0
        %5248 = vmatprep.subr.mxu0 0.0
        %5249 = vmatpush1.msra.mxu0 0.0
        %5250 = vmatprep.subr.mxu0 0.0
        %5251 = vmatpush1.msra.mxu0 0.0
        %5252 = vmatprep.subr.mxu0 0.0
        %5253 = vmatpush1.msra.mxu0 0.0
        %5254 = vmatprep.subr.mxu0 0.0
        %5255 = vmatpush1.msra.mxu0 0.0
        %5256 = vmatprep.subr.mxu0 0.0
        %5257 = vmatpush1.msra.mxu0 0.0
        %5258 = vmatprep.subr.mxu0 0.0
        %5259 = vmatpush1.msra.mxu0 0.0
        %5260 = vmatprep.subr.mxu0 0.0
        %5261 = vmatpush1.msra.mxu0 %v5228
        %5262 = vmatprep.subr.mxu0 0.0
        %5263 = vmatpush2.msra.mxu0 0.0
        %5264 = vmatprep.subr.mxu0 0.0
        %5265 = vmatpush2.msra.mxu0 0.0
        %5266 = vmatprep.subr.mxu0 0.0
        %5267 = vmatpush2.msra.mxu0 0.0
        %5268 = vmatprep.subr.mxu0 0.0
        %5269 = vmatpush2.msra.mxu0 0.0
        %5270 = vmatprep.subr.mxu0 0.0
        %5271 = vmatpush2.msra.mxu0 0.0
        %5272 = vmatprep.subr.mxu0 0.0
        %5273 = vmatpush2.msra.mxu0 0.0
        %5274 = vmatprep.subr.mxu0 0.0
        %5275 = vmatpush2.msra.mxu0 0.0
        %5276 = vmatprep.subr.mxu0 0.0
        %5277 = vmatpush2.msra.mxu0 0.0
        %5278 = vmatprep.subr.mxu0 0.0
        %5279 = vmatpush2.msra.mxu0 0.0
        %5280 = vmatprep.subr.mxu0 0.0
        %5281 = vmatpush2.msra.mxu0 0.0
        %5282 = vmatprep.subr.mxu0 0.0
        %5283 = vmatpush2.msra.mxu0 0.0
        %5284 = vmatprep.subr.mxu0 0.0
        %5285 = vmatpush2.msra.mxu0 0.0
        %5286 = vmatprep.subr.mxu0 0.0
        %5287 = vmatpush2.msra.mxu0 0.0
        %5288 = vmatprep.subr.mxu0 0.0
        %5289 = vmatpush2.msra.mxu0 0.0
        %5290 = vmatprep.subr.mxu0 0.0
        %5291 = vmatpush2.msra.mxu0 0.0
        %5292 = vmatprep.subr.mxu0 0.0
        %5293 = vmatpush2.msra.mxu0 0.0
        %5294 = vmatprep.mubr.f32.mxu0 0.0
        %5295 = vmatmul.mubr.f32.gmra.mxu0 %v5222
        %v5296 = vpop.f32.mrf.mxu0
        %v5297 = vadd.f32 0.0, %v5296
        %v5298 = vpop.f32.mrf.mxu0
        %5299 = vmatprep.mubr.f32.mxu0 0.0
        %5300 = vmatmul.mubr.f32.gmra.mxu0 %v5225
        %v5301 = vpop.f32.mrf.mxu0
        %v5302 = vadd.f32 0.0, %v5301
        %v5303 = vpop.f32.mrf.mxu0
        %5304 = vdwg.mxu0
        %v5305 = vadd.f32 %v5147, %v5297
        %v5306 = vadd.f32 %v5148, %v5302
        %v5307 = vadd.f32 %v5305, %v913
        %v5308 = vadd.f32 %v5306, %v918
        %v5309 = vmax.f32 %v5307, 0.0
        %v5310 = vadd.f32 %v5309, %v5308
        %v5311 = vmax.f32 %v5310, 0.0
        %v5313 = vcombine.high %v5311, %v5311
        %v5315 = vunpack.c.l.s4 1966171168
        %v5316 = vunpack.c.0.s8 %v5315
        %v5317 = vlaneseq
        %v5318 = vshrl.u32 %v5317, 7
        %v5319 = vsub.s32 %v5316, %v5318
        %v5320 = vrot.slane %v5311, %v5319
        %v5322 = vunpack.c.l.s4 1966171168
        %v5323 = vunpack.c.0.s8 %v5322
        %v5324 = vlaneseq
        %v5325 = vshrl.u32 %v5324, 7
        %v5326 = vsub.s32 %v5323, %v5325
        %v5327 = vrot.slane %v5313, %v5326
        %v5328 = vcombine.high %v5320, %v5320
        %v5329 = vcombine.high %v5327, %v5327
        %v5331 = vunpack.c.l.s4 1966171168
        %v5332 = vunpack.c.0.s8 %v5331
        %v5333 = vlaneseq
        %v5334 = vshrl.u32 %v5333, 7
        %v5335 = vsub.s32 %v5332, %v5334
        %v5336 = vrot.slane %v5320, %v5335
        %v5338 = vunpack.c.l.s4 1966171168
        %v5339 = vunpack.c.0.s8 %v5338
        %v5340 = vlaneseq
        %v5341 = vshrl.u32 %v5340, 7
        %v5342 = vsub.s32 %v5339, %v5341
        %v5343 = vrot.slane %v5327, %v5342
        %v5345 = vunpack.c.l.s4 1966171168
        %v5346 = vunpack.c.0.s8 %v5345
        %v5347 = vlaneseq
        %v5348 = vshrl.u32 %v5347, 7
        %v5349 = vsub.s32 %v5346, %v5348
        %v5350 = vrot.slane %v5328, %v5349
        %v5352 = vunpack.c.l.s4 1966171168
        %v5353 = vunpack.c.0.s8 %v5352
        %v5354 = vlaneseq
        %v5355 = vshrl.u32 %v5354, 7
        %v5356 = vsub.s32 %v5353, %v5355
        %v5357 = vrot.slane %v5329, %v5356
        %v5358 = vcombine.high %v5336, %v5336
        %v5359 = vcombine.high %v5343, %v5343
        %v5360 = vcombine.high %v5350, %v5350
        %v5361 = vcombine.high %v5357, %v5357
        %5370 = vst.msk [vmem:[%s218 + $0x6] sm:$0x1] %vm983, %v5336
        %5371 = vst.msk [vmem:[%s218 + $0xe] sm:$0x1] %vm983, %v5350
        %5372 = vst.msk [vmem:[%s218 + $0x16] sm:$0x1] %vm983, %v5358
        %5373 = vst.msk [vmem:[%s218 + $0x1e] sm:$0x1] %vm983, %v5360
        %5374 = vst.msk [vmem:[%s218 + $0x26] sm:$0x1] %vm983, %v5343
        %5375 = vst.msk [vmem:[%s218 + $0x2e] sm:$0x1] %vm983, %v5357
        %5376 = vst.msk [vmem:[%s218 + $0x36] sm:$0x1] %vm983, %v5359
        %5377 = vst.msk [vmem:[%s218 + $0x3e] sm:$0x1] %vm983, %v5361
        %v5378 = vld [vmem:[%s196 + $0xe] sm:$0x1]
        %v5379 = vld [vmem:[%s196 + $0x1e] sm:$0x1]
        %v5380 = vld [vmem:[%s196 + $0x2e] sm:$0x1]
        %v5381 = vld [vmem:[%s196 + $0x3e] sm:$0x1]
        %v5386 = vrot.slane %v5379, 7
        %v5387 = vsel %vm250, %v5386, %v5378
        %v5388 = vrot.slane %v5380, 6
        %v5389 = vsel %vm253, %v5388, %v5387
        %v5390 = vrot.slane %v5381, 5
        %v5391 = vsel %vm256, %v5390, %v5389
        %v5392 = vsel %vm258, %v5391, 0
        %5394 = vmatprep.subr.mxu0 0.0
        %5395 = vmatpush1.msra.mxu0 0.0
        %5396 = vmatprep.subr.mxu0 0.0
        %5397 = vmatpush1.msra.mxu0 0.0
        %5398 = vmatprep.subr.mxu0 0.0
        %5399 = vmatpush1.msra.mxu0 0.0
        %5400 = vmatprep.subr.mxu0 0.0
        %5401 = vmatpush1.msra.mxu0 0.0
        %5402 = vmatprep.subr.mxu0 0.0
        %5403 = vmatpush1.msra.mxu0 0.0
        %5404 = vmatprep.subr.mxu0 0.0
        %5405 = vmatpush1.msra.mxu0 0.0
        %5406 = vmatprep.subr.mxu0 0.0
        %5407 = vmatpush1.msra.mxu0 0.0
        %5408 = vmatprep.subr.mxu0 0.0
        %5409 = vmatpush1.msra.mxu0 0.0
        %5410 = vmatprep.subr.mxu0 0.0
        %5411 = vmatpush1.msra.mxu0 0.0
        %5412 = vmatprep.subr.mxu0 0.0
        %5413 = vmatpush1.msra.mxu0 0.0
        %5414 = vmatprep.subr.mxu0 0.0
        %5415 = vmatpush1.msra.mxu0 0.0
        %5416 = vmatprep.subr.mxu0 0.0
        %5417 = vmatpush1.msra.mxu0 0.0
        %5418 = vmatprep.subr.mxu0 0.0
        %5419 = vmatpush1.msra.mxu0 0.0
        %5420 = vmatprep.subr.mxu0 0.0
        %5421 = vmatpush1.msra.mxu0 0.0
        %5422 = vmatprep.subr.mxu0 0.0
        %5423 = vmatpush1.msra.mxu0 %v231
        %5424 = vmatprep.subr.mxu0 0.0
        %5425 = vmatpush1.msra.mxu0 %v230
        %5426 = vmatprep.subr.mxu0 0.0
        %5427 = vmatpush2.msra.mxu0 0.0
        %5428 = vmatprep.subr.mxu0 0.0
        %5429 = vmatpush2.msra.mxu0 0.0
        %5430 = vmatprep.subr.mxu0 0.0
        %5431 = vmatpush2.msra.mxu0 0.0
        %5432 = vmatprep.subr.mxu0 0.0
        %5433 = vmatpush2.msra.mxu0 0.0
        %5434 = vmatprep.subr.mxu0 0.0
        %5435 = vmatpush2.msra.mxu0 0.0
        %5436 = vmatprep.subr.mxu0 0.0
        %5437 = vmatpush2.msra.mxu0 0.0
        %5438 = vmatprep.subr.mxu0 0.0
        %5439 = vmatpush2.msra.mxu0 0.0
        %5440 = vmatprep.subr.mxu0 0.0
        %5441 = vmatpush2.msra.mxu0 0.0
        %5442 = vmatprep.subr.mxu0 0.0
        %5443 = vmatpush2.msra.mxu0 0.0
        %5444 = vmatprep.subr.mxu0 0.0
        %5445 = vmatpush2.msra.mxu0 0.0
        %5446 = vmatprep.subr.mxu0 0.0
        %5447 = vmatpush2.msra.mxu0 0.0
        %5448 = vmatprep.subr.mxu0 0.0
        %5449 = vmatpush2.msra.mxu0 0.0
        %5450 = vmatprep.subr.mxu0 0.0
        %5451 = vmatpush2.msra.mxu0 0.0
        %5452 = vmatprep.subr.mxu0 0.0
        %5453 = vmatpush2.msra.mxu0 0.0
        %5454 = vmatprep.subr.mxu0 0.0
        %5455 = vmatpush2.msra.mxu0 0.0
        %5456 = vmatprep.subr.mxu0 0.0
        %5457 = vmatpush2.msra.mxu0 0.0
        %5458 = vmatprep.mubr.f32.mxu0 0.0
        %5459 = vmatmul.mubr.f32.gmra.mxu0 %v5392
        %v5460 = vpop.f32.mrf.mxu0
        %v5461 = vadd.f32 0.0, %v5460
        %v5462 = vpop.f32.mrf.mxu0
        %5463 = vdwg.mxu0
        %v5464 = vld [vmem:[%s1] sm:$0xff]
        %v5465 = vld [vmem:[%s1 + $0x8] sm:$0xff]
        %5466 = vmatprep.subr.mxu0 0.0
        %5467 = vmatpush1.msra.mxu0 0.0
        %5468 = vmatprep.subr.mxu0 0.0
        %5469 = vmatpush1.msra.mxu0 0.0
        %5470 = vmatprep.subr.mxu0 0.0
        %5471 = vmatpush1.msra.mxu0 0.0
        %5472 = vmatprep.subr.mxu0 0.0
        %5473 = vmatpush1.msra.mxu0 0.0
        %5474 = vmatprep.subr.mxu0 0.0
        %5475 = vmatpush1.msra.mxu0 0.0
        %5476 = vmatprep.subr.mxu0 0.0
        %5477 = vmatpush1.msra.mxu0 0.0
        %5478 = vmatprep.subr.mxu0 0.0
        %5479 = vmatpush1.msra.mxu0 0.0
        %5480 = vmatprep.subr.mxu0 0.0
        %5481 = vmatpush1.msra.mxu0 0.0
        %5482 = vmatprep.subr.mxu0 0.0
        %5483 = vmatpush1.msra.mxu0 0.0
        %5484 = vmatprep.subr.mxu0 0.0
        %5485 = vmatpush1.msra.mxu0 0.0
        %5486 = vmatprep.subr.mxu0 0.0
        %5487 = vmatpush1.msra.mxu0 0.0
        %5488 = vmatprep.subr.mxu0 0.0
        %5489 = vmatpush1.msra.mxu0 0.0
        %5490 = vmatprep.subr.mxu0 0.0
        %5491 = vmatpush1.msra.mxu0 0.0
        %5492 = vmatprep.subr.mxu0 0.0
        %5493 = vmatpush1.msra.mxu0 0.0
        %5494 = vmatprep.subr.mxu0 0.0
        %5495 = vmatpush1.msra.mxu0 %v238
        %5496 = vmatprep.subr.mxu0 0.0
        %5497 = vmatpush1.msra.mxu0 %v237
        %5498 = vmatprep.subr.mxu0 0.0
        %5499 = vmatpush2.msra.mxu0 0.0
        %5500 = vmatprep.subr.mxu0 0.0
        %5501 = vmatpush2.msra.mxu0 0.0
        %5502 = vmatprep.subr.mxu0 0.0
        %5503 = vmatpush2.msra.mxu0 0.0
        %5504 = vmatprep.subr.mxu0 0.0
        %5505 = vmatpush2.msra.mxu0 0.0
        %5506 = vmatprep.subr.mxu0 0.0
        %5507 = vmatpush2.msra.mxu0 0.0
        %5508 = vmatprep.subr.mxu0 0.0
        %5509 = vmatpush2.msra.mxu0 0.0
        %5510 = vmatprep.subr.mxu0 0.0
        %5511 = vmatpush2.msra.mxu0 0.0
        %5512 = vmatprep.subr.mxu0 0.0
        %5513 = vmatpush2.msra.mxu0 0.0
        %5514 = vmatprep.subr.mxu0 0.0
        %5515 = vmatpush2.msra.mxu0 0.0
        %5516 = vmatprep.subr.mxu0 0.0
        %5517 = vmatpush2.msra.mxu0 0.0
        %5518 = vmatprep.subr.mxu0 0.0
        %5519 = vmatpush2.msra.mxu0 0.0
        %5520 = vmatprep.subr.mxu0 0.0
        %5521 = vmatpush2.msra.mxu0 0.0
        %5522 = vmatprep.subr.mxu0 0.0
        %5523 = vmatpush2.msra.mxu0 0.0
        %5524 = vmatprep.subr.mxu0 0.0
        %5525 = vmatpush2.msra.mxu0 0.0
        %5526 = vmatprep.subr.mxu0 0.0
        %5527 = vmatpush2.msra.mxu0 0.0
        %5528 = vmatprep.subr.mxu0 0.0
        %5529 = vmatpush2.msra.mxu0 0.0
        %5530 = vmatprep.mubr.f32.mxu0 0.0
        %5531 = vmatmul.mubr.f32.gmra.mxu0 %v5392
        %v5532 = vpop.f32.mrf.mxu0
        %v5533 = vadd.f32 0.0, %v5532
        %v5534 = vpop.f32.mrf.mxu0
        %5535 = vdwg.mxu0
        %v5536 = vld [vmem:[%s403] sm:$0xff]
        %v5537 = vld [vmem:[%s403 + $0x8] sm:$0xff]
        %v5539 = vsel %vm406, %v5536, 0
        %v5542 = vsel %vm406, %v5537, 0
        %v5545 = vsel %vm413, %v5533, 0
        %5547 = vmatprep.subr.mxu0 0.0
        %5548 = vmatpush1.msra.mxu0 0.0
        %5549 = vmatprep.subr.mxu0 0.0
        %5550 = vmatpush1.msra.mxu0 0.0
        %5551 = vmatprep.subr.mxu0 0.0
        %5552 = vmatpush1.msra.mxu0 0.0
        %5553 = vmatprep.subr.mxu0 0.0
        %5554 = vmatpush1.msra.mxu0 0.0
        %5555 = vmatprep.subr.mxu0 0.0
        %5556 = vmatpush1.msra.mxu0 0.0
        %5557 = vmatprep.subr.mxu0 0.0
        %5558 = vmatpush1.msra.mxu0 0.0
        %5559 = vmatprep.subr.mxu0 0.0
        %5560 = vmatpush1.msra.mxu0 0.0
        %5561 = vmatprep.subr.mxu0 0.0
        %5562 = vmatpush1.msra.mxu0 0.0
        %5563 = vmatprep.subr.mxu0 0.0
        %5564 = vmatpush1.msra.mxu0 0.0
        %5565 = vmatprep.subr.mxu0 0.0
        %5566 = vmatpush1.msra.mxu0 0.0
        %5567 = vmatprep.subr.mxu0 0.0
        %5568 = vmatpush1.msra.mxu0 0.0
        %5569 = vmatprep.subr.mxu0 0.0
        %5570 = vmatpush1.msra.mxu0 0.0
        %5571 = vmatprep.subr.mxu0 0.0
        %5572 = vmatpush1.msra.mxu0 0.0
        %5573 = vmatprep.subr.mxu0 0.0
        %5574 = vmatpush1.msra.mxu0 0.0
        %5575 = vmatprep.subr.mxu0 0.0
        %5576 = vmatpush1.msra.mxu0 0.0
        %5577 = vmatprep.subr.mxu0 0.0
        %5578 = vmatpush1.msra.mxu0 %v5545
        %5579 = vmatprep.subr.mxu0 0.0
        %5580 = vmatpush2.msra.mxu0 0.0
        %5581 = vmatprep.subr.mxu0 0.0
        %5582 = vmatpush2.msra.mxu0 0.0
        %5583 = vmatprep.subr.mxu0 0.0
        %5584 = vmatpush2.msra.mxu0 0.0
        %5585 = vmatprep.subr.mxu0 0.0
        %5586 = vmatpush2.msra.mxu0 0.0
        %5587 = vmatprep.subr.mxu0 0.0
        %5588 = vmatpush2.msra.mxu0 0.0
        %5589 = vmatprep.subr.mxu0 0.0
        %5590 = vmatpush2.msra.mxu0 0.0
        %5591 = vmatprep.subr.mxu0 0.0
        %5592 = vmatpush2.msra.mxu0 0.0
        %5593 = vmatprep.subr.mxu0 0.0
        %5594 = vmatpush2.msra.mxu0 0.0
        %5595 = vmatprep.subr.mxu0 0.0
        %5596 = vmatpush2.msra.mxu0 0.0
        %5597 = vmatprep.subr.mxu0 0.0
        %5598 = vmatpush2.msra.mxu0 0.0
        %5599 = vmatprep.subr.mxu0 0.0
        %5600 = vmatpush2.msra.mxu0 0.0
        %5601 = vmatprep.subr.mxu0 0.0
        %5602 = vmatpush2.msra.mxu0 0.0
        %5603 = vmatprep.subr.mxu0 0.0
        %5604 = vmatpush2.msra.mxu0 0.0
        %5605 = vmatprep.subr.mxu0 0.0
        %5606 = vmatpush2.msra.mxu0 0.0
        %5607 = vmatprep.subr.mxu0 0.0
        %5608 = vmatpush2.msra.mxu0 0.0
        %5609 = vmatprep.subr.mxu0 0.0
        %5610 = vmatpush2.msra.mxu0 0.0
        %5611 = vmatprep.mubr.f32.mxu0 0.0
        %5612 = vmatmul.mubr.f32.gmra.mxu0 %v5539
        %v5613 = vpop.f32.mrf.mxu0
        %v5614 = vadd.f32 0.0, %v5613
        %v5615 = vpop.f32.mrf.mxu0
        %5616 = vmatprep.mubr.f32.mxu0 0.0
        %5617 = vmatmul.mubr.f32.gmra.mxu0 %v5542
        %v5618 = vpop.f32.mrf.mxu0
        %v5619 = vadd.f32 0.0, %v5618
        %v5620 = vpop.f32.mrf.mxu0
        %5621 = vdwg.mxu0
        %v5623 = vsel %vm406, %v5464, 0
        %v5626 = vsel %vm406, %v5465, 0
        %v5629 = vsel %vm413, %v5461, 0
        %5631 = vmatprep.subr.mxu0 0.0
        %5632 = vmatpush1.msra.mxu0 0.0
        %5633 = vmatprep.subr.mxu0 0.0
        %5634 = vmatpush1.msra.mxu0 0.0
        %5635 = vmatprep.subr.mxu0 0.0
        %5636 = vmatpush1.msra.mxu0 0.0
        %5637 = vmatprep.subr.mxu0 0.0
        %5638 = vmatpush1.msra.mxu0 0.0
        %5639 = vmatprep.subr.mxu0 0.0
        %5640 = vmatpush1.msra.mxu0 0.0
        %5641 = vmatprep.subr.mxu0 0.0
        %5642 = vmatpush1.msra.mxu0 0.0
        %5643 = vmatprep.subr.mxu0 0.0
        %5644 = vmatpush1.msra.mxu0 0.0
        %5645 = vmatprep.subr.mxu0 0.0
        %5646 = vmatpush1.msra.mxu0 0.0
        %5647 = vmatprep.subr.mxu0 0.0
        %5648 = vmatpush1.msra.mxu0 0.0
        %5649 = vmatprep.subr.mxu0 0.0
        %5650 = vmatpush1.msra.mxu0 0.0
        %5651 = vmatprep.subr.mxu0 0.0
        %5652 = vmatpush1.msra.mxu0 0.0
        %5653 = vmatprep.subr.mxu0 0.0
        %5654 = vmatpush1.msra.mxu0 0.0
        %5655 = vmatprep.subr.mxu0 0.0
        %5656 = vmatpush1.msra.mxu0 0.0
        %5657 = vmatprep.subr.mxu0 0.0
        %5658 = vmatpush1.msra.mxu0 0.0
        %5659 = vmatprep.subr.mxu0 0.0
        %5660 = vmatpush1.msra.mxu0 0.0
        %5661 = vmatprep.subr.mxu0 0.0
        %5662 = vmatpush1.msra.mxu0 %v5629
        %5663 = vmatprep.subr.mxu0 0.0
        %5664 = vmatpush2.msra.mxu0 0.0
        %5665 = vmatprep.subr.mxu0 0.0
        %5666 = vmatpush2.msra.mxu0 0.0
        %5667 = vmatprep.subr.mxu0 0.0
        %5668 = vmatpush2.msra.mxu0 0.0
        %5669 = vmatprep.subr.mxu0 0.0
        %5670 = vmatpush2.msra.mxu0 0.0
        %5671 = vmatprep.subr.mxu0 0.0
        %5672 = vmatpush2.msra.mxu0 0.0
        %5673 = vmatprep.subr.mxu0 0.0
        %5674 = vmatpush2.msra.mxu0 0.0
        %5675 = vmatprep.subr.mxu0 0.0
        %5676 = vmatpush2.msra.mxu0 0.0
        %5677 = vmatprep.subr.mxu0 0.0
        %5678 = vmatpush2.msra.mxu0 0.0
        %5679 = vmatprep.subr.mxu0 0.0
        %5680 = vmatpush2.msra.mxu0 0.0
        %5681 = vmatprep.subr.mxu0 0.0
        %5682 = vmatpush2.msra.mxu0 0.0
        %5683 = vmatprep.subr.mxu0 0.0
        %5684 = vmatpush2.msra.mxu0 0.0
        %5685 = vmatprep.subr.mxu0 0.0
        %5686 = vmatpush2.msra.mxu0 0.0
        %5687 = vmatprep.subr.mxu0 0.0
        %5688 = vmatpush2.msra.mxu0 0.0
        %5689 = vmatprep.subr.mxu0 0.0
        %5690 = vmatpush2.msra.mxu0 0.0
        %5691 = vmatprep.subr.mxu0 0.0
        %5692 = vmatpush2.msra.mxu0 0.0
        %5693 = vmatprep.subr.mxu0 0.0
        %5694 = vmatpush2.msra.mxu0 0.0
        %5695 = vmatprep.mubr.f32.mxu0 0.0
        %5696 = vmatmul.mubr.f32.gmra.mxu0 %v5623
        %v5697 = vpop.f32.mrf.mxu0
        %v5698 = vadd.f32 %v5614, %v5697
        %v5699 = vpop.f32.mrf.mxu0
        %5700 = vmatprep.mubr.f32.mxu0 0.0
        %5701 = vmatmul.mubr.f32.gmra.mxu0 %v5626
        %v5702 = vpop.f32.mrf.mxu0
        %v5703 = vadd.f32 %v5619, %v5702
        %v5704 = vpop.f32.mrf.mxu0
        %5705 = vdwg.mxu0
        %v5706 = vld [vmem:[%s196 + $0xf] sm:$0x1]
        %v5707 = vld [vmem:[%s196 + $0x1f] sm:$0x1]
        %v5708 = vld [vmem:[%s196 + $0x2f] sm:$0x1]
        %v5709 = vld [vmem:[%s196 + $0x3f] sm:$0x1]
        %v5714 = vrot.slane %v5707, 7
        %v5715 = vsel %vm250, %v5714, %v5706
        %v5716 = vrot.slane %v5708, 6
        %v5717 = vsel %vm253, %v5716, %v5715
        %v5718 = vrot.slane %v5709, 5
        %v5719 = vsel %vm256, %v5718, %v5717
        %v5720 = vsel %vm258, %v5719, 0
        %5722 = vmatprep.subr.mxu0 0.0
        %5723 = vmatpush1.msra.mxu0 0.0
        %5724 = vmatprep.subr.mxu0 0.0
        %5725 = vmatpush1.msra.mxu0 0.0
        %5726 = vmatprep.subr.mxu0 0.0
        %5727 = vmatpush1.msra.mxu0 0.0
        %5728 = vmatprep.subr.mxu0 0.0
        %5729 = vmatpush1.msra.mxu0 0.0
        %5730 = vmatprep.subr.mxu0 0.0
        %5731 = vmatpush1.msra.mxu0 0.0
        %5732 = vmatprep.subr.mxu0 0.0
        %5733 = vmatpush1.msra.mxu0 0.0
        %5734 = vmatprep.subr.mxu0 0.0
        %5735 = vmatpush1.msra.mxu0 0.0
        %5736 = vmatprep.subr.mxu0 0.0
        %5737 = vmatpush1.msra.mxu0 0.0
        %5738 = vmatprep.subr.mxu0 0.0
        %5739 = vmatpush1.msra.mxu0 0.0
        %5740 = vmatprep.subr.mxu0 0.0
        %5741 = vmatpush1.msra.mxu0 0.0
        %5742 = vmatprep.subr.mxu0 0.0
        %5743 = vmatpush1.msra.mxu0 0.0
        %5744 = vmatprep.subr.mxu0 0.0
        %5745 = vmatpush1.msra.mxu0 0.0
        %5746 = vmatprep.subr.mxu0 0.0
        %5747 = vmatpush1.msra.mxu0 0.0
        %5748 = vmatprep.subr.mxu0 0.0
        %5749 = vmatpush1.msra.mxu0 0.0
        %5750 = vmatprep.subr.mxu0 0.0
        %5751 = vmatpush1.msra.mxu0 %v231
        %5752 = vmatprep.subr.mxu0 0.0
        %5753 = vmatpush1.msra.mxu0 %v230
        %5754 = vmatprep.subr.mxu0 0.0
        %5755 = vmatpush2.msra.mxu0 0.0
        %5756 = vmatprep.subr.mxu0 0.0
        %5757 = vmatpush2.msra.mxu0 0.0
        %5758 = vmatprep.subr.mxu0 0.0
        %5759 = vmatpush2.msra.mxu0 0.0
        %5760 = vmatprep.subr.mxu0 0.0
        %5761 = vmatpush2.msra.mxu0 0.0
        %5762 = vmatprep.subr.mxu0 0.0
        %5763 = vmatpush2.msra.mxu0 0.0
        %5764 = vmatprep.subr.mxu0 0.0
        %5765 = vmatpush2.msra.mxu0 0.0
        %5766 = vmatprep.subr.mxu0 0.0
        %5767 = vmatpush2.msra.mxu0 0.0
        %5768 = vmatprep.subr.mxu0 0.0
        %5769 = vmatpush2.msra.mxu0 0.0
        %5770 = vmatprep.subr.mxu0 0.0
        %5771 = vmatpush2.msra.mxu0 0.0
        %5772 = vmatprep.subr.mxu0 0.0
        %5773 = vmatpush2.msra.mxu0 0.0
        %5774 = vmatprep.subr.mxu0 0.0
        %5775 = vmatpush2.msra.mxu0 0.0
        %5776 = vmatprep.subr.mxu0 0.0
        %5777 = vmatpush2.msra.mxu0 0.0
        %5778 = vmatprep.subr.mxu0 0.0
        %5779 = vmatpush2.msra.mxu0 0.0
        %5780 = vmatprep.subr.mxu0 0.0
        %5781 = vmatpush2.msra.mxu0 0.0
        %5782 = vmatprep.subr.mxu0 0.0
        %5783 = vmatpush2.msra.mxu0 0.0
        %5784 = vmatprep.subr.mxu0 0.0
        %5785 = vmatpush2.msra.mxu0 0.0
        %5786 = vmatprep.mubr.f32.mxu0 0.0
        %5787 = vmatmul.mubr.f32.gmra.mxu0 %v5720
        %v5788 = vpop.f32.mrf.mxu0
        %v5789 = vadd.f32 0.0, %v5788
        %v5790 = vpop.f32.mrf.mxu0
        %5791 = vdwg.mxu0
        %v5792 = vld [vmem:[%s662] sm:$0xff]
        %v5793 = vld [vmem:[%s662 + $0x8] sm:$0xff]
        %v5795 = vsel %vm406, %v5792, 0
        %v5798 = vsel %vm406, %v5793, 0
        %v5801 = vsel %vm413, %v5789, 0
        %5803 = vmatprep.subr.mxu0 0.0
        %5804 = vmatpush1.msra.mxu0 0.0
        %5805 = vmatprep.subr.mxu0 0.0
        %5806 = vmatpush1.msra.mxu0 0.0
        %5807 = vmatprep.subr.mxu0 0.0
        %5808 = vmatpush1.msra.mxu0 0.0
        %5809 = vmatprep.subr.mxu0 0.0
        %5810 = vmatpush1.msra.mxu0 0.0
        %5811 = vmatprep.subr.mxu0 0.0
        %5812 = vmatpush1.msra.mxu0 0.0
        %5813 = vmatprep.subr.mxu0 0.0
        %5814 = vmatpush1.msra.mxu0 0.0
        %5815 = vmatprep.subr.mxu0 0.0
        %5816 = vmatpush1.msra.mxu0 0.0
        %5817 = vmatprep.subr.mxu0 0.0
        %5818 = vmatpush1.msra.mxu0 0.0
        %5819 = vmatprep.subr.mxu0 0.0
        %5820 = vmatpush1.msra.mxu0 0.0
        %5821 = vmatprep.subr.mxu0 0.0
        %5822 = vmatpush1.msra.mxu0 0.0
        %5823 = vmatprep.subr.mxu0 0.0
        %5824 = vmatpush1.msra.mxu0 0.0
        %5825 = vmatprep.subr.mxu0 0.0
        %5826 = vmatpush1.msra.mxu0 0.0
        %5827 = vmatprep.subr.mxu0 0.0
        %5828 = vmatpush1.msra.mxu0 0.0
        %5829 = vmatprep.subr.mxu0 0.0
        %5830 = vmatpush1.msra.mxu0 0.0
        %5831 = vmatprep.subr.mxu0 0.0
        %5832 = vmatpush1.msra.mxu0 0.0
        %5833 = vmatprep.subr.mxu0 0.0
        %5834 = vmatpush1.msra.mxu0 %v5801
        %5835 = vmatprep.subr.mxu0 0.0
        %5836 = vmatpush2.msra.mxu0 0.0
        %5837 = vmatprep.subr.mxu0 0.0
        %5838 = vmatpush2.msra.mxu0 0.0
        %5839 = vmatprep.subr.mxu0 0.0
        %5840 = vmatpush2.msra.mxu0 0.0
        %5841 = vmatprep.subr.mxu0 0.0
        %5842 = vmatpush2.msra.mxu0 0.0
        %5843 = vmatprep.subr.mxu0 0.0
        %5844 = vmatpush2.msra.mxu0 0.0
        %5845 = vmatprep.subr.mxu0 0.0
        %5846 = vmatpush2.msra.mxu0 0.0
        %5847 = vmatprep.subr.mxu0 0.0
        %5848 = vmatpush2.msra.mxu0 0.0
        %5849 = vmatprep.subr.mxu0 0.0
        %5850 = vmatpush2.msra.mxu0 0.0
        %5851 = vmatprep.subr.mxu0 0.0
        %5852 = vmatpush2.msra.mxu0 0.0
        %5853 = vmatprep.subr.mxu0 0.0
        %5854 = vmatpush2.msra.mxu0 0.0
        %5855 = vmatprep.subr.mxu0 0.0
        %5856 = vmatpush2.msra.mxu0 0.0
        %5857 = vmatprep.subr.mxu0 0.0
        %5858 = vmatpush2.msra.mxu0 0.0
        %5859 = vmatprep.subr.mxu0 0.0
        %5860 = vmatpush2.msra.mxu0 0.0
        %5861 = vmatprep.subr.mxu0 0.0
        %5862 = vmatpush2.msra.mxu0 0.0
        %5863 = vmatprep.subr.mxu0 0.0
        %5864 = vmatpush2.msra.mxu0 0.0
        %5865 = vmatprep.subr.mxu0 0.0
        %5866 = vmatpush2.msra.mxu0 0.0
        %5867 = vmatprep.mubr.f32.mxu0 0.0
        %5868 = vmatmul.mubr.f32.gmra.mxu0 %v5795
        %v5869 = vpop.f32.mrf.mxu0
        %v5870 = vadd.f32 0.0, %v5869
        %v5871 = vpop.f32.mrf.mxu0
        %5872 = vmatprep.mubr.f32.mxu0 0.0
        %5873 = vmatmul.mubr.f32.gmra.mxu0 %v5798
        %v5874 = vpop.f32.mrf.mxu0
        %v5875 = vadd.f32 0.0, %v5874
        %v5876 = vpop.f32.mrf.mxu0
        %5877 = vdwg.mxu0
        %v5878 = vadd.f32 %v5698, %v5870
        %v5879 = vadd.f32 %v5703, %v5875
        %5880 = vmatprep.subr.mxu0 0.0
        %5881 = vmatpush1.msra.mxu0 0.0
        %5882 = vmatprep.subr.mxu0 0.0
        %5883 = vmatpush1.msra.mxu0 0.0
        %5884 = vmatprep.subr.mxu0 0.0
        %5885 = vmatpush1.msra.mxu0 0.0
        %5886 = vmatprep.subr.mxu0 0.0
        %5887 = vmatpush1.msra.mxu0 0.0
        %5888 = vmatprep.subr.mxu0 0.0
        %5889 = vmatpush1.msra.mxu0 0.0
        %5890 = vmatprep.subr.mxu0 0.0
        %5891 = vmatpush1.msra.mxu0 0.0
        %5892 = vmatprep.subr.mxu0 0.0
        %5893 = vmatpush1.msra.mxu0 0.0
        %5894 = vmatprep.subr.mxu0 0.0
        %5895 = vmatpush1.msra.mxu0 0.0
        %5896 = vmatprep.subr.mxu0 0.0
        %5897 = vmatpush1.msra.mxu0 0.0
        %5898 = vmatprep.subr.mxu0 0.0
        %5899 = vmatpush1.msra.mxu0 0.0
        %5900 = vmatprep.subr.mxu0 0.0
        %5901 = vmatpush1.msra.mxu0 0.0
        %5902 = vmatprep.subr.mxu0 0.0
        %5903 = vmatpush1.msra.mxu0 0.0
        %5904 = vmatprep.subr.mxu0 0.0
        %5905 = vmatpush1.msra.mxu0 0.0
        %5906 = vmatprep.subr.mxu0 0.0
        %5907 = vmatpush1.msra.mxu0 0.0
        %5908 = vmatprep.subr.mxu0 0.0
        %5909 = vmatpush1.msra.mxu0 %v238
        %5910 = vmatprep.subr.mxu0 0.0
        %5911 = vmatpush1.msra.mxu0 %v237
        %5912 = vmatprep.subr.mxu0 0.0
        %5913 = vmatpush2.msra.mxu0 0.0
        %5914 = vmatprep.subr.mxu0 0.0
        %5915 = vmatpush2.msra.mxu0 0.0
        %5916 = vmatprep.subr.mxu0 0.0
        %5917 = vmatpush2.msra.mxu0 0.0
        %5918 = vmatprep.subr.mxu0 0.0
        %5919 = vmatpush2.msra.mxu0 0.0
        %5920 = vmatprep.subr.mxu0 0.0
        %5921 = vmatpush2.msra.mxu0 0.0
        %5922 = vmatprep.subr.mxu0 0.0
        %5923 = vmatpush2.msra.mxu0 0.0
        %5924 = vmatprep.subr.mxu0 0.0
        %5925 = vmatpush2.msra.mxu0 0.0
        %5926 = vmatprep.subr.mxu0 0.0
        %5927 = vmatpush2.msra.mxu0 0.0
        %5928 = vmatprep.subr.mxu0 0.0
        %5929 = vmatpush2.msra.mxu0 0.0
        %5930 = vmatprep.subr.mxu0 0.0
        %5931 = vmatpush2.msra.mxu0 0.0
        %5932 = vmatprep.subr.mxu0 0.0
        %5933 = vmatpush2.msra.mxu0 0.0
        %5934 = vmatprep.subr.mxu0 0.0
        %5935 = vmatpush2.msra.mxu0 0.0
        %5936 = vmatprep.subr.mxu0 0.0
        %5937 = vmatpush2.msra.mxu0 0.0
        %5938 = vmatprep.subr.mxu0 0.0
        %5939 = vmatpush2.msra.mxu0 0.0
        %5940 = vmatprep.subr.mxu0 0.0
        %5941 = vmatpush2.msra.mxu0 0.0
        %5942 = vmatprep.subr.mxu0 0.0
        %5943 = vmatpush2.msra.mxu0 0.0
        %5944 = vmatprep.mubr.f32.mxu0 0.0
        %5945 = vmatmul.mubr.f32.gmra.mxu0 %v5720
        %v5946 = vpop.f32.mrf.mxu0
        %v5947 = vadd.f32 0.0, %v5946
        %v5948 = vpop.f32.mrf.mxu0
        %5949 = vdwg.mxu0
        %v5950 = vld [vmem:[%s821] sm:$0xff]
        %v5951 = vld [vmem:[%s821 + $0x8] sm:$0xff]
        %v5953 = vsel %vm406, %v5950, 0
        %v5956 = vsel %vm406, %v5951, 0
        %v5959 = vsel %vm413, %v5947, 0
        %5961 = vmatprep.subr.mxu0 0.0
        %5962 = vmatpush1.msra.mxu0 0.0
        %5963 = vmatprep.subr.mxu0 0.0
        %5964 = vmatpush1.msra.mxu0 0.0
        %5965 = vmatprep.subr.mxu0 0.0
        %5966 = vmatpush1.msra.mxu0 0.0
        %5967 = vmatprep.subr.mxu0 0.0
        %5968 = vmatpush1.msra.mxu0 0.0
        %5969 = vmatprep.subr.mxu0 0.0
        %5970 = vmatpush1.msra.mxu0 0.0
        %5971 = vmatprep.subr.mxu0 0.0
        %5972 = vmatpush1.msra.mxu0 0.0
        %5973 = vmatprep.subr.mxu0 0.0
        %5974 = vmatpush1.msra.mxu0 0.0
        %5975 = vmatprep.subr.mxu0 0.0
        %5976 = vmatpush1.msra.mxu0 0.0
        %5977 = vmatprep.subr.mxu0 0.0
        %5978 = vmatpush1.msra.mxu0 0.0
        %5979 = vmatprep.subr.mxu0 0.0
        %5980 = vmatpush1.msra.mxu0 0.0
        %5981 = vmatprep.subr.mxu0 0.0
        %5982 = vmatpush1.msra.mxu0 0.0
        %5983 = vmatprep.subr.mxu0 0.0
        %5984 = vmatpush1.msra.mxu0 0.0
        %5985 = vmatprep.subr.mxu0 0.0
        %5986 = vmatpush1.msra.mxu0 0.0
        %5987 = vmatprep.subr.mxu0 0.0
        %5988 = vmatpush1.msra.mxu0 0.0
        %5989 = vmatprep.subr.mxu0 0.0
        %5990 = vmatpush1.msra.mxu0 0.0
        %5991 = vmatprep.subr.mxu0 0.0
        %5992 = vmatpush1.msra.mxu0 %v5959
        %5993 = vmatprep.subr.mxu0 0.0
        %5994 = vmatpush2.msra.mxu0 0.0
        %5995 = vmatprep.subr.mxu0 0.0
        %5996 = vmatpush2.msra.mxu0 0.0
        %5997 = vmatprep.subr.mxu0 0.0
        %5998 = vmatpush2.msra.mxu0 0.0
        %5999 = vmatprep.subr.mxu0 0.0
        %6000 = vmatpush2.msra.mxu0 0.0
        %6001 = vmatprep.subr.mxu0 0.0
        %6002 = vmatpush2.msra.mxu0 0.0
        %6003 = vmatprep.subr.mxu0 0.0
        %6004 = vmatpush2.msra.mxu0 0.0
        %6005 = vmatprep.subr.mxu0 0.0
        %6006 = vmatpush2.msra.mxu0 0.0
        %6007 = vmatprep.subr.mxu0 0.0
        %6008 = vmatpush2.msra.mxu0 0.0
        %6009 = vmatprep.subr.mxu0 0.0
        %6010 = vmatpush2.msra.mxu0 0.0
        %6011 = vmatprep.subr.mxu0 0.0
        %6012 = vmatpush2.msra.mxu0 0.0
        %6013 = vmatprep.subr.mxu0 0.0
        %6014 = vmatpush2.msra.mxu0 0.0
        %6015 = vmatprep.subr.mxu0 0.0
        %6016 = vmatpush2.msra.mxu0 0.0
        %6017 = vmatprep.subr.mxu0 0.0
        %6018 = vmatpush2.msra.mxu0 0.0
        %6019 = vmatprep.subr.mxu0 0.0
        %6020 = vmatpush2.msra.mxu0 0.0
        %6021 = vmatprep.subr.mxu0 0.0
        %6022 = vmatpush2.msra.mxu0 0.0
        %6023 = vmatprep.subr.mxu0 0.0
        %6024 = vmatpush2.msra.mxu0 0.0
        %6025 = vmatprep.mubr.f32.mxu0 0.0
        %6026 = vmatmul.mubr.f32.gmra.mxu0 %v5953
        %v6027 = vpop.f32.mrf.mxu0
        %v6028 = vadd.f32 0.0, %v6027
        %v6029 = vpop.f32.mrf.mxu0
        %6030 = vmatprep.mubr.f32.mxu0 0.0
        %6031 = vmatmul.mubr.f32.gmra.mxu0 %v5956
        %v6032 = vpop.f32.mrf.mxu0
        %v6033 = vadd.f32 0.0, %v6032
        %v6034 = vpop.f32.mrf.mxu0
        %6035 = vdwg.mxu0
        %v6036 = vadd.f32 %v5878, %v6028
        %v6037 = vadd.f32 %v5879, %v6033
        %v6038 = vadd.f32 %v6036, %v913
        %v6039 = vadd.f32 %v6037, %v918
        %v6040 = vmax.f32 %v6038, 0.0
        %v6041 = vadd.f32 %v6040, %v6039
        %v6042 = vmax.f32 %v6041, 0.0
        %v6044 = vcombine.high %v6042, %v6042
        %v6046 = vunpack.c.l.s4 1966171168
        %v6047 = vunpack.c.0.s8 %v6046
        %v6048 = vlaneseq
        %v6049 = vshrl.u32 %v6048, 7
        %v6050 = vsub.s32 %v6047, %v6049
        %v6051 = vrot.slane %v6042, %v6050
        %v6053 = vunpack.c.l.s4 1966171168
        %v6054 = vunpack.c.0.s8 %v6053
        %v6055 = vlaneseq
        %v6056 = vshrl.u32 %v6055, 7
        %v6057 = vsub.s32 %v6054, %v6056
        %v6058 = vrot.slane %v6044, %v6057
        %v6059 = vcombine.high %v6051, %v6051
        %v6060 = vcombine.high %v6058, %v6058
        %v6062 = vunpack.c.l.s4 1966171168
        %v6063 = vunpack.c.0.s8 %v6062
        %v6064 = vlaneseq
        %v6065 = vshrl.u32 %v6064, 7
        %v6066 = vsub.s32 %v6063, %v6065
        %v6067 = vrot.slane %v6051, %v6066
        %v6069 = vunpack.c.l.s4 1966171168
        %v6070 = vunpack.c.0.s8 %v6069
        %v6071 = vlaneseq
        %v6072 = vshrl.u32 %v6071, 7
        %v6073 = vsub.s32 %v6070, %v6072
        %v6074 = vrot.slane %v6058, %v6073
        %v6076 = vunpack.c.l.s4 1966171168
        %v6077 = vunpack.c.0.s8 %v6076
        %v6078 = vlaneseq
        %v6079 = vshrl.u32 %v6078, 7
        %v6080 = vsub.s32 %v6077, %v6079
        %v6081 = vrot.slane %v6059, %v6080
        %v6083 = vunpack.c.l.s4 1966171168
        %v6084 = vunpack.c.0.s8 %v6083
        %v6085 = vlaneseq
        %v6086 = vshrl.u32 %v6085, 7
        %v6087 = vsub.s32 %v6084, %v6086
        %v6088 = vrot.slane %v6060, %v6087
        %v6089 = vcombine.high %v6067, %v6067
        %v6090 = vcombine.high %v6074, %v6074
        %v6091 = vcombine.high %v6081, %v6081
        %v6092 = vcombine.high %v6088, %v6088
        %6101 = vst.msk [vmem:[%s218 + $0x7] sm:$0x1] %vm983, %v6067
        %6102 = vst.msk [vmem:[%s218 + $0xf] sm:$0x1] %vm983, %v6081
        %6103 = vst.msk [vmem:[%s218 + $0x17] sm:$0x1] %vm983, %v6089
        %6104 = vst.msk [vmem:[%s218 + $0x1f] sm:$0x1] %vm983, %v6091
        %6105 = vst.msk [vmem:[%s218 + $0x27] sm:$0x1] %vm983, %v6074
        %6106 = vst.msk [vmem:[%s218 + $0x2f] sm:$0x1] %vm983, %v6088
        %6107 = vst.msk [vmem:[%s218 + $0x37] sm:$0x1] %vm983, %v6090
        %6108 = vst.msk [vmem:[%s218 + $0x3f] sm:$0x1] %vm983, %v6092
        %s6109 = sand.u32 %s123, 1
        %s6110 = scalar_lea.sflag [#allocation4], %s6109
        %s6111 = sand.u32 %s123, 1
        %s6112 = smul.addr %s6111, 64
        %s6113 = scalar_lea.vmem [#allocation5], %s6112
        // Predicated region
        $region37: #{tpu_custom_call.1} parent=31 // pred_check
          %p6114 = pneg %p133
        $region38: #{tpu_custom_call.1} parent=31 // pred_check_branch
          %6116 = sbr.rel (%p6114) target = $region40
        $region39: #{tpu_custom_call.1} parent=31 // pred_region
          %s6118 = ssub.s32 1024, 1024
          %6119 = vsyncadd %s6110, %s6118
          %s6120 = sadd.s32 %s27, %s26
          %s6121 = smul.addr %s25, 8
          %s6122 = sadd.s32 %s6120, %s6121
          %s6123 = smul.addr %s6122, 128
          %s6124 = scalar_lea.hbm %s3, %s6123
          %s6125 = sshll.u32 %s6113, 4
          %s6126 = int_to_ptr.vmem [resolvable:$true] %s6125
          %6131 = dma.vmem_to_hbm [thread:$0]  %s6126, 1024, %s6124, %s6110, 128, 128, 8
        $region40: #{tpu_custom_call.1} parent=31 // pred_fallthru
          _
      $region32: #{tpu_custom_call.1} parent=5 // pred_fallthru
        _
      %p6132 = scmp.le.s32.totalorder 2, %s15
      // Predicated region
      $region41: #{tpu_custom_call.1} parent=5 // pred_check
        %p6133 = pneg %p6132
      $region42: #{tpu_custom_call.1} parent=5 // pred_check_branch
        %6135 = sbr.rel (%p6133) target = $region44
      $region43: #{tpu_custom_call.1} parent=5 // pred_region
        %s6136 = ssub.s32 %s15, 2
        // Predicated region
        $region45: #{tpu_custom_call.1} parent=43 // pred_check
          %p6137 = pneg %p139
        $region46: #{tpu_custom_call.1} parent=43 // pred_check_branch
          %6139 = sbr.rel (%p6137) target = $region48
        $region47: #{tpu_custom_call.1} parent=43 // pred_region
          %s6140 = sand.u32 %s124, 1
          %s6141 = scalar_lea.sflag [#allocation4], %s6140
          %s6142 = sand.u32 %s124, 1
          %s6143 = smul.addr %s6142, 64
          %s6144 = scalar_lea.vmem [#allocation5], %s6143
          %6145 = dma.done %s6141, 1024
        $region48: #{tpu_custom_call.1} parent=43 // pred_fallthru
          _
      $region44: #{tpu_custom_call.1} parent=5 // pred_fallthru
        _
    $region6: #{tpu_custom_call.1} parent=1 // loop_footer
      %s19 = sadd.s32 1, %s15
    $region7: #{tpu_custom_call.1} parent=1 // loop_footer_branch
      %14 = sbr.rel target = $region3
    $region8: #{tpu_custom_call.1} parent=1 // loop_exit
      _
    %6146 = vsyncpa [#allocation3], 1
    %s6147 = scalar_lea.sflag [#allocation3], 1
    %6148 = vsyncpa %s6147, 1
    %6149 = vsyncpa [#allocation4], 1
    %s6150 = scalar_lea.sflag [#allocation4], 1
    %6151 = vsyncpa %s6150, 1

</llo_original>
